<compile_context>
chip_gen: v6e
topology: v6e:2x2x1
jax: 0.10.0
libtpu: 0.0.40
codegen_flags: <defaults>
</compile_context>

<pallas_src>
import functools

import jax
import jax.numpy as jnp
import numpy as np
from jax import lax
from jax.experimental import pallas as pl
from jax.experimental.pallas import tpu as pltpu


def _feature_decoder_kernel(H, W, hid, hw_chunk, dot_dtype, sel_dtype, fold_c2,
                            *refs):
    if fold_c2:
        (p_ref, row_ref, wp_ref, feat_ref,
         wblk_ref, bblk_ref, woutt_ref, bout_ref, o_ref) = refs
        wc2_ref = None
    else:
        (p_ref, row_ref, wp_ref, feat_ref, wc2_ref,
         wblk_ref, bblk_ref, woutt_ref, bout_ref, o_ref) = refs

    f32 = jnp.float32
    Tt = p_ref.shape[1]
    HW_pad, Cw = feat_ref.shape[1], feat_ref.shape[2]
    n_chunks = HW_pad // hw_chunk

    # per-batch packed row: [fc_c1(c1)+fc_z(z)+fc_p2(b)+summed biases | A | b]
    row = row_ref[0]                                              # (1, hid+12)
    const_row = row[:, :hid]

    # ---- AffineLayer: Ap = p @ A + b (needed only for the sample coords) ----
    p = p_ref[0]                                                  # (Tt, 3)
    Ap = (p[:, 0:1] * row[:, hid + 0:hid + 3]
          + p[:, 1:2] * row[:, hid + 3:hid + 6]
          + p[:, 2:3] * row[:, hid + 6:hid + 9]
          + row[:, hid + 9:hid + 12])                             # (Tt, 3)

    # ---- projective normalization + grid_sample coordinates (f32, exact) ----
    denom = jnp.abs(Ap[:, 2:3]) + 1e-5
    gx = 2.0 * Ap[:, 0:1] / denom
    gy = 2.0 * Ap[:, 1:2] / denom
    ix = jnp.clip(((gx + 1.0) * W - 1.0) * 0.5, 0.0, float(W - 1))
    iy = jnp.clip(((gy + 1.0) * H - 1.0) * 0.5, 0.0, float(H - 1))
    x0f = jnp.floor(ix)
    y0f = jnp.floor(iy)
    wx1 = ix - x0f
    wy1 = iy - y0f
    x0 = x0f.astype(jnp.int32)
    y0 = y0f.astype(jnp.int32)
    x1 = jnp.minimum(x0 + 1, W - 1)
    y1 = jnp.minimum(y0 + 1, H - 1)

    # one base flat index, other corners derived (fewer (Tt, 1) int ops)
    k00 = y0 * W + x0
    dxi = x1 - x0
    dyw = (y1 - y0) * W
    k01 = k00 + dxi
    k10 = k00 + dyw
    k11 = k10 + dxi
    # (Tt, 1) bilinear weights, built directly in the select dtype
    w00 = ((1.0 - wy1) * (1.0 - wx1)).astype(sel_dtype)
    w01 = ((1.0 - wy1) * wx1).astype(sel_dtype)
    w10 = (wy1 * (1.0 - wx1)).astype(sel_dtype)
    w11 = (wy1 * wx1).astype(sel_dtype)
    zero = jnp.zeros((), sel_dtype)

    # constant lane ramp, hoisted out of the chunk loop (iota is not CSE'd)
    lane = lax.broadcasted_iota(jnp.int32, (Tt, hw_chunk), 1)

    # ---- bilinear gather as chunked one-hot matmuls: sum_chunks M @ feat ----
    def hw_body(ci, acc):
        base = pl.multiple_of(ci * hw_chunk, hw_chunk)
        M = (jnp.where(lane == (k00 - base), w00, zero)
             + jnp.where(lane == (k01 - base), w01, zero)
             + jnp.where(lane == (k10 - base), w10, zero)
             + jnp.where(lane == (k11 - base), w11, zero))        # (Tt, HWC)
        chunk = feat_ref[0, pl.ds(base, hw_chunk), :]             # (HWC, Cw)
        return acc + jnp.dot(M.astype(dot_dtype), chunk,
                             preferred_element_type=f32)

    acc = lax.fori_loop(0, n_chunks, hw_body, jnp.zeros((Tt, Cw), f32))

    # ---- trunk input: fused fc_p1(p)+fc_p2(Ap) via per-batch (3, hid) W ----
    net = jnp.dot(p, wp_ref[0], preferred_element_type=f32) + const_row
    if fold_c2:
        net = net + acc                       # fc_c2 already folded into feat
    else:
        net = net + jnp.dot(acc.astype(dot_dtype), wc2_ref[...],
                            preferred_element_type=f32)

    # ---- 4 x ResnetBlockFC(hidden, hidden): x + fc1(relu(fc0(relu(x)))) ----
    for i in range(4):
        h = jnp.dot(jnp.maximum(net, 0.0).astype(dot_dtype), wblk_ref[2 * i],
                    preferred_element_type=f32) + bblk_ref[2 * i]
        dx = jnp.dot(jnp.maximum(h, 0.0).astype(dot_dtype), wblk_ref[2 * i + 1],
                     preferred_element_type=f32) + bblk_ref[2 * i + 1]
        net = net + dx

    # ---- lane-dense output: produce a (1, Tt) row, not a (Tt, 1) column ----
    relu_net = jnp.maximum(net, 0.0).astype(dot_dtype)
    out_row = lax.dot_general(woutt_ref[...], relu_net,
                              (((1,), (1,)), ((), ())),
                              preferred_element_type=f32)         # (1, Tt)
    o_ref[...] = (out_row + bout_ref[...])[None]                  # (1, 1, Tt)


def feature_decoder_pallas(p, z, c, params, *, t_tile=512, hw_chunk=512,
                           use_bf16=True, bf16_select=None,
                           single_buffer_shared=True):
    """FeatureDecoder forward.  p:(B,T,3), z:(B,Zd), c:(B,Cd,H,W) -> (B,T).

    use_bf16:    MXU operands (+ shipped feature grid / trunk weights) in bf16,
                 f32 accumulation.  Set False for exact f32 everywhere.
    bf16_select: build the one-hot gather matrix directly in bf16 (v6e/v7x);
                 set False on v5e (no bf16 VPU) to build it in f32 and cast at
                 the dot.  Defaults to use_bf16.
    """
    f32 = jnp.float32
    if bf16_select is None:
        bf16_select = use_bf16
    dot_dtype = jnp.bfloat16 if use_bf16 else f32               # MXU operands
    sel_dtype = jnp.bfloat16 if (use_bf16 and bf16_select) else f32

    B, T, D = p.shape
    _, Cd, H, W = c.shape
    hid = params['w_p1'].shape[1]
    HW = H * W
    fold_c2 = hid <= Cd     # fold fc_c2 into the gather only if feat shrinks

    # --- tile sizing: multiples of 128 so MXU rows / output lanes stay dense ---
    t_tile = max(128, (t_tile // 128) * 128)
    hw_chunk = max(128, (hw_chunk // 128) * 128)
    Tt = min(t_tile, 128 * pl.cdiv(T, 128))
    T_pad = Tt * pl.cdiv(T, Tt)
    HWC = min(hw_chunk, 128 * pl.cdiv(HW, 128))
    HW_pad = HWC * pl.cdiv(HW, HWC)
    nT = T_pad // Tt

    # --- per-batch precompute in the wrapper (f32, once per batch) ---
    cg = jnp.transpose(c, (0, 2, 3, 1)).reshape(B, HW, Cd).astype(f32)
    c1 = jnp.max(cg, axis=1)                                     # (B, Cd), f32!
    w_c1x = jnp.concatenate([params['w_c1'], params['w_A'], params['w_b']],
                            axis=1).astype(f32)                  # (Cd, hid+12)
    b_sum = (params['b_p1'] + params['b_p2'] + params['b_z']
             + params['b_c1'] + params['b_c2'])
    b_c1x = jnp.concatenate([b_sum, params['b_A'], params['b_b']],
                            axis=0)[None].astype(f32)            # (1, hid+12)
    row = c1 @ w_c1x + b_c1x                                     # (B, hid+12)
    A = row[:, hid:hid + 9].reshape(B, 3, 3)
    b_aff = row[:, hid + 9:hid + 12]                             # (B, 3)
    w_p1 = params['w_p1'].astype(f32)
    w_p2 = params['w_p2'].astype(f32)
    # fc_p1(p) + fc_p2(p@A + b) == p @ (w_p1 + A @ w_p2) + b @ w_p2 (+ biases)
    w_p = w_p1[None] + jnp.einsum('bij,jk->bik', A, w_p2)        # (B, 3, hid)
    const = (row[:, :hid] + z.astype(f32) @ params['w_z'].astype(f32)
             + b_aff @ w_p2)                                     # (B, hid)
    row_packed = jnp.concatenate([const, row[:, hid:]], axis=1)[:, None, :]

    # --- spatial features, pre-cast to the MXU dtype, zero-padded to HW_pad ---
    if fold_c2:
        feat = jnp.einsum('bhc,cd->bhd', cg, params['w_c2'].astype(f32))
        Cw = hid
    else:
        feat = cg
        Cw = Cd
    feat = feat.astype(dot_dtype)
    if HW_pad > HW:
        feat = jnp.pad(feat, ((0, 0), (0, HW_pad - HW), (0, 0)))

    p_pad = p.astype(f32)
    if T_pad > T:
        p_pad = jnp.pad(p_pad, ((0, 0), (0, T_pad - T), (0, 0)))

    # --- shared (batch-invariant) weights ---
    w_blk = jnp.stack([params[f'blk{i}_w{j}'] for i in range(4)
                       for j in range(2)]).astype(dot_dtype)     # (8, hid, hid)
    b_blk = jnp.stack([params[f'blk{i}_b{j}'][None] for i in range(4)
                       for j in range(2)]).astype(f32)           # (8, 1, hid)
    w_out_t = params['w_out'].T.astype(dot_dtype)                # (1, hid)
    b_out = params['b_out'][None].astype(f32)                    # (1, 1)
    weights = ([] if fold_c2 else [params['w_c2'].astype(dot_dtype)])
    weights += [w_blk, b_blk, w_out_t, b_out]

    # --- VMEM budget: 3/4 of queried capacity (≈96MiB v5e/v6e, ≈48MiB v7x) ---
    try:
        vmem_cap = int(pltpu.get_tpu_info().vmem_capacity_bytes)
    except Exception:
        vmem_cap = 64 * 2 ** 20       # assume the smallest (v7x per-core)
    vmem_budget = (3 * vmem_cap) // 4

    weight_bytes = sum(int(w.size) * w.dtype.itemsize for w in weights)
    feat_bytes = HW_pad * Cw * feat.dtype.itemsize
    sel_sz = jnp.dtype(sel_dtype).itemsize
    temp_bytes = (Tt * HWC * (4 + 3 * sel_sz)      # lane ramp + one-hot temps
                  + 4 * Tt * Cw                    # f32 gather accumulator
                  + 4 * 4 * Tt * hid)              # trunk temporaries
    io_bytes = 4 * (Tt * D + (hid + 12) + 3 * hid + Tt)   # p + row + w_p + out

    flops_step = (2 * Tt * HW_pad * Cw + 2 * Tt * 3 * hid
                  + (0 if fold_c2 else 2 * Tt * Cd * hid)
                  + 16 * Tt * hid * hid + 2 * Tt * hid)
    flops = int(B * nT * flops_step)
    bytes_accessed = int(4 * (p_pad.size + row_packed.size + w_p.size
                              + B * T_pad)
                         + B * feat_bytes + weight_bytes)

    kernel = functools.partial(_feature_decoder_kernel, H, W, hid, HWC,
                               dot_dtype, sel_dtype, fold_c2)

    def build(single_buffer):
        def spec(shape, index_map, single):
            kw = {"pipeline_mode": pl.Buffered(1)} if single else {}
            return pl.BlockSpec(shape, index_map, **kw)

        in_specs = [
            pl.BlockSpec((1, Tt, D), lambda b, t: (b, t, 0)),
            pl.BlockSpec((1, 1, hid + 12), lambda b, t: (b, 0, 0)),
            pl.BlockSpec((1, 3, hid), lambda b, t: (b, 0, 0)),
            spec((1, HW_pad, Cw), lambda b, t: (b, 0, 0), single_buffer),
        ] + [spec(w.shape, (lambda b, t, _n=w.ndim: (0,) * _n), single_buffer)
             for w in weights]

        shared_mult = 1 if single_buffer else 2
        vmem_est = (2 * io_bytes + shared_mult * (feat_bytes + weight_bytes)
                    + temp_bytes)
        vmem_limit = int(min(max(2 * vmem_est, 16 * 2 ** 20), vmem_budget))

        return pl.pallas_call(
            kernel,
            out_shape=jax.ShapeDtypeStruct((B, 1, T_pad), f32),
            grid=(B, nT),
            in_specs=in_specs,
            out_specs=pl.BlockSpec((1, 1, Tt), lambda b, t: (b, 0, t)),
            compiler_params=pltpu.CompilerParams(
                dimension_semantics=("parallel", "parallel"),
                vmem_limit_bytes=vmem_limit),
            cost_estimate=pl.CostEstimate(flops=flops, transcendentals=0,
                                          bytes_accessed=bytes_accessed),
        )

    args = (p_pad, row_packed, w_p, feat, *weights)
    if single_buffer_shared and hasattr(pl, "Buffered"):
        try:
            out = build(True)(*args)
        except Exception:
            # pipeline_mode=pl.Buffered(1) unsupported on this jax/libtpu:
            # fall back to default double buffering (correctness unchanged).
            out = build(False)(*args)
    else:
        out = build(False)(*args)
    return out[:, 0, :T]                                         # (B, T)


def feature_decoder_ref(p, z, c, params):
    """Pure-JAX f32 reference with the module's exact semantics."""
    B, T, D = p.shape
    _, Cd, H, W = c.shape
    cg = jnp.transpose(c, (0, 2, 3, 1)).reshape(B, H * W, Cd)
    c1 = jnp.max(cg, axis=1)                                      # (B, Cd)
    A = (c1 @ params['w_A'] + params['b_A']).reshape(B, 3, 3)
    bb = (c1 @ params['w_b'] + params['b_b']).reshape(B, 1, 3)
    Ap = jnp.einsum('btk,bkj->btj', p, A) + bb
    denom = jnp.abs(Ap[..., 2]) + 1e-5
    gx = 2.0 * Ap[..., 0] / denom
    gy = 2.0 * Ap[..., 1] / denom
    ix = jnp.clip(((gx + 1.0) * W - 1.0) * 0.5, 0.0, W - 1.0)
    iy = jnp.clip(((gy + 1.0) * H - 1.0) * 0.5, 0.0, H - 1.0)
    x0f = jnp.floor(ix); y0f = jnp.floor(iy)
    wx1 = ix - x0f; wy1 = iy - y0f
    x0 = x0f.astype(jnp.int32); y0 = y0f.astype(jnp.int32)
    x1 = jnp.minimum(x0 + 1, W - 1); y1 = jnp.minimum(y0 + 1, H - 1)

    def gather(yi, xi):
        flat = yi * W + xi                                        # (B, T)
        return jnp.take_along_axis(cg, flat[..., None], axis=1)   # (B, T, Cd)

    c2 = (((1 - wy1) * (1 - wx1))[..., None] * gather(y0, x0)
          + ((1 - wy1) * wx1)[..., None] * gather(y0, x1)
          + (wy1 * (1 - wx1))[..., None] * gather(y1, x0)
          + (wy1 * wx1)[..., None] * gather(y1, x1))
    net = (p @ params['w_p1'] + params['b_p1']
           + Ap @ params['w_p2'] + params['b_p2']
           + (z @ params['w_z'] + params['b_z'])[:, None, :]
           + c2 @ params['w_c2'] + params['b_c2']
           + (c1 @ params['w_c1'] + params['b_c1'])[:, None, :])
    for i in range(4):
        h = jnp.maximum(net, 0.0) @ params[f'blk{i}_w0'] + params[f'blk{i}_b0']
        dx = jnp.maximum(h, 0.0) @ params[f'blk{i}_w1'] + params[f'blk{i}_b1']
        net = net + dx
    out = jnp.maximum(net, 0.0) @ params['w_out'] + params['b_out']
    return out[..., 0]


if __name__ == "__main__":
    def make_params(key, D, z_dim, c_dim, hidden):
        keys = iter(jax.random.split(key, 64))

        def nrm(shape, scale=0.1):
            return scale * jax.random.normal(next(keys), shape, dtype=jnp.float32)

        # Linear weights stored as (in, out) so x @ W + b == PyTorch x @ W.T + b.
        params = {
            'w_A': nrm((c_dim, 9)),
            'b_A': jnp.eye(3, dtype=jnp.float32).reshape(-1),  # AffineLayer init
            'w_b': nrm((c_dim, 3)),
            'b_b': jnp.array([0.0, 0.0, 2.0], jnp.float32),
            'w_z': nrm((z_dim, hidden)), 'b_z': nrm((hidden,)),
            'w_p1': nrm((D, hidden)), 'b_p1': nrm((hidden,)),
            'w_p2': nrm((D, hidden)), 'b_p2': nrm((hidden,)),
            'w_c1': nrm((c_dim, hidden)), 'b_c1': nrm((hidden,)),
            'w_c2': nrm((c_dim, hidden)), 'b_c2': nrm((hidden,)),
            'w_out': nrm((hidden, 1)), 'b_out': nrm((1,)),
        }
        for i in range(4):
            params[f'blk{i}_w0'] = nrm((hidden, hidden))
            params[f'blk{i}_b0'] = nrm((hidden,))
            params[f'blk{i}_w1'] = nrm((hidden, hidden))
            params[f'blk{i}_b1'] = nrm((hidden,))
        return params

    B, T, D = 2, 200, 3
    H = W = 16

    def run_case(case_key, z_dim, c_dim, hidden, **kw):
        kp, k1, k2, k3 = jax.random.split(case_key, 4)
        params = make_params(kp, D, z_dim, c_dim, hidden)
        p = jax.random.normal(k1, (B, T, D), jnp.float32)
        z = jax.random.normal(k2, (B, z_dim), jnp.float32)
        c = jax.random.normal(k3, (B, c_dim, H, W), jnp.float32)
        ref = feature_decoder_ref(p, z, c, params)
        out = jax.block_until_ready(
            feature_decoder_pallas(p, z, c, params, **kw))
        assert out.shape == (B, T)
        return np.asarray(out), np.asarray(ref)

    key = jax.random.PRNGKey(0)
    kA, kB = jax.random.split(key)

    # Case 1: hidden > c_dim (fc_c2 stays in the kernel).  Exercises T tiling
    # (200 -> 2 tiles of 128 + pad) and 2 HW chunks of 128.  f32 = exact check.
    out, ref = run_case(kA, z_dim=8, c_dim=16, hidden=32,
                        t_tile=128, hw_chunk=128, use_bf16=False)
    np.testing.assert_allclose(out, ref, rtol=1e-3, atol=1e-3)

    # bf16 MXU + bf16 one-hot build (v6e / v7x fast path).
    out, ref = run_case(kA, z_dim=8, c_dim=16, hidden=32,
                        t_tile=128, hw_chunk=128, use_bf16=True)
    np.testing.assert_allclose(out, ref, rtol=5e-2, atol=5e-2)

    # bf16 MXU with the one-hot matrix built in f32 (v5e-safe elementwise path).
    out, ref = run_case(kA, z_dim=8, c_dim=16, hidden=32,
                        t_tile=128, hw_chunk=128, use_bf16=True,
                        bf16_select=False)
    np.testing.assert_allclose(out, ref, rtol=5e-2, atol=5e-2)

    # Case 2: hidden <= c_dim -> fc_c2 folded into the gather in the wrapper.
    out, ref = run_case(kB, z_dim=8, c_dim=32, hidden=32,
                        t_tile=256, hw_chunk=256, use_bf16=False)
    np.testing.assert_allclose(out, ref, rtol=1e-3, atol=1e-3)

    print("KERNEL_OK")
</pallas_src>

<mosaic_0001>
module attributes {stable_mosaic.version = 11 : i64} {
  func.func @_feature_decoder_kernel(%arg0: i32, %arg1: i32, %arg2: memref<1x128x3xf32, #tpu.memory_space<vmem>>, %arg3: memref<1x1x44xf32, #tpu.memory_space<vmem>>, %arg4: memref<1x3x32xf32, #tpu.memory_space<vmem>>, %arg5: memref<1x256x16xf32, #tpu.memory_space<vmem>>, %arg6: memref<16x32xf32, #tpu.memory_space<vmem>>, %arg7: memref<8x32x32xf32, #tpu.memory_space<vmem>>, %arg8: memref<8x1x32xf32, #tpu.memory_space<vmem>>, %arg9: memref<1x32xf32, #tpu.memory_space<vmem>>, %arg10: memref<1x1xf32, #tpu.memory_space<vmem>>, %arg11: memref<1x1x128xf32, #tpu.memory_space<vmem>>) attributes {dimension_semantics = [#tpu.dimension_semantics<parallel>, #tpu.dimension_semantics<parallel>], iteration_bounds = array<i64: 2, 2>, scalar_prefetch = 0 : i64, scratch_operands = 0 : i64, tpu.core_type = #tpu.core_type<tc>, window_params = [{transform_indices = @transform_0, window_bounds = array<i64: 1, 128, 3>}, {transform_indices = @transform_1, window_bounds = array<i64: 1, 1, 44>}, {transform_indices = @transform_2, window_bounds = array<i64: 1, 3, 32>}, {pipeline_mode = #tpu.pipeline_mode<synchronous>, transform_indices = @transform_3, window_bounds = array<i64: 1, 256, 16>}, {pipeline_mode = #tpu.pipeline_mode<synchronous>, transform_indices = @transform_4, window_bounds = array<i64: 16, 32>}, {pipeline_mode = #tpu.pipeline_mode<synchronous>, transform_indices = @transform_5, window_bounds = array<i64: 8, 32, 32>}, {pipeline_mode = #tpu.pipeline_mode<synchronous>, transform_indices = @transform_6, window_bounds = array<i64: 8, 1, 32>}, {pipeline_mode = #tpu.pipeline_mode<synchronous>, transform_indices = @transform_7, window_bounds = array<i64: 1, 32>}, {pipeline_mode = #tpu.pipeline_mode<synchronous>, transform_indices = @transform_8, window_bounds = array<i64: 1, 1>}, {transform_indices = @transform_9, window_bounds = array<i64: 1, 1, 128>}]} {
    %c0 = arith.constant 0 : index
    %c0_0 = arith.constant 0 : index
    %c0_1 = arith.constant 0 : index
    %0 = vector.load %arg3[%c0, %c0_0, %c0_1] : memref<1x1x44xf32, #tpu.memory_space<vmem>>, vector<1x1x44xf32>
    %1 = vector.shape_cast %0 : vector<1x1x44xf32> to vector<1x44xf32>
    %2 = vector.extract_strided_slice %1 {offsets = [0, 0], sizes = [1, 32], strides = [1, 1]} : vector<1x44xf32> to vector<1x32xf32>
    %c0_2 = arith.constant 0 : index
    %c0_3 = arith.constant 0 : index
    %c0_4 = arith.constant 0 : index
    %3 = vector.load %arg2[%c0_2, %c0_3, %c0_4] : memref<1x128x3xf32, #tpu.memory_space<vmem>>, vector<1x128x3xf32>
    %4 = vector.shape_cast %3 : vector<1x128x3xf32> to vector<128x3xf32>
    %5 = vector.extract_strided_slice %4 {offsets = [0, 0], sizes = [128, 1], strides = [1, 1]} : vector<128x3xf32> to vector<128x1xf32>
    %6 = vector.extract_strided_slice %1 {offsets = [0, 32], sizes = [1, 3], strides = [1, 1]} : vector<1x44xf32> to vector<1x3xf32>
    %7 = vector.broadcast %5 : vector<128x1xf32> to vector<128x3xf32>
    %8 = vector.broadcast %6 : vector<1x3xf32> to vector<128x3xf32>
    %9 = arith.mulf %7, %8 : vector<128x3xf32>
    %10 = vector.extract_strided_slice %4 {offsets = [0, 1], sizes = [128, 1], strides = [1, 1]} : vector<128x3xf32> to vector<128x1xf32>
    %11 = vector.extract_strided_slice %1 {offsets = [0, 35], sizes = [1, 3], strides = [1, 1]} : vector<1x44xf32> to vector<1x3xf32>
    %12 = vector.broadcast %10 : vector<128x1xf32> to vector<128x3xf32>
    %13 = vector.broadcast %11 : vector<1x3xf32> to vector<128x3xf32>
    %14 = arith.mulf %12, %13 : vector<128x3xf32>
    %15 = arith.addf %9, %14 : vector<128x3xf32>
    %16 = vector.extract_strided_slice %4 {offsets = [0, 2], sizes = [128, 1], strides = [1, 1]} : vector<128x3xf32> to vector<128x1xf32>
    %17 = vector.extract_strided_slice %1 {offsets = [0, 38], sizes = [1, 3], strides = [1, 1]} : vector<1x44xf32> to vector<1x3xf32>
    %18 = vector.broadcast %16 : vector<128x1xf32> to vector<128x3xf32>
    %19 = vector.broadcast %17 : vector<1x3xf32> to vector<128x3xf32>
    %20 = arith.mulf %18, %19 : vector<128x3xf32>
    %21 = arith.addf %15, %20 : vector<128x3xf32>
    %22 = vector.extract_strided_slice %1 {offsets = [0, 41], sizes = [1, 3], strides = [1, 1]} : vector<1x44xf32> to vector<1x3xf32>
    %23 = vector.broadcast %22 : vector<1x3xf32> to vector<128x3xf32>
    %24 = arith.addf %21, %23 : vector<128x3xf32>
    %25 = vector.extract_strided_slice %24 {offsets = [0, 2], sizes = [128, 1], strides = [1, 1]} : vector<128x3xf32> to vector<128x1xf32>
    %26 = math.absf %25 : vector<128x1xf32>
    %cst = arith.constant 9.99999974E-6 : f32
    %27 = vector.broadcast %cst : f32 to vector<128x1xf32>
    %28 = arith.addf %26, %27 : vector<128x1xf32>
    %29 = vector.extract_strided_slice %24 {offsets = [0, 0], sizes = [128, 1], strides = [1, 1]} : vector<128x3xf32> to vector<128x1xf32>
    %cst_5 = arith.constant 2.000000e+00 : f32
    %30 = vector.broadcast %cst_5 : f32 to vector<128x1xf32>
    %31 = arith.mulf %30, %29 : vector<128x1xf32>
    %32 = arith.divf %31, %28 : vector<128x1xf32>
    %33 = vector.extract_strided_slice %24 {offsets = [0, 1], sizes = [128, 1], strides = [1, 1]} : vector<128x3xf32> to vector<128x1xf32>
    %cst_6 = arith.constant 2.000000e+00 : f32
    %34 = vector.broadcast %cst_6 : f32 to vector<128x1xf32>
    %35 = arith.mulf %34, %33 : vector<128x1xf32>
    %36 = arith.divf %35, %28 : vector<128x1xf32>
    %cst_7 = arith.constant 1.000000e+00 : f32
    %37 = vector.broadcast %cst_7 : f32 to vector<128x1xf32>
    %38 = arith.addf %32, %37 : vector<128x1xf32>
    %cst_8 = arith.constant 1.600000e+01 : f32
    %39 = vector.broadcast %cst_8 : f32 to vector<128x1xf32>
    %40 = arith.mulf %38, %39 : vector<128x1xf32>
    %cst_9 = arith.constant 1.000000e+00 : f32
    %41 = vector.broadcast %cst_9 : f32 to vector<128x1xf32>
    %42 = arith.subf %40, %41 : vector<128x1xf32>
    %cst_10 = arith.constant 5.000000e-01 : f32
    %43 = vector.broadcast %cst_10 : f32 to vector<128x1xf32>
    %44 = arith.mulf %42, %43 : vector<128x1xf32>
    %cst_11 = arith.constant 0.000000e+00 : f32
    %cst_12 = arith.constant 1.500000e+01 : f32
    %45 = vector.broadcast %cst_11 : f32 to vector<128x1xf32>
    %46 = arith.maximumf %45, %44 : vector<128x1xf32>
    %47 = vector.broadcast %cst_12 : f32 to vector<128x1xf32>
    %48 = arith.minimumf %47, %46 : vector<128x1xf32>
    %cst_13 = arith.constant 1.000000e+00 : f32
    %49 = vector.broadcast %cst_13 : f32 to vector<128x1xf32>
    %50 = arith.addf %36, %49 : vector<128x1xf32>
    %cst_14 = arith.constant 1.600000e+01 : f32
    %51 = vector.broadcast %cst_14 : f32 to vector<128x1xf32>
    %52 = arith.mulf %50, %51 : vector<128x1xf32>
    %cst_15 = arith.constant 1.000000e+00 : f32
    %53 = vector.broadcast %cst_15 : f32 to vector<128x1xf32>
    %54 = arith.subf %52, %53 : vector<128x1xf32>
    %cst_16 = arith.constant 5.000000e-01 : f32
    %55 = vector.broadcast %cst_16 : f32 to vector<128x1xf32>
    %56 = arith.mulf %54, %55 : vector<128x1xf32>
    %cst_17 = arith.constant 0.000000e+00 : f32
    %cst_18 = arith.constant 1.500000e+01 : f32
    %57 = vector.broadcast %cst_17 : f32 to vector<128x1xf32>
    %58 = arith.maximumf %57, %56 : vector<128x1xf32>
    %59 = vector.broadcast %cst_18 : f32 to vector<128x1xf32>
    %60 = arith.minimumf %59, %58 : vector<128x1xf32>
    %61 = math.floor %48 : vector<128x1xf32>
    %62 = math.floor %60 : vector<128x1xf32>
    %63 = arith.subf %48, %61 : vector<128x1xf32>
    %64 = arith.subf %60, %62 : vector<128x1xf32>
    %65 = arith.fptosi %61 : vector<128x1xf32> to vector<128x1xi32>
    %66 = arith.fptosi %62 : vector<128x1xf32> to vector<128x1xi32>
    %c1_i32 = arith.constant 1 : i32
    %67 = vector.broadcast %c1_i32 : i32 to vector<128x1xi32>
    %68 = arith.addi %65, %67 : vector<128x1xi32>
    %c15_i32 = arith.constant 15 : i32
    %69 = vector.broadcast %c15_i32 : i32 to vector<128x1xi32>
    %70 = arith.minsi %68, %69 : vector<128x1xi32>
    %c1_i32_19 = arith.constant 1 : i32
    %71 = vector.broadcast %c1_i32_19 : i32 to vector<128x1xi32>
    %72 = arith.addi %66, %71 : vector<128x1xi32>
    %c15_i32_20 = arith.constant 15 : i32
    %73 = vector.broadcast %c15_i32_20 : i32 to vector<128x1xi32>
    %74 = arith.minsi %72, %73 : vector<128x1xi32>
    %c16_i32 = arith.constant 16 : i32
    %75 = vector.broadcast %c16_i32 : i32 to vector<128x1xi32>
    %76 = arith.muli %66, %75 : vector<128x1xi32>
    %77 = arith.addi %76, %65 : vector<128x1xi32>
    %78 = arith.subi %70, %65 : vector<128x1xi32>
    %79 = arith.subi %74, %66 : vector<128x1xi32>
    %c16_i32_21 = arith.constant 16 : i32
    %80 = vector.broadcast %c16_i32_21 : i32 to vector<128x1xi32>
    %81 = arith.muli %79, %80 : vector<128x1xi32>
    %82 = arith.addi %77, %78 : vector<128x1xi32>
    %83 = arith.addi %77, %81 : vector<128x1xi32>
    %84 = arith.addi %83, %78 : vector<128x1xi32>
    %cst_22 = arith.constant 1.000000e+00 : f32
    %85 = vector.broadcast %cst_22 : f32 to vector<128x1xf32>
    %86 = arith.subf %85, %64 : vector<128x1xf32>
    %cst_23 = arith.constant 1.000000e+00 : f32
    %87 = vector.broadcast %cst_23 : f32 to vector<128x1xf32>
    %88 = arith.subf %87, %63 : vector<128x1xf32>
    %89 = arith.mulf %86, %88 : vector<128x1xf32>
    %cst_24 = arith.constant 1.000000e+00 : f32
    %90 = vector.broadcast %cst_24 : f32 to vector<128x1xf32>
    %91 = arith.subf %90, %64 : vector<128x1xf32>
    %92 = arith.mulf %91, %63 : vector<128x1xf32>
    %cst_25 = arith.constant 1.000000e+00 : f32
    %93 = vector.broadcast %cst_25 : f32 to vector<128x1xf32>
    %94 = arith.subf %93, %63 : vector<128x1xf32>
    %95 = arith.mulf %64, %94 : vector<128x1xf32>
    %96 = arith.mulf %64, %63 : vector<128x1xf32>
    %97 = tpu.iota {dimensions = array<i32: 1>} : vector<128x128xi32>
    %cst_26 = arith.constant 0.000000e+00 : f32
    %98 = vector.broadcast %cst_26 : f32 to vector<128x16xf32>
    %cst_27 = arith.constant 0.000000e+00 : f32
    %c0_i32 = arith.constant 0 : i32
    %c2_i32 = arith.constant 2 : i32
    %99 = arith.addi %c0_i32, %c2_i32 : i32
    %c1_i32_28 = arith.constant 1 : i32
    %100 = scf.for %arg12 = %c0_i32 to %99 step %c1_i32_28 iter_args(%arg13 = %98) -> (vector<128x16xf32>)  : i32 {
      %c128_i32 = arith.constant 128 : i32
      %194 = arith.muli %arg12, %c128_i32 : i32
      %195 = tpu.assume_multiple %194, 128 : i32
      %196 = vector.broadcast %195 : i32 to vector<128x1xi32>
      %197 = arith.subi %77, %196 : vector<128x1xi32>
      %198 = vector.broadcast %197 : vector<128x1xi32> to vector<128x128xi32>
      %199 = arith.cmpi eq, %97, %198 : vector<128x128xi32>
      %200 = vector.shape_cast %89 : vector<128x1xf32> to vector<128x1xf32>
      %201 = vector.broadcast %200 : vector<128x1xf32> to vector<128x128xf32>
      %202 = vector.broadcast %cst_27 : f32 to vector<128x128xf32>
      %203 = arith.select %199, %201, %202 : vector<128x128xi1>, vector<128x128xf32>
      %204 = vector.broadcast %195 : i32 to vector<128x1xi32>
      %205 = arith.subi %82, %204 : vector<128x1xi32>
      %206 = vector.broadcast %205 : vector<128x1xi32> to vector<128x128xi32>
      %207 = arith.cmpi eq, %97, %206 : vector<128x128xi32>
      %208 = vector.shape_cast %92 : vector<128x1xf32> to vector<128x1xf32>
      %209 = vector.broadcast %208 : vector<128x1xf32> to vector<128x128xf32>
      %210 = vector.broadcast %cst_27 : f32 to vector<128x128xf32>
      %211 = arith.select %207, %209, %210 : vector<128x128xi1>, vector<128x128xf32>
      %212 = arith.addf %203, %211 : vector<128x128xf32>
      %213 = vector.broadcast %195 : i32 to vector<128x1xi32>
      %214 = arith.subi %83, %213 : vector<128x1xi32>
      %215 = vector.broadcast %214 : vector<128x1xi32> to vector<128x128xi32>
      %216 = arith.cmpi eq, %97, %215 : vector<128x128xi32>
      %217 = vector.shape_cast %95 : vector<128x1xf32> to vector<128x1xf32>
      %218 = vector.broadcast %217 : vector<128x1xf32> to vector<128x128xf32>
      %219 = vector.broadcast %cst_27 : f32 to vector<128x128xf32>
      %220 = arith.select %216, %218, %219 : vector<128x128xi1>, vector<128x128xf32>
      %221 = arith.addf %212, %220 : vector<128x128xf32>
      %222 = vector.broadcast %195 : i32 to vector<128x1xi32>
      %223 = arith.subi %84, %222 : vector<128x1xi32>
      %224 = vector.broadcast %223 : vector<128x1xi32> to vector<128x128xi32>
      %225 = arith.cmpi eq, %97, %224 : vector<128x128xi32>
      %226 = vector.shape_cast %96 : vector<128x1xf32> to vector<128x1xf32>
      %227 = vector.broadcast %226 : vector<128x1xf32> to vector<128x128xf32>
      %228 = vector.broadcast %cst_27 : f32 to vector<128x128xf32>
      %229 = arith.select %225, %227, %228 : vector<128x128xi1>, vector<128x128xf32>
      %230 = arith.addf %221, %229 : vector<128x128xf32>
      %c0_103 = arith.constant 0 : index
      %231 = arith.index_cast %195 : i32 to index
      %c0_104 = arith.constant 0 : index
      %232 = vector.load %arg5[%c0_103, %231, %c0_104] : memref<1x256x16xf32, #tpu.memory_space<vmem>>, vector<1x128x16xf32>
      %233 = vector.shape_cast %232 : vector<1x128x16xf32> to vector<128x16xf32>
      %cst_105 = arith.constant dense<0.000000e+00> : vector<128x16xf32>
      %234 = tpu.matmul %230, %233, %cst_105 {dimension_numbers = #tpu.dot_dimension_numbers<[1], [0], [0], [1], [0, 0, 1, 1], [], []>} : vector<128x128xf32>, vector<128x16xf32>, vector<128x16xf32> -> vector<128x16xf32>
      %235 = arith.addf %arg13, %234 : vector<128x16xf32>
      scf.yield %235 : vector<128x16xf32>
    }
    %c2_i32_29 = arith.constant 2 : i32
    %c0_30 = arith.constant 0 : index
    %c0_31 = arith.constant 0 : index
    %c0_32 = arith.constant 0 : index
    %101 = vector.load %arg4[%c0_30, %c0_31, %c0_32] : memref<1x3x32xf32, #tpu.memory_space<vmem>>, vector<1x3x32xf32>
    %102 = vector.shape_cast %101 : vector<1x3x32xf32> to vector<3x32xf32>
    %cst_33 = arith.constant dense<0.000000e+00> : vector<128x32xf32>
    %103 = tpu.matmul %4, %102, %cst_33 {dimension_numbers = #tpu.dot_dimension_numbers<[1], [0], [0], [1], [0, 0, 1, 1], [], []>} : vector<128x3xf32>, vector<3x32xf32>, vector<128x32xf32> -> vector<128x32xf32>
    %104 = vector.broadcast %2 : vector<1x32xf32> to vector<128x32xf32>
    %105 = arith.addf %103, %104 : vector<128x32xf32>
    %c0_34 = arith.constant 0 : index
    %c0_35 = arith.constant 0 : index
    %106 = vector.load %arg6[%c0_34, %c0_35] : memref<16x32xf32, #tpu.memory_space<vmem>>, vector<16x32xf32>
    %cst_36 = arith.constant dense<0.000000e+00> : vector<128x32xf32>
    %107 = tpu.matmul %100, %106, %cst_36 {dimension_numbers = #tpu.dot_dimension_numbers<[1], [0], [0], [1], [0, 0, 1, 1], [], []>} : vector<128x16xf32>, vector<16x32xf32>, vector<128x32xf32> -> vector<128x32xf32>
    %108 = arith.addf %105, %107 : vector<128x32xf32>
    %cst_37 = arith.constant 0.000000e+00 : f32
    %109 = vector.broadcast %cst_37 : f32 to vector<128x32xf32>
    %110 = arith.maximumf %108, %109 : vector<128x32xf32>
    %c0_38 = arith.constant 0 : index
    %c0_39 = arith.constant 0 : index
    %c0_40 = arith.constant 0 : index
    %111 = vector.load %arg7[%c0_38, %c0_39, %c0_40] : memref<8x32x32xf32, #tpu.memory_space<vmem>>, vector<1x32x32xf32>
    %112 = vector.shape_cast %111 : vector<1x32x32xf32> to vector<32x32xf32>
    %cst_41 = arith.constant dense<0.000000e+00> : vector<128x32xf32>
    %113 = tpu.matmul %110, %112, %cst_41 {dimension_numbers = #tpu.dot_dimension_numbers<[1], [0], [0], [1], [0, 0, 1, 1], [], []>} : vector<128x32xf32>, vector<32x32xf32>, vector<128x32xf32> -> vector<128x32xf32>
    %c0_42 = arith.constant 0 : index
    %c0_43 = arith.constant 0 : index
    %c0_44 = arith.constant 0 : index
    %114 = vector.load %arg8[%c0_42, %c0_43, %c0_44] : memref<8x1x32xf32, #tpu.memory_space<vmem>>, vector<1x1x32xf32>
    %115 = vector.shape_cast %114 : vector<1x1x32xf32> to vector<1x32xf32>
    %116 = vector.broadcast %115 : vector<1x32xf32> to vector<128x32xf32>
    %117 = arith.addf %113, %116 : vector<128x32xf32>
    %cst_45 = arith.constant 0.000000e+00 : f32
    %118 = vector.broadcast %cst_45 : f32 to vector<128x32xf32>
    %119 = arith.maximumf %117, %118 : vector<128x32xf32>
    %c1 = arith.constant 1 : index
    %c0_46 = arith.constant 0 : index
    %c0_47 = arith.constant 0 : index
    %120 = vector.load %arg7[%c1, %c0_46, %c0_47] : memref<8x32x32xf32, #tpu.memory_space<vmem>>, vector<1x32x32xf32>
    %121 = vector.shape_cast %120 : vector<1x32x32xf32> to vector<32x32xf32>
    %cst_48 = arith.constant dense<0.000000e+00> : vector<128x32xf32>
    %122 = tpu.matmul %119, %121, %cst_48 {dimension_numbers = #tpu.dot_dimension_numbers<[1], [0], [0], [1], [0, 0, 1, 1], [], []>} : vector<128x32xf32>, vector<32x32xf32>, vector<128x32xf32> -> vector<128x32xf32>
    %c1_49 = arith.constant 1 : index
    %c0_50 = arith.constant 0 : index
    %c0_51 = arith.constant 0 : index
    %123 = vector.load %arg8[%c1_49, %c0_50, %c0_51] : memref<8x1x32xf32, #tpu.memory_space<vmem>>, vector<1x1x32xf32>
    %124 = vector.shape_cast %123 : vector<1x1x32xf32> to vector<1x32xf32>
    %125 = vector.broadcast %124 : vector<1x32xf32> to vector<128x32xf32>
    %126 = arith.addf %122, %125 : vector<128x32xf32>
    %127 = arith.addf %108, %126 : vector<128x32xf32>
    %cst_52 = arith.constant 0.000000e+00 : f32
    %128 = vector.broadcast %cst_52 : f32 to vector<128x32xf32>
    %129 = arith.maximumf %127, %128 : vector<128x32xf32>
    %c2 = arith.constant 2 : index
    %c0_53 = arith.constant 0 : index
    %c0_54 = arith.constant 0 : index
    %130 = vector.load %arg7[%c2, %c0_53, %c0_54] : memref<8x32x32xf32, #tpu.memory_space<vmem>>, vector<1x32x32xf32>
    %131 = vector.shape_cast %130 : vector<1x32x32xf32> to vector<32x32xf32>
    %cst_55 = arith.constant dense<0.000000e+00> : vector<128x32xf32>
    %132 = tpu.matmul %129, %131, %cst_55 {dimension_numbers = #tpu.dot_dimension_numbers<[1], [0], [0], [1], [0, 0, 1, 1], [], []>} : vector<128x32xf32>, vector<32x32xf32>, vector<128x32xf32> -> vector<128x32xf32>
    %c2_56 = arith.constant 2 : index
    %c0_57 = arith.constant 0 : index
    %c0_58 = arith.constant 0 : index
    %133 = vector.load %arg8[%c2_56, %c0_57, %c0_58] : memref<8x1x32xf32, #tpu.memory_space<vmem>>, vector<1x1x32xf32>
    %134 = vector.shape_cast %133 : vector<1x1x32xf32> to vector<1x32xf32>
    %135 = vector.broadcast %134 : vector<1x32xf32> to vector<128x32xf32>
    %136 = arith.addf %132, %135 : vector<128x32xf32>
    %cst_59 = arith.constant 0.000000e+00 : f32
    %137 = vector.broadcast %cst_59 : f32 to vector<128x32xf32>
    %138 = arith.maximumf %136, %137 : vector<128x32xf32>
    %c3 = arith.constant 3 : index
    %c0_60 = arith.constant 0 : index
    %c0_61 = arith.constant 0 : index
    %139 = vector.load %arg7[%c3, %c0_60, %c0_61] : memref<8x32x32xf32, #tpu.memory_space<vmem>>, vector<1x32x32xf32>
    %140 = vector.shape_cast %139 : vector<1x32x32xf32> to vector<32x32xf32>
    %cst_62 = arith.constant dense<0.000000e+00> : vector<128x32xf32>
    %141 = tpu.matmul %138, %140, %cst_62 {dimension_numbers = #tpu.dot_dimension_numbers<[1], [0], [0], [1], [0, 0, 1, 1], [], []>} : vector<128x32xf32>, vector<32x32xf32>, vector<128x32xf32> -> vector<128x32xf32>
    %c3_63 = arith.constant 3 : index
    %c0_64 = arith.constant 0 : index
    %c0_65 = arith.constant 0 : index
    %142 = vector.load %arg8[%c3_63, %c0_64, %c0_65] : memref<8x1x32xf32, #tpu.memory_space<vmem>>, vector<1x1x32xf32>
    %143 = vector.shape_cast %142 : vector<1x1x32xf32> to vector<1x32xf32>
    %144 = vector.broadcast %143 : vector<1x32xf32> to vector<128x32xf32>
    %145 = arith.addf %141, %144 : vector<128x32xf32>
    %146 = arith.addf %127, %145 : vector<128x32xf32>
    %cst_66 = arith.constant 0.000000e+00 : f32
    %147 = vector.broadcast %cst_66 : f32 to vector<128x32xf32>
    %148 = arith.maximumf %146, %147 : vector<128x32xf32>
    %c4 = arith.constant 4 : index
    %c0_67 = arith.constant 0 : index
    %c0_68 = arith.constant 0 : index
    %149 = vector.load %arg7[%c4, %c0_67, %c0_68] : memref<8x32x32xf32, #tpu.memory_space<vmem>>, vector<1x32x32xf32>
    %150 = vector.shape_cast %149 : vector<1x32x32xf32> to vector<32x32xf32>
    %cst_69 = arith.constant dense<0.000000e+00> : vector<128x32xf32>
    %151 = tpu.matmul %148, %150, %cst_69 {dimension_numbers = #tpu.dot_dimension_numbers<[1], [0], [0], [1], [0, 0, 1, 1], [], []>} : vector<128x32xf32>, vector<32x32xf32>, vector<128x32xf32> -> vector<128x32xf32>
    %c4_70 = arith.constant 4 : index
    %c0_71 = arith.constant 0 : index
    %c0_72 = arith.constant 0 : index
    %152 = vector.load %arg8[%c4_70, %c0_71, %c0_72] : memref<8x1x32xf32, #tpu.memory_space<vmem>>, vector<1x1x32xf32>
    %153 = vector.shape_cast %152 : vector<1x1x32xf32> to vector<1x32xf32>
    %154 = vector.broadcast %153 : vector<1x32xf32> to vector<128x32xf32>
    %155 = arith.addf %151, %154 : vector<128x32xf32>
    %cst_73 = arith.constant 0.000000e+00 : f32
    %156 = vector.broadcast %cst_73 : f32 to vector<128x32xf32>
    %157 = arith.maximumf %155, %156 : vector<128x32xf32>
    %c5 = arith.constant 5 : index
    %c0_74 = arith.constant 0 : index
    %c0_75 = arith.constant 0 : index
    %158 = vector.load %arg7[%c5, %c0_74, %c0_75] : memref<8x32x32xf32, #tpu.memory_space<vmem>>, vector<1x32x32xf32>
    %159 = vector.shape_cast %158 : vector<1x32x32xf32> to vector<32x32xf32>
    %cst_76 = arith.constant dense<0.000000e+00> : vector<128x32xf32>
    %160 = tpu.matmul %157, %159, %cst_76 {dimension_numbers = #tpu.dot_dimension_numbers<[1], [0], [0], [1], [0, 0, 1, 1], [], []>} : vector<128x32xf32>, vector<32x32xf32>, vector<128x32xf32> -> vector<128x32xf32>
    %c5_77 = arith.constant 5 : index
    %c0_78 = arith.constant 0 : index
    %c0_79 = arith.constant 0 : index
    %161 = vector.load %arg8[%c5_77, %c0_78, %c0_79] : memref<8x1x32xf32, #tpu.memory_space<vmem>>, vector<1x1x32xf32>
    %162 = vector.shape_cast %161 : vector<1x1x32xf32> to vector<1x32xf32>
    %163 = vector.broadcast %162 : vector<1x32xf32> to vector<128x32xf32>
    %164 = arith.addf %160, %163 : vector<128x32xf32>
    %165 = arith.addf %146, %164 : vector<128x32xf32>
    %cst_80 = arith.constant 0.000000e+00 : f32
    %166 = vector.broadcast %cst_80 : f32 to vector<128x32xf32>
    %167 = arith.maximumf %165, %166 : vector<128x32xf32>
    %c6 = arith.constant 6 : index
    %c0_81 = arith.constant 0 : index
    %c0_82 = arith.constant 0 : index
    %168 = vector.load %arg7[%c6, %c0_81, %c0_82] : memref<8x32x32xf32, #tpu.memory_space<vmem>>, vector<1x32x32xf32>
    %169 = vector.shape_cast %168 : vector<1x32x32xf32> to vector<32x32xf32>
    %cst_83 = arith.constant dense<0.000000e+00> : vector<128x32xf32>
    %170 = tpu.matmul %167, %169, %cst_83 {dimension_numbers = #tpu.dot_dimension_numbers<[1], [0], [0], [1], [0, 0, 1, 1], [], []>} : vector<128x32xf32>, vector<32x32xf32>, vector<128x32xf32> -> vector<128x32xf32>
    %c6_84 = arith.constant 6 : index
    %c0_85 = arith.constant 0 : index
    %c0_86 = arith.constant 0 : index
    %171 = vector.load %arg8[%c6_84, %c0_85, %c0_86] : memref<8x1x32xf32, #tpu.memory_space<vmem>>, vector<1x1x32xf32>
    %172 = vector.shape_cast %171 : vector<1x1x32xf32> to vector<1x32xf32>
    %173 = vector.broadcast %172 : vector<1x32xf32> to vector<128x32xf32>
    %174 = arith.addf %170, %173 : vector<128x32xf32>
    %cst_87 = arith.constant 0.000000e+00 : f32
    %175 = vector.broadcast %cst_87 : f32 to vector<128x32xf32>
    %176 = arith.maximumf %174, %175 : vector<128x32xf32>
    %c7 = arith.constant 7 : index
    %c0_88 = arith.constant 0 : index
    %c0_89 = arith.constant 0 : index
    %177 = vector.load %arg7[%c7, %c0_88, %c0_89] : memref<8x32x32xf32, #tpu.memory_space<vmem>>, vector<1x32x32xf32>
    %178 = vector.shape_cast %177 : vector<1x32x32xf32> to vector<32x32xf32>
    %cst_90 = arith.constant dense<0.000000e+00> : vector<128x32xf32>
    %179 = tpu.matmul %176, %178, %cst_90 {dimension_numbers = #tpu.dot_dimension_numbers<[1], [0], [0], [1], [0, 0, 1, 1], [], []>} : vector<128x32xf32>, vector<32x32xf32>, vector<128x32xf32> -> vector<128x32xf32>
    %c7_91 = arith.constant 7 : index
    %c0_92 = arith.constant 0 : index
    %c0_93 = arith.constant 0 : index
    %180 = vector.load %arg8[%c7_91, %c0_92, %c0_93] : memref<8x1x32xf32, #tpu.memory_space<vmem>>, vector<1x1x32xf32>
    %181 = vector.shape_cast %180 : vector<1x1x32xf32> to vector<1x32xf32>
    %182 = vector.broadcast %181 : vector<1x32xf32> to vector<128x32xf32>
    %183 = arith.addf %179, %182 : vector<128x32xf32>
    %184 = arith.addf %165, %183 : vector<128x32xf32>
    %cst_94 = arith.constant 0.000000e+00 : f32
    %185 = vector.broadcast %cst_94 : f32 to vector<128x32xf32>
    %186 = arith.maximumf %184, %185 : vector<128x32xf32>
    %c0_95 = arith.constant 0 : index
    %c0_96 = arith.constant 0 : index
    %187 = vector.load %arg9[%c0_95, %c0_96] : memref<1x32xf32, #tpu.memory_space<vmem>>, vector<1x32xf32>
    %cst_97 = arith.constant dense<0.000000e+00> : vector<1x128xf32>
    %188 = tpu.matmul %187, %186, %cst_97 {dimension_numbers = #tpu.dot_dimension_numbers<[1], [1], [0], [0], [0, 0, 1, 0], [], []>} : vector<1x32xf32>, vector<128x32xf32>, vector<1x128xf32> -> vector<1x128xf32>
    %c0_98 = arith.constant 0 : index
    %c0_99 = arith.constant 0 : index
    %189 = vector.load %arg10[%c0_98, %c0_99] : memref<1x1xf32, #tpu.memory_space<vmem>>, vector<1x1xf32>
    %190 = vector.broadcast %189 : vector<1x1xf32> to vector<1x128xf32>
    %191 = arith.addf %188, %190 : vector<1x128xf32>
    %192 = vector.shape_cast %191 : vector<1x128xf32> to vector<1x1x128xf32>
    %c0_100 = arith.constant 0 : index
    %c0_101 = arith.constant 0 : index
    %c0_102 = arith.constant 0 : index
    %193 = vector.load %arg11[%c0_100, %c0_101, %c0_102] : memref<1x1x128xf32, #tpu.memory_space<vmem>>, vector<1x1x128xf32>
    tpu.vector_store %arg11[%c0_100, %c0_101, %c0_102], %192 {strides = array<i32>} : memref<1x1x128xf32, #tpu.memory_space<vmem>>, vector<1x1x128xf32>,
    return
  }
  func.func @transform_0(%arg0: i32, %arg1: i32) -> (i32, i32, i32) {
    %c0_i32 = arith.constant 0 : i32
    %c0_i32_0 = arith.constant 0 : i32
    return %arg0, %arg1, %c0_i32 : i32, i32, i32
  }
  func.func @transform_1(%arg0: i32, %arg1: i32) -> (i32, i32, i32) {
    %c0_i32 = arith.constant 0 : i32
    %c0_i32_0 = arith.constant 0 : i32
    %c0_i32_1 = arith.constant 0 : i32
    return %arg0, %c0_i32, %c0_i32_0 : i32, i32, i32
  }
  func.func @transform_2(%arg0: i32, %arg1: i32) -> (i32, i32, i32) {
    %c0_i32 = arith.constant 0 : i32
    %c0_i32_0 = arith.constant 0 : i32
    %c0_i32_1 = arith.constant 0 : i32
    return %arg0, %c0_i32, %c0_i32_0 : i32, i32, i32
  }
  func.func @transform_3(%arg0: i32, %arg1: i32) -> (i32, i32, i32) {
    %c0_i32 = arith.constant 0 : i32
    %c0_i32_0 = arith.constant 0 : i32
    %c0_i32_1 = arith.constant 0 : i32
    return %arg0, %c0_i32, %c0_i32_0 : i32, i32, i32
  }
  func.func @transform_4(%arg0: i32, %arg1: i32) -> (i32, i32) {
    %c0_i32 = arith.constant 0 : i32
    %c0_i32_0 = arith.constant 0 : i32
    %c0_i32_1 = arith.constant 0 : i32
    return %c0_i32, %c0_i32_0 : i32, i32
  }
  func.func @transform_5(%arg0: i32, %arg1: i32) -> (i32, i32, i32) {
    %c0_i32 = arith.constant 0 : i32
    %c0_i32_0 = arith.constant 0 : i32
    %c0_i32_1 = arith.constant 0 : i32
    %c0_i32_2 = arith.constant 0 : i32
    return %c0_i32, %c0_i32_0, %c0_i32_1 : i32, i32, i32
  }
  func.func @transform_6(%arg0: i32, %arg1: i32) -> (i32, i32, i32) {
    %c0_i32 = arith.constant 0 : i32
    %c0_i32_0 = arith.constant 0 : i32
    %c0_i32_1 = arith.constant 0 : i32
    %c0_i32_2 = arith.constant 0 : i32
    return %c0_i32, %c0_i32_0, %c0_i32_1 : i32, i32, i32
  }
  func.func @transform_7(%arg0: i32, %arg1: i32) -> (i32, i32) {
    %c0_i32 = arith.constant 0 : i32
    %c0_i32_0 = arith.constant 0 : i32
    %c0_i32_1 = arith.constant 0 : i32
    return %c0_i32, %c0_i32_0 : i32, i32
  }
  func.func @transform_8(%arg0: i32, %arg1: i32) -> (i32, i32) {
    %c0_i32 = arith.constant 0 : i32
    %c0_i32_0 = arith.constant 0 : i32
    %c0_i32_1 = arith.constant 0 : i32
    return %c0_i32, %c0_i32_0 : i32, i32
  }
  func.func @transform_9(%arg0: i32, %arg1: i32) -> (i32, i32, i32) {
    %c0_i32 = arith.constant 0 : i32
    %c0_i32_0 = arith.constant 0 : i32
    return %arg0, %c0_i32, %arg1 : i32, i32, i32
  }
}

module attributes {stable_mosaic.version = 11 : i64} {
  func.func @_feature_decoder_kernel(%arg0: i32, %arg1: i32, %arg2: memref<1x128x3xf32, #tpu.memory_space<vmem>>, %arg3: memref<1x1x44xf32, #tpu.memory_space<vmem>>, %arg4: memref<1x3x32xf32, #tpu.memory_space<vmem>>, %arg5: memref<1x256x16xf32, #tpu.memory_space<vmem>>, %arg6: memref<16x32xf32, #tpu.memory_space<vmem>>, %arg7: memref<8x32x32xf32, #tpu.memory_space<vmem>>, %arg8: memref<8x1x32xf32, #tpu.memory_space<vmem>>, %arg9: memref<1x32xf32, #tpu.memory_space<vmem>>, %arg10: memref<1x1xf32, #tpu.memory_space<vmem>>, %arg11: memref<1x1x128xf32, #tpu.memory_space<vmem>>) attributes {dimension_semantics = [#tpu.dimension_semantics<parallel>, #tpu.dimension_semantics<parallel>], iteration_bounds = array<i64: 2, 2>, scalar_prefetch = 0 : i64, scratch_operands = 0 : i64, tpu.core_type = #tpu.core_type<tc>, window_params = [{transform_indices = @transform_0, window_bounds = array<i64: 1, 128, 3>}, {transform_indices = @transform_1, window_bounds = array<i64: 1, 1, 44>}, {transform_indices = @transform_2, window_bounds = array<i64: 1, 3, 32>}, {transform_indices = @transform_3, window_bounds = array<i64: 1, 256, 16>}, {pipeline_mode = #tpu.pipeline_mode<synchronous>, transform_indices = @transform_4, window_bounds = array<i64: 16, 32>}, {pipeline_mode = #tpu.pipeline_mode<synchronous>, transform_indices = @transform_5, window_bounds = array<i64: 8, 32, 32>}, {pipeline_mode = #tpu.pipeline_mode<synchronous>, transform_indices = @transform_6, window_bounds = array<i64: 8, 1, 32>}, {pipeline_mode = #tpu.pipeline_mode<synchronous>, transform_indices = @transform_7, window_bounds = array<i64: 1, 32>}, {pipeline_mode = #tpu.pipeline_mode<synchronous>, transform_indices = @transform_8, window_bounds = array<i64: 1, 1>}, {transform_indices = @transform_9, window_bounds = array<i64: 1, 1, 128>}]} {
    %c0 = arith.constant 0 : index
    %c0_0 = arith.constant 0 : index
    %c0_1 = arith.constant 0 : index
    %0 = vector.load %arg3[%c0, %c0_0, %c0_1] : memref<1x1x44xf32, #tpu.memory_space<vmem>>, vector<1x1x44xf32>
    %1 = vector.shape_cast %0 : vector<1x1x44xf32> to vector<1x44xf32>
    %2 = vector.extract_strided_slice %1 {offsets = [0, 0], sizes = [1, 32], strides = [1, 1]} : vector<1x44xf32> to vector<1x32xf32>
    %c0_2 = arith.constant 0 : index
    %c0_3 = arith.constant 0 : index
    %c0_4 = arith.constant 0 : index
    %3 = vector.load %arg2[%c0_2, %c0_3, %c0_4] : memref<1x128x3xf32, #tpu.memory_space<vmem>>, vector<1x128x3xf32>
    %4 = vector.shape_cast %3 : vector<1x128x3xf32> to vector<128x3xf32>
    %5 = vector.extract_strided_slice %4 {offsets = [0, 0], sizes = [128, 1], strides = [1, 1]} : vector<128x3xf32> to vector<128x1xf32>
    %6 = vector.extract_strided_slice %1 {offsets = [0, 32], sizes = [1, 3], strides = [1, 1]} : vector<1x44xf32> to vector<1x3xf32>
    %7 = vector.broadcast %5 : vector<128x1xf32> to vector<128x3xf32>
    %8 = vector.broadcast %6 : vector<1x3xf32> to vector<128x3xf32>
    %9 = arith.mulf %7, %8 : vector<128x3xf32>
    %10 = vector.extract_strided_slice %4 {offsets = [0, 1], sizes = [128, 1], strides = [1, 1]} : vector<128x3xf32> to vector<128x1xf32>
    %11 = vector.extract_strided_slice %1 {offsets = [0, 35], sizes = [1, 3], strides = [1, 1]} : vector<1x44xf32> to vector<1x3xf32>
    %12 = vector.broadcast %10 : vector<128x1xf32> to vector<128x3xf32>
    %13 = vector.broadcast %11 : vector<1x3xf32> to vector<128x3xf32>
    %14 = arith.mulf %12, %13 : vector<128x3xf32>
    %15 = arith.addf %9, %14 : vector<128x3xf32>
    %16 = vector.extract_strided_slice %4 {offsets = [0, 2], sizes = [128, 1], strides = [1, 1]} : vector<128x3xf32> to vector<128x1xf32>
    %17 = vector.extract_strided_slice %1 {offsets = [0, 38], sizes = [1, 3], strides = [1, 1]} : vector<1x44xf32> to vector<1x3xf32>
    %18 = vector.broadcast %16 : vector<128x1xf32> to vector<128x3xf32>
    %19 = vector.broadcast %17 : vector<1x3xf32> to vector<128x3xf32>
    %20 = arith.mulf %18, %19 : vector<128x3xf32>
    %21 = arith.addf %15, %20 : vector<128x3xf32>
    %22 = vector.extract_strided_slice %1 {offsets = [0, 41], sizes = [1, 3], strides = [1, 1]} : vector<1x44xf32> to vector<1x3xf32>
    %23 = vector.broadcast %22 : vector<1x3xf32> to vector<128x3xf32>
    %24 = arith.addf %21, %23 : vector<128x3xf32>
    %25 = vector.extract_strided_slice %24 {offsets = [0, 2], sizes = [128, 1], strides = [1, 1]} : vector<128x3xf32> to vector<128x1xf32>
    %26 = math.absf %25 : vector<128x1xf32>
    %cst = arith.constant 9.99999974E-6 : f32
    %27 = vector.broadcast %cst : f32 to vector<128x1xf32>
    %28 = arith.addf %26, %27 : vector<128x1xf32>
    %29 = vector.extract_strided_slice %24 {offsets = [0, 0], sizes = [128, 1], strides = [1, 1]} : vector<128x3xf32> to vector<128x1xf32>
    %cst_5 = arith.constant 2.000000e+00 : f32
    %30 = vector.broadcast %cst_5 : f32 to vector<128x1xf32>
    %31 = arith.mulf %30, %29 : vector<128x1xf32>
    %32 = arith.divf %31, %28 : vector<128x1xf32>
    %33 = vector.extract_strided_slice %24 {offsets = [0, 1], sizes = [128, 1], strides = [1, 1]} : vector<128x3xf32> to vector<128x1xf32>
    %cst_6 = arith.constant 2.000000e+00 : f32
    %34 = vector.broadcast %cst_6 : f32 to vector<128x1xf32>
    %35 = arith.mulf %34, %33 : vector<128x1xf32>
    %36 = arith.divf %35, %28 : vector<128x1xf32>
    %cst_7 = arith.constant 1.000000e+00 : f32
    %37 = vector.broadcast %cst_7 : f32 to vector<128x1xf32>
    %38 = arith.addf %32, %37 : vector<128x1xf32>
    %cst_8 = arith.constant 1.600000e+01 : f32
    %39 = vector.broadcast %cst_8 : f32 to vector<128x1xf32>
    %40 = arith.mulf %38, %39 : vector<128x1xf32>
    %cst_9 = arith.constant 1.000000e+00 : f32
    %41 = vector.broadcast %cst_9 : f32 to vector<128x1xf32>
    %42 = arith.subf %40, %41 : vector<128x1xf32>
    %cst_10 = arith.constant 5.000000e-01 : f32
    %43 = vector.broadcast %cst_10 : f32 to vector<128x1xf32>
    %44 = arith.mulf %42, %43 : vector<128x1xf32>
    %cst_11 = arith.constant 0.000000e+00 : f32
    %cst_12 = arith.constant 1.500000e+01 : f32
    %45 = vector.broadcast %cst_11 : f32 to vector<128x1xf32>
    %46 = arith.maximumf %45, %44 : vector<128x1xf32>
    %47 = vector.broadcast %cst_12 : f32 to vector<128x1xf32>
    %48 = arith.minimumf %47, %46 : vector<128x1xf32>
    %cst_13 = arith.constant 1.000000e+00 : f32
    %49 = vector.broadcast %cst_13 : f32 to vector<128x1xf32>
    %50 = arith.addf %36, %49 : vector<128x1xf32>
    %cst_14 = arith.constant 1.600000e+01 : f32
    %51 = vector.broadcast %cst_14 : f32 to vector<128x1xf32>
    %52 = arith.mulf %50, %51 : vector<128x1xf32>
    %cst_15 = arith.constant 1.000000e+00 : f32
    %53 = vector.broadcast %cst_15 : f32 to vector<128x1xf32>
    %54 = arith.subf %52, %53 : vector<128x1xf32>
    %cst_16 = arith.constant 5.000000e-01 : f32
    %55 = vector.broadcast %cst_16 : f32 to vector<128x1xf32>
    %56 = arith.mulf %54, %55 : vector<128x1xf32>
    %cst_17 = arith.constant 0.000000e+00 : f32
    %cst_18 = arith.constant 1.500000e+01 : f32
    %57 = vector.broadcast %cst_17 : f32 to vector<128x1xf32>
    %58 = arith.maximumf %57, %56 : vector<128x1xf32>
    %59 = vector.broadcast %cst_18 : f32 to vector<128x1xf32>
    %60 = arith.minimumf %59, %58 : vector<128x1xf32>
    %61 = math.floor %48 : vector<128x1xf32>
    %62 = math.floor %60 : vector<128x1xf32>
    %63 = arith.subf %48, %61 : vector<128x1xf32>
    %64 = arith.subf %60, %62 : vector<128x1xf32>
    %65 = arith.fptosi %61 : vector<128x1xf32> to vector<128x1xi32>
    %66 = arith.fptosi %62 : vector<128x1xf32> to vector<128x1xi32>
    %c1_i32 = arith.constant 1 : i32
    %67 = vector.broadcast %c1_i32 : i32 to vector<128x1xi32>
    %68 = arith.addi %65, %67 : vector<128x1xi32>
    %c15_i32 = arith.constant 15 : i32
    %69 = vector.broadcast %c15_i32 : i32 to vector<128x1xi32>
    %70 = arith.minsi %68, %69 : vector<128x1xi32>
    %c1_i32_19 = arith.constant 1 : i32
    %71 = vector.broadcast %c1_i32_19 : i32 to vector<128x1xi32>
    %72 = arith.addi %66, %71 : vector<128x1xi32>
    %c15_i32_20 = arith.constant 15 : i32
    %73 = vector.broadcast %c15_i32_20 : i32 to vector<128x1xi32>
    %74 = arith.minsi %72, %73 : vector<128x1xi32>
    %c16_i32 = arith.constant 16 : i32
    %75 = vector.broadcast %c16_i32 : i32 to vector<128x1xi32>
    %76 = arith.muli %66, %75 : vector<128x1xi32>
    %77 = arith.addi %76, %65 : vector<128x1xi32>
    %78 = arith.subi %70, %65 : vector<128x1xi32>
    %79 = arith.subi %74, %66 : vector<128x1xi32>
    %c16_i32_21 = arith.constant 16 : i32
    %80 = vector.broadcast %c16_i32_21 : i32 to vector<128x1xi32>
    %81 = arith.muli %79, %80 : vector<128x1xi32>
    %82 = arith.addi %77, %78 : vector<128x1xi32>
    %83 = arith.addi %77, %81 : vector<128x1xi32>
    %84 = arith.addi %83, %78 : vector<128x1xi32>
    %cst_22 = arith.constant 1.000000e+00 : f32
    %85 = vector.broadcast %cst_22 : f32 to vector<128x1xf32>
    %86 = arith.subf %85, %64 : vector<128x1xf32>
    %cst_23 = arith.constant 1.000000e+00 : f32
    %87 = vector.broadcast %cst_23 : f32 to vector<128x1xf32>
    %88 = arith.subf %87, %63 : vector<128x1xf32>
    %89 = arith.mulf %86, %88 : vector<128x1xf32>
    %cst_24 = arith.constant 1.000000e+00 : f32
    %90 = vector.broadcast %cst_24 : f32 to vector<128x1xf32>
    %91 = arith.subf %90, %64 : vector<128x1xf32>
    %92 = arith.mulf %91, %63 : vector<128x1xf32>
    %cst_25 = arith.constant 1.000000e+00 : f32
    %93 = vector.broadcast %cst_25 : f32 to vector<128x1xf32>
    %94 = arith.subf %93, %63 : vector<128x1xf32>
    %95 = arith.mulf %64, %94 : vector<128x1xf32>
    %96 = arith.mulf %64, %63 : vector<128x1xf32>
    %97 = tpu.iota {dimensions = array<i32: 1>} : vector<128x128xi32>
    %cst_26 = arith.constant 0.000000e+00 : f32
    %98 = vector.broadcast %cst_26 : f32 to vector<128x16xf32>
    %cst_27 = arith.constant 0.000000e+00 : f32
    %c0_i32 = arith.constant 0 : i32
    %c2_i32 = arith.constant 2 : i32
    %99 = arith.addi %c0_i32, %c2_i32 : i32
    %c1_i32_28 = arith.constant 1 : i32
    %100 = scf.for %arg12 = %c0_i32 to %99 step %c1_i32_28 iter_args(%arg13 = %98) -> (vector<128x16xf32>)  : i32 {
      %c128_i32 = arith.constant 128 : i32
      %194 = arith.muli %arg12, %c128_i32 : i32
      %195 = tpu.assume_multiple %194, 128 : i32
      %196 = vector.broadcast %195 : i32 to vector<128x1xi32>
      %197 = arith.subi %77, %196 : vector<128x1xi32>
      %198 = vector.broadcast %197 : vector<128x1xi32> to vector<128x128xi32>
      %199 = arith.cmpi eq, %97, %198 : vector<128x128xi32>
      %200 = vector.shape_cast %89 : vector<128x1xf32> to vector<128x1xf32>
      %201 = vector.broadcast %200 : vector<128x1xf32> to vector<128x128xf32>
      %202 = vector.broadcast %cst_27 : f32 to vector<128x128xf32>
      %203 = arith.select %199, %201, %202 : vector<128x128xi1>, vector<128x128xf32>
      %204 = vector.broadcast %195 : i32 to vector<128x1xi32>
      %205 = arith.subi %82, %204 : vector<128x1xi32>
      %206 = vector.broadcast %205 : vector<128x1xi32> to vector<128x128xi32>
      %207 = arith.cmpi eq, %97, %206 : vector<128x128xi32>
      %208 = vector.shape_cast %92 : vector<128x1xf32> to vector<128x1xf32>
      %209 = vector.broadcast %208 : vector<128x1xf32> to vector<128x128xf32>
      %210 = vector.broadcast %cst_27 : f32 to vector<128x128xf32>
      %211 = arith.select %207, %209, %210 : vector<128x128xi1>, vector<128x128xf32>
      %212 = arith.addf %203, %211 : vector<128x128xf32>
      %213 = vector.broadcast %195 : i32 to vector<128x1xi32>
      %214 = arith.subi %83, %213 : vector<128x1xi32>
      %215 = vector.broadcast %214 : vector<128x1xi32> to vector<128x128xi32>
      %216 = arith.cmpi eq, %97, %215 : vector<128x128xi32>
      %217 = vector.shape_cast %95 : vector<128x1xf32> to vector<128x1xf32>
      %218 = vector.broadcast %217 : vector<128x1xf32> to vector<128x128xf32>
      %219 = vector.broadcast %cst_27 : f32 to vector<128x128xf32>
      %220 = arith.select %216, %218, %219 : vector<128x128xi1>, vector<128x128xf32>
      %221 = arith.addf %212, %220 : vector<128x128xf32>
      %222 = vector.broadcast %195 : i32 to vector<128x1xi32>
      %223 = arith.subi %84, %222 : vector<128x1xi32>
      %224 = vector.broadcast %223 : vector<128x1xi32> to vector<128x128xi32>
      %225 = arith.cmpi eq, %97, %224 : vector<128x128xi32>
      %226 = vector.shape_cast %96 : vector<128x1xf32> to vector<128x1xf32>
      %227 = vector.broadcast %226 : vector<128x1xf32> to vector<128x128xf32>
      %228 = vector.broadcast %cst_27 : f32 to vector<128x128xf32>
      %229 = arith.select %225, %227, %228 : vector<128x128xi1>, vector<128x128xf32>
      %230 = arith.addf %221, %229 : vector<128x128xf32>
      %c0_103 = arith.constant 0 : index
      %231 = arith.index_cast %195 : i32 to index
      %c0_104 = arith.constant 0 : index
      %232 = vector.load %arg5[%c0_103, %231, %c0_104] : memref<1x256x16xf32, #tpu.memory_space<vmem>>, vector<1x128x16xf32>
      %233 = vector.shape_cast %232 : vector<1x128x16xf32> to vector<128x16xf32>
      %cst_105 = arith.constant dense<0.000000e+00> : vector<128x16xf32>
      %234 = tpu.matmul %230, %233, %cst_105 {dimension_numbers = #tpu.dot_dimension_numbers<[1], [0], [0], [1], [0, 0, 1, 1], [], []>} : vector<128x128xf32>, vector<128x16xf32>, vector<128x16xf32> -> vector<128x16xf32>
      %235 = arith.addf %arg13, %234 : vector<128x16xf32>
      scf.yield %235 : vector<128x16xf32>
    }
    %c2_i32_29 = arith.constant 2 : i32
    %c0_30 = arith.constant 0 : index
    %c0_31 = arith.constant 0 : index
    %c0_32 = arith.constant 0 : index
    %101 = vector.load %arg4[%c0_30, %c0_31, %c0_32] : memref<1x3x32xf32, #tpu.memory_space<vmem>>, vector<1x3x32xf32>
    %102 = vector.shape_cast %101 : vector<1x3x32xf32> to vector<3x32xf32>
    %cst_33 = arith.constant dense<0.000000e+00> : vector<128x32xf32>
    %103 = tpu.matmul %4, %102, %cst_33 {dimension_numbers = #tpu.dot_dimension_numbers<[1], [0], [0], [1], [0, 0, 1, 1], [], []>} : vector<128x3xf32>, vector<3x32xf32>, vector<128x32xf32> -> vector<128x32xf32>
    %104 = vector.broadcast %2 : vector<1x32xf32> to vector<128x32xf32>
    %105 = arith.addf %103, %104 : vector<128x32xf32>
    %c0_34 = arith.constant 0 : index
    %c0_35 = arith.constant 0 : index
    %106 = vector.load %arg6[%c0_34, %c0_35] : memref<16x32xf32, #tpu.memory_space<vmem>>, vector<16x32xf32>
    %cst_36 = arith.constant dense<0.000000e+00> : vector<128x32xf32>
    %107 = tpu.matmul %100, %106, %cst_36 {dimension_numbers = #tpu.dot_dimension_numbers<[1], [0], [0], [1], [0, 0, 1, 1], [], []>} : vector<128x16xf32>, vector<16x32xf32>, vector<128x32xf32> -> vector<128x32xf32>
    %108 = arith.addf %105, %107 : vector<128x32xf32>
    %cst_37 = arith.constant 0.000000e+00 : f32
    %109 = vector.broadcast %cst_37 : f32 to vector<128x32xf32>
    %110 = arith.maximumf %108, %109 : vector<128x32xf32>
    %c0_38 = arith.constant 0 : index
    %c0_39 = arith.constant 0 : index
    %c0_40 = arith.constant 0 : index
    %111 = vector.load %arg7[%c0_38, %c0_39, %c0_40] : memref<8x32x32xf32, #tpu.memory_space<vmem>>, vector<1x32x32xf32>
    %112 = vector.shape_cast %111 : vector<1x32x32xf32> to vector<32x32xf32>
    %cst_41 = arith.constant dense<0.000000e+00> : vector<128x32xf32>
    %113 = tpu.matmul %110, %112, %cst_41 {dimension_numbers = #tpu.dot_dimension_numbers<[1], [0], [0], [1], [0, 0, 1, 1], [], []>} : vector<128x32xf32>, vector<32x32xf32>, vector<128x32xf32> -> vector<128x32xf32>
    %c0_42 = arith.constant 0 : index
    %c0_43 = arith.constant 0 : index
    %c0_44 = arith.constant 0 : index
    %114 = vector.load %arg8[%c0_42, %c0_43, %c0_44] : memref<8x1x32xf32, #tpu.memory_space<vmem>>, vector<1x1x32xf32>
    %115 = vector.shape_cast %114 : vector<1x1x32xf32> to vector<1x32xf32>
    %116 = vector.broadcast %115 : vector<1x32xf32> to vector<128x32xf32>
    %117 = arith.addf %113, %116 : vector<128x32xf32>
    %cst_45 = arith.constant 0.000000e+00 : f32
    %118 = vector.broadcast %cst_45 : f32 to vector<128x32xf32>
    %119 = arith.maximumf %117, %118 : vector<128x32xf32>
    %c1 = arith.constant 1 : index
    %c0_46 = arith.constant 0 : index
    %c0_47 = arith.constant 0 : index
    %120 = vector.load %arg7[%c1, %c0_46, %c0_47] : memref<8x32x32xf32, #tpu.memory_space<vmem>>, vector<1x32x32xf32>
    %121 = vector.shape_cast %120 : vector<1x32x32xf32> to vector<32x32xf32>
    %cst_48 = arith.constant dense<0.000000e+00> : vector<128x32xf32>
    %122 = tpu.matmul %119, %121, %cst_48 {dimension_numbers = #tpu.dot_dimension_numbers<[1], [0], [0], [1], [0, 0, 1, 1], [], []>} : vector<128x32xf32>, vector<32x32xf32>, vector<128x32xf32> -> vector<128x32xf32>
    %c1_49 = arith.constant 1 : index
    %c0_50 = arith.constant 0 : index
    %c0_51 = arith.constant 0 : index
    %123 = vector.load %arg8[%c1_49, %c0_50, %c0_51] : memref<8x1x32xf32, #tpu.memory_space<vmem>>, vector<1x1x32xf32>
    %124 = vector.shape_cast %123 : vector<1x1x32xf32> to vector<1x32xf32>
    %125 = vector.broadcast %124 : vector<1x32xf32> to vector<128x32xf32>
    %126 = arith.addf %122, %125 : vector<128x32xf32>
    %127 = arith.addf %108, %126 : vector<128x32xf32>
    %cst_52 = arith.constant 0.000000e+00 : f32
    %128 = vector.broadcast %cst_52 : f32 to vector<128x32xf32>
    %129 = arith.maximumf %127, %128 : vector<128x32xf32>
    %c2 = arith.constant 2 : index
    %c0_53 = arith.constant 0 : index
    %c0_54 = arith.constant 0 : index
    %130 = vector.load %arg7[%c2, %c0_53, %c0_54] : memref<8x32x32xf32, #tpu.memory_space<vmem>>, vector<1x32x32xf32>
    %131 = vector.shape_cast %130 : vector<1x32x32xf32> to vector<32x32xf32>
    %cst_55 = arith.constant dense<0.000000e+00> : vector<128x32xf32>
    %132 = tpu.matmul %129, %131, %cst_55 {dimension_numbers = #tpu.dot_dimension_numbers<[1], [0], [0], [1], [0, 0, 1, 1], [], []>} : vector<128x32xf32>, vector<32x32xf32>, vector<128x32xf32> -> vector<128x32xf32>
    %c2_56 = arith.constant 2 : index
    %c0_57 = arith.constant 0 : index
    %c0_58 = arith.constant 0 : index
    %133 = vector.load %arg8[%c2_56, %c0_57, %c0_58] : memref<8x1x32xf32, #tpu.memory_space<vmem>>, vector<1x1x32xf32>
    %134 = vector.shape_cast %133 : vector<1x1x32xf32> to vector<1x32xf32>
    %135 = vector.broadcast %134 : vector<1x32xf32> to vector<128x32xf32>
    %136 = arith.addf %132, %135 : vector<128x32xf32>
    %cst_59 = arith.constant 0.000000e+00 : f32
    %137 = vector.broadcast %cst_59 : f32 to vector<128x32xf32>
    %138 = arith.maximumf %136, %137 : vector<128x32xf32>
    %c3 = arith.constant 3 : index
    %c0_60 = arith.constant 0 : index
    %c0_61 = arith.constant 0 : index
    %139 = vector.load %arg7[%c3, %c0_60, %c0_61] : memref<8x32x32xf32, #tpu.memory_space<vmem>>, vector<1x32x32xf32>
    %140 = vector.shape_cast %139 : vector<1x32x32xf32> to vector<32x32xf32>
    %cst_62 = arith.constant dense<0.000000e+00> : vector<128x32xf32>
    %141 = tpu.matmul %138, %140, %cst_62 {dimension_numbers = #tpu.dot_dimension_numbers<[1], [0], [0], [1], [0, 0, 1, 1], [], []>} : vector<128x32xf32>, vector<32x32xf32>, vector<128x32xf32> -> vector<128x32xf32>
    %c3_63 = arith.constant 3 : index
    %c0_64 = arith.constant 0 : index
    %c0_65 = arith.constant 0 : index
    %142 = vector.load %arg8[%c3_63, %c0_64, %c0_65] : memref<8x1x32xf32, #tpu.memory_space<vmem>>, vector<1x1x32xf32>
    %143 = vector.shape_cast %142 : vector<1x1x32xf32> to vector<1x32xf32>
    %144 = vector.broadcast %143 : vector<1x32xf32> to vector<128x32xf32>
    %145 = arith.addf %141, %144 : vector<128x32xf32>
    %146 = arith.addf %127, %145 : vector<128x32xf32>
    %cst_66 = arith.constant 0.000000e+00 : f32
    %147 = vector.broadcast %cst_66 : f32 to vector<128x32xf32>
    %148 = arith.maximumf %146, %147 : vector<128x32xf32>
    %c4 = arith.constant 4 : index
    %c0_67 = arith.constant 0 : index
    %c0_68 = arith.constant 0 : index
    %149 = vector.load %arg7[%c4, %c0_67, %c0_68] : memref<8x32x32xf32, #tpu.memory_space<vmem>>, vector<1x32x32xf32>
    %150 = vector.shape_cast %149 : vector<1x32x32xf32> to vector<32x32xf32>
    %cst_69 = arith.constant dense<0.000000e+00> : vector<128x32xf32>
    %151 = tpu.matmul %148, %150, %cst_69 {dimension_numbers = #tpu.dot_dimension_numbers<[1], [0], [0], [1], [0, 0, 1, 1], [], []>} : vector<128x32xf32>, vector<32x32xf32>, vector<128x32xf32> -> vector<128x32xf32>
    %c4_70 = arith.constant 4 : index
    %c0_71 = arith.constant 0 : index
    %c0_72 = arith.constant 0 : index
    %152 = vector.load %arg8[%c4_70, %c0_71, %c0_72] : memref<8x1x32xf32, #tpu.memory_space<vmem>>, vector<1x1x32xf32>
    %153 = vector.shape_cast %152 : vector<1x1x32xf32> to vector<1x32xf32>
    %154 = vector.broadcast %153 : vector<1x32xf32> to vector<128x32xf32>
    %155 = arith.addf %151, %154 : vector<128x32xf32>
    %cst_73 = arith.constant 0.000000e+00 : f32
    %156 = vector.broadcast %cst_73 : f32 to vector<128x32xf32>
    %157 = arith.maximumf %155, %156 : vector<128x32xf32>
    %c5 = arith.constant 5 : index
    %c0_74 = arith.constant 0 : index
    %c0_75 = arith.constant 0 : index
    %158 = vector.load %arg7[%c5, %c0_74, %c0_75] : memref<8x32x32xf32, #tpu.memory_space<vmem>>, vector<1x32x32xf32>
    %159 = vector.shape_cast %158 : vector<1x32x32xf32> to vector<32x32xf32>
    %cst_76 = arith.constant dense<0.000000e+00> : vector<128x32xf32>
    %160 = tpu.matmul %157, %159, %cst_76 {dimension_numbers = #tpu.dot_dimension_numbers<[1], [0], [0], [1], [0, 0, 1, 1], [], []>} : vector<128x32xf32>, vector<32x32xf32>, vector<128x32xf32> -> vector<128x32xf32>
    %c5_77 = arith.constant 5 : index
    %c0_78 = arith.constant 0 : index
    %c0_79 = arith.constant 0 : index
    %161 = vector.load %arg8[%c5_77, %c0_78, %c0_79] : memref<8x1x32xf32, #tpu.memory_space<vmem>>, vector<1x1x32xf32>
    %162 = vector.shape_cast %161 : vector<1x1x32xf32> to vector<1x32xf32>
    %163 = vector.broadcast %162 : vector<1x32xf32> to vector<128x32xf32>
    %164 = arith.addf %160, %163 : vector<128x32xf32>
    %165 = arith.addf %146, %164 : vector<128x32xf32>
    %cst_80 = arith.constant 0.000000e+00 : f32
    %166 = vector.broadcast %cst_80 : f32 to vector<128x32xf32>
    %167 = arith.maximumf %165, %166 : vector<128x32xf32>
    %c6 = arith.constant 6 : index
    %c0_81 = arith.constant 0 : index
    %c0_82 = arith.constant 0 : index
    %168 = vector.load %arg7[%c6, %c0_81, %c0_82] : memref<8x32x32xf32, #tpu.memory_space<vmem>>, vector<1x32x32xf32>
    %169 = vector.shape_cast %168 : vector<1x32x32xf32> to vector<32x32xf32>
    %cst_83 = arith.constant dense<0.000000e+00> : vector<128x32xf32>
    %170 = tpu.matmul %167, %169, %cst_83 {dimension_numbers = #tpu.dot_dimension_numbers<[1], [0], [0], [1], [0, 0, 1, 1], [], []>} : vector<128x32xf32>, vector<32x32xf32>, vector<128x32xf32> -> vector<128x32xf32>
    %c6_84 = arith.constant 6 : index
    %c0_85 = arith.constant 0 : index
    %c0_86 = arith.constant 0 : index
    %171 = vector.load %arg8[%c6_84, %c0_85, %c0_86] : memref<8x1x32xf32, #tpu.memory_space<vmem>>, vector<1x1x32xf32>
    %172 = vector.shape_cast %171 : vector<1x1x32xf32> to vector<1x32xf32>
    %173 = vector.broadcast %172 : vector<1x32xf32> to vector<128x32xf32>
    %174 = arith.addf %170, %173 : vector<128x32xf32>
    %cst_87 = arith.constant 0.000000e+00 : f32
    %175 = vector.broadcast %cst_87 : f32 to vector<128x32xf32>
    %176 = arith.maximumf %174, %175 : vector<128x32xf32>
    %c7 = arith.constant 7 : index
    %c0_88 = arith.constant 0 : index
    %c0_89 = arith.constant 0 : index
    %177 = vector.load %arg7[%c7, %c0_88, %c0_89] : memref<8x32x32xf32, #tpu.memory_space<vmem>>, vector<1x32x32xf32>
    %178 = vector.shape_cast %177 : vector<1x32x32xf32> to vector<32x32xf32>
    %cst_90 = arith.constant dense<0.000000e+00> : vector<128x32xf32>
    %179 = tpu.matmul %176, %178, %cst_90 {dimension_numbers = #tpu.dot_dimension_numbers<[1], [0], [0], [1], [0, 0, 1, 1], [], []>} : vector<128x32xf32>, vector<32x32xf32>, vector<128x32xf32> -> vector<128x32xf32>
    %c7_91 = arith.constant 7 : index
    %c0_92 = arith.constant 0 : index
    %c0_93 = arith.constant 0 : index
    %180 = vector.load %arg8[%c7_91, %c0_92, %c0_93] : memref<8x1x32xf32, #tpu.memory_space<vmem>>, vector<1x1x32xf32>
    %181 = vector.shape_cast %180 : vector<1x1x32xf32> to vector<1x32xf32>
    %182 = vector.broadcast %181 : vector<1x32xf32> to vector<128x32xf32>
    %183 = arith.addf %179, %182 : vector<128x32xf32>
    %184 = arith.addf %165, %183 : vector<128x32xf32>
    %cst_94 = arith.constant 0.000000e+00 : f32
    %185 = vector.broadcast %cst_94 : f32 to vector<128x32xf32>
    %186 = arith.maximumf %184, %185 : vector<128x32xf32>
    %c0_95 = arith.constant 0 : index
    %c0_96 = arith.constant 0 : index
    %187 = vector.load %arg9[%c0_95, %c0_96] : memref<1x32xf32, #tpu.memory_space<vmem>>, vector<1x32xf32>
    %cst_97 = arith.constant dense<0.000000e+00> : vector<1x128xf32>
    %188 = tpu.matmul %187, %186, %cst_97 {dimension_numbers = #tpu.dot_dimension_numbers<[1], [1], [0], [0], [0, 0, 1, 0], [], []>} : vector<1x32xf32>, vector<128x32xf32>, vector<1x128xf32> -> vector<1x128xf32>
    %c0_98 = arith.constant 0 : index
    %c0_99 = arith.constant 0 : index
    %189 = vector.load %arg10[%c0_98, %c0_99] : memref<1x1xf32, #tpu.memory_space<vmem>>, vector<1x1xf32>
    %190 = vector.broadcast %189 : vector<1x1xf32> to vector<1x128xf32>
    %191 = arith.addf %188, %190 : vector<1x128xf32>
    %192 = vector.shape_cast %191 : vector<1x128xf32> to vector<1x1x128xf32>
    %c0_100 = arith.constant 0 : index
    %c0_101 = arith.constant 0 : index
    %c0_102 = arith.constant 0 : index
    %193 = vector.load %arg11[%c0_100, %c0_101, %c0_102] : memref<1x1x128xf32, #tpu.memory_space<vmem>>, vector<1x1x128xf32>
    tpu.vector_store %arg11[%c0_100, %c0_101, %c0_102], %192 {strides = array<i32>} : memref<1x1x128xf32, #tpu.memory_space<vmem>>, vector<1x1x128xf32>,
    return
  }
  func.func @transform_0(%arg0: i32, %arg1: i32) -> (i32, i32, i32) {
    %c0_i32 = arith.constant 0 : i32
    %c0_i32_0 = arith.constant 0 : i32
    return %arg0, %arg1, %c0_i32 : i32, i32, i32
  }
  func.func @transform_1(%arg0: i32, %arg1: i32) -> (i32, i32, i32) {
    %c0_i32 = arith.constant 0 : i32
    %c0_i32_0 = arith.constant 0 : i32
    %c0_i32_1 = arith.constant 0 : i32
    return %arg0, %c0_i32, %c0_i32_0 : i32, i32, i32
  }
  func.func @transform_2(%arg0: i32, %arg1: i32) -> (i32, i32, i32) {
    %c0_i32 = arith.constant 0 : i32
    %c0_i32_0 = arith.constant 0 : i32
    %c0_i32_1 = arith.constant 0 : i32
    return %arg0, %c0_i32, %c0_i32_0 : i32, i32, i32
  }
  func.func @transform_3(%arg0: i32, %arg1: i32) -> (i32, i32, i32) {
    %c0_i32 = arith.constant 0 : i32
    %c0_i32_0 = arith.constant 0 : i32
    %c0_i32_1 = arith.constant 0 : i32
    return %arg0, %c0_i32, %c0_i32_0 : i32, i32, i32
  }
  func.func @transform_4(%arg0: i32, %arg1: i32) -> (i32, i32) {
    %c0_i32 = arith.constant 0 : i32
    %c0_i32_0 = arith.constant 0 : i32
    %c0_i32_1 = arith.constant 0 : i32
    return %c0_i32, %c0_i32_0 : i32, i32
  }
  func.func @transform_5(%arg0: i32, %arg1: i32) -> (i32, i32, i32) {
    %c0_i32 = arith.constant 0 : i32
    %c0_i32_0 = arith.constant 0 : i32
    %c0_i32_1 = arith.constant 0 : i32
    %c0_i32_2 = arith.constant 0 : i32
    return %c0_i32, %c0_i32_0, %c0_i32_1 : i32, i32, i32
  }
  func.func @transform_6(%arg0: i32, %arg1: i32) -> (i32, i32, i32) {
    %c0_i32 = arith.constant 0 : i32
    %c0_i32_0 = arith.constant 0 : i32
    %c0_i32_1 = arith.constant 0 : i32
    %c0_i32_2 = arith.constant 0 : i32
    return %c0_i32, %c0_i32_0, %c0_i32_1 : i32, i32, i32
  }
  func.func @transform_7(%arg0: i32, %arg1: i32) -> (i32, i32) {
    %c0_i32 = arith.constant 0 : i32
    %c0_i32_0 = arith.constant 0 : i32
    %c0_i32_1 = arith.constant 0 : i32
    return %c0_i32, %c0_i32_0 : i32, i32
  }
  func.func @transform_8(%arg0: i32, %arg1: i32) -> (i32, i32) {
    %c0_i32 = arith.constant 0 : i32
    %c0_i32_0 = arith.constant 0 : i32
    %c0_i32_1 = arith.constant 0 : i32
    return %c0_i32, %c0_i32_0 : i32, i32
  }
  func.func @transform_9(%arg0: i32, %arg1: i32) -> (i32, i32, i32) {
    %c0_i32 = arith.constant 0 : i32
    %c0_i32_0 = arith.constant 0 : i32
    return %arg0, %c0_i32, %arg1 : i32, i32, i32
  }
}

</mosaic_0001>

<llo_original>
// kernel: tpu_custom_call.1
$region0: #{tpu_custom_call.1}
  #allocation0 [shape = 'u32[]', space=smem, size = 0x4, offset = 0x4, fixed_abs, tag = 'smem constant byte address 0x4 - core index']
  #allocation1 [shape = 'u32[144,128]{1,0:T(1,128)}', space=vmem, size = 0x12000, scoped, tag = 'internal scratch']
  #allocation2 [shape = 'f32[1,1]{1,0:T(1,128)S(1)}', space=vmem, size = 0x200, scoped, tag = 'scoped memory for tpu_custom_call.1']
  %s0 = inlined_call_operand.vmem [shape: f32[2,256,3], index: 0, kind: input, shape index: {}]
  %s1 = inlined_call_operand.vmem [shape: f32[2,1,44], index: 1, kind: input, shape index: {}]
  %s2 = inlined_call_operand.vmem [shape: f32[2,3,32], index: 2, kind: input, shape index: {}]
  %s3 = inlined_call_operand.vmem [shape: f32[2,256,16], index: 3, kind: input, shape index: {}]
  %s4 = inlined_call_operand.vmem [shape: f32[16,32], index: 4, kind: input, shape index: {}]
  %s5 = inlined_call_operand.vmem [shape: f32[8,32,32], index: 5, kind: input, shape index: {}]
  %s6 = inlined_call_operand.vmem [shape: f32[8,1,32], index: 6, kind: input, shape index: {}]
  %s7 = inlined_call_operand.vmem [shape: f32[1,32], index: 7, kind: input, shape index: {}]
  %s8 = inlined_call_operand.<no memory space> [shape: f32[1,1], index: 8, kind: input, shape index: {}]
  %s9 = inlined_call_operand.hbm [shape: f32[2,1,256], index: 9, kind: output, shape index: {}]
  %s10 = sld [smem:[#allocation0]]
  $region76: #{tpu_custom_call.1} parent=0
    _
  %s12 = ssub.s32 1, %s10
  %s13 = scalar_select 0, %s12, %s10
  %v14 = vstv %s8
  %15 = vst [vmem:[#allocation2] sm:$0x1] %v14
  $region1: #{tpu_custom_call.1} parent=0
    #allocation3 [shape = 'u8[1024]{0}', space=vmem, size = 0x400, scoped, tag = 'output window, operand 0']
    #allocation4 [shape = 's32[2]{0}', space=sflag, size = 0x8, scoped, tag = 'scoped memory for tpu_custom_call.1']
    %16 = vsyncpa [#allocation4], 0
    %s17 = scalar_lea.sflag [#allocation4], 1
    %18 = vsyncpa %s17, 0
    loop: start=0, step=1, limit=6
    $region2: #{tpu_custom_call.1} parent=1 // loop_pre_header
      _
    $region3: #{tpu_custom_call.1} parent=1 // loop_header
      %s20 = sphi 0, %s24
      %p21 = scmp.ge.s32.totalorder %s20, 6
      %s27 = sphi 0, %s39
      %s28 = sphi 0, %s35
      %s29 = sphi 0, %s27
      %s30 = sphi 0, %s28
      %s31 = sphi 0, %s29
      %s32 = sphi 0, %s30
      %s44 = sphi 0, %s46
      %s47 = sphi 0, %s44
      %s48 = sphi 0, %s47
      %s64 = sphi 0, %s48
      %s70 = sphi 0, %s72
      %s73 = sphi 0, %s70
      %s74 = sphi 0, %s73
      %s90 = sphi 0, %s74
      %s96 = sphi 0, %s98
      %s99 = sphi 0, %s96
      %s100 = sphi 0, %s99
      %s116 = sphi 0, %s100
      %s122 = sphi 0, %s124
      %s125 = sphi 0, %s122
      %s126 = sphi 0, %s125
      %s142 = sphi 0, %s126
      %s146 = sphi 0, %s146
      %s148 = sphi 0, %s146
      %s149 = sphi 0, %s148
      %s163 = sphi 0, %s149
      %s167 = sphi 0, %s167
      %s169 = sphi 0, %s167
      %s170 = sphi 0, %s169
      %s184 = sphi 0, %s170
      %s188 = sphi 0, %s188
      %s190 = sphi 0, %s188
      %s191 = sphi 0, %s190
      %s205 = sphi 0, %s191
      %s209 = sphi 0, %s209
      %s211 = sphi 0, %s209
      %s212 = sphi 0, %s211
      %s226 = sphi 0, %s212
      %s230 = sphi 0, %s230
      %s232 = sphi 0, %s230
      %s233 = sphi 0, %s232
      %s247 = sphi 0, %s233
      %s255 = sphi 0, %s257
      %s258 = sphi 0, %s255
      %s259 = sphi 0, %s258
      %s275 = sphi 0, %s259
    $region4: #{tpu_custom_call.1} parent=1 // loop_header_branch
      %23 = sbr.rel (%p21) target = $region8
    $region5: #{tpu_custom_call.1} parent=1 // loop_body
      %s25 = ssub.s32 %s20, 1
      %s26 = ssub.s32 %s20, 2
      %s33 = sadd.s32 1, %s28
      %p34 = scmp.ge.s32.totalorder %s33, 2
      %s35 = scalar_select %p34, 0, %s33
      %s36 = sadd.s32 1, %s27
      %s37 = scalar_select %p34, %s36, %s27
      %p38 = scmp.ge.s32.totalorder %s37, 2
      %s39 = scalar_select %p38, 0, %s37
      %s40 = ssub.s32 %s27, %s39
      %s41 = ssub.s32 %s28, %s35
      %s42 = sor.u32 %s40, %s41
      %p43 = scmp.eq.s32.totalorder %s42, 0
      %s45 = sadd.s32 %s44, 1
      %s46 = scalar_select %p43, %s44, %s45
      %p49 = pneg %p43
      %p50 = scmp.eq.s32.totalorder %s20, 3
      %p51 = por %p49, %p50
      %p52 = scmp.ne.s32.totalorder %s44, %s47
      %p53 = scmp.eq.s32.totalorder %s20, 0
      %p54 = por %p52, %p53
      %p55 = scmp.ne.s32.totalorder %s44, %s47
      %p56 = scmp.eq.s32.totalorder %s25, 3
      %p57 = por %p55, %p56
      %p58 = scmp.ne.s32.totalorder %s47, %s48
      %p59 = scmp.eq.s32.totalorder %s25, 0
      %p60 = por %p58, %p59
      %p61 = scmp.ne.s32.totalorder %s47, %s48
      %p62 = scmp.eq.s32.totalorder %s26, 3
      %p63 = por %p61, %p62
      %p65 = scmp.ne.s32.totalorder %s48, %s64
      %p66 = scmp.eq.s32.totalorder %s26, 0
      %p67 = por %p65, %p66
      %s68 = ssub.s32 %s27, %s39
      %p69 = scmp.eq.s32.totalorder %s68, 0
      %s71 = sadd.s32 %s70, 1
      %s72 = scalar_select %p69, %s70, %s71
      %p75 = pneg %p69
      %p76 = scmp.eq.s32.totalorder %s20, 3
      %p77 = por %p75, %p76
      %p78 = scmp.ne.s32.totalorder %s70, %s73
      %p79 = scmp.eq.s32.totalorder %s20, 0
      %p80 = por %p78, %p79
      %p81 = scmp.ne.s32.totalorder %s70, %s73
      %p82 = scmp.eq.s32.totalorder %s25, 3
      %p83 = por %p81, %p82
      %p84 = scmp.ne.s32.totalorder %s73, %s74
      %p85 = scmp.eq.s32.totalorder %s25, 0
      %p86 = por %p84, %p85
      %p87 = scmp.ne.s32.totalorder %s73, %s74
      %p88 = scmp.eq.s32.totalorder %s26, 3
      %p89 = por %p87, %p88
      %p91 = scmp.ne.s32.totalorder %s74, %s90
      %p92 = scmp.eq.s32.totalorder %s26, 0
      %p93 = por %p91, %p92
      %s94 = ssub.s32 %s27, %s39
      %p95 = scmp.eq.s32.totalorder %s94, 0
      %s97 = sadd.s32 %s96, 1
      %s98 = scalar_select %p95, %s96, %s97
      %p101 = pneg %p95
      %p102 = scmp.eq.s32.totalorder %s20, 3
      %p103 = por %p101, %p102
      %p104 = scmp.ne.s32.totalorder %s96, %s99
      %p105 = scmp.eq.s32.totalorder %s20, 0
      %p106 = por %p104, %p105
      %p107 = scmp.ne.s32.totalorder %s96, %s99
      %p108 = scmp.eq.s32.totalorder %s25, 3
      %p109 = por %p107, %p108
      %p110 = scmp.ne.s32.totalorder %s99, %s100
      %p111 = scmp.eq.s32.totalorder %s25, 0
      %p112 = por %p110, %p111
      %p113 = scmp.ne.s32.totalorder %s99, %s100
      %p114 = scmp.eq.s32.totalorder %s26, 3
      %p115 = por %p113, %p114
      %p117 = scmp.ne.s32.totalorder %s100, %s116
      %p118 = scmp.eq.s32.totalorder %s26, 0
      %p119 = por %p117, %p118
      %s120 = ssub.s32 %s27, %s39
      %p121 = scmp.eq.s32.totalorder %s120, 0
      %s123 = sadd.s32 %s122, 1
      %s124 = scalar_select %p121, %s122, %s123
      %p127 = pneg %p121
      %p128 = scmp.eq.s32.totalorder %s20, 3
      %p129 = por %p127, %p128
      %p130 = scmp.ne.s32.totalorder %s122, %s125
      %p131 = scmp.eq.s32.totalorder %s20, 0
      %p132 = por %p130, %p131
      %p133 = scmp.ne.s32.totalorder %s122, %s125
      %p134 = scmp.eq.s32.totalorder %s25, 3
      %p135 = por %p133, %p134
      %p136 = scmp.ne.s32.totalorder %s125, %s126
      %p137 = scmp.eq.s32.totalorder %s25, 0
      %p138 = por %p136, %p137
      %p139 = scmp.ne.s32.totalorder %s125, %s126
      %p140 = scmp.eq.s32.totalorder %s26, 3
      %p141 = por %p139, %p140
      %p143 = scmp.ne.s32.totalorder %s126, %s142
      %p144 = scmp.eq.s32.totalorder %s26, 0
      %p145 = por %p143, %p144
      %s147 = sadd.s32 %s146, 1
      %p150 = scmp.eq.s32.totalorder %s20, 3
      %p151 = scmp.ne.s32.totalorder %s146, %s148
      %p152 = scmp.eq.s32.totalorder %s20, 0
      %p153 = por %p151, %p152
      %p154 = scmp.ne.s32.totalorder %s146, %s148
      %p155 = scmp.eq.s32.totalorder %s25, 3
      %p156 = por %p154, %p155
      %p157 = scmp.ne.s32.totalorder %s148, %s149
      %p158 = scmp.eq.s32.totalorder %s25, 0
      %p159 = por %p157, %p158
      %p160 = scmp.ne.s32.totalorder %s148, %s149
      %p161 = scmp.eq.s32.totalorder %s26, 3
      %p162 = por %p160, %p161
      %p164 = scmp.ne.s32.totalorder %s149, %s163
      %p165 = scmp.eq.s32.totalorder %s26, 0
      %p166 = por %p164, %p165
      %s168 = sadd.s32 %s167, 1
      %p171 = scmp.eq.s32.totalorder %s20, 3
      %p172 = scmp.ne.s32.totalorder %s167, %s169
      %p173 = scmp.eq.s32.totalorder %s20, 0
      %p174 = por %p172, %p173
      %p175 = scmp.ne.s32.totalorder %s167, %s169
      %p176 = scmp.eq.s32.totalorder %s25, 3
      %p177 = por %p175, %p176
      %p178 = scmp.ne.s32.totalorder %s169, %s170
      %p179 = scmp.eq.s32.totalorder %s25, 0
      %p180 = por %p178, %p179
      %p181 = scmp.ne.s32.totalorder %s169, %s170
      %p182 = scmp.eq.s32.totalorder %s26, 3
      %p183 = por %p181, %p182
      %p185 = scmp.ne.s32.totalorder %s170, %s184
      %p186 = scmp.eq.s32.totalorder %s26, 0
      %p187 = por %p185, %p186
      %s189 = sadd.s32 %s188, 1
      %p192 = scmp.eq.s32.totalorder %s20, 3
      %p193 = scmp.ne.s32.totalorder %s188, %s190
      %p194 = scmp.eq.s32.totalorder %s20, 0
      %p195 = por %p193, %p194
      %p196 = scmp.ne.s32.totalorder %s188, %s190
      %p197 = scmp.eq.s32.totalorder %s25, 3
      %p198 = por %p196, %p197
      %p199 = scmp.ne.s32.totalorder %s190, %s191
      %p200 = scmp.eq.s32.totalorder %s25, 0
      %p201 = por %p199, %p200
      %p202 = scmp.ne.s32.totalorder %s190, %s191
      %p203 = scmp.eq.s32.totalorder %s26, 3
      %p204 = por %p202, %p203
      %p206 = scmp.ne.s32.totalorder %s191, %s205
      %p207 = scmp.eq.s32.totalorder %s26, 0
      %p208 = por %p206, %p207
      %s210 = sadd.s32 %s209, 1
      %p213 = scmp.eq.s32.totalorder %s20, 3
      %p214 = scmp.ne.s32.totalorder %s209, %s211
      %p215 = scmp.eq.s32.totalorder %s20, 0
      %p216 = por %p214, %p215
      %p217 = scmp.ne.s32.totalorder %s209, %s211
      %p218 = scmp.eq.s32.totalorder %s25, 3
      %p219 = por %p217, %p218
      %p220 = scmp.ne.s32.totalorder %s211, %s212
      %p221 = scmp.eq.s32.totalorder %s25, 0
      %p222 = por %p220, %p221
      %p223 = scmp.ne.s32.totalorder %s211, %s212
      %p224 = scmp.eq.s32.totalorder %s26, 3
      %p225 = por %p223, %p224
      %p227 = scmp.ne.s32.totalorder %s212, %s226
      %p228 = scmp.eq.s32.totalorder %s26, 0
      %p229 = por %p227, %p228
      %s231 = sadd.s32 %s230, 1
      %p234 = scmp.eq.s32.totalorder %s20, 3
      %p235 = scmp.ne.s32.totalorder %s230, %s232
      %p236 = scmp.eq.s32.totalorder %s20, 0
      %p237 = por %p235, %p236
      %p238 = scmp.ne.s32.totalorder %s230, %s232
      %p239 = scmp.eq.s32.totalorder %s25, 3
      %p240 = por %p238, %p239
      %p241 = scmp.ne.s32.totalorder %s232, %s233
      %p242 = scmp.eq.s32.totalorder %s25, 0
      %p243 = por %p241, %p242
      %p244 = scmp.ne.s32.totalorder %s232, %s233
      %p245 = scmp.eq.s32.totalorder %s26, 3
      %p246 = por %p244, %p245
      %p248 = scmp.ne.s32.totalorder %s233, %s247
      %p249 = scmp.eq.s32.totalorder %s26, 0
      %p250 = por %p248, %p249
      %s251 = ssub.s32 %s27, %s39
      %s252 = ssub.s32 %s28, %s35
      %s253 = sor.u32 %s251, %s252
      %p254 = scmp.eq.s32.totalorder %s253, 0
      %s256 = sadd.s32 %s255, 1
      %s257 = scalar_select %p254, %s255, %s256
      %p260 = pneg %p254
      %p261 = scmp.eq.s32.totalorder %s20, 3
      %p262 = por %p260, %p261
      %p263 = scmp.ne.s32.totalorder %s255, %s258
      %p264 = scmp.eq.s32.totalorder %s20, 0
      %p265 = por %p263, %p264
      %p266 = scmp.ne.s32.totalorder %s255, %s258
      %p267 = scmp.eq.s32.totalorder %s25, 3
      %p268 = por %p266, %p267
      %p269 = scmp.ne.s32.totalorder %s258, %s259
      %p270 = scmp.eq.s32.totalorder %s25, 0
      %p271 = por %p269, %p270
      %p272 = scmp.ne.s32.totalorder %s258, %s259
      %p273 = scmp.eq.s32.totalorder %s26, 3
      %p274 = por %p272, %p273
      %p276 = scmp.ne.s32.totalorder %s259, %s275
      %p277 = scmp.eq.s32.totalorder %s26, 0
      %p278 = por %p276, %p277
      %p279 = scmp.le.s32.totalorder 1, %s20
      %p280 = scmp.lt.s32.totalorder %s20, 5
      %p281 = pnand %p279, %p280
      %p282 = pneg %p281
      // Predicated region
      $region9: #{tpu_custom_call.1} parent=5 // pred_check
        _
      $region10: #{tpu_custom_call.1} parent=5 // pred_check_branch
        %284 = sbr.rel (%p281) target = $region12
      $region11: #{tpu_custom_call.1} parent=5 // pred_region
        %s285 = ssub.s32 %s20, 1
        // Predicated region
        $region13: #{tpu_custom_call.1} parent=11 // pred_check
          %p286 = pneg %p138
        $region14: #{tpu_custom_call.1} parent=11 // pred_check_branch
          %288 = sbr.rel (%p286) target = $region16
        $region15: #{tpu_custom_call.1} parent=11 // pred_region
          %p289 = scmp.lt.s32.totalorder %s29, 1
          %s290 = scalar_select %p289, %s29, 1
          %s291 = smul.addr %s290, 32
          %s292 = smul.addr %s291, 8
          %s293 = scalar_lea.vmem %s3, %s292
        $region16: #{tpu_custom_call.1} parent=11 // pred_fallthru
          _
        // Predicated region
        $region17: #{tpu_custom_call.1} parent=11 // pred_check
          %p294 = pneg %p159
        $region18: #{tpu_custom_call.1} parent=11 // pred_check_branch
          %296 = sbr.rel (%p294) target = $region20
        $region19: #{tpu_custom_call.1} parent=11 // pred_region
          _
        $region20: #{tpu_custom_call.1} parent=11 // pred_fallthru
          _
        // Predicated region
        $region21: #{tpu_custom_call.1} parent=11 // pred_check
          %p297 = pneg %p180
        $region22: #{tpu_custom_call.1} parent=11 // pred_check_branch
          %299 = sbr.rel (%p297) target = $region24
        $region23: #{tpu_custom_call.1} parent=11 // pred_region
          _
        $region24: #{tpu_custom_call.1} parent=11 // pred_fallthru
          _
        // Predicated region
        $region25: #{tpu_custom_call.1} parent=11 // pred_check
          %p300 = pneg %p201
        $region26: #{tpu_custom_call.1} parent=11 // pred_check_branch
          %302 = sbr.rel (%p300) target = $region28
        $region27: #{tpu_custom_call.1} parent=11 // pred_region
          _
        $region28: #{tpu_custom_call.1} parent=11 // pred_fallthru
          _
        // Predicated region
        $region29: #{tpu_custom_call.1} parent=11 // pred_check
          %p303 = pneg %p222
        $region30: #{tpu_custom_call.1} parent=11 // pred_check_branch
          %305 = sbr.rel (%p303) target = $region32
        $region31: #{tpu_custom_call.1} parent=11 // pred_region
          _
        $region32: #{tpu_custom_call.1} parent=11 // pred_fallthru
          _
        // Predicated region
        $region33: #{tpu_custom_call.1} parent=11 // pred_check
          %p306 = pneg %p243
        $region34: #{tpu_custom_call.1} parent=11 // pred_check_branch
          %308 = sbr.rel (%p306) target = $region36
        $region35: #{tpu_custom_call.1} parent=11 // pred_region
          _
        $region36: #{tpu_custom_call.1} parent=11 // pred_fallthru
          _
      $region12: #{tpu_custom_call.1} parent=5 // pred_fallthru
        _
      %p309 = scmp.lt.s32.totalorder %s20, 4
      // Predicated region
      $region37: #{tpu_custom_call.1} parent=5 // pred_check
        %p310 = pneg %p309
      $region38: #{tpu_custom_call.1} parent=5 // pred_check_branch
        %312 = sbr.rel (%p310) target = $region40
      $region39: #{tpu_custom_call.1} parent=5 // pred_region
        // Predicated region
        $region41: #{tpu_custom_call.1} parent=39 // pred_check
          %p313 = pneg %p54
        $region42: #{tpu_custom_call.1} parent=39 // pred_check_branch
          %315 = sbr.rel (%p313) target = $region44
        $region43: #{tpu_custom_call.1} parent=39 // pred_region
          %s316 = smul.u32 16, %s28
          %p317 = scmp.lt.s32.totalorder %s27, 1
          %s318 = scalar_select %p317, %s27, 1
          %p319 = scmp.lt.s32.totalorder %s316, 31
          %s320 = scalar_select %p319, %s316, 31
          %s321 = smul.addr %s318, 32
          %s322 = sadd.s32 %s320, %s321
          %s323 = smul.addr %s322, 8
          %s324 = scalar_lea.vmem %s0, %s323
          %s325 = smul.u32 16, %s28
        $region44: #{tpu_custom_call.1} parent=39 // pred_fallthru
          _
        // Predicated region
        $region45: #{tpu_custom_call.1} parent=39 // pred_check
          %p326 = pneg %p80
        $region46: #{tpu_custom_call.1} parent=39 // pred_check_branch
          %328 = sbr.rel (%p326) target = $region48
        $region47: #{tpu_custom_call.1} parent=39 // pred_region
          %p329 = scmp.lt.s32.totalorder %s27, 1
          %s330 = scalar_select %p329, %s27, 1
          %s331 = scalar_lea.vmem %s1, %s330
        $region48: #{tpu_custom_call.1} parent=39 // pred_fallthru
          _
        // Predicated region
        $region49: #{tpu_custom_call.1} parent=39 // pred_check
          %p332 = pneg %p106
        $region50: #{tpu_custom_call.1} parent=39 // pred_check_branch
          %334 = sbr.rel (%p332) target = $region52
        $region51: #{tpu_custom_call.1} parent=39 // pred_region
          %p335 = scmp.lt.s32.totalorder %s27, 1
          %s336 = scalar_select %p335, %s27, 1
          %s337 = smul.addr %s336, 4
          %s338 = scalar_lea.vmem %s2, %s337
        $region52: #{tpu_custom_call.1} parent=39 // pred_fallthru
          _
      $region40: #{tpu_custom_call.1} parent=5 // pred_fallthru
        _
      %p339 = scmp.le.s32.totalorder 1, %s20
      %p340 = scmp.lt.s32.totalorder %s20, 5
      %p341 = pnand %p339, %p340
      %p342 = pneg %p341
      // Predicated region
      $region53: #{tpu_custom_call.1} parent=5 // pred_check
        _
      $region54: #{tpu_custom_call.1} parent=5 // pred_check_branch
        %344 = sbr.rel (%p341) target = $region56
      $region55: #{tpu_custom_call.1} parent=5 // pred_region
        %s345 = ssub.s32 %s20, 1
        %s346 = smul.u32 16, %s30
        %p347 = scmp.lt.s32.totalorder %s29, 1
        %s348 = scalar_select %p347, %s29, 1
        %p349 = scmp.lt.s32.totalorder %s346, 31
        %s350 = scalar_select %p349, %s346, 31
        %s351 = smul.addr %s348, 32
        %s352 = sadd.s32 %s350, %s351
        %s353 = smul.addr %s352, 8
        %s354 = scalar_lea.vmem %s0, %s353
        %p355 = pneg %p60
        %p356 = pneg %p57
        %p357 = scmp.lt.s32.totalorder %s29, 1
        %s358 = scalar_select %p357, %s29, 1
        %s359 = scalar_lea.vmem %s1, %s358
        %p360 = pneg %p86
        %p361 = pneg %p83
        %p362 = scmp.lt.s32.totalorder %s29, 1
        %s363 = scalar_select %p362, %s29, 1
        %s364 = smul.addr %s363, 4
        %s365 = scalar_lea.vmem %s2, %s364
        %p366 = pneg %p112
        %p367 = pneg %p109
        %p368 = scmp.lt.s32.totalorder %s29, 1
        %s369 = scalar_select %p368, %s29, 1
        %s370 = smul.addr %s369, 32
        %s371 = smul.addr %s370, 8
        %s372 = scalar_lea.vmem %s3, %s371
        %p373 = pneg %p138
        %p374 = pneg %p135
        %p375 = pneg %p159
        %p376 = pneg %p156
        %p377 = pneg %p180
        %p378 = pneg %p177
        %p379 = pneg %p201
        %p380 = pneg %p198
        %p381 = pneg %p222
        %p382 = pneg %p219
        %p383 = pneg %p243
        %p384 = pneg %p240
        %p385 = pneg %p271
        %p386 = pneg %p268
        %s387 = sand.u32 %s258, 1
        %s388 = scalar_lea.sflag [#allocation4], %s387
        %s389 = sand.u32 %s258, 1
        %s390 = scalar_lea.vmem [#allocation3], %s389
        %s391 = smul.u32 16, %s30
        %p392 = scmp.lt.s32.totalorder %s29, 1
        %s393 = scalar_select %p392, %s29, 1
        %p394 = scmp.lt.s32.totalorder %s391, 31
        %s395 = scalar_select %p394, %s391, 31
        %s396 = smul.addr %s393, 32
        %s397 = sadd.s32 %s395, %s396
        %s398 = smul.addr %s397, 8
        %s399 = scalar_lea.vmem %s0, %s398
        %s400 = smul.u32 16, %s30
        %p401 = scmp.lt.s32.totalorder %s29, 1
        %s402 = scalar_select %p401, %s29, 1
        %s403 = scalar_lea.vmem %s1, %s402
        %p404 = scmp.lt.s32.totalorder %s29, 1
        %s405 = scalar_select %p404, %s29, 1
        %s406 = smul.addr %s405, 4
        %s407 = scalar_lea.vmem %s2, %s406
        %p408 = scmp.lt.s32.totalorder %s29, 1
        %s409 = scalar_select %p408, %s29, 1
        %s410 = smul.addr %s409, 32
        %s411 = smul.addr %s410, 8
        %s412 = scalar_lea.vmem %s3, %s411
        %v413 = vld [vmem:[%s403] sm:$0x1]
        %v414 = vld [vmem:[%s399] sm:$0xff]
        %v415 = vld [vmem:[%s399 + $0x8] sm:$0xff]
        %v416 = vld [vmem:[%s399 + $0x10] sm:$0xff]
        %v417 = vld [vmem:[%s399 + $0x18] sm:$0xff]
        %v418 = vld [vmem:[%s399 + $0x20] sm:$0xff]
        %v419 = vld [vmem:[%s399 + $0x28] sm:$0xff]
        %v420 = vld [vmem:[%s399 + $0x30] sm:$0xff]
        %v421 = vld [vmem:[%s399 + $0x38] sm:$0xff]
        %v422 = vld [vmem:[%s399 + $0x40] sm:$0xff]
        %v423 = vld [vmem:[%s399 + $0x48] sm:$0xff]
        %v424 = vld [vmem:[%s399 + $0x50] sm:$0xff]
        %v425 = vld [vmem:[%s399 + $0x58] sm:$0xff]
        %v426 = vld [vmem:[%s399 + $0x60] sm:$0xff]
        %v427 = vld [vmem:[%s399 + $0x68] sm:$0xff]
        %v428 = vld [vmem:[%s399 + $0x70] sm:$0xff]
        %v429 = vld [vmem:[%s399 + $0x78] sm:$0xff]
        %431 = vset.pattern.permute.xlu0 0
        %432 = vperm.xlu0 %431, %v414
        %v433 = vpop.permute.xlu0 %432
        %436 = vset.pattern.permute.xlu0 0
        %437 = vperm.xlu0 %436, %v415
        %v438 = vpop.permute.xlu0 %437
        %441 = vset.pattern.permute.xlu0 0
        %442 = vperm.xlu0 %441, %v416
        %v443 = vpop.permute.xlu0 %442
        %446 = vset.pattern.permute.xlu0 0
        %447 = vperm.xlu0 %446, %v417
        %v448 = vpop.permute.xlu0 %447
        %451 = vset.pattern.permute.xlu0 0
        %452 = vperm.xlu0 %451, %v418
        %v453 = vpop.permute.xlu0 %452
        %456 = vset.pattern.permute.xlu0 0
        %457 = vperm.xlu0 %456, %v419
        %v458 = vpop.permute.xlu0 %457
        %461 = vset.pattern.permute.xlu0 0
        %462 = vperm.xlu0 %461, %v420
        %v463 = vpop.permute.xlu0 %462
        %466 = vset.pattern.permute.xlu0 0
        %467 = vperm.xlu0 %466, %v421
        %v468 = vpop.permute.xlu0 %467
        %471 = vset.pattern.permute.xlu0 0
        %472 = vperm.xlu0 %471, %v422
        %v473 = vpop.permute.xlu0 %472
        %476 = vset.pattern.permute.xlu0 0
        %477 = vperm.xlu0 %476, %v423
        %v478 = vpop.permute.xlu0 %477
        %481 = vset.pattern.permute.xlu0 0
        %482 = vperm.xlu0 %481, %v424
        %v483 = vpop.permute.xlu0 %482
        %486 = vset.pattern.permute.xlu0 0
        %487 = vperm.xlu0 %486, %v425
        %v488 = vpop.permute.xlu0 %487
        %491 = vset.pattern.permute.xlu0 0
        %492 = vperm.xlu0 %491, %v426
        %v493 = vpop.permute.xlu0 %492
        %496 = vset.pattern.permute.xlu0 0
        %497 = vperm.xlu0 %496, %v427
        %v498 = vpop.permute.xlu0 %497
        %501 = vset.pattern.permute.xlu0 0
        %502 = vperm.xlu0 %501, %v428
        %v503 = vpop.permute.xlu0 %502
        %506 = vset.pattern.permute.xlu0 0
        %507 = vperm.xlu0 %506, %v429
        %v508 = vpop.permute.xlu0 %507
        %v511 = vlaneseq
        %v512 = vshrl.u32 %v511, 7
        %v513 = vsub.s32 0, %v512
        %v514 = vrot.slane %v413, %v513
        %v516 = vmul.f32 %v433, %v514
        %v517 = vmul.f32 %v438, %v514
        %v518 = vmul.f32 %v443, %v514
        %v519 = vmul.f32 %v448, %v514
        %v520 = vmul.f32 %v453, %v514
        %v521 = vmul.f32 %v458, %v514
        %v522 = vmul.f32 %v463, %v514
        %v523 = vmul.f32 %v468, %v514
        %v524 = vmul.f32 %v473, %v514
        %v525 = vmul.f32 %v478, %v514
        %v526 = vmul.f32 %v483, %v514
        %v527 = vmul.f32 %v488, %v514
        %v528 = vmul.f32 %v493, %v514
        %v529 = vmul.f32 %v498, %v514
        %v530 = vmul.f32 %v503, %v514
        %v531 = vmul.f32 %v508, %v514
        %532 = vset.pattern.permute.xlu0 1
        %533 = vperm.xlu0 %532, %v414
        %v534 = vpop.permute.xlu0 %533
        %536 = vset.pattern.permute.xlu0 1
        %537 = vperm.xlu0 %536, %v415
        %v538 = vpop.permute.xlu0 %537
        %540 = vset.pattern.permute.xlu0 1
        %541 = vperm.xlu0 %540, %v416
        %v542 = vpop.permute.xlu0 %541
        %544 = vset.pattern.permute.xlu0 1
        %545 = vperm.xlu0 %544, %v417
        %v546 = vpop.permute.xlu0 %545
        %548 = vset.pattern.permute.xlu0 1
        %549 = vperm.xlu0 %548, %v418
        %v550 = vpop.permute.xlu0 %549
        %552 = vset.pattern.permute.xlu0 1
        %553 = vperm.xlu0 %552, %v419
        %v554 = vpop.permute.xlu0 %553
        %556 = vset.pattern.permute.xlu0 1
        %557 = vperm.xlu0 %556, %v420
        %v558 = vpop.permute.xlu0 %557
        %560 = vset.pattern.permute.xlu0 1
        %561 = vperm.xlu0 %560, %v421
        %v562 = vpop.permute.xlu0 %561
        %564 = vset.pattern.permute.xlu0 1
        %565 = vperm.xlu0 %564, %v422
        %v566 = vpop.permute.xlu0 %565
        %568 = vset.pattern.permute.xlu0 1
        %569 = vperm.xlu0 %568, %v423
        %v570 = vpop.permute.xlu0 %569
        %572 = vset.pattern.permute.xlu0 1
        %573 = vperm.xlu0 %572, %v424
        %v574 = vpop.permute.xlu0 %573
        %576 = vset.pattern.permute.xlu0 1
        %577 = vperm.xlu0 %576, %v425
        %v578 = vpop.permute.xlu0 %577
        %580 = vset.pattern.permute.xlu0 1
        %581 = vperm.xlu0 %580, %v426
        %v582 = vpop.permute.xlu0 %581
        %584 = vset.pattern.permute.xlu0 1
        %585 = vperm.xlu0 %584, %v427
        %v586 = vpop.permute.xlu0 %585
        %588 = vset.pattern.permute.xlu0 1
        %589 = vperm.xlu0 %588, %v428
        %v590 = vpop.permute.xlu0 %589
        %592 = vset.pattern.permute.xlu0 1
        %593 = vperm.xlu0 %592, %v429
        %v594 = vpop.permute.xlu0 %593
        %v596 = vmul.f32 %v534, %v514
        %v597 = vmul.f32 %v538, %v514
        %v598 = vmul.f32 %v542, %v514
        %v599 = vmul.f32 %v546, %v514
        %v600 = vmul.f32 %v550, %v514
        %v601 = vmul.f32 %v554, %v514
        %v602 = vmul.f32 %v558, %v514
        %v603 = vmul.f32 %v562, %v514
        %v604 = vmul.f32 %v566, %v514
        %v605 = vmul.f32 %v570, %v514
        %v606 = vmul.f32 %v574, %v514
        %v607 = vmul.f32 %v578, %v514
        %v608 = vmul.f32 %v582, %v514
        %v609 = vmul.f32 %v586, %v514
        %v610 = vmul.f32 %v590, %v514
        %v611 = vmul.f32 %v594, %v514
        %628 = vrot.lane.b32.xlu0 %v596, 125
        %v629 = vpop.permute.xlu0 %628
        %630 = vrot.lane.b32.xlu0 %v597, 125
        %v631 = vpop.permute.xlu0 %630
        %632 = vrot.lane.b32.xlu0 %v598, 125
        %v633 = vpop.permute.xlu0 %632
        %634 = vrot.lane.b32.xlu0 %v599, 125
        %v635 = vpop.permute.xlu0 %634
        %636 = vrot.lane.b32.xlu0 %v600, 125
        %v637 = vpop.permute.xlu0 %636
        %638 = vrot.lane.b32.xlu0 %v601, 125
        %v639 = vpop.permute.xlu0 %638
        %640 = vrot.lane.b32.xlu0 %v602, 125
        %v641 = vpop.permute.xlu0 %640
        %642 = vrot.lane.b32.xlu0 %v603, 125
        %v643 = vpop.permute.xlu0 %642
        %644 = vrot.lane.b32.xlu0 %v604, 125
        %v645 = vpop.permute.xlu0 %644
        %646 = vrot.lane.b32.xlu0 %v605, 125
        %v647 = vpop.permute.xlu0 %646
        %648 = vrot.lane.b32.xlu0 %v606, 125
        %v649 = vpop.permute.xlu0 %648
        %650 = vrot.lane.b32.xlu0 %v607, 125
        %v651 = vpop.permute.xlu0 %650
        %652 = vrot.lane.b32.xlu0 %v608, 125
        %v653 = vpop.permute.xlu0 %652
        %654 = vrot.lane.b32.xlu0 %v609, 125
        %v655 = vpop.permute.xlu0 %654
        %656 = vrot.lane.b32.xlu0 %v610, 125
        %v657 = vpop.permute.xlu0 %656
        %658 = vrot.lane.b32.xlu0 %v611, 125
        %v659 = vpop.permute.xlu0 %658
        %v676 = vadd.f32 %v516, %v629
        %v677 = vadd.f32 %v517, %v631
        %v678 = vadd.f32 %v518, %v633
        %v679 = vadd.f32 %v519, %v635
        %v680 = vadd.f32 %v520, %v637
        %v681 = vadd.f32 %v521, %v639
        %v682 = vadd.f32 %v522, %v641
        %v683 = vadd.f32 %v523, %v643
        %v684 = vadd.f32 %v524, %v645
        %v685 = vadd.f32 %v525, %v647
        %v686 = vadd.f32 %v526, %v649
        %v687 = vadd.f32 %v527, %v651
        %v688 = vadd.f32 %v528, %v653
        %v689 = vadd.f32 %v529, %v655
        %v690 = vadd.f32 %v530, %v657
        %v691 = vadd.f32 %v531, %v659
        %692 = vset.pattern.permute.xlu0 2
        %693 = vperm.xlu0 %692, %v414
        %v694 = vpop.permute.xlu0 %693
        %696 = vset.pattern.permute.xlu0 2
        %697 = vperm.xlu0 %696, %v415
        %v698 = vpop.permute.xlu0 %697
        %700 = vset.pattern.permute.xlu0 2
        %701 = vperm.xlu0 %700, %v416
        %v702 = vpop.permute.xlu0 %701
        %704 = vset.pattern.permute.xlu0 2
        %705 = vperm.xlu0 %704, %v417
        %v706 = vpop.permute.xlu0 %705
        %708 = vset.pattern.permute.xlu0 2
        %709 = vperm.xlu0 %708, %v418
        %v710 = vpop.permute.xlu0 %709
        %712 = vset.pattern.permute.xlu0 2
        %713 = vperm.xlu0 %712, %v419
        %v714 = vpop.permute.xlu0 %713
        %716 = vset.pattern.permute.xlu0 2
        %717 = vperm.xlu0 %716, %v420
        %v718 = vpop.permute.xlu0 %717
        %720 = vset.pattern.permute.xlu0 2
        %721 = vperm.xlu0 %720, %v421
        %v722 = vpop.permute.xlu0 %721
        %724 = vset.pattern.permute.xlu0 2
        %725 = vperm.xlu0 %724, %v422
        %v726 = vpop.permute.xlu0 %725
        %728 = vset.pattern.permute.xlu0 2
        %729 = vperm.xlu0 %728, %v423
        %v730 = vpop.permute.xlu0 %729
        %732 = vset.pattern.permute.xlu0 2
        %733 = vperm.xlu0 %732, %v424
        %v734 = vpop.permute.xlu0 %733
        %736 = vset.pattern.permute.xlu0 2
        %737 = vperm.xlu0 %736, %v425
        %v738 = vpop.permute.xlu0 %737
        %740 = vset.pattern.permute.xlu0 2
        %741 = vperm.xlu0 %740, %v426
        %v742 = vpop.permute.xlu0 %741
        %744 = vset.pattern.permute.xlu0 2
        %745 = vperm.xlu0 %744, %v427
        %v746 = vpop.permute.xlu0 %745
        %748 = vset.pattern.permute.xlu0 2
        %749 = vperm.xlu0 %748, %v428
        %v750 = vpop.permute.xlu0 %749
        %752 = vset.pattern.permute.xlu0 2
        %753 = vperm.xlu0 %752, %v429
        %v754 = vpop.permute.xlu0 %753
        %v756 = vmul.f32 %v694, %v514
        %v757 = vmul.f32 %v698, %v514
        %v758 = vmul.f32 %v702, %v514
        %v759 = vmul.f32 %v706, %v514
        %v760 = vmul.f32 %v710, %v514
        %v761 = vmul.f32 %v714, %v514
        %v762 = vmul.f32 %v718, %v514
        %v763 = vmul.f32 %v722, %v514
        %v764 = vmul.f32 %v726, %v514
        %v765 = vmul.f32 %v730, %v514
        %v766 = vmul.f32 %v734, %v514
        %v767 = vmul.f32 %v738, %v514
        %v768 = vmul.f32 %v742, %v514
        %v769 = vmul.f32 %v746, %v514
        %v770 = vmul.f32 %v750, %v514
        %v771 = vmul.f32 %v754, %v514
        %788 = vrot.lane.b32.xlu0 %v756, 122
        %v789 = vpop.permute.xlu0 %788
        %790 = vrot.lane.b32.xlu0 %v757, 122
        %v791 = vpop.permute.xlu0 %790
        %792 = vrot.lane.b32.xlu0 %v758, 122
        %v793 = vpop.permute.xlu0 %792
        %794 = vrot.lane.b32.xlu0 %v759, 122
        %v795 = vpop.permute.xlu0 %794
        %796 = vrot.lane.b32.xlu0 %v760, 122
        %v797 = vpop.permute.xlu0 %796
        %798 = vrot.lane.b32.xlu0 %v761, 122
        %v799 = vpop.permute.xlu0 %798
        %800 = vrot.lane.b32.xlu0 %v762, 122
        %v801 = vpop.permute.xlu0 %800
        %802 = vrot.lane.b32.xlu0 %v763, 122
        %v803 = vpop.permute.xlu0 %802
        %804 = vrot.lane.b32.xlu0 %v764, 122
        %v805 = vpop.permute.xlu0 %804
        %806 = vrot.lane.b32.xlu0 %v765, 122
        %v807 = vpop.permute.xlu0 %806
        %808 = vrot.lane.b32.xlu0 %v766, 122
        %v809 = vpop.permute.xlu0 %808
        %810 = vrot.lane.b32.xlu0 %v767, 122
        %v811 = vpop.permute.xlu0 %810
        %812 = vrot.lane.b32.xlu0 %v768, 122
        %v813 = vpop.permute.xlu0 %812
        %814 = vrot.lane.b32.xlu0 %v769, 122
        %v815 = vpop.permute.xlu0 %814
        %816 = vrot.lane.b32.xlu0 %v770, 122
        %v817 = vpop.permute.xlu0 %816
        %818 = vrot.lane.b32.xlu0 %v771, 122
        %v819 = vpop.permute.xlu0 %818
        %v836 = vadd.f32 %v676, %v789
        %v837 = vadd.f32 %v677, %v791
        %v838 = vadd.f32 %v678, %v793
        %v839 = vadd.f32 %v679, %v795
        %v840 = vadd.f32 %v680, %v797
        %v841 = vadd.f32 %v681, %v799
        %v842 = vadd.f32 %v682, %v801
        %v843 = vadd.f32 %v683, %v803
        %v844 = vadd.f32 %v684, %v805
        %v845 = vadd.f32 %v685, %v807
        %v846 = vadd.f32 %v686, %v809
        %v847 = vadd.f32 %v687, %v811
        %v848 = vadd.f32 %v688, %v813
        %v849 = vadd.f32 %v689, %v815
        %v850 = vadd.f32 %v690, %v817
        %v851 = vadd.f32 %v691, %v819
        %852 = vrot.lane.b32.xlu0 %v514, 119
        %v853 = vpop.permute.xlu0 %852
        %v855 = vadd.f32 %v836, %v853
        %v856 = vadd.f32 %v837, %v853
        %v857 = vadd.f32 %v838, %v853
        %v858 = vadd.f32 %v839, %v853
        %v859 = vadd.f32 %v840, %v853
        %v860 = vadd.f32 %v841, %v853
        %v861 = vadd.f32 %v842, %v853
        %v862 = vadd.f32 %v843, %v853
        %v863 = vadd.f32 %v844, %v853
        %v864 = vadd.f32 %v845, %v853
        %v865 = vadd.f32 %v846, %v853
        %v866 = vadd.f32 %v847, %v853
        %v867 = vadd.f32 %v848, %v853
        %v868 = vadd.f32 %v849, %v853
        %v869 = vadd.f32 %v850, %v853
        %v870 = vadd.f32 %v851, %v853
        %v871 = vand.u32 2147483647, %v855
        %v872 = vand.u32 2147483647, %v856
        %v873 = vand.u32 2147483647, %v857
        %v874 = vand.u32 2147483647, %v858
        %v875 = vand.u32 2147483647, %v859
        %v876 = vand.u32 2147483647, %v860
        %v877 = vand.u32 2147483647, %v861
        %v878 = vand.u32 2147483647, %v862
        %v879 = vand.u32 2147483647, %v863
        %v880 = vand.u32 2147483647, %v864
        %v881 = vand.u32 2147483647, %v865
        %v882 = vand.u32 2147483647, %v866
        %v883 = vand.u32 2147483647, %v867
        %v884 = vand.u32 2147483647, %v868
        %v885 = vand.u32 2147483647, %v869
        %v886 = vand.u32 2147483647, %v870
        %v887 = vadd.f32 %v871, 1e-05
        %v888 = vadd.f32 %v872, 1e-05
        %v889 = vadd.f32 %v873, 1e-05
        %v890 = vadd.f32 %v874, 1e-05
        %v891 = vadd.f32 %v875, 1e-05
        %v892 = vadd.f32 %v876, 1e-05
        %v893 = vadd.f32 %v877, 1e-05
        %v894 = vadd.f32 %v878, 1e-05
        %v895 = vadd.f32 %v879, 1e-05
        %v896 = vadd.f32 %v880, 1e-05
        %v897 = vadd.f32 %v881, 1e-05
        %v898 = vadd.f32 %v882, 1e-05
        %v899 = vadd.f32 %v883, 1e-05
        %v900 = vadd.f32 %v884, 1e-05
        %v901 = vadd.f32 %v885, 1e-05
        %v902 = vadd.f32 %v886, 1e-05
        %v903 = vmul.f32 %v855, 2.0
        %v904 = vmul.f32 %v856, 2.0
        %v905 = vmul.f32 %v857, 2.0
        %v906 = vmul.f32 %v858, 2.0
        %v907 = vmul.f32 %v859, 2.0
        %v908 = vmul.f32 %v860, 2.0
        %v909 = vmul.f32 %v861, 2.0
        %v910 = vmul.f32 %v862, 2.0
        %v911 = vmul.f32 %v863, 2.0
        %v912 = vmul.f32 %v864, 2.0
        %v913 = vmul.f32 %v865, 2.0
        %v914 = vmul.f32 %v866, 2.0
        %v915 = vmul.f32 %v867, 2.0
        %v916 = vmul.f32 %v868, 2.0
        %v917 = vmul.f32 %v869, 2.0
        %v918 = vmul.f32 %v870, 2.0
        %935 = vrot.lane.b32.xlu0 %v887, 126
        %v936 = vpop.permute.xlu0 %935
        %937 = vrot.lane.b32.xlu0 %v888, 126
        %v938 = vpop.permute.xlu0 %937
        %939 = vrot.lane.b32.xlu0 %v889, 126
        %v940 = vpop.permute.xlu0 %939
        %941 = vrot.lane.b32.xlu0 %v890, 126
        %v942 = vpop.permute.xlu0 %941
        %943 = vrot.lane.b32.xlu0 %v891, 126
        %v944 = vpop.permute.xlu0 %943
        %945 = vrot.lane.b32.xlu0 %v892, 126
        %v946 = vpop.permute.xlu0 %945
        %947 = vrot.lane.b32.xlu0 %v893, 126
        %v948 = vpop.permute.xlu0 %947
        %949 = vrot.lane.b32.xlu0 %v894, 126
        %v950 = vpop.permute.xlu0 %949
        %951 = vrot.lane.b32.xlu0 %v895, 126
        %v952 = vpop.permute.xlu0 %951
        %953 = vrot.lane.b32.xlu0 %v896, 126
        %v954 = vpop.permute.xlu0 %953
        %955 = vrot.lane.b32.xlu0 %v897, 126
        %v956 = vpop.permute.xlu0 %955
        %957 = vrot.lane.b32.xlu0 %v898, 126
        %v958 = vpop.permute.xlu0 %957
        %959 = vrot.lane.b32.xlu0 %v899, 126
        %v960 = vpop.permute.xlu0 %959
        %961 = vrot.lane.b32.xlu0 %v900, 126
        %v962 = vpop.permute.xlu0 %961
        %963 = vrot.lane.b32.xlu0 %v901, 126
        %v964 = vpop.permute.xlu0 %963
        %965 = vrot.lane.b32.xlu0 %v902, 126
        %v966 = vpop.permute.xlu0 %965
        %v983 = vrcp.pop %v936
        %v984 = vmul.f32 %v903, %v983
        %v985 = vrcp.pop %v938
        %v986 = vmul.f32 %v904, %v985
        %v987 = vrcp.pop %v940
        %v988 = vmul.f32 %v905, %v987
        %v989 = vrcp.pop %v942
        %v990 = vmul.f32 %v906, %v989
        %v991 = vrcp.pop %v944
        %v992 = vmul.f32 %v907, %v991
        %v993 = vrcp.pop %v946
        %v994 = vmul.f32 %v908, %v993
        %v995 = vrcp.pop %v948
        %v996 = vmul.f32 %v909, %v995
        %v997 = vrcp.pop %v950
        %v998 = vmul.f32 %v910, %v997
        %v999 = vrcp.pop %v952
        %v1000 = vmul.f32 %v911, %v999
        %v1001 = vrcp.pop %v954
        %v1002 = vmul.f32 %v912, %v1001
        %v1003 = vrcp.pop %v956
        %v1004 = vmul.f32 %v913, %v1003
        %v1005 = vrcp.pop %v958
        %v1006 = vmul.f32 %v914, %v1005
        %v1007 = vrcp.pop %v960
        %v1008 = vmul.f32 %v915, %v1007
        %v1009 = vrcp.pop %v962
        %v1010 = vmul.f32 %v916, %v1009
        %v1011 = vrcp.pop %v964
        %v1012 = vmul.f32 %v917, %v1011
        %v1013 = vrcp.pop %v966
        %v1014 = vmul.f32 %v918, %v1013
        %1015 = vrot.lane.b32.xlu0 %v887, 127
        %v1016 = vpop.permute.xlu0 %1015
        %1017 = vrot.lane.b32.xlu0 %v888, 127
        %v1018 = vpop.permute.xlu0 %1017
        %1019 = vrot.lane.b32.xlu0 %v889, 127
        %v1020 = vpop.permute.xlu0 %1019
        %1021 = vrot.lane.b32.xlu0 %v890, 127
        %v1022 = vpop.permute.xlu0 %1021
        %1023 = vrot.lane.b32.xlu0 %v891, 127
        %v1024 = vpop.permute.xlu0 %1023
        %1025 = vrot.lane.b32.xlu0 %v892, 127
        %v1026 = vpop.permute.xlu0 %1025
        %1027 = vrot.lane.b32.xlu0 %v893, 127
        %v1028 = vpop.permute.xlu0 %1027
        %1029 = vrot.lane.b32.xlu0 %v894, 127
        %v1030 = vpop.permute.xlu0 %1029
        %1031 = vrot.lane.b32.xlu0 %v895, 127
        %v1032 = vpop.permute.xlu0 %1031
        %1033 = vrot.lane.b32.xlu0 %v896, 127
        %v1034 = vpop.permute.xlu0 %1033
        %1035 = vrot.lane.b32.xlu0 %v897, 127
        %v1036 = vpop.permute.xlu0 %1035
        %1037 = vrot.lane.b32.xlu0 %v898, 127
        %v1038 = vpop.permute.xlu0 %1037
        %1039 = vrot.lane.b32.xlu0 %v899, 127
        %v1040 = vpop.permute.xlu0 %1039
        %1041 = vrot.lane.b32.xlu0 %v900, 127
        %v1042 = vpop.permute.xlu0 %1041
        %1043 = vrot.lane.b32.xlu0 %v901, 127
        %v1044 = vpop.permute.xlu0 %1043
        %1045 = vrot.lane.b32.xlu0 %v902, 127
        %v1046 = vpop.permute.xlu0 %1045
        %v1063 = vrcp.pop %v1016
        %v1064 = vmul.f32 %v903, %v1063
        %v1065 = vrcp.pop %v1018
        %v1066 = vmul.f32 %v904, %v1065
        %v1067 = vrcp.pop %v1020
        %v1068 = vmul.f32 %v905, %v1067
        %v1069 = vrcp.pop %v1022
        %v1070 = vmul.f32 %v906, %v1069
        %v1071 = vrcp.pop %v1024
        %v1072 = vmul.f32 %v907, %v1071
        %v1073 = vrcp.pop %v1026
        %v1074 = vmul.f32 %v908, %v1073
        %v1075 = vrcp.pop %v1028
        %v1076 = vmul.f32 %v909, %v1075
        %v1077 = vrcp.pop %v1030
        %v1078 = vmul.f32 %v910, %v1077
        %v1079 = vrcp.pop %v1032
        %v1080 = vmul.f32 %v911, %v1079
        %v1081 = vrcp.pop %v1034
        %v1082 = vmul.f32 %v912, %v1081
        %v1083 = vrcp.pop %v1036
        %v1084 = vmul.f32 %v913, %v1083
        %v1085 = vrcp.pop %v1038
        %v1086 = vmul.f32 %v914, %v1085
        %v1087 = vrcp.pop %v1040
        %v1088 = vmul.f32 %v915, %v1087
        %v1089 = vrcp.pop %v1042
        %v1090 = vmul.f32 %v916, %v1089
        %v1091 = vrcp.pop %v1044
        %v1092 = vmul.f32 %v917, %v1091
        %v1093 = vrcp.pop %v1046
        %v1094 = vmul.f32 %v918, %v1093
        %v1095 = vadd.f32 %v984, 1.0
        %v1096 = vadd.f32 %v986, 1.0
        %v1097 = vadd.f32 %v988, 1.0
        %v1098 = vadd.f32 %v990, 1.0
        %v1099 = vadd.f32 %v992, 1.0
        %v1100 = vadd.f32 %v994, 1.0
        %v1101 = vadd.f32 %v996, 1.0
        %v1102 = vadd.f32 %v998, 1.0
        %v1103 = vadd.f32 %v1000, 1.0
        %v1104 = vadd.f32 %v1002, 1.0
        %v1105 = vadd.f32 %v1004, 1.0
        %v1106 = vadd.f32 %v1006, 1.0
        %v1107 = vadd.f32 %v1008, 1.0
        %v1108 = vadd.f32 %v1010, 1.0
        %v1109 = vadd.f32 %v1012, 1.0
        %v1110 = vadd.f32 %v1014, 1.0
        %v1111 = vmul.f32 %v1095, 16.0
        %v1112 = vmul.f32 %v1096, 16.0
        %v1113 = vmul.f32 %v1097, 16.0
        %v1114 = vmul.f32 %v1098, 16.0
        %v1115 = vmul.f32 %v1099, 16.0
        %v1116 = vmul.f32 %v1100, 16.0
        %v1117 = vmul.f32 %v1101, 16.0
        %v1118 = vmul.f32 %v1102, 16.0
        %v1119 = vmul.f32 %v1103, 16.0
        %v1120 = vmul.f32 %v1104, 16.0
        %v1121 = vmul.f32 %v1105, 16.0
        %v1122 = vmul.f32 %v1106, 16.0
        %v1123 = vmul.f32 %v1107, 16.0
        %v1124 = vmul.f32 %v1108, 16.0
        %v1125 = vmul.f32 %v1109, 16.0
        %v1126 = vmul.f32 %v1110, 16.0
        %v1127 = vsub.f32 %v1111, 1.0
        %v1128 = vsub.f32 %v1112, 1.0
        %v1129 = vsub.f32 %v1113, 1.0
        %v1130 = vsub.f32 %v1114, 1.0
        %v1131 = vsub.f32 %v1115, 1.0
        %v1132 = vsub.f32 %v1116, 1.0
        %v1133 = vsub.f32 %v1117, 1.0
        %v1134 = vsub.f32 %v1118, 1.0
        %v1135 = vsub.f32 %v1119, 1.0
        %v1136 = vsub.f32 %v1120, 1.0
        %v1137 = vsub.f32 %v1121, 1.0
        %v1138 = vsub.f32 %v1122, 1.0
        %v1139 = vsub.f32 %v1123, 1.0
        %v1140 = vsub.f32 %v1124, 1.0
        %v1141 = vsub.f32 %v1125, 1.0
        %v1142 = vsub.f32 %v1126, 1.0
        %v1143 = vmul.f32 %v1127, 0.5
        %v1144 = vmul.f32 %v1128, 0.5
        %v1145 = vmul.f32 %v1129, 0.5
        %v1146 = vmul.f32 %v1130, 0.5
        %v1147 = vmul.f32 %v1131, 0.5
        %v1148 = vmul.f32 %v1132, 0.5
        %v1149 = vmul.f32 %v1133, 0.5
        %v1150 = vmul.f32 %v1134, 0.5
        %v1151 = vmul.f32 %v1135, 0.5
        %v1152 = vmul.f32 %v1136, 0.5
        %v1153 = vmul.f32 %v1137, 0.5
        %v1154 = vmul.f32 %v1138, 0.5
        %v1155 = vmul.f32 %v1139, 0.5
        %v1156 = vmul.f32 %v1140, 0.5
        %v1157 = vmul.f32 %v1141, 0.5
        %v1158 = vmul.f32 %v1142, 0.5
        %v1159 = vmax.f32 %v1143, 0.0
        %v1160 = vmax.f32 %v1144, 0.0
        %v1161 = vmax.f32 %v1145, 0.0
        %v1162 = vmax.f32 %v1146, 0.0
        %v1163 = vmax.f32 %v1147, 0.0
        %v1164 = vmax.f32 %v1148, 0.0
        %v1165 = vmax.f32 %v1149, 0.0
        %v1166 = vmax.f32 %v1150, 0.0
        %v1167 = vmax.f32 %v1151, 0.0
        %v1168 = vmax.f32 %v1152, 0.0
        %v1169 = vmax.f32 %v1153, 0.0
        %v1170 = vmax.f32 %v1154, 0.0
        %v1171 = vmax.f32 %v1155, 0.0
        %v1172 = vmax.f32 %v1156, 0.0
        %v1173 = vmax.f32 %v1157, 0.0
        %v1174 = vmax.f32 %v1158, 0.0
        %v1175 = vmin.f32 %v1159, 15.0
        %v1176 = vmin.f32 %v1160, 15.0
        %v1177 = vmin.f32 %v1161, 15.0
        %v1178 = vmin.f32 %v1162, 15.0
        %v1179 = vmin.f32 %v1163, 15.0
        %v1180 = vmin.f32 %v1164, 15.0
        %v1181 = vmin.f32 %v1165, 15.0
        %v1182 = vmin.f32 %v1166, 15.0
        %v1183 = vmin.f32 %v1167, 15.0
        %v1184 = vmin.f32 %v1168, 15.0
        %v1185 = vmin.f32 %v1169, 15.0
        %v1186 = vmin.f32 %v1170, 15.0
        %v1187 = vmin.f32 %v1171, 15.0
        %v1188 = vmin.f32 %v1172, 15.0
        %v1189 = vmin.f32 %v1173, 15.0
        %v1190 = vmin.f32 %v1174, 15.0
        %v1191 = vadd.f32 %v1064, 1.0
        %v1192 = vadd.f32 %v1066, 1.0
        %v1193 = vadd.f32 %v1068, 1.0
        %v1194 = vadd.f32 %v1070, 1.0
        %v1195 = vadd.f32 %v1072, 1.0
        %v1196 = vadd.f32 %v1074, 1.0
        %v1197 = vadd.f32 %v1076, 1.0
        %v1198 = vadd.f32 %v1078, 1.0
        %v1199 = vadd.f32 %v1080, 1.0
        %v1200 = vadd.f32 %v1082, 1.0
        %v1201 = vadd.f32 %v1084, 1.0
        %v1202 = vadd.f32 %v1086, 1.0
        %v1203 = vadd.f32 %v1088, 1.0
        %v1204 = vadd.f32 %v1090, 1.0
        %v1205 = vadd.f32 %v1092, 1.0
        %v1206 = vadd.f32 %v1094, 1.0
        %v1207 = vmul.f32 %v1191, 16.0
        %v1208 = vmul.f32 %v1192, 16.0
        %v1209 = vmul.f32 %v1193, 16.0
        %v1210 = vmul.f32 %v1194, 16.0
        %v1211 = vmul.f32 %v1195, 16.0
        %v1212 = vmul.f32 %v1196, 16.0
        %v1213 = vmul.f32 %v1197, 16.0
        %v1214 = vmul.f32 %v1198, 16.0
        %v1215 = vmul.f32 %v1199, 16.0
        %v1216 = vmul.f32 %v1200, 16.0
        %v1217 = vmul.f32 %v1201, 16.0
        %v1218 = vmul.f32 %v1202, 16.0
        %v1219 = vmul.f32 %v1203, 16.0
        %v1220 = vmul.f32 %v1204, 16.0
        %v1221 = vmul.f32 %v1205, 16.0
        %v1222 = vmul.f32 %v1206, 16.0
        %v1223 = vsub.f32 %v1207, 1.0
        %v1224 = vsub.f32 %v1208, 1.0
        %v1225 = vsub.f32 %v1209, 1.0
        %v1226 = vsub.f32 %v1210, 1.0
        %v1227 = vsub.f32 %v1211, 1.0
        %v1228 = vsub.f32 %v1212, 1.0
        %v1229 = vsub.f32 %v1213, 1.0
        %v1230 = vsub.f32 %v1214, 1.0
        %v1231 = vsub.f32 %v1215, 1.0
        %v1232 = vsub.f32 %v1216, 1.0
        %v1233 = vsub.f32 %v1217, 1.0
        %v1234 = vsub.f32 %v1218, 1.0
        %v1235 = vsub.f32 %v1219, 1.0
        %v1236 = vsub.f32 %v1220, 1.0
        %v1237 = vsub.f32 %v1221, 1.0
        %v1238 = vsub.f32 %v1222, 1.0
        %v1239 = vmul.f32 %v1223, 0.5
        %v1240 = vmul.f32 %v1224, 0.5
        %v1241 = vmul.f32 %v1225, 0.5
        %v1242 = vmul.f32 %v1226, 0.5
        %v1243 = vmul.f32 %v1227, 0.5
        %v1244 = vmul.f32 %v1228, 0.5
        %v1245 = vmul.f32 %v1229, 0.5
        %v1246 = vmul.f32 %v1230, 0.5
        %v1247 = vmul.f32 %v1231, 0.5
        %v1248 = vmul.f32 %v1232, 0.5
        %v1249 = vmul.f32 %v1233, 0.5
        %v1250 = vmul.f32 %v1234, 0.5
        %v1251 = vmul.f32 %v1235, 0.5
        %v1252 = vmul.f32 %v1236, 0.5
        %v1253 = vmul.f32 %v1237, 0.5
        %v1254 = vmul.f32 %v1238, 0.5
        %v1255 = vmax.f32 %v1239, 0.0
        %v1256 = vmax.f32 %v1240, 0.0
        %v1257 = vmax.f32 %v1241, 0.0
        %v1258 = vmax.f32 %v1242, 0.0
        %v1259 = vmax.f32 %v1243, 0.0
        %v1260 = vmax.f32 %v1244, 0.0
        %v1261 = vmax.f32 %v1245, 0.0
        %v1262 = vmax.f32 %v1246, 0.0
        %v1263 = vmax.f32 %v1247, 0.0
        %v1264 = vmax.f32 %v1248, 0.0
        %v1265 = vmax.f32 %v1249, 0.0
        %v1266 = vmax.f32 %v1250, 0.0
        %v1267 = vmax.f32 %v1251, 0.0
        %v1268 = vmax.f32 %v1252, 0.0
        %v1269 = vmax.f32 %v1253, 0.0
        %v1270 = vmax.f32 %v1254, 0.0
        %v1271 = vmin.f32 %v1255, 15.0
        %v1272 = vmin.f32 %v1256, 15.0
        %v1273 = vmin.f32 %v1257, 15.0
        %v1274 = vmin.f32 %v1258, 15.0
        %v1275 = vmin.f32 %v1259, 15.0
        %v1276 = vmin.f32 %v1260, 15.0
        %v1277 = vmin.f32 %v1261, 15.0
        %v1278 = vmin.f32 %v1262, 15.0
        %v1279 = vmin.f32 %v1263, 15.0
        %v1280 = vmin.f32 %v1264, 15.0
        %v1281 = vmin.f32 %v1265, 15.0
        %v1282 = vmin.f32 %v1266, 15.0
        %v1283 = vmin.f32 %v1267, 15.0
        %v1284 = vmin.f32 %v1268, 15.0
        %v1285 = vmin.f32 %v1269, 15.0
        %v1286 = vmin.f32 %v1270, 15.0
        %v1287 = vfloor.f32 %v1175
        %v1288 = vfloor.f32 %v1176
        %v1289 = vfloor.f32 %v1177
        %v1290 = vfloor.f32 %v1178
        %v1291 = vfloor.f32 %v1179
        %v1292 = vfloor.f32 %v1180
        %v1293 = vfloor.f32 %v1181
        %v1294 = vfloor.f32 %v1182
        %v1295 = vfloor.f32 %v1183
        %v1296 = vfloor.f32 %v1184
        %v1297 = vfloor.f32 %v1185
        %v1298 = vfloor.f32 %v1186
        %v1299 = vfloor.f32 %v1187
        %v1300 = vfloor.f32 %v1188
        %v1301 = vfloor.f32 %v1189
        %v1302 = vfloor.f32 %v1190
        %v1303 = vfloor.f32 %v1271
        %v1304 = vfloor.f32 %v1272
        %v1305 = vfloor.f32 %v1273
        %v1306 = vfloor.f32 %v1274
        %v1307 = vfloor.f32 %v1275
        %v1308 = vfloor.f32 %v1276
        %v1309 = vfloor.f32 %v1277
        %v1310 = vfloor.f32 %v1278
        %v1311 = vfloor.f32 %v1279
        %v1312 = vfloor.f32 %v1280
        %v1313 = vfloor.f32 %v1281
        %v1314 = vfloor.f32 %v1282
        %v1315 = vfloor.f32 %v1283
        %v1316 = vfloor.f32 %v1284
        %v1317 = vfloor.f32 %v1285
        %v1318 = vfloor.f32 %v1286
        %v1319 = vsub.f32 %v1175, %v1287
        %v1320 = vsub.f32 %v1176, %v1288
        %v1321 = vsub.f32 %v1177, %v1289
        %v1322 = vsub.f32 %v1178, %v1290
        %v1323 = vsub.f32 %v1179, %v1291
        %v1324 = vsub.f32 %v1180, %v1292
        %v1325 = vsub.f32 %v1181, %v1293
        %v1326 = vsub.f32 %v1182, %v1294
        %v1327 = vsub.f32 %v1183, %v1295
        %v1328 = vsub.f32 %v1184, %v1296
        %v1329 = vsub.f32 %v1185, %v1297
        %v1330 = vsub.f32 %v1186, %v1298
        %v1331 = vsub.f32 %v1187, %v1299
        %v1332 = vsub.f32 %v1188, %v1300
        %v1333 = vsub.f32 %v1189, %v1301
        %v1334 = vsub.f32 %v1190, %v1302
        %v1335 = vsub.f32 %v1271, %v1303
        %v1336 = vsub.f32 %v1272, %v1304
        %v1337 = vsub.f32 %v1273, %v1305
        %v1338 = vsub.f32 %v1274, %v1306
        %v1339 = vsub.f32 %v1275, %v1307
        %v1340 = vsub.f32 %v1276, %v1308
        %v1341 = vsub.f32 %v1277, %v1309
        %v1342 = vsub.f32 %v1278, %v1310
        %v1343 = vsub.f32 %v1279, %v1311
        %v1344 = vsub.f32 %v1280, %v1312
        %v1345 = vsub.f32 %v1281, %v1313
        %v1346 = vsub.f32 %v1282, %v1314
        %v1347 = vsub.f32 %v1283, %v1315
        %v1348 = vsub.f32 %v1284, %v1316
        %v1349 = vsub.f32 %v1285, %v1317
        %v1350 = vsub.f32 %v1286, %v1318
        %v1351 = vcvt.f32.s32.to.zero.pseudo %v1287
        %v1352 = vcvt.f32.s32.to.zero.pseudo %v1288
        %v1353 = vcvt.f32.s32.to.zero.pseudo %v1289
        %v1354 = vcvt.f32.s32.to.zero.pseudo %v1290
        %v1355 = vcvt.f32.s32.to.zero.pseudo %v1291
        %v1356 = vcvt.f32.s32.to.zero.pseudo %v1292
        %v1357 = vcvt.f32.s32.to.zero.pseudo %v1293
        %v1358 = vcvt.f32.s32.to.zero.pseudo %v1294
        %v1359 = vcvt.f32.s32.to.zero.pseudo %v1295
        %v1360 = vcvt.f32.s32.to.zero.pseudo %v1296
        %v1361 = vcvt.f32.s32.to.zero.pseudo %v1297
        %v1362 = vcvt.f32.s32.to.zero.pseudo %v1298
        %v1363 = vcvt.f32.s32.to.zero.pseudo %v1299
        %v1364 = vcvt.f32.s32.to.zero.pseudo %v1300
        %v1365 = vcvt.f32.s32.to.zero.pseudo %v1301
        %v1366 = vcvt.f32.s32.to.zero.pseudo %v1302
        %v1367 = vcvt.f32.s32.to.zero.pseudo %v1303
        %v1368 = vcvt.f32.s32.to.zero.pseudo %v1304
        %v1369 = vcvt.f32.s32.to.zero.pseudo %v1305
        %v1370 = vcvt.f32.s32.to.zero.pseudo %v1306
        %v1371 = vcvt.f32.s32.to.zero.pseudo %v1307
        %v1372 = vcvt.f32.s32.to.zero.pseudo %v1308
        %v1373 = vcvt.f32.s32.to.zero.pseudo %v1309
        %v1374 = vcvt.f32.s32.to.zero.pseudo %v1310
        %v1375 = vcvt.f32.s32.to.zero.pseudo %v1311
        %v1376 = vcvt.f32.s32.to.zero.pseudo %v1312
        %v1377 = vcvt.f32.s32.to.zero.pseudo %v1313
        %v1378 = vcvt.f32.s32.to.zero.pseudo %v1314
        %v1379 = vcvt.f32.s32.to.zero.pseudo %v1315
        %v1380 = vcvt.f32.s32.to.zero.pseudo %v1316
        %v1381 = vcvt.f32.s32.to.zero.pseudo %v1317
        %v1382 = vcvt.f32.s32.to.zero.pseudo %v1318
        %v1383 = vadd.s32 %v1351, 1
        %v1384 = vadd.s32 %v1352, 1
        %v1385 = vadd.s32 %v1353, 1
        %v1386 = vadd.s32 %v1354, 1
        %v1387 = vadd.s32 %v1355, 1
        %v1388 = vadd.s32 %v1356, 1
        %v1389 = vadd.s32 %v1357, 1
        %v1390 = vadd.s32 %v1358, 1
        %v1391 = vadd.s32 %v1359, 1
        %v1392 = vadd.s32 %v1360, 1
        %v1393 = vadd.s32 %v1361, 1
        %v1394 = vadd.s32 %v1362, 1
        %v1395 = vadd.s32 %v1363, 1
        %v1396 = vadd.s32 %v1364, 1
        %v1397 = vadd.s32 %v1365, 1
        %v1398 = vadd.s32 %v1366, 1
        %vm1399 = vcmp.lt.s32.totalorder %v1383, 15
        %v1400 = vsel %vm1399, %v1383, 15
        %vm1401 = vcmp.lt.s32.totalorder %v1384, 15
        %v1402 = vsel %vm1401, %v1384, 15
        %vm1403 = vcmp.lt.s32.totalorder %v1385, 15
        %v1404 = vsel %vm1403, %v1385, 15
        %vm1405 = vcmp.lt.s32.totalorder %v1386, 15
        %v1406 = vsel %vm1405, %v1386, 15
        %vm1407 = vcmp.lt.s32.totalorder %v1387, 15
        %v1408 = vsel %vm1407, %v1387, 15
        %vm1409 = vcmp.lt.s32.totalorder %v1388, 15
        %v1410 = vsel %vm1409, %v1388, 15
        %vm1411 = vcmp.lt.s32.totalorder %v1389, 15
        %v1412 = vsel %vm1411, %v1389, 15
        %vm1413 = vcmp.lt.s32.totalorder %v1390, 15
        %v1414 = vsel %vm1413, %v1390, 15
        %vm1415 = vcmp.lt.s32.totalorder %v1391, 15
        %v1416 = vsel %vm1415, %v1391, 15
        %vm1417 = vcmp.lt.s32.totalorder %v1392, 15
        %v1418 = vsel %vm1417, %v1392, 15
        %vm1419 = vcmp.lt.s32.totalorder %v1393, 15
        %v1420 = vsel %vm1419, %v1393, 15
        %vm1421 = vcmp.lt.s32.totalorder %v1394, 15
        %v1422 = vsel %vm1421, %v1394, 15
        %vm1423 = vcmp.lt.s32.totalorder %v1395, 15
        %v1424 = vsel %vm1423, %v1395, 15
        %vm1425 = vcmp.lt.s32.totalorder %v1396, 15
        %v1426 = vsel %vm1425, %v1396, 15
        %vm1427 = vcmp.lt.s32.totalorder %v1397, 15
        %v1428 = vsel %vm1427, %v1397, 15
        %vm1429 = vcmp.lt.s32.totalorder %v1398, 15
        %v1430 = vsel %vm1429, %v1398, 15
        %v1431 = vadd.s32 %v1367, 1
        %v1432 = vadd.s32 %v1368, 1
        %v1433 = vadd.s32 %v1369, 1
        %v1434 = vadd.s32 %v1370, 1
        %v1435 = vadd.s32 %v1371, 1
        %v1436 = vadd.s32 %v1372, 1
        %v1437 = vadd.s32 %v1373, 1
        %v1438 = vadd.s32 %v1374, 1
        %v1439 = vadd.s32 %v1375, 1
        %v1440 = vadd.s32 %v1376, 1
        %v1441 = vadd.s32 %v1377, 1
        %v1442 = vadd.s32 %v1378, 1
        %v1443 = vadd.s32 %v1379, 1
        %v1444 = vadd.s32 %v1380, 1
        %v1445 = vadd.s32 %v1381, 1
        %v1446 = vadd.s32 %v1382, 1
        %vm1447 = vcmp.lt.s32.totalorder %v1431, 15
        %v1448 = vsel %vm1447, %v1431, 15
        %vm1449 = vcmp.lt.s32.totalorder %v1432, 15
        %v1450 = vsel %vm1449, %v1432, 15
        %vm1451 = vcmp.lt.s32.totalorder %v1433, 15
        %v1452 = vsel %vm1451, %v1433, 15
        %vm1453 = vcmp.lt.s32.totalorder %v1434, 15
        %v1454 = vsel %vm1453, %v1434, 15
        %vm1455 = vcmp.lt.s32.totalorder %v1435, 15
        %v1456 = vsel %vm1455, %v1435, 15
        %vm1457 = vcmp.lt.s32.totalorder %v1436, 15
        %v1458 = vsel %vm1457, %v1436, 15
        %vm1459 = vcmp.lt.s32.totalorder %v1437, 15
        %v1460 = vsel %vm1459, %v1437, 15
        %vm1461 = vcmp.lt.s32.totalorder %v1438, 15
        %v1462 = vsel %vm1461, %v1438, 15
        %vm1463 = vcmp.lt.s32.totalorder %v1439, 15
        %v1464 = vsel %vm1463, %v1439, 15
        %vm1465 = vcmp.lt.s32.totalorder %v1440, 15
        %v1466 = vsel %vm1465, %v1440, 15
        %vm1467 = vcmp.lt.s32.totalorder %v1441, 15
        %v1468 = vsel %vm1467, %v1441, 15
        %vm1469 = vcmp.lt.s32.totalorder %v1442, 15
        %v1470 = vsel %vm1469, %v1442, 15
        %vm1471 = vcmp.lt.s32.totalorder %v1443, 15
        %v1472 = vsel %vm1471, %v1443, 15
        %vm1473 = vcmp.lt.s32.totalorder %v1444, 15
        %v1474 = vsel %vm1473, %v1444, 15
        %vm1475 = vcmp.lt.s32.totalorder %v1445, 15
        %v1476 = vsel %vm1475, %v1445, 15
        %vm1477 = vcmp.lt.s32.totalorder %v1446, 15
        %v1478 = vsel %vm1477, %v1446, 15
        %v1479 = vmul.u32 %v1367, 16
        %v1480 = vmul.u32 %v1368, 16
        %v1481 = vmul.u32 %v1369, 16
        %v1482 = vmul.u32 %v1370, 16
        %v1483 = vmul.u32 %v1371, 16
        %v1484 = vmul.u32 %v1372, 16
        %v1485 = vmul.u32 %v1373, 16
        %v1486 = vmul.u32 %v1374, 16
        %v1487 = vmul.u32 %v1375, 16
        %v1488 = vmul.u32 %v1376, 16
        %v1489 = vmul.u32 %v1377, 16
        %v1490 = vmul.u32 %v1378, 16
        %v1491 = vmul.u32 %v1379, 16
        %v1492 = vmul.u32 %v1380, 16
        %v1493 = vmul.u32 %v1381, 16
        %v1494 = vmul.u32 %v1382, 16
        %1495 = vrot.lane.b32.xlu0 %v1351, 1
        %v1496 = vpop.permute.xlu0 %1495
        %1497 = vrot.lane.b32.xlu0 %v1352, 1
        %v1498 = vpop.permute.xlu0 %1497
        %1499 = vrot.lane.b32.xlu0 %v1353, 1
        %v1500 = vpop.permute.xlu0 %1499
        %1501 = vrot.lane.b32.xlu0 %v1354, 1
        %v1502 = vpop.permute.xlu0 %1501
        %1503 = vrot.lane.b32.xlu0 %v1355, 1
        %v1504 = vpop.permute.xlu0 %1503
        %1505 = vrot.lane.b32.xlu0 %v1356, 1
        %v1506 = vpop.permute.xlu0 %1505
        %1507 = vrot.lane.b32.xlu0 %v1357, 1
        %v1508 = vpop.permute.xlu0 %1507
        %1509 = vrot.lane.b32.xlu0 %v1358, 1
        %v1510 = vpop.permute.xlu0 %1509
        %1511 = vrot.lane.b32.xlu0 %v1359, 1
        %v1512 = vpop.permute.xlu0 %1511
        %1513 = vrot.lane.b32.xlu0 %v1360, 1
        %v1514 = vpop.permute.xlu0 %1513
        %1515 = vrot.lane.b32.xlu0 %v1361, 1
        %v1516 = vpop.permute.xlu0 %1515
        %1517 = vrot.lane.b32.xlu0 %v1362, 1
        %v1518 = vpop.permute.xlu0 %1517
        %1519 = vrot.lane.b32.xlu0 %v1363, 1
        %v1520 = vpop.permute.xlu0 %1519
        %1521 = vrot.lane.b32.xlu0 %v1364, 1
        %v1522 = vpop.permute.xlu0 %1521
        %1523 = vrot.lane.b32.xlu0 %v1365, 1
        %v1524 = vpop.permute.xlu0 %1523
        %1525 = vrot.lane.b32.xlu0 %v1366, 1
        %v1526 = vpop.permute.xlu0 %1525
        %v1527 = vadd.s32 %v1479, %v1496
        %v1528 = vadd.s32 %v1480, %v1498
        %v1529 = vadd.s32 %v1481, %v1500
        %v1530 = vadd.s32 %v1482, %v1502
        %v1531 = vadd.s32 %v1483, %v1504
        %v1532 = vadd.s32 %v1484, %v1506
        %v1533 = vadd.s32 %v1485, %v1508
        %v1534 = vadd.s32 %v1486, %v1510
        %v1535 = vadd.s32 %v1487, %v1512
        %v1536 = vadd.s32 %v1488, %v1514
        %v1537 = vadd.s32 %v1489, %v1516
        %v1538 = vadd.s32 %v1490, %v1518
        %v1539 = vadd.s32 %v1491, %v1520
        %v1540 = vadd.s32 %v1492, %v1522
        %v1541 = vadd.s32 %v1493, %v1524
        %v1542 = vadd.s32 %v1494, %v1526
        %v1543 = vsub.s32 %v1400, %v1351
        %v1544 = vsub.s32 %v1402, %v1352
        %v1545 = vsub.s32 %v1404, %v1353
        %v1546 = vsub.s32 %v1406, %v1354
        %v1547 = vsub.s32 %v1408, %v1355
        %v1548 = vsub.s32 %v1410, %v1356
        %v1549 = vsub.s32 %v1412, %v1357
        %v1550 = vsub.s32 %v1414, %v1358
        %v1551 = vsub.s32 %v1416, %v1359
        %v1552 = vsub.s32 %v1418, %v1360
        %v1553 = vsub.s32 %v1420, %v1361
        %v1554 = vsub.s32 %v1422, %v1362
        %v1555 = vsub.s32 %v1424, %v1363
        %v1556 = vsub.s32 %v1426, %v1364
        %v1557 = vsub.s32 %v1428, %v1365
        %v1558 = vsub.s32 %v1430, %v1366
        %v1559 = vsub.s32 %v1448, %v1367
        %v1560 = vsub.s32 %v1450, %v1368
        %v1561 = vsub.s32 %v1452, %v1369
        %v1562 = vsub.s32 %v1454, %v1370
        %v1563 = vsub.s32 %v1456, %v1371
        %v1564 = vsub.s32 %v1458, %v1372
        %v1565 = vsub.s32 %v1460, %v1373
        %v1566 = vsub.s32 %v1462, %v1374
        %v1567 = vsub.s32 %v1464, %v1375
        %v1568 = vsub.s32 %v1466, %v1376
        %v1569 = vsub.s32 %v1468, %v1377
        %v1570 = vsub.s32 %v1470, %v1378
        %v1571 = vsub.s32 %v1472, %v1379
        %v1572 = vsub.s32 %v1474, %v1380
        %v1573 = vsub.s32 %v1476, %v1381
        %v1574 = vsub.s32 %v1478, %v1382
        %v1575 = vmul.u32 %v1559, 16
        %v1576 = vmul.u32 %v1560, 16
        %v1577 = vmul.u32 %v1561, 16
        %v1578 = vmul.u32 %v1562, 16
        %v1579 = vmul.u32 %v1563, 16
        %v1580 = vmul.u32 %v1564, 16
        %v1581 = vmul.u32 %v1565, 16
        %v1582 = vmul.u32 %v1566, 16
        %v1583 = vmul.u32 %v1567, 16
        %v1584 = vmul.u32 %v1568, 16
        %v1585 = vmul.u32 %v1569, 16
        %v1586 = vmul.u32 %v1570, 16
        %v1587 = vmul.u32 %v1571, 16
        %v1588 = vmul.u32 %v1572, 16
        %v1589 = vmul.u32 %v1573, 16
        %v1590 = vmul.u32 %v1574, 16
        %1591 = vrot.lane.b32.xlu0 %v1543, 1
        %v1592 = vpop.permute.xlu0 %1591
        %1593 = vrot.lane.b32.xlu0 %v1544, 1
        %v1594 = vpop.permute.xlu0 %1593
        %1595 = vrot.lane.b32.xlu0 %v1545, 1
        %v1596 = vpop.permute.xlu0 %1595
        %1597 = vrot.lane.b32.xlu0 %v1546, 1
        %v1598 = vpop.permute.xlu0 %1597
        %1599 = vrot.lane.b32.xlu0 %v1547, 1
        %v1600 = vpop.permute.xlu0 %1599
        %1601 = vrot.lane.b32.xlu0 %v1548, 1
        %v1602 = vpop.permute.xlu0 %1601
        %1603 = vrot.lane.b32.xlu0 %v1549, 1
        %v1604 = vpop.permute.xlu0 %1603
        %1605 = vrot.lane.b32.xlu0 %v1550, 1
        %v1606 = vpop.permute.xlu0 %1605
        %1607 = vrot.lane.b32.xlu0 %v1551, 1
        %v1608 = vpop.permute.xlu0 %1607
        %1609 = vrot.lane.b32.xlu0 %v1552, 1
        %v1610 = vpop.permute.xlu0 %1609
        %1611 = vrot.lane.b32.xlu0 %v1553, 1
        %v1612 = vpop.permute.xlu0 %1611
        %1613 = vrot.lane.b32.xlu0 %v1554, 1
        %v1614 = vpop.permute.xlu0 %1613
        %1615 = vrot.lane.b32.xlu0 %v1555, 1
        %v1616 = vpop.permute.xlu0 %1615
        %1617 = vrot.lane.b32.xlu0 %v1556, 1
        %v1618 = vpop.permute.xlu0 %1617
        %1619 = vrot.lane.b32.xlu0 %v1557, 1
        %v1620 = vpop.permute.xlu0 %1619
        %1621 = vrot.lane.b32.xlu0 %v1558, 1
        %v1622 = vpop.permute.xlu0 %1621
        %v1623 = vadd.s32 %v1527, %v1592
        %v1624 = vadd.s32 %v1528, %v1594
        %v1625 = vadd.s32 %v1529, %v1596
        %v1626 = vadd.s32 %v1530, %v1598
        %v1627 = vadd.s32 %v1531, %v1600
        %v1628 = vadd.s32 %v1532, %v1602
        %v1629 = vadd.s32 %v1533, %v1604
        %v1630 = vadd.s32 %v1534, %v1606
        %v1631 = vadd.s32 %v1535, %v1608
        %v1632 = vadd.s32 %v1536, %v1610
        %v1633 = vadd.s32 %v1537, %v1612
        %v1634 = vadd.s32 %v1538, %v1614
        %v1635 = vadd.s32 %v1539, %v1616
        %v1636 = vadd.s32 %v1540, %v1618
        %v1637 = vadd.s32 %v1541, %v1620
        %v1638 = vadd.s32 %v1542, %v1622
        %v1639 = vadd.s32 %v1527, %v1575
        %v1640 = vadd.s32 %v1528, %v1576
        %v1641 = vadd.s32 %v1529, %v1577
        %v1642 = vadd.s32 %v1530, %v1578
        %v1643 = vadd.s32 %v1531, %v1579
        %v1644 = vadd.s32 %v1532, %v1580
        %v1645 = vadd.s32 %v1533, %v1581
        %v1646 = vadd.s32 %v1534, %v1582
        %v1647 = vadd.s32 %v1535, %v1583
        %v1648 = vadd.s32 %v1536, %v1584
        %v1649 = vadd.s32 %v1537, %v1585
        %v1650 = vadd.s32 %v1538, %v1586
        %v1651 = vadd.s32 %v1539, %v1587
        %v1652 = vadd.s32 %v1540, %v1588
        %v1653 = vadd.s32 %v1541, %v1589
        %v1654 = vadd.s32 %v1542, %v1590
        %v1655 = vadd.s32 %v1639, %v1592
        %v1656 = vadd.s32 %v1640, %v1594
        %v1657 = vadd.s32 %v1641, %v1596
        %v1658 = vadd.s32 %v1642, %v1598
        %v1659 = vadd.s32 %v1643, %v1600
        %v1660 = vadd.s32 %v1644, %v1602
        %v1661 = vadd.s32 %v1645, %v1604
        %v1662 = vadd.s32 %v1646, %v1606
        %v1663 = vadd.s32 %v1647, %v1608
        %v1664 = vadd.s32 %v1648, %v1610
        %v1665 = vadd.s32 %v1649, %v1612
        %v1666 = vadd.s32 %v1650, %v1614
        %v1667 = vadd.s32 %v1651, %v1616
        %v1668 = vadd.s32 %v1652, %v1618
        %v1669 = vadd.s32 %v1653, %v1620
        %v1670 = vadd.s32 %v1654, %v1622
        %v1671 = vsub.f32 1.0, %v1335
        %v1672 = vsub.f32 1.0, %v1336
        %v1673 = vsub.f32 1.0, %v1337
        %v1674 = vsub.f32 1.0, %v1338
        %v1675 = vsub.f32 1.0, %v1339
        %v1676 = vsub.f32 1.0, %v1340
        %v1677 = vsub.f32 1.0, %v1341
        %v1678 = vsub.f32 1.0, %v1342
        %v1679 = vsub.f32 1.0, %v1343
        %v1680 = vsub.f32 1.0, %v1344
        %v1681 = vsub.f32 1.0, %v1345
        %v1682 = vsub.f32 1.0, %v1346
        %v1683 = vsub.f32 1.0, %v1347
        %v1684 = vsub.f32 1.0, %v1348
        %v1685 = vsub.f32 1.0, %v1349
        %v1686 = vsub.f32 1.0, %v1350
        %v1687 = vsub.f32 1.0, %v1319
        %v1688 = vsub.f32 1.0, %v1320
        %v1689 = vsub.f32 1.0, %v1321
        %v1690 = vsub.f32 1.0, %v1322
        %v1691 = vsub.f32 1.0, %v1323
        %v1692 = vsub.f32 1.0, %v1324
        %v1693 = vsub.f32 1.0, %v1325
        %v1694 = vsub.f32 1.0, %v1326
        %v1695 = vsub.f32 1.0, %v1327
        %v1696 = vsub.f32 1.0, %v1328
        %v1697 = vsub.f32 1.0, %v1329
        %v1698 = vsub.f32 1.0, %v1330
        %v1699 = vsub.f32 1.0, %v1331
        %v1700 = vsub.f32 1.0, %v1332
        %v1701 = vsub.f32 1.0, %v1333
        %v1702 = vsub.f32 1.0, %v1334
        %1719 = vrot.lane.b32.xlu0 %v1687, 1
        %v1720 = vpop.permute.xlu0 %1719
        %1721 = vrot.lane.b32.xlu0 %v1688, 1
        %v1722 = vpop.permute.xlu0 %1721
        %1723 = vrot.lane.b32.xlu0 %v1689, 1
        %v1724 = vpop.permute.xlu0 %1723
        %1725 = vrot.lane.b32.xlu0 %v1690, 1
        %v1726 = vpop.permute.xlu0 %1725
        %1727 = vrot.lane.b32.xlu0 %v1691, 1
        %v1728 = vpop.permute.xlu0 %1727
        %1729 = vrot.lane.b32.xlu0 %v1692, 1
        %v1730 = vpop.permute.xlu0 %1729
        %1731 = vrot.lane.b32.xlu0 %v1693, 1
        %v1732 = vpop.permute.xlu0 %1731
        %1733 = vrot.lane.b32.xlu0 %v1694, 1
        %v1734 = vpop.permute.xlu0 %1733
        %1735 = vrot.lane.b32.xlu0 %v1695, 1
        %v1736 = vpop.permute.xlu0 %1735
        %1737 = vrot.lane.b32.xlu0 %v1696, 1
        %v1738 = vpop.permute.xlu0 %1737
        %1739 = vrot.lane.b32.xlu0 %v1697, 1
        %v1740 = vpop.permute.xlu0 %1739
        %1741 = vrot.lane.b32.xlu0 %v1698, 1
        %v1742 = vpop.permute.xlu0 %1741
        %1743 = vrot.lane.b32.xlu0 %v1699, 1
        %v1744 = vpop.permute.xlu0 %1743
        %1745 = vrot.lane.b32.xlu0 %v1700, 1
        %v1746 = vpop.permute.xlu0 %1745
        %1747 = vrot.lane.b32.xlu0 %v1701, 1
        %v1748 = vpop.permute.xlu0 %1747
        %1749 = vrot.lane.b32.xlu0 %v1702, 1
        %v1750 = vpop.permute.xlu0 %1749
        %v1767 = vmul.f32 %v1671, %v1720
        %v1768 = vmul.f32 %v1672, %v1722
        %v1769 = vmul.f32 %v1673, %v1724
        %v1770 = vmul.f32 %v1674, %v1726
        %v1771 = vmul.f32 %v1675, %v1728
        %v1772 = vmul.f32 %v1676, %v1730
        %v1773 = vmul.f32 %v1677, %v1732
        %v1774 = vmul.f32 %v1678, %v1734
        %v1775 = vmul.f32 %v1679, %v1736
        %v1776 = vmul.f32 %v1680, %v1738
        %v1777 = vmul.f32 %v1681, %v1740
        %v1778 = vmul.f32 %v1682, %v1742
        %v1779 = vmul.f32 %v1683, %v1744
        %v1780 = vmul.f32 %v1684, %v1746
        %v1781 = vmul.f32 %v1685, %v1748
        %v1782 = vmul.f32 %v1686, %v1750
        %1799 = vrot.lane.b32.xlu0 %v1319, 1
        %v1800 = vpop.permute.xlu0 %1799
        %1801 = vrot.lane.b32.xlu0 %v1320, 1
        %v1802 = vpop.permute.xlu0 %1801
        %1803 = vrot.lane.b32.xlu0 %v1321, 1
        %v1804 = vpop.permute.xlu0 %1803
        %1805 = vrot.lane.b32.xlu0 %v1322, 1
        %v1806 = vpop.permute.xlu0 %1805
        %1807 = vrot.lane.b32.xlu0 %v1323, 1
        %v1808 = vpop.permute.xlu0 %1807
        %1809 = vrot.lane.b32.xlu0 %v1324, 1
        %v1810 = vpop.permute.xlu0 %1809
        %1811 = vrot.lane.b32.xlu0 %v1325, 1
        %v1812 = vpop.permute.xlu0 %1811
        %1813 = vrot.lane.b32.xlu0 %v1326, 1
        %v1814 = vpop.permute.xlu0 %1813
        %1815 = vrot.lane.b32.xlu0 %v1327, 1
        %v1816 = vpop.permute.xlu0 %1815
        %1817 = vrot.lane.b32.xlu0 %v1328, 1
        %v1818 = vpop.permute.xlu0 %1817
        %1819 = vrot.lane.b32.xlu0 %v1329, 1
        %v1820 = vpop.permute.xlu0 %1819
        %1821 = vrot.lane.b32.xlu0 %v1330, 1
        %v1822 = vpop.permute.xlu0 %1821
        %1823 = vrot.lane.b32.xlu0 %v1331, 1
        %v1824 = vpop.permute.xlu0 %1823
        %1825 = vrot.lane.b32.xlu0 %v1332, 1
        %v1826 = vpop.permute.xlu0 %1825
        %1827 = vrot.lane.b32.xlu0 %v1333, 1
        %v1828 = vpop.permute.xlu0 %1827
        %1829 = vrot.lane.b32.xlu0 %v1334, 1
        %v1830 = vpop.permute.xlu0 %1829
        %v1847 = vmul.f32 %v1671, %v1800
        %v1848 = vmul.f32 %v1672, %v1802
        %v1849 = vmul.f32 %v1673, %v1804
        %v1850 = vmul.f32 %v1674, %v1806
        %v1851 = vmul.f32 %v1675, %v1808
        %v1852 = vmul.f32 %v1676, %v1810
        %v1853 = vmul.f32 %v1677, %v1812
        %v1854 = vmul.f32 %v1678, %v1814
        %v1855 = vmul.f32 %v1679, %v1816
        %v1856 = vmul.f32 %v1680, %v1818
        %v1857 = vmul.f32 %v1681, %v1820
        %v1858 = vmul.f32 %v1682, %v1822
        %v1859 = vmul.f32 %v1683, %v1824
        %v1860 = vmul.f32 %v1684, %v1826
        %v1861 = vmul.f32 %v1685, %v1828
        %v1862 = vmul.f32 %v1686, %v1830
        %v1863 = vmul.f32 %v1335, %v1720
        %v1864 = vmul.f32 %v1336, %v1722
        %v1865 = vmul.f32 %v1337, %v1724
        %v1866 = vmul.f32 %v1338, %v1726
        %v1867 = vmul.f32 %v1339, %v1728
        %v1868 = vmul.f32 %v1340, %v1730
        %v1869 = vmul.f32 %v1341, %v1732
        %v1870 = vmul.f32 %v1342, %v1734
        %v1871 = vmul.f32 %v1343, %v1736
        %v1872 = vmul.f32 %v1344, %v1738
        %v1873 = vmul.f32 %v1345, %v1740
        %v1874 = vmul.f32 %v1346, %v1742
        %v1875 = vmul.f32 %v1347, %v1744
        %v1876 = vmul.f32 %v1348, %v1746
        %v1877 = vmul.f32 %v1349, %v1748
        %v1878 = vmul.f32 %v1350, %v1750
        %v1879 = vmul.f32 %v1335, %v1800
        %v1880 = vmul.f32 %v1336, %v1802
        %v1881 = vmul.f32 %v1337, %v1804
        %v1882 = vmul.f32 %v1338, %v1806
        %v1883 = vmul.f32 %v1339, %v1808
        %v1884 = vmul.f32 %v1340, %v1810
        %v1885 = vmul.f32 %v1341, %v1812
        %v1886 = vmul.f32 %v1342, %v1814
        %v1887 = vmul.f32 %v1343, %v1816
        %v1888 = vmul.f32 %v1344, %v1818
        %v1889 = vmul.f32 %v1345, %v1820
        %v1890 = vmul.f32 %v1346, %v1822
        %v1891 = vmul.f32 %v1347, %v1824
        %v1892 = vmul.f32 %v1348, %v1826
        %v1893 = vmul.f32 %v1349, %v1828
        %v1894 = vmul.f32 %v1350, %v1830
        %v1895 = vlaneseq
        %v1896 = vand.u32 %v1895, 127
        loop: start=0, step=1, limit=2
        $region57: #{tpu_custom_call.1} parent=55 // loop_pre_header
          _
        $region58: #{tpu_custom_call.1} parent=55 // loop_header
          %s1898 = sphi 0, %s1902
          %p1899 = scmp.ge.s32.totalorder %s1898, 2
          %v1903 = vphi 0.0, %v2835
          %v1904 = vphi 0.0, %v2836
          %v1905 = vphi 0.0, %v2837
          %v1906 = vphi 0.0, %v2838
          %v1907 = vphi 0.0, %v2839
          %v1908 = vphi 0.0, %v2840
          %v1909 = vphi 0.0, %v2841
          %v1910 = vphi 0.0, %v2842
          %v1911 = vphi 0.0, %v2843
          %v1912 = vphi 0.0, %v2844
          %v1913 = vphi 0.0, %v2845
          %v1914 = vphi 0.0, %v2846
          %v1915 = vphi 0.0, %v2847
          %v1916 = vphi 0.0, %v2848
          %v1917 = vphi 0.0, %v2849
          %v1918 = vphi 0.0, %v2850
        $region59: #{tpu_custom_call.1} parent=55 // loop_header_branch
          %1901 = sbr.rel (%p1899) target = $region63
        $region60: #{tpu_custom_call.1} parent=55 // loop_body
          %s1919 = smul.u32 %s1898, 128
          %v1920 = vstv %s1919
          %v1921 = vsub.s32 %v1527, %v1920
          %v1922 = vsub.s32 %v1528, %v1920
          %v1923 = vsub.s32 %v1529, %v1920
          %v1924 = vsub.s32 %v1530, %v1920
          %v1925 = vsub.s32 %v1531, %v1920
          %v1926 = vsub.s32 %v1532, %v1920
          %v1927 = vsub.s32 %v1533, %v1920
          %v1928 = vsub.s32 %v1534, %v1920
          %v1929 = vsub.s32 %v1535, %v1920
          %v1930 = vsub.s32 %v1536, %v1920
          %v1931 = vsub.s32 %v1537, %v1920
          %v1932 = vsub.s32 %v1538, %v1920
          %v1933 = vsub.s32 %v1539, %v1920
          %v1934 = vsub.s32 %v1540, %v1920
          %v1935 = vsub.s32 %v1541, %v1920
          %v1936 = vsub.s32 %v1542, %v1920
          %1937 = vset.pattern.permute.xlu0 33
          %1938 = vperm.xlu0 %1937, %v1921
          %v1939 = vpop.permute.xlu0 %1938
          %1940 = vset.pattern.permute.xlu0 33
          %1941 = vperm.xlu0 %1940, %v1922
          %v1942 = vpop.permute.xlu0 %1941
          %1943 = vset.pattern.permute.xlu0 33
          %1944 = vperm.xlu0 %1943, %v1923
          %v1945 = vpop.permute.xlu0 %1944
          %1946 = vset.pattern.permute.xlu0 33
          %1947 = vperm.xlu0 %1946, %v1924
          %v1948 = vpop.permute.xlu0 %1947
          %1949 = vset.pattern.permute.xlu0 33
          %1950 = vperm.xlu0 %1949, %v1925
          %v1951 = vpop.permute.xlu0 %1950
          %1952 = vset.pattern.permute.xlu0 33
          %1953 = vperm.xlu0 %1952, %v1926
          %v1954 = vpop.permute.xlu0 %1953
          %1955 = vset.pattern.permute.xlu0 33
          %1956 = vperm.xlu0 %1955, %v1927
          %v1957 = vpop.permute.xlu0 %1956
          %1958 = vset.pattern.permute.xlu0 33
          %1959 = vperm.xlu0 %1958, %v1928
          %v1960 = vpop.permute.xlu0 %1959
          %1961 = vset.pattern.permute.xlu0 33
          %1962 = vperm.xlu0 %1961, %v1929
          %v1963 = vpop.permute.xlu0 %1962
          %1964 = vset.pattern.permute.xlu0 33
          %1965 = vperm.xlu0 %1964, %v1930
          %v1966 = vpop.permute.xlu0 %1965
          %1967 = vset.pattern.permute.xlu0 33
          %1968 = vperm.xlu0 %1967, %v1931
          %v1969 = vpop.permute.xlu0 %1968
          %1970 = vset.pattern.permute.xlu0 33
          %1971 = vperm.xlu0 %1970, %v1932
          %v1972 = vpop.permute.xlu0 %1971
          %1973 = vset.pattern.permute.xlu0 33
          %1974 = vperm.xlu0 %1973, %v1933
          %v1975 = vpop.permute.xlu0 %1974
          %1976 = vset.pattern.permute.xlu0 33
          %1977 = vperm.xlu0 %1976, %v1934
          %v1978 = vpop.permute.xlu0 %1977
          %1979 = vset.pattern.permute.xlu0 33
          %1980 = vperm.xlu0 %1979, %v1935
          %v1981 = vpop.permute.xlu0 %1980
          %1982 = vset.pattern.permute.xlu0 33
          %1983 = vperm.xlu0 %1982, %v1936
          %v1984 = vpop.permute.xlu0 %1983
          %vm1985 = vcmp.eq.s32.totalorder %v1896, %v1939
          %vm1986 = vcmp.eq.s32.totalorder %v1896, %v1942
          %vm1987 = vcmp.eq.s32.totalorder %v1896, %v1945
          %vm1988 = vcmp.eq.s32.totalorder %v1896, %v1948
          %vm1989 = vcmp.eq.s32.totalorder %v1896, %v1951
          %vm1990 = vcmp.eq.s32.totalorder %v1896, %v1954
          %vm1991 = vcmp.eq.s32.totalorder %v1896, %v1957
          %vm1992 = vcmp.eq.s32.totalorder %v1896, %v1960
          %vm1993 = vcmp.eq.s32.totalorder %v1896, %v1963
          %vm1994 = vcmp.eq.s32.totalorder %v1896, %v1966
          %vm1995 = vcmp.eq.s32.totalorder %v1896, %v1969
          %vm1996 = vcmp.eq.s32.totalorder %v1896, %v1972
          %vm1997 = vcmp.eq.s32.totalorder %v1896, %v1975
          %vm1998 = vcmp.eq.s32.totalorder %v1896, %v1978
          %vm1999 = vcmp.eq.s32.totalorder %v1896, %v1981
          %vm2000 = vcmp.eq.s32.totalorder %v1896, %v1984
          %2002 = vset.pattern.permute.xlu0 33
          %2003 = vperm.xlu0 %2002, %v1767
          %v2004 = vpop.permute.xlu0 %2003
          %2007 = vset.pattern.permute.xlu0 33
          %2008 = vperm.xlu0 %2007, %v1768
          %v2009 = vpop.permute.xlu0 %2008
          %2012 = vset.pattern.permute.xlu0 33
          %2013 = vperm.xlu0 %2012, %v1769
          %v2014 = vpop.permute.xlu0 %2013
          %2017 = vset.pattern.permute.xlu0 33
          %2018 = vperm.xlu0 %2017, %v1770
          %v2019 = vpop.permute.xlu0 %2018
          %2022 = vset.pattern.permute.xlu0 33
          %2023 = vperm.xlu0 %2022, %v1771
          %v2024 = vpop.permute.xlu0 %2023
          %2027 = vset.pattern.permute.xlu0 33
          %2028 = vperm.xlu0 %2027, %v1772
          %v2029 = vpop.permute.xlu0 %2028
          %2032 = vset.pattern.permute.xlu0 33
          %2033 = vperm.xlu0 %2032, %v1773
          %v2034 = vpop.permute.xlu0 %2033
          %2037 = vset.pattern.permute.xlu0 33
          %2038 = vperm.xlu0 %2037, %v1774
          %v2039 = vpop.permute.xlu0 %2038
          %2042 = vset.pattern.permute.xlu0 33
          %2043 = vperm.xlu0 %2042, %v1775
          %v2044 = vpop.permute.xlu0 %2043
          %2047 = vset.pattern.permute.xlu0 33
          %2048 = vperm.xlu0 %2047, %v1776
          %v2049 = vpop.permute.xlu0 %2048
          %2052 = vset.pattern.permute.xlu0 33
          %2053 = vperm.xlu0 %2052, %v1777
          %v2054 = vpop.permute.xlu0 %2053
          %2057 = vset.pattern.permute.xlu0 33
          %2058 = vperm.xlu0 %2057, %v1778
          %v2059 = vpop.permute.xlu0 %2058
          %2062 = vset.pattern.permute.xlu0 33
          %2063 = vperm.xlu0 %2062, %v1779
          %v2064 = vpop.permute.xlu0 %2063
          %2067 = vset.pattern.permute.xlu0 33
          %2068 = vperm.xlu0 %2067, %v1780
          %v2069 = vpop.permute.xlu0 %2068
          %2072 = vset.pattern.permute.xlu0 33
          %2073 = vperm.xlu0 %2072, %v1781
          %v2074 = vpop.permute.xlu0 %2073
          %2077 = vset.pattern.permute.xlu0 33
          %2078 = vperm.xlu0 %2077, %v1782
          %v2079 = vpop.permute.xlu0 %2078
          %v2081 = vsel %vm1985, %v2004, 0.0
          %v2082 = vsel %vm1986, %v2009, 0.0
          %v2083 = vsel %vm1987, %v2014, 0.0
          %v2084 = vsel %vm1988, %v2019, 0.0
          %v2085 = vsel %vm1989, %v2024, 0.0
          %v2086 = vsel %vm1990, %v2029, 0.0
          %v2087 = vsel %vm1991, %v2034, 0.0
          %v2088 = vsel %vm1992, %v2039, 0.0
          %v2089 = vsel %vm1993, %v2044, 0.0
          %v2090 = vsel %vm1994, %v2049, 0.0
          %v2091 = vsel %vm1995, %v2054, 0.0
          %v2092 = vsel %vm1996, %v2059, 0.0
          %v2093 = vsel %vm1997, %v2064, 0.0
          %v2094 = vsel %vm1998, %v2069, 0.0
          %v2095 = vsel %vm1999, %v2074, 0.0
          %v2096 = vsel %vm2000, %v2079, 0.0
          %v2097 = vsub.s32 %v1623, %v1920
          %v2098 = vsub.s32 %v1624, %v1920
          %v2099 = vsub.s32 %v1625, %v1920
          %v2100 = vsub.s32 %v1626, %v1920
          %v2101 = vsub.s32 %v1627, %v1920
          %v2102 = vsub.s32 %v1628, %v1920
          %v2103 = vsub.s32 %v1629, %v1920
          %v2104 = vsub.s32 %v1630, %v1920
          %v2105 = vsub.s32 %v1631, %v1920
          %v2106 = vsub.s32 %v1632, %v1920
          %v2107 = vsub.s32 %v1633, %v1920
          %v2108 = vsub.s32 %v1634, %v1920
          %v2109 = vsub.s32 %v1635, %v1920
          %v2110 = vsub.s32 %v1636, %v1920
          %v2111 = vsub.s32 %v1637, %v1920
          %v2112 = vsub.s32 %v1638, %v1920
          %2113 = vset.pattern.permute.xlu0 33
          %2114 = vperm.xlu0 %2113, %v2097
          %v2115 = vpop.permute.xlu0 %2114
          %2116 = vset.pattern.permute.xlu0 33
          %2117 = vperm.xlu0 %2116, %v2098
          %v2118 = vpop.permute.xlu0 %2117
          %2119 = vset.pattern.permute.xlu0 33
          %2120 = vperm.xlu0 %2119, %v2099
          %v2121 = vpop.permute.xlu0 %2120
          %2122 = vset.pattern.permute.xlu0 33
          %2123 = vperm.xlu0 %2122, %v2100
          %v2124 = vpop.permute.xlu0 %2123
          %2125 = vset.pattern.permute.xlu0 33
          %2126 = vperm.xlu0 %2125, %v2101
          %v2127 = vpop.permute.xlu0 %2126
          %2128 = vset.pattern.permute.xlu0 33
          %2129 = vperm.xlu0 %2128, %v2102
          %v2130 = vpop.permute.xlu0 %2129
          %2131 = vset.pattern.permute.xlu0 33
          %2132 = vperm.xlu0 %2131, %v2103
          %v2133 = vpop.permute.xlu0 %2132
          %2134 = vset.pattern.permute.xlu0 33
          %2135 = vperm.xlu0 %2134, %v2104
          %v2136 = vpop.permute.xlu0 %2135
          %2137 = vset.pattern.permute.xlu0 33
          %2138 = vperm.xlu0 %2137, %v2105
          %v2139 = vpop.permute.xlu0 %2138
          %2140 = vset.pattern.permute.xlu0 33
          %2141 = vperm.xlu0 %2140, %v2106
          %v2142 = vpop.permute.xlu0 %2141
          %2143 = vset.pattern.permute.xlu0 33
          %2144 = vperm.xlu0 %2143, %v2107
          %v2145 = vpop.permute.xlu0 %2144
          %2146 = vset.pattern.permute.xlu0 33
          %2147 = vperm.xlu0 %2146, %v2108
          %v2148 = vpop.permute.xlu0 %2147
          %2149 = vset.pattern.permute.xlu0 33
          %2150 = vperm.xlu0 %2149, %v2109
          %v2151 = vpop.permute.xlu0 %2150
          %2152 = vset.pattern.permute.xlu0 33
          %2153 = vperm.xlu0 %2152, %v2110
          %v2154 = vpop.permute.xlu0 %2153
          %2155 = vset.pattern.permute.xlu0 33
          %2156 = vperm.xlu0 %2155, %v2111
          %v2157 = vpop.permute.xlu0 %2156
          %2158 = vset.pattern.permute.xlu0 33
          %2159 = vperm.xlu0 %2158, %v2112
          %v2160 = vpop.permute.xlu0 %2159
          %vm2161 = vcmp.eq.s32.totalorder %v1896, %v2115
          %vm2162 = vcmp.eq.s32.totalorder %v1896, %v2118
          %vm2163 = vcmp.eq.s32.totalorder %v1896, %v2121
          %vm2164 = vcmp.eq.s32.totalorder %v1896, %v2124
          %vm2165 = vcmp.eq.s32.totalorder %v1896, %v2127
          %vm2166 = vcmp.eq.s32.totalorder %v1896, %v2130
          %vm2167 = vcmp.eq.s32.totalorder %v1896, %v2133
          %vm2168 = vcmp.eq.s32.totalorder %v1896, %v2136
          %vm2169 = vcmp.eq.s32.totalorder %v1896, %v2139
          %vm2170 = vcmp.eq.s32.totalorder %v1896, %v2142
          %vm2171 = vcmp.eq.s32.totalorder %v1896, %v2145
          %vm2172 = vcmp.eq.s32.totalorder %v1896, %v2148
          %vm2173 = vcmp.eq.s32.totalorder %v1896, %v2151
          %vm2174 = vcmp.eq.s32.totalorder %v1896, %v2154
          %vm2175 = vcmp.eq.s32.totalorder %v1896, %v2157
          %vm2176 = vcmp.eq.s32.totalorder %v1896, %v2160
          %2178 = vset.pattern.permute.xlu0 33
          %2179 = vperm.xlu0 %2178, %v1847
          %v2180 = vpop.permute.xlu0 %2179
          %2183 = vset.pattern.permute.xlu0 33
          %2184 = vperm.xlu0 %2183, %v1848
          %v2185 = vpop.permute.xlu0 %2184
          %2188 = vset.pattern.permute.xlu0 33
          %2189 = vperm.xlu0 %2188, %v1849
          %v2190 = vpop.permute.xlu0 %2189
          %2193 = vset.pattern.permute.xlu0 33
          %2194 = vperm.xlu0 %2193, %v1850
          %v2195 = vpop.permute.xlu0 %2194
          %2198 = vset.pattern.permute.xlu0 33
          %2199 = vperm.xlu0 %2198, %v1851
          %v2200 = vpop.permute.xlu0 %2199
          %2203 = vset.pattern.permute.xlu0 33
          %2204 = vperm.xlu0 %2203, %v1852
          %v2205 = vpop.permute.xlu0 %2204
          %2208 = vset.pattern.permute.xlu0 33
          %2209 = vperm.xlu0 %2208, %v1853
          %v2210 = vpop.permute.xlu0 %2209
          %2213 = vset.pattern.permute.xlu0 33
          %2214 = vperm.xlu0 %2213, %v1854
          %v2215 = vpop.permute.xlu0 %2214
          %2218 = vset.pattern.permute.xlu0 33
          %2219 = vperm.xlu0 %2218, %v1855
          %v2220 = vpop.permute.xlu0 %2219
          %2223 = vset.pattern.permute.xlu0 33
          %2224 = vperm.xlu0 %2223, %v1856
          %v2225 = vpop.permute.xlu0 %2224
          %2228 = vset.pattern.permute.xlu0 33
          %2229 = vperm.xlu0 %2228, %v1857
          %v2230 = vpop.permute.xlu0 %2229
          %2233 = vset.pattern.permute.xlu0 33
          %2234 = vperm.xlu0 %2233, %v1858
          %v2235 = vpop.permute.xlu0 %2234
          %2238 = vset.pattern.permute.xlu0 33
          %2239 = vperm.xlu0 %2238, %v1859
          %v2240 = vpop.permute.xlu0 %2239
          %2243 = vset.pattern.permute.xlu0 33
          %2244 = vperm.xlu0 %2243, %v1860
          %v2245 = vpop.permute.xlu0 %2244
          %2248 = vset.pattern.permute.xlu0 33
          %2249 = vperm.xlu0 %2248, %v1861
          %v2250 = vpop.permute.xlu0 %2249
          %2253 = vset.pattern.permute.xlu0 33
          %2254 = vperm.xlu0 %2253, %v1862
          %v2255 = vpop.permute.xlu0 %2254
          %v2257 = vsel %vm2161, %v2180, 0.0
          %v2258 = vsel %vm2162, %v2185, 0.0
          %v2259 = vsel %vm2163, %v2190, 0.0
          %v2260 = vsel %vm2164, %v2195, 0.0
          %v2261 = vsel %vm2165, %v2200, 0.0
          %v2262 = vsel %vm2166, %v2205, 0.0
          %v2263 = vsel %vm2167, %v2210, 0.0
          %v2264 = vsel %vm2168, %v2215, 0.0
          %v2265 = vsel %vm2169, %v2220, 0.0
          %v2266 = vsel %vm2170, %v2225, 0.0
          %v2267 = vsel %vm2171, %v2230, 0.0
          %v2268 = vsel %vm2172, %v2235, 0.0
          %v2269 = vsel %vm2173, %v2240, 0.0
          %v2270 = vsel %vm2174, %v2245, 0.0
          %v2271 = vsel %vm2175, %v2250, 0.0
          %v2272 = vsel %vm2176, %v2255, 0.0
          %v2273 = vadd.f32 %v2081, %v2257
          %v2274 = vadd.f32 %v2082, %v2258
          %v2275 = vadd.f32 %v2083, %v2259
          %v2276 = vadd.f32 %v2084, %v2260
          %v2277 = vadd.f32 %v2085, %v2261
          %v2278 = vadd.f32 %v2086, %v2262
          %v2279 = vadd.f32 %v2087, %v2263
          %v2280 = vadd.f32 %v2088, %v2264
          %v2281 = vadd.f32 %v2089, %v2265
          %v2282 = vadd.f32 %v2090, %v2266
          %v2283 = vadd.f32 %v2091, %v2267
          %v2284 = vadd.f32 %v2092, %v2268
          %v2285 = vadd.f32 %v2093, %v2269
          %v2286 = vadd.f32 %v2094, %v2270
          %v2287 = vadd.f32 %v2095, %v2271
          %v2288 = vadd.f32 %v2096, %v2272
          %v2289 = vsub.s32 %v1639, %v1920
          %v2290 = vsub.s32 %v1640, %v1920
          %v2291 = vsub.s32 %v1641, %v1920
          %v2292 = vsub.s32 %v1642, %v1920
          %v2293 = vsub.s32 %v1643, %v1920
          %v2294 = vsub.s32 %v1644, %v1920
          %v2295 = vsub.s32 %v1645, %v1920
          %v2296 = vsub.s32 %v1646, %v1920
          %v2297 = vsub.s32 %v1647, %v1920
          %v2298 = vsub.s32 %v1648, %v1920
          %v2299 = vsub.s32 %v1649, %v1920
          %v2300 = vsub.s32 %v1650, %v1920
          %v2301 = vsub.s32 %v1651, %v1920
          %v2302 = vsub.s32 %v1652, %v1920
          %v2303 = vsub.s32 %v1653, %v1920
          %v2304 = vsub.s32 %v1654, %v1920
          %2305 = vset.pattern.permute.xlu0 33
          %2306 = vperm.xlu0 %2305, %v2289
          %v2307 = vpop.permute.xlu0 %2306
          %2308 = vset.pattern.permute.xlu0 33
          %2309 = vperm.xlu0 %2308, %v2290
          %v2310 = vpop.permute.xlu0 %2309
          %2311 = vset.pattern.permute.xlu0 33
          %2312 = vperm.xlu0 %2311, %v2291
          %v2313 = vpop.permute.xlu0 %2312
          %2314 = vset.pattern.permute.xlu0 33
          %2315 = vperm.xlu0 %2314, %v2292
          %v2316 = vpop.permute.xlu0 %2315
          %2317 = vset.pattern.permute.xlu0 33
          %2318 = vperm.xlu0 %2317, %v2293
          %v2319 = vpop.permute.xlu0 %2318
          %2320 = vset.pattern.permute.xlu0 33
          %2321 = vperm.xlu0 %2320, %v2294
          %v2322 = vpop.permute.xlu0 %2321
          %2323 = vset.pattern.permute.xlu0 33
          %2324 = vperm.xlu0 %2323, %v2295
          %v2325 = vpop.permute.xlu0 %2324
          %2326 = vset.pattern.permute.xlu0 33
          %2327 = vperm.xlu0 %2326, %v2296
          %v2328 = vpop.permute.xlu0 %2327
          %2329 = vset.pattern.permute.xlu0 33
          %2330 = vperm.xlu0 %2329, %v2297
          %v2331 = vpop.permute.xlu0 %2330
          %2332 = vset.pattern.permute.xlu0 33
          %2333 = vperm.xlu0 %2332, %v2298
          %v2334 = vpop.permute.xlu0 %2333
          %2335 = vset.pattern.permute.xlu0 33
          %2336 = vperm.xlu0 %2335, %v2299
          %v2337 = vpop.permute.xlu0 %2336
          %2338 = vset.pattern.permute.xlu0 33
          %2339 = vperm.xlu0 %2338, %v2300
          %v2340 = vpop.permute.xlu0 %2339
          %2341 = vset.pattern.permute.xlu0 33
          %2342 = vperm.xlu0 %2341, %v2301
          %v2343 = vpop.permute.xlu0 %2342
          %2344 = vset.pattern.permute.xlu0 33
          %2345 = vperm.xlu0 %2344, %v2302
          %v2346 = vpop.permute.xlu0 %2345
          %2347 = vset.pattern.permute.xlu0 33
          %2348 = vperm.xlu0 %2347, %v2303
          %v2349 = vpop.permute.xlu0 %2348
          %2350 = vset.pattern.permute.xlu0 33
          %2351 = vperm.xlu0 %2350, %v2304
          %v2352 = vpop.permute.xlu0 %2351
          %vm2353 = vcmp.eq.s32.totalorder %v1896, %v2307
          %vm2354 = vcmp.eq.s32.totalorder %v1896, %v2310
          %vm2355 = vcmp.eq.s32.totalorder %v1896, %v2313
          %vm2356 = vcmp.eq.s32.totalorder %v1896, %v2316
          %vm2357 = vcmp.eq.s32.totalorder %v1896, %v2319
          %vm2358 = vcmp.eq.s32.totalorder %v1896, %v2322
          %vm2359 = vcmp.eq.s32.totalorder %v1896, %v2325
          %vm2360 = vcmp.eq.s32.totalorder %v1896, %v2328
          %vm2361 = vcmp.eq.s32.totalorder %v1896, %v2331
          %vm2362 = vcmp.eq.s32.totalorder %v1896, %v2334
          %vm2363 = vcmp.eq.s32.totalorder %v1896, %v2337
          %vm2364 = vcmp.eq.s32.totalorder %v1896, %v2340
          %vm2365 = vcmp.eq.s32.totalorder %v1896, %v2343
          %vm2366 = vcmp.eq.s32.totalorder %v1896, %v2346
          %vm2367 = vcmp.eq.s32.totalorder %v1896, %v2349
          %vm2368 = vcmp.eq.s32.totalorder %v1896, %v2352
          %2370 = vset.pattern.permute.xlu0 33
          %2371 = vperm.xlu0 %2370, %v1863
          %v2372 = vpop.permute.xlu0 %2371
          %2375 = vset.pattern.permute.xlu0 33
          %2376 = vperm.xlu0 %2375, %v1864
          %v2377 = vpop.permute.xlu0 %2376
          %2380 = vset.pattern.permute.xlu0 33
          %2381 = vperm.xlu0 %2380, %v1865
          %v2382 = vpop.permute.xlu0 %2381
          %2385 = vset.pattern.permute.xlu0 33
          %2386 = vperm.xlu0 %2385, %v1866
          %v2387 = vpop.permute.xlu0 %2386
          %2390 = vset.pattern.permute.xlu0 33
          %2391 = vperm.xlu0 %2390, %v1867
          %v2392 = vpop.permute.xlu0 %2391
          %2395 = vset.pattern.permute.xlu0 33
          %2396 = vperm.xlu0 %2395, %v1868
          %v2397 = vpop.permute.xlu0 %2396
          %2400 = vset.pattern.permute.xlu0 33
          %2401 = vperm.xlu0 %2400, %v1869
          %v2402 = vpop.permute.xlu0 %2401
          %2405 = vset.pattern.permute.xlu0 33
          %2406 = vperm.xlu0 %2405, %v1870
          %v2407 = vpop.permute.xlu0 %2406
          %2410 = vset.pattern.permute.xlu0 33
          %2411 = vperm.xlu0 %2410, %v1871
          %v2412 = vpop.permute.xlu0 %2411
          %2415 = vset.pattern.permute.xlu0 33
          %2416 = vperm.xlu0 %2415, %v1872
          %v2417 = vpop.permute.xlu0 %2416
          %2420 = vset.pattern.permute.xlu0 33
          %2421 = vperm.xlu0 %2420, %v1873
          %v2422 = vpop.permute.xlu0 %2421
          %2425 = vset.pattern.permute.xlu0 33
          %2426 = vperm.xlu0 %2425, %v1874
          %v2427 = vpop.permute.xlu0 %2426
          %2430 = vset.pattern.permute.xlu0 33
          %2431 = vperm.xlu0 %2430, %v1875
          %v2432 = vpop.permute.xlu0 %2431
          %2435 = vset.pattern.permute.xlu0 33
          %2436 = vperm.xlu0 %2435, %v1876
          %v2437 = vpop.permute.xlu0 %2436
          %2440 = vset.pattern.permute.xlu0 33
          %2441 = vperm.xlu0 %2440, %v1877
          %v2442 = vpop.permute.xlu0 %2441
          %2445 = vset.pattern.permute.xlu0 33
          %2446 = vperm.xlu0 %2445, %v1878
          %v2447 = vpop.permute.xlu0 %2446
          %v2449 = vsel %vm2353, %v2372, 0.0
          %v2450 = vsel %vm2354, %v2377, 0.0
          %v2451 = vsel %vm2355, %v2382, 0.0
          %v2452 = vsel %vm2356, %v2387, 0.0
          %v2453 = vsel %vm2357, %v2392, 0.0
          %v2454 = vsel %vm2358, %v2397, 0.0
          %v2455 = vsel %vm2359, %v2402, 0.0
          %v2456 = vsel %vm2360, %v2407, 0.0
          %v2457 = vsel %vm2361, %v2412, 0.0
          %v2458 = vsel %vm2362, %v2417, 0.0
          %v2459 = vsel %vm2363, %v2422, 0.0
          %v2460 = vsel %vm2364, %v2427, 0.0
          %v2461 = vsel %vm2365, %v2432, 0.0
          %v2462 = vsel %vm2366, %v2437, 0.0
          %v2463 = vsel %vm2367, %v2442, 0.0
          %v2464 = vsel %vm2368, %v2447, 0.0
          %v2465 = vadd.f32 %v2273, %v2449
          %v2466 = vadd.f32 %v2274, %v2450
          %v2467 = vadd.f32 %v2275, %v2451
          %v2468 = vadd.f32 %v2276, %v2452
          %v2469 = vadd.f32 %v2277, %v2453
          %v2470 = vadd.f32 %v2278, %v2454
          %v2471 = vadd.f32 %v2279, %v2455
          %v2472 = vadd.f32 %v2280, %v2456
          %v2473 = vadd.f32 %v2281, %v2457
          %v2474 = vadd.f32 %v2282, %v2458
          %v2475 = vadd.f32 %v2283, %v2459
          %v2476 = vadd.f32 %v2284, %v2460
          %v2477 = vadd.f32 %v2285, %v2461
          %v2478 = vadd.f32 %v2286, %v2462
          %v2479 = vadd.f32 %v2287, %v2463
          %v2480 = vadd.f32 %v2288, %v2464
          %v2481 = vsub.s32 %v1655, %v1920
          %v2482 = vsub.s32 %v1656, %v1920
          %v2483 = vsub.s32 %v1657, %v1920
          %v2484 = vsub.s32 %v1658, %v1920
          %v2485 = vsub.s32 %v1659, %v1920
          %v2486 = vsub.s32 %v1660, %v1920
          %v2487 = vsub.s32 %v1661, %v1920
          %v2488 = vsub.s32 %v1662, %v1920
          %v2489 = vsub.s32 %v1663, %v1920
          %v2490 = vsub.s32 %v1664, %v1920
          %v2491 = vsub.s32 %v1665, %v1920
          %v2492 = vsub.s32 %v1666, %v1920
          %v2493 = vsub.s32 %v1667, %v1920
          %v2494 = vsub.s32 %v1668, %v1920
          %v2495 = vsub.s32 %v1669, %v1920
          %v2496 = vsub.s32 %v1670, %v1920
          %2497 = vset.pattern.permute.xlu0 33
          %2498 = vperm.xlu0 %2497, %v2481
          %v2499 = vpop.permute.xlu0 %2498
          %2500 = vset.pattern.permute.xlu0 33
          %2501 = vperm.xlu0 %2500, %v2482
          %v2502 = vpop.permute.xlu0 %2501
          %2503 = vset.pattern.permute.xlu0 33
          %2504 = vperm.xlu0 %2503, %v2483
          %v2505 = vpop.permute.xlu0 %2504
          %2506 = vset.pattern.permute.xlu0 33
          %2507 = vperm.xlu0 %2506, %v2484
          %v2508 = vpop.permute.xlu0 %2507
          %2509 = vset.pattern.permute.xlu0 33
          %2510 = vperm.xlu0 %2509, %v2485
          %v2511 = vpop.permute.xlu0 %2510
          %2512 = vset.pattern.permute.xlu0 33
          %2513 = vperm.xlu0 %2512, %v2486
          %v2514 = vpop.permute.xlu0 %2513
          %2515 = vset.pattern.permute.xlu0 33
          %2516 = vperm.xlu0 %2515, %v2487
          %v2517 = vpop.permute.xlu0 %2516
          %2518 = vset.pattern.permute.xlu0 33
          %2519 = vperm.xlu0 %2518, %v2488
          %v2520 = vpop.permute.xlu0 %2519
          %2521 = vset.pattern.permute.xlu0 33
          %2522 = vperm.xlu0 %2521, %v2489
          %v2523 = vpop.permute.xlu0 %2522
          %2524 = vset.pattern.permute.xlu0 33
          %2525 = vperm.xlu0 %2524, %v2490
          %v2526 = vpop.permute.xlu0 %2525
          %2527 = vset.pattern.permute.xlu0 33
          %2528 = vperm.xlu0 %2527, %v2491
          %v2529 = vpop.permute.xlu0 %2528
          %2530 = vset.pattern.permute.xlu0 33
          %2531 = vperm.xlu0 %2530, %v2492
          %v2532 = vpop.permute.xlu0 %2531
          %2533 = vset.pattern.permute.xlu0 33
          %2534 = vperm.xlu0 %2533, %v2493
          %v2535 = vpop.permute.xlu0 %2534
          %2536 = vset.pattern.permute.xlu0 33
          %2537 = vperm.xlu0 %2536, %v2494
          %v2538 = vpop.permute.xlu0 %2537
          %2539 = vset.pattern.permute.xlu0 33
          %2540 = vperm.xlu0 %2539, %v2495
          %v2541 = vpop.permute.xlu0 %2540
          %2542 = vset.pattern.permute.xlu0 33
          %2543 = vperm.xlu0 %2542, %v2496
          %v2544 = vpop.permute.xlu0 %2543
          %vm2545 = vcmp.eq.s32.totalorder %v1896, %v2499
          %vm2546 = vcmp.eq.s32.totalorder %v1896, %v2502
          %vm2547 = vcmp.eq.s32.totalorder %v1896, %v2505
          %vm2548 = vcmp.eq.s32.totalorder %v1896, %v2508
          %vm2549 = vcmp.eq.s32.totalorder %v1896, %v2511
          %vm2550 = vcmp.eq.s32.totalorder %v1896, %v2514
          %vm2551 = vcmp.eq.s32.totalorder %v1896, %v2517
          %vm2552 = vcmp.eq.s32.totalorder %v1896, %v2520
          %vm2553 = vcmp.eq.s32.totalorder %v1896, %v2523
          %vm2554 = vcmp.eq.s32.totalorder %v1896, %v2526
          %vm2555 = vcmp.eq.s32.totalorder %v1896, %v2529
          %vm2556 = vcmp.eq.s32.totalorder %v1896, %v2532
          %vm2557 = vcmp.eq.s32.totalorder %v1896, %v2535
          %vm2558 = vcmp.eq.s32.totalorder %v1896, %v2538
          %vm2559 = vcmp.eq.s32.totalorder %v1896, %v2541
          %vm2560 = vcmp.eq.s32.totalorder %v1896, %v2544
          %2562 = vset.pattern.permute.xlu0 33
          %2563 = vperm.xlu0 %2562, %v1879
          %v2564 = vpop.permute.xlu0 %2563
          %2567 = vset.pattern.permute.xlu0 33
          %2568 = vperm.xlu0 %2567, %v1880
          %v2569 = vpop.permute.xlu0 %2568
          %2572 = vset.pattern.permute.xlu0 33
          %2573 = vperm.xlu0 %2572, %v1881
          %v2574 = vpop.permute.xlu0 %2573
          %2577 = vset.pattern.permute.xlu0 33
          %2578 = vperm.xlu0 %2577, %v1882
          %v2579 = vpop.permute.xlu0 %2578
          %2582 = vset.pattern.permute.xlu0 33
          %2583 = vperm.xlu0 %2582, %v1883
          %v2584 = vpop.permute.xlu0 %2583
          %2587 = vset.pattern.permute.xlu0 33
          %2588 = vperm.xlu0 %2587, %v1884
          %v2589 = vpop.permute.xlu0 %2588
          %2592 = vset.pattern.permute.xlu0 33
          %2593 = vperm.xlu0 %2592, %v1885
          %v2594 = vpop.permute.xlu0 %2593
          %2597 = vset.pattern.permute.xlu0 33
          %2598 = vperm.xlu0 %2597, %v1886
          %v2599 = vpop.permute.xlu0 %2598
          %2602 = vset.pattern.permute.xlu0 33
          %2603 = vperm.xlu0 %2602, %v1887
          %v2604 = vpop.permute.xlu0 %2603
          %2607 = vset.pattern.permute.xlu0 33
          %2608 = vperm.xlu0 %2607, %v1888
          %v2609 = vpop.permute.xlu0 %2608
          %2612 = vset.pattern.permute.xlu0 33
          %2613 = vperm.xlu0 %2612, %v1889
          %v2614 = vpop.permute.xlu0 %2613
          %2617 = vset.pattern.permute.xlu0 33
          %2618 = vperm.xlu0 %2617, %v1890
          %v2619 = vpop.permute.xlu0 %2618
          %2622 = vset.pattern.permute.xlu0 33
          %2623 = vperm.xlu0 %2622, %v1891
          %v2624 = vpop.permute.xlu0 %2623
          %2627 = vset.pattern.permute.xlu0 33
          %2628 = vperm.xlu0 %2627, %v1892
          %v2629 = vpop.permute.xlu0 %2628
          %2632 = vset.pattern.permute.xlu0 33
          %2633 = vperm.xlu0 %2632, %v1893
          %v2634 = vpop.permute.xlu0 %2633
          %2637 = vset.pattern.permute.xlu0 33
          %2638 = vperm.xlu0 %2637, %v1894
          %v2639 = vpop.permute.xlu0 %2638
          %v2641 = vsel %vm2545, %v2564, 0.0
          %v2642 = vsel %vm2546, %v2569, 0.0
          %v2643 = vsel %vm2547, %v2574, 0.0
          %v2644 = vsel %vm2548, %v2579, 0.0
          %v2645 = vsel %vm2549, %v2584, 0.0
          %v2646 = vsel %vm2550, %v2589, 0.0
          %v2647 = vsel %vm2551, %v2594, 0.0
          %v2648 = vsel %vm2552, %v2599, 0.0
          %v2649 = vsel %vm2553, %v2604, 0.0
          %v2650 = vsel %vm2554, %v2609, 0.0
          %v2651 = vsel %vm2555, %v2614, 0.0
          %v2652 = vsel %vm2556, %v2619, 0.0
          %v2653 = vsel %vm2557, %v2624, 0.0
          %v2654 = vsel %vm2558, %v2629, 0.0
          %v2655 = vsel %vm2559, %v2634, 0.0
          %v2656 = vsel %vm2560, %v2639, 0.0
          %v2657 = vadd.f32 %v2465, %v2641
          %v2658 = vadd.f32 %v2466, %v2642
          %v2659 = vadd.f32 %v2467, %v2643
          %v2660 = vadd.f32 %v2468, %v2644
          %v2661 = vadd.f32 %v2469, %v2645
          %v2662 = vadd.f32 %v2470, %v2646
          %v2663 = vadd.f32 %v2471, %v2647
          %v2664 = vadd.f32 %v2472, %v2648
          %v2665 = vadd.f32 %v2473, %v2649
          %v2666 = vadd.f32 %v2474, %v2650
          %v2667 = vadd.f32 %v2475, %v2651
          %v2668 = vadd.f32 %v2476, %v2652
          %v2669 = vadd.f32 %v2477, %v2653
          %v2670 = vadd.f32 %v2478, %v2654
          %v2671 = vadd.f32 %v2479, %v2655
          %v2672 = vadd.f32 %v2480, %v2656
          %s2673 = scalar_lea.vmem %s412, %s1919
          %v2674 = vld [vmem:[%s2673] sm:$0xff]
          %v2675 = vld [vmem:[%s2673 + $0x8] sm:$0xff]
          %v2676 = vld [vmem:[%s2673 + $0x10] sm:$0xff]
          %v2677 = vld [vmem:[%s2673 + $0x18] sm:$0xff]
          %v2678 = vld [vmem:[%s2673 + $0x20] sm:$0xff]
          %v2679 = vld [vmem:[%s2673 + $0x28] sm:$0xff]
          %v2680 = vld [vmem:[%s2673 + $0x30] sm:$0xff]
          %v2681 = vld [vmem:[%s2673 + $0x38] sm:$0xff]
          %v2682 = vld [vmem:[%s2673 + $0x40] sm:$0xff]
          %v2683 = vld [vmem:[%s2673 + $0x48] sm:$0xff]
          %v2684 = vld [vmem:[%s2673 + $0x50] sm:$0xff]
          %v2685 = vld [vmem:[%s2673 + $0x58] sm:$0xff]
          %v2686 = vld [vmem:[%s2673 + $0x60] sm:$0xff]
          %v2687 = vld [vmem:[%s2673 + $0x68] sm:$0xff]
          %v2688 = vld [vmem:[%s2673 + $0x70] sm:$0xff]
          %v2689 = vld [vmem:[%s2673 + $0x78] sm:$0xff]
          %2690 = vmatprep.subr.mxu0 0.0
          %2691 = vmatpush1.msra.mxu0 %v2689
          %2692 = vmatprep.subr.mxu0 0.0
          %2693 = vmatpush1.msra.mxu0 %v2688
          %2694 = vmatprep.subr.mxu0 0.0
          %2695 = vmatpush1.msra.mxu0 %v2687
          %2696 = vmatprep.subr.mxu0 0.0
          %2697 = vmatpush1.msra.mxu0 %v2686
          %2698 = vmatprep.subr.mxu0 0.0
          %2699 = vmatpush1.msra.mxu0 %v2685
          %2700 = vmatprep.subr.mxu0 0.0
          %2701 = vmatpush1.msra.mxu0 %v2684
          %2702 = vmatprep.subr.mxu0 0.0
          %2703 = vmatpush1.msra.mxu0 %v2683
          %2704 = vmatprep.subr.mxu0 0.0
          %2705 = vmatpush1.msra.mxu0 %v2682
          %2706 = vmatprep.subr.mxu0 0.0
          %2707 = vmatpush1.msra.mxu0 %v2681
          %2708 = vmatprep.subr.mxu0 0.0
          %2709 = vmatpush1.msra.mxu0 %v2680
          %2710 = vmatprep.subr.mxu0 0.0
          %2711 = vmatpush1.msra.mxu0 %v2679
          %2712 = vmatprep.subr.mxu0 0.0
          %2713 = vmatpush1.msra.mxu0 %v2678
          %2714 = vmatprep.subr.mxu0 0.0
          %2715 = vmatpush1.msra.mxu0 %v2677
          %2716 = vmatprep.subr.mxu0 0.0
          %2717 = vmatpush1.msra.mxu0 %v2676
          %2718 = vmatprep.subr.mxu0 0.0
          %2719 = vmatpush1.msra.mxu0 %v2675
          %2720 = vmatprep.subr.mxu0 0.0
          %2721 = vmatpush1.msra.mxu0 %v2674
          %2722 = vmatprep.subr.mxu0 0.0
          %2723 = vmatpush2.msra.mxu0 0.0
          %2724 = vmatprep.subr.mxu0 0.0
          %2725 = vmatpush2.msra.mxu0 0.0
          %2726 = vmatprep.subr.mxu0 0.0
          %2727 = vmatpush2.msra.mxu0 0.0
          %2728 = vmatprep.subr.mxu0 0.0
          %2729 = vmatpush2.msra.mxu0 0.0
          %2730 = vmatprep.subr.mxu0 0.0
          %2731 = vmatpush2.msra.mxu0 0.0
          %2732 = vmatprep.subr.mxu0 0.0
          %2733 = vmatpush2.msra.mxu0 0.0
          %2734 = vmatprep.subr.mxu0 0.0
          %2735 = vmatpush2.msra.mxu0 0.0
          %2736 = vmatprep.subr.mxu0 0.0
          %2737 = vmatpush2.msra.mxu0 0.0
          %2738 = vmatprep.subr.mxu0 0.0
          %2739 = vmatpush2.msra.mxu0 0.0
          %2740 = vmatprep.subr.mxu0 0.0
          %2741 = vmatpush2.msra.mxu0 0.0
          %2742 = vmatprep.subr.mxu0 0.0
          %2743 = vmatpush2.msra.mxu0 0.0
          %2744 = vmatprep.subr.mxu0 0.0
          %2745 = vmatpush2.msra.mxu0 0.0
          %2746 = vmatprep.subr.mxu0 0.0
          %2747 = vmatpush2.msra.mxu0 0.0
          %2748 = vmatprep.subr.mxu0 0.0
          %2749 = vmatpush2.msra.mxu0 0.0
          %2750 = vmatprep.subr.mxu0 0.0
          %2751 = vmatpush2.msra.mxu0 0.0
          %2752 = vmatprep.subr.mxu0 0.0
          %2753 = vmatpush2.msra.mxu0 0.0
          %2754 = vmatprep.mubr.f32.mxu0 0.0
          %2755 = vmatmul.mubr.f32.gmra.mxu0 %v2657
          %v2756 = vpop.f32.mrf.mxu0
          %v2757 = vadd.f32 0.0, %v2756
          %v2758 = vpop.f32.mrf.mxu0
          %2759 = vmatprep.mubr.f32.mxu0 0.0
          %2760 = vmatmul.mubr.f32.gmra.mxu0 %v2658
          %v2761 = vpop.f32.mrf.mxu0
          %v2762 = vadd.f32 0.0, %v2761
          %v2763 = vpop.f32.mrf.mxu0
          %2764 = vmatprep.mubr.f32.mxu0 0.0
          %2765 = vmatmul.mubr.f32.gmra.mxu0 %v2659
          %v2766 = vpop.f32.mrf.mxu0
          %v2767 = vadd.f32 0.0, %v2766
          %v2768 = vpop.f32.mrf.mxu0
          %2769 = vmatprep.mubr.f32.mxu0 0.0
          %2770 = vmatmul.mubr.f32.gmra.mxu0 %v2660
          %v2771 = vpop.f32.mrf.mxu0
          %v2772 = vadd.f32 0.0, %v2771
          %v2773 = vpop.f32.mrf.mxu0
          %2774 = vmatprep.mubr.f32.mxu0 0.0
          %2775 = vmatmul.mubr.f32.gmra.mxu0 %v2661
          %v2776 = vpop.f32.mrf.mxu0
          %v2777 = vadd.f32 0.0, %v2776
          %v2778 = vpop.f32.mrf.mxu0
          %2779 = vmatprep.mubr.f32.mxu0 0.0
          %2780 = vmatmul.mubr.f32.gmra.mxu0 %v2662
          %v2781 = vpop.f32.mrf.mxu0
          %v2782 = vadd.f32 0.0, %v2781
          %v2783 = vpop.f32.mrf.mxu0
          %2784 = vmatprep.mubr.f32.mxu0 0.0
          %2785 = vmatmul.mubr.f32.gmra.mxu0 %v2663
          %v2786 = vpop.f32.mrf.mxu0
          %v2787 = vadd.f32 0.0, %v2786
          %v2788 = vpop.f32.mrf.mxu0
          %2789 = vmatprep.mubr.f32.mxu0 0.0
          %2790 = vmatmul.mubr.f32.gmra.mxu0 %v2664
          %v2791 = vpop.f32.mrf.mxu0
          %v2792 = vadd.f32 0.0, %v2791
          %v2793 = vpop.f32.mrf.mxu0
          %2794 = vmatprep.mubr.f32.mxu0 0.0
          %2795 = vmatmul.mubr.f32.gmra.mxu0 %v2665
          %v2796 = vpop.f32.mrf.mxu0
          %v2797 = vadd.f32 0.0, %v2796
          %v2798 = vpop.f32.mrf.mxu0
          %2799 = vmatprep.mubr.f32.mxu0 0.0
          %2800 = vmatmul.mubr.f32.gmra.mxu0 %v2666
          %v2801 = vpop.f32.mrf.mxu0
          %v2802 = vadd.f32 0.0, %v2801
          %v2803 = vpop.f32.mrf.mxu0
          %2804 = vmatprep.mubr.f32.mxu0 0.0
          %2805 = vmatmul.mubr.f32.gmra.mxu0 %v2667
          %v2806 = vpop.f32.mrf.mxu0
          %v2807 = vadd.f32 0.0, %v2806
          %v2808 = vpop.f32.mrf.mxu0
          %2809 = vmatprep.mubr.f32.mxu0 0.0
          %2810 = vmatmul.mubr.f32.gmra.mxu0 %v2668
          %v2811 = vpop.f32.mrf.mxu0
          %v2812 = vadd.f32 0.0, %v2811
          %v2813 = vpop.f32.mrf.mxu0
          %2814 = vmatprep.mubr.f32.mxu0 0.0
          %2815 = vmatmul.mubr.f32.gmra.mxu0 %v2669
          %v2816 = vpop.f32.mrf.mxu0
          %v2817 = vadd.f32 0.0, %v2816
          %v2818 = vpop.f32.mrf.mxu0
          %2819 = vmatprep.mubr.f32.mxu0 0.0
          %2820 = vmatmul.mubr.f32.gmra.mxu0 %v2670
          %v2821 = vpop.f32.mrf.mxu0
          %v2822 = vadd.f32 0.0, %v2821
          %v2823 = vpop.f32.mrf.mxu0
          %2824 = vmatprep.mubr.f32.mxu0 0.0
          %2825 = vmatmul.mubr.f32.gmra.mxu0 %v2671
          %v2826 = vpop.f32.mrf.mxu0
          %v2827 = vadd.f32 0.0, %v2826
          %v2828 = vpop.f32.mrf.mxu0
          %2829 = vmatprep.mubr.f32.mxu0 0.0
          %2830 = vmatmul.mubr.f32.gmra.mxu0 %v2672
          %v2831 = vpop.f32.mrf.mxu0
          %v2832 = vadd.f32 0.0, %v2831
          %v2833 = vpop.f32.mrf.mxu0
          %2834 = vdwg.mxu0
          %v2835 = vadd.f32 %v1903, %v2757
          %v2836 = vadd.f32 %v1904, %v2762
          %v2837 = vadd.f32 %v1905, %v2767
          %v2838 = vadd.f32 %v1906, %v2772
          %v2839 = vadd.f32 %v1907, %v2777
          %v2840 = vadd.f32 %v1908, %v2782
          %v2841 = vadd.f32 %v1909, %v2787
          %v2842 = vadd.f32 %v1910, %v2792
          %v2843 = vadd.f32 %v1911, %v2797
          %v2844 = vadd.f32 %v1912, %v2802
          %v2845 = vadd.f32 %v1913, %v2807
          %v2846 = vadd.f32 %v1914, %v2812
          %v2847 = vadd.f32 %v1915, %v2817
          %v2848 = vadd.f32 %v1916, %v2822
          %v2849 = vadd.f32 %v1917, %v2827
          %v2850 = vadd.f32 %v1918, %v2832
        $region61: #{tpu_custom_call.1} parent=55 // loop_footer
          %s1902 = sadd.s32 1, %s1898
        $region62: #{tpu_custom_call.1} parent=55 // loop_footer_branch
          %1897 = sbr.rel target = $region58
        $region63: #{tpu_custom_call.1} parent=55 // loop_exit
          _
        %v2851 = vld [vmem:[%s407] sm:$0x7]
        %vm2852 = vcmask 23552
        %v2853 = vsel %vm2852, %v414, 0
        %v2855 = vsel %vm2852, %v415, 0
        %v2857 = vsel %vm2852, %v416, 0
        %v2859 = vsel %vm2852, %v417, 0
        %v2861 = vsel %vm2852, %v418, 0
        %v2863 = vsel %vm2852, %v419, 0
        %v2865 = vsel %vm2852, %v420, 0
        %v2867 = vsel %vm2852, %v421, 0
        %v2869 = vsel %vm2852, %v422, 0
        %v2871 = vsel %vm2852, %v423, 0
        %v2873 = vsel %vm2852, %v424, 0
        %v2875 = vsel %vm2852, %v425, 0
        %v2877 = vsel %vm2852, %v426, 0
        %v2879 = vsel %vm2852, %v427, 0
        %v2881 = vsel %vm2852, %v428, 0
        %v2883 = vsel %vm2852, %v429, 0
        %vm2885 = vcmask 1042432
        %v2887 = vsel %vm2885, %v2851, 0
        %2889 = vmatprep.subr.mxu0 0.0
        %2890 = vmatpush1.msra.mxu0 0.0
        %2891 = vmatprep.subr.mxu0 0.0
        %2892 = vmatpush1.msra.mxu0 0.0
        %2893 = vmatprep.subr.mxu0 0.0
        %2894 = vmatpush1.msra.mxu0 0.0
        %2895 = vmatprep.subr.mxu0 0.0
        %2896 = vmatpush1.msra.mxu0 0.0
        %2897 = vmatprep.subr.mxu0 0.0
        %2898 = vmatpush1.msra.mxu0 0.0
        %2899 = vmatprep.subr.mxu0 0.0
        %2900 = vmatpush1.msra.mxu0 0.0
        %2901 = vmatprep.subr.mxu0 0.0
        %2902 = vmatpush1.msra.mxu0 0.0
        %2903 = vmatprep.subr.mxu0 0.0
        %2904 = vmatpush1.msra.mxu0 0.0
        %2905 = vmatprep.subr.mxu0 0.0
        %2906 = vmatpush1.msra.mxu0 0.0
        %2907 = vmatprep.subr.mxu0 0.0
        %2908 = vmatpush1.msra.mxu0 0.0
        %2909 = vmatprep.subr.mxu0 0.0
        %2910 = vmatpush1.msra.mxu0 0.0
        %2911 = vmatprep.subr.mxu0 0.0
        %2912 = vmatpush1.msra.mxu0 0.0
        %2913 = vmatprep.subr.mxu0 0.0
        %2914 = vmatpush1.msra.mxu0 0.0
        %2915 = vmatprep.subr.mxu0 0.0
        %2916 = vmatpush1.msra.mxu0 0.0
        %2917 = vmatprep.subr.mxu0 0.0
        %2918 = vmatpush1.msra.mxu0 0.0
        %2919 = vmatprep.subr.mxu0 0.0
        %2920 = vmatpush1.msra.mxu0 %v2887
        %2921 = vmatprep.subr.mxu0 0.0
        %2922 = vmatpush2.msra.mxu0 0.0
        %2923 = vmatprep.subr.mxu0 0.0
        %2924 = vmatpush2.msra.mxu0 0.0
        %2925 = vmatprep.subr.mxu0 0.0
        %2926 = vmatpush2.msra.mxu0 0.0
        %2927 = vmatprep.subr.mxu0 0.0
        %2928 = vmatpush2.msra.mxu0 0.0
        %2929 = vmatprep.subr.mxu0 0.0
        %2930 = vmatpush2.msra.mxu0 0.0
        %2931 = vmatprep.subr.mxu0 0.0
        %2932 = vmatpush2.msra.mxu0 0.0
        %2933 = vmatprep.subr.mxu0 0.0
        %2934 = vmatpush2.msra.mxu0 0.0
        %2935 = vmatprep.subr.mxu0 0.0
        %2936 = vmatpush2.msra.mxu0 0.0
        %2937 = vmatprep.subr.mxu0 0.0
        %2938 = vmatpush2.msra.mxu0 0.0
        %2939 = vmatprep.subr.mxu0 0.0
        %2940 = vmatpush2.msra.mxu0 0.0
        %2941 = vmatprep.subr.mxu0 0.0
        %2942 = vmatpush2.msra.mxu0 0.0
        %2943 = vmatprep.subr.mxu0 0.0
        %2944 = vmatpush2.msra.mxu0 0.0
        %2945 = vmatprep.subr.mxu0 0.0
        %2946 = vmatpush2.msra.mxu0 0.0
        %2947 = vmatprep.subr.mxu0 0.0
        %2948 = vmatpush2.msra.mxu0 0.0
        %2949 = vmatprep.subr.mxu0 0.0
        %2950 = vmatpush2.msra.mxu0 0.0
        %2951 = vmatprep.subr.mxu0 0.0
        %2952 = vmatpush2.msra.mxu0 0.0
        %2953 = vmatprep.mubr.f32.mxu0 0.0
        %2954 = vmatmul.mubr.f32.gmra.mxu0 %v2853
        %v2955 = vpop.f32.mrf.mxu0
        %v2956 = vadd.f32 %v514, %v2955
        %v2957 = vpop.f32.mrf.mxu0
        %2958 = vmatprep.mubr.f32.mxu0 0.0
        %2959 = vmatmul.mubr.f32.gmra.mxu0 %v2855
        %v2960 = vpop.f32.mrf.mxu0
        %v2961 = vadd.f32 %v514, %v2960
        %v2962 = vpop.f32.mrf.mxu0
        %2963 = vmatprep.mubr.f32.mxu0 0.0
        %2964 = vmatmul.mubr.f32.gmra.mxu0 %v2857
        %v2965 = vpop.f32.mrf.mxu0
        %v2966 = vadd.f32 %v514, %v2965
        %v2967 = vpop.f32.mrf.mxu0
        %2968 = vmatprep.mubr.f32.mxu0 0.0
        %2969 = vmatmul.mubr.f32.gmra.mxu0 %v2859
        %v2970 = vpop.f32.mrf.mxu0
        %v2971 = vadd.f32 %v514, %v2970
        %v2972 = vpop.f32.mrf.mxu0
        %2973 = vmatprep.mubr.f32.mxu0 0.0
        %2974 = vmatmul.mubr.f32.gmra.mxu0 %v2861
        %v2975 = vpop.f32.mrf.mxu0
        %v2976 = vadd.f32 %v514, %v2975
        %v2977 = vpop.f32.mrf.mxu0
        %2978 = vmatprep.mubr.f32.mxu0 0.0
        %2979 = vmatmul.mubr.f32.gmra.mxu0 %v2863
        %v2980 = vpop.f32.mrf.mxu0
        %v2981 = vadd.f32 %v514, %v2980
        %v2982 = vpop.f32.mrf.mxu0
        %2983 = vmatprep.mubr.f32.mxu0 0.0
        %2984 = vmatmul.mubr.f32.gmra.mxu0 %v2865
        %v2985 = vpop.f32.mrf.mxu0
        %v2986 = vadd.f32 %v514, %v2985
        %v2987 = vpop.f32.mrf.mxu0
        %2988 = vmatprep.mubr.f32.mxu0 0.0
        %2989 = vmatmul.mubr.f32.gmra.mxu0 %v2867
        %v2990 = vpop.f32.mrf.mxu0
        %v2991 = vadd.f32 %v514, %v2990
        %v2992 = vpop.f32.mrf.mxu0
        %2993 = vmatprep.mubr.f32.mxu0 0.0
        %2994 = vmatmul.mubr.f32.gmra.mxu0 %v2869
        %v2995 = vpop.f32.mrf.mxu0
        %v2996 = vadd.f32 %v514, %v2995
        %v2997 = vpop.f32.mrf.mxu0
        %2998 = vmatprep.mubr.f32.mxu0 0.0
        %2999 = vmatmul.mubr.f32.gmra.mxu0 %v2871
        %v3000 = vpop.f32.mrf.mxu0
        %v3001 = vadd.f32 %v514, %v3000
        %v3002 = vpop.f32.mrf.mxu0
        %3003 = vmatprep.mubr.f32.mxu0 0.0
        %3004 = vmatmul.mubr.f32.gmra.mxu0 %v2873
        %v3005 = vpop.f32.mrf.mxu0
        %v3006 = vadd.f32 %v514, %v3005
        %v3007 = vpop.f32.mrf.mxu0
        %3008 = vmatprep.mubr.f32.mxu0 0.0
        %3009 = vmatmul.mubr.f32.gmra.mxu0 %v2875
        %v3010 = vpop.f32.mrf.mxu0
        %v3011 = vadd.f32 %v514, %v3010
        %v3012 = vpop.f32.mrf.mxu0
        %3013 = vmatprep.mubr.f32.mxu0 0.0
        %3014 = vmatmul.mubr.f32.gmra.mxu0 %v2877
        %v3015 = vpop.f32.mrf.mxu0
        %v3016 = vadd.f32 %v514, %v3015
        %v3017 = vpop.f32.mrf.mxu0
        %3018 = vmatprep.mubr.f32.mxu0 0.0
        %3019 = vmatmul.mubr.f32.gmra.mxu0 %v2879
        %v3020 = vpop.f32.mrf.mxu0
        %v3021 = vadd.f32 %v514, %v3020
        %v3022 = vpop.f32.mrf.mxu0
        %3023 = vmatprep.mubr.f32.mxu0 0.0
        %3024 = vmatmul.mubr.f32.gmra.mxu0 %v2881
        %v3025 = vpop.f32.mrf.mxu0
        %v3026 = vadd.f32 %v514, %v3025
        %v3027 = vpop.f32.mrf.mxu0
        %3028 = vmatprep.mubr.f32.mxu0 0.0
        %3029 = vmatmul.mubr.f32.gmra.mxu0 %v2883
        %v3030 = vpop.f32.mrf.mxu0
        %v3031 = vadd.f32 %v514, %v3030
        %v3032 = vpop.f32.mrf.mxu0
        %3033 = vdwg.mxu0
        %v3034 = vld [vmem:[%s4] sm:$0xff]
        %v3035 = vld [vmem:[%s4 + $0x8] sm:$0xff]
        %vm3036 = vcmask 130048
        %v3038 = vsel %vm3036, %v1903, 0
        %v3041 = vsel %vm3036, %v1904, 0
        %v3044 = vsel %vm3036, %v1905, 0
        %v3047 = vsel %vm3036, %v1906, 0
        %v3050 = vsel %vm3036, %v1907, 0
        %v3053 = vsel %vm3036, %v1908, 0
        %v3056 = vsel %vm3036, %v1909, 0
        %v3059 = vsel %vm3036, %v1910, 0
        %v3062 = vsel %vm3036, %v1911, 0
        %v3065 = vsel %vm3036, %v1912, 0
        %v3068 = vsel %vm3036, %v1913, 0
        %v3071 = vsel %vm3036, %v1914, 0
        %v3074 = vsel %vm3036, %v1915, 0
        %v3077 = vsel %vm3036, %v1916, 0
        %v3080 = vsel %vm3036, %v1917, 0
        %v3083 = vsel %vm3036, %v1918, 0
        %3085 = vmatprep.subr.mxu0 0.0
        %3086 = vmatpush1.msra.mxu0 0.0
        %3087 = vmatprep.subr.mxu0 0.0
        %3088 = vmatpush1.msra.mxu0 0.0
        %3089 = vmatprep.subr.mxu0 0.0
        %3090 = vmatpush1.msra.mxu0 0.0
        %3091 = vmatprep.subr.mxu0 0.0
        %3092 = vmatpush1.msra.mxu0 0.0
        %3093 = vmatprep.subr.mxu0 0.0
        %3094 = vmatpush1.msra.mxu0 0.0
        %3095 = vmatprep.subr.mxu0 0.0
        %3096 = vmatpush1.msra.mxu0 0.0
        %3097 = vmatprep.subr.mxu0 0.0
        %3098 = vmatpush1.msra.mxu0 0.0
        %3099 = vmatprep.subr.mxu0 0.0
        %3100 = vmatpush1.msra.mxu0 0.0
        %3101 = vmatprep.subr.mxu0 0.0
        %3102 = vmatpush1.msra.mxu0 0.0
        %3103 = vmatprep.subr.mxu0 0.0
        %3104 = vmatpush1.msra.mxu0 0.0
        %3105 = vmatprep.subr.mxu0 0.0
        %3106 = vmatpush1.msra.mxu0 0.0
        %3107 = vmatprep.subr.mxu0 0.0
        %3108 = vmatpush1.msra.mxu0 0.0
        %3109 = vmatprep.subr.mxu0 0.0
        %3110 = vmatpush1.msra.mxu0 0.0
        %3111 = vmatprep.subr.mxu0 0.0
        %3112 = vmatpush1.msra.mxu0 0.0
        %3113 = vmatprep.subr.mxu0 0.0
        %3114 = vmatpush1.msra.mxu0 %v3035
        %3115 = vmatprep.subr.mxu0 0.0
        %3116 = vmatpush1.msra.mxu0 %v3034
        %3117 = vmatprep.subr.mxu0 0.0
        %3118 = vmatpush2.msra.mxu0 0.0
        %3119 = vmatprep.subr.mxu0 0.0
        %3120 = vmatpush2.msra.mxu0 0.0
        %3121 = vmatprep.subr.mxu0 0.0
        %3122 = vmatpush2.msra.mxu0 0.0
        %3123 = vmatprep.subr.mxu0 0.0
        %3124 = vmatpush2.msra.mxu0 0.0
        %3125 = vmatprep.subr.mxu0 0.0
        %3126 = vmatpush2.msra.mxu0 0.0
        %3127 = vmatprep.subr.mxu0 0.0
        %3128 = vmatpush2.msra.mxu0 0.0
        %3129 = vmatprep.subr.mxu0 0.0
        %3130 = vmatpush2.msra.mxu0 0.0
        %3131 = vmatprep.subr.mxu0 0.0
        %3132 = vmatpush2.msra.mxu0 0.0
        %3133 = vmatprep.subr.mxu0 0.0
        %3134 = vmatpush2.msra.mxu0 0.0
        %3135 = vmatprep.subr.mxu0 0.0
        %3136 = vmatpush2.msra.mxu0 0.0
        %3137 = vmatprep.subr.mxu0 0.0
        %3138 = vmatpush2.msra.mxu0 0.0
        %3139 = vmatprep.subr.mxu0 0.0
        %3140 = vmatpush2.msra.mxu0 0.0
        %3141 = vmatprep.subr.mxu0 0.0
        %3142 = vmatpush2.msra.mxu0 0.0
        %3143 = vmatprep.subr.mxu0 0.0
        %3144 = vmatpush2.msra.mxu0 0.0
        %3145 = vmatprep.subr.mxu0 0.0
        %3146 = vmatpush2.msra.mxu0 0.0
        %3147 = vmatprep.subr.mxu0 0.0
        %3148 = vmatpush2.msra.mxu0 0.0
        %3149 = vmatprep.mubr.f32.mxu0 0.0
        %3150 = vmatmul.mubr.f32.gmra.mxu0 %v3038
        %v3151 = vpop.f32.mrf.mxu0
        %v3152 = vadd.f32 0.0, %v3151
        %v3153 = vpop.f32.mrf.mxu0
        %3154 = vmatprep.mubr.f32.mxu0 0.0
        %3155 = vmatmul.mubr.f32.gmra.mxu0 %v3041
        %v3156 = vpop.f32.mrf.mxu0
        %v3157 = vadd.f32 0.0, %v3156
        %v3158 = vpop.f32.mrf.mxu0
        %3159 = vmatprep.mubr.f32.mxu0 0.0
        %3160 = vmatmul.mubr.f32.gmra.mxu0 %v3044
        %v3161 = vpop.f32.mrf.mxu0
        %v3162 = vadd.f32 0.0, %v3161
        %v3163 = vpop.f32.mrf.mxu0
        %3164 = vmatprep.mubr.f32.mxu0 0.0
        %3165 = vmatmul.mubr.f32.gmra.mxu0 %v3047
        %v3166 = vpop.f32.mrf.mxu0
        %v3167 = vadd.f32 0.0, %v3166
        %v3168 = vpop.f32.mrf.mxu0
        %3169 = vmatprep.mubr.f32.mxu0 0.0
        %3170 = vmatmul.mubr.f32.gmra.mxu0 %v3050
        %v3171 = vpop.f32.mrf.mxu0
        %v3172 = vadd.f32 0.0, %v3171
        %v3173 = vpop.f32.mrf.mxu0
        %3174 = vmatprep.mubr.f32.mxu0 0.0
        %3175 = vmatmul.mubr.f32.gmra.mxu0 %v3053
        %v3176 = vpop.f32.mrf.mxu0
        %v3177 = vadd.f32 0.0, %v3176
        %v3178 = vpop.f32.mrf.mxu0
        %3179 = vmatprep.mubr.f32.mxu0 0.0
        %3180 = vmatmul.mubr.f32.gmra.mxu0 %v3056
        %v3181 = vpop.f32.mrf.mxu0
        %v3182 = vadd.f32 0.0, %v3181
        %v3183 = vpop.f32.mrf.mxu0
        %3184 = vmatprep.mubr.f32.mxu0 0.0
        %3185 = vmatmul.mubr.f32.gmra.mxu0 %v3059
        %v3186 = vpop.f32.mrf.mxu0
        %v3187 = vadd.f32 0.0, %v3186
        %v3188 = vpop.f32.mrf.mxu0
        %3189 = vmatprep.mubr.f32.mxu0 0.0
        %3190 = vmatmul.mubr.f32.gmra.mxu0 %v3062
        %v3191 = vpop.f32.mrf.mxu0
        %v3192 = vadd.f32 0.0, %v3191
        %v3193 = vpop.f32.mrf.mxu0
        %3194 = vmatprep.mubr.f32.mxu0 0.0
        %3195 = vmatmul.mubr.f32.gmra.mxu0 %v3065
        %v3196 = vpop.f32.mrf.mxu0
        %v3197 = vadd.f32 0.0, %v3196
        %v3198 = vpop.f32.mrf.mxu0
        %3199 = vmatprep.mubr.f32.mxu0 0.0
        %3200 = vmatmul.mubr.f32.gmra.mxu0 %v3068
        %v3201 = vpop.f32.mrf.mxu0
        %v3202 = vadd.f32 0.0, %v3201
        %v3203 = vpop.f32.mrf.mxu0
        %3204 = vmatprep.mubr.f32.mxu0 0.0
        %3205 = vmatmul.mubr.f32.gmra.mxu0 %v3071
        %v3206 = vpop.f32.mrf.mxu0
        %v3207 = vadd.f32 0.0, %v3206
        %v3208 = vpop.f32.mrf.mxu0
        %3209 = vmatprep.mubr.f32.mxu0 0.0
        %3210 = vmatmul.mubr.f32.gmra.mxu0 %v3074
        %v3211 = vpop.f32.mrf.mxu0
        %v3212 = vadd.f32 0.0, %v3211
        %v3213 = vpop.f32.mrf.mxu0
        %3214 = vmatprep.mubr.f32.mxu0 0.0
        %3215 = vmatmul.mubr.f32.gmra.mxu0 %v3077
        %v3216 = vpop.f32.mrf.mxu0
        %v3217 = vadd.f32 0.0, %v3216
        %v3218 = vpop.f32.mrf.mxu0
        %3219 = vmatprep.mubr.f32.mxu0 0.0
        %3220 = vmatmul.mubr.f32.gmra.mxu0 %v3080
        %v3221 = vpop.f32.mrf.mxu0
        %v3222 = vadd.f32 0.0, %v3221
        %v3223 = vpop.f32.mrf.mxu0
        %3224 = vmatprep.mubr.f32.mxu0 0.0
        %3225 = vmatmul.mubr.f32.gmra.mxu0 %v3083
        %v3226 = vpop.f32.mrf.mxu0
        %v3227 = vadd.f32 0.0, %v3226
        %v3228 = vpop.f32.mrf.mxu0
        %3229 = vdwg.mxu0
        %v3230 = vadd.f32 %v2956, %v3152
        %v3231 = vadd.f32 %v2961, %v3157
        %v3232 = vadd.f32 %v2966, %v3162
        %v3233 = vadd.f32 %v2971, %v3167
        %v3234 = vadd.f32 %v2976, %v3172
        %v3235 = vadd.f32 %v2981, %v3177
        %v3236 = vadd.f32 %v2986, %v3182
        %v3237 = vadd.f32 %v2991, %v3187
        %v3238 = vadd.f32 %v2996, %v3192
        %v3239 = vadd.f32 %v3001, %v3197
        %v3240 = vadd.f32 %v3006, %v3202
        %v3241 = vadd.f32 %v3011, %v3207
        %v3242 = vadd.f32 %v3016, %v3212
        %v3243 = vadd.f32 %v3021, %v3217
        %v3244 = vadd.f32 %v3026, %v3222
        %v3245 = vadd.f32 %v3031, %v3227
        %v3246 = vmax.f32 %v3230, 0.0
        %v3247 = vmax.f32 %v3231, 0.0
        %v3248 = vmax.f32 %v3232, 0.0
        %v3249 = vmax.f32 %v3233, 0.0
        %v3250 = vmax.f32 %v3234, 0.0
        %v3251 = vmax.f32 %v3235, 0.0
        %v3252 = vmax.f32 %v3236, 0.0
        %v3253 = vmax.f32 %v3237, 0.0
        %v3254 = vmax.f32 %v3238, 0.0
        %v3255 = vmax.f32 %v3239, 0.0
        %v3256 = vmax.f32 %v3240, 0.0
        %v3257 = vmax.f32 %v3241, 0.0
        %v3258 = vmax.f32 %v3242, 0.0
        %v3259 = vmax.f32 %v3243, 0.0
        %v3260 = vmax.f32 %v3244, 0.0
        %v3261 = vmax.f32 %v3245, 0.0
        %v3262 = vld [vmem:[%s5] sm:$0xff]
        %v3263 = vld [vmem:[%s5 + $0x8] sm:$0xff]
        %v3264 = vld [vmem:[%s5 + $0x10] sm:$0xff]
        %v3265 = vld [vmem:[%s5 + $0x18] sm:$0xff]
        %v3266 = vld [vmem:[%s6] sm:$0x1]
        %v3268 = vlaneseq
        %v3269 = vshrl.u32 %v3268, 7
        %v3270 = vsub.s32 0, %v3269
        %v3271 = vrot.slane %v3266, %v3270
        %vm3273 = vcmask 261120
        %v3275 = vsel %vm3273, %v3246, 0
        %v3278 = vsel %vm3273, %v3247, 0
        %v3281 = vsel %vm3273, %v3248, 0
        %v3284 = vsel %vm3273, %v3249, 0
        %v3287 = vsel %vm3273, %v3250, 0
        %v3290 = vsel %vm3273, %v3251, 0
        %v3293 = vsel %vm3273, %v3252, 0
        %v3296 = vsel %vm3273, %v3253, 0
        %v3299 = vsel %vm3273, %v3254, 0
        %v3302 = vsel %vm3273, %v3255, 0
        %v3305 = vsel %vm3273, %v3256, 0
        %v3308 = vsel %vm3273, %v3257, 0
        %v3311 = vsel %vm3273, %v3258, 0
        %v3314 = vsel %vm3273, %v3259, 0
        %v3317 = vsel %vm3273, %v3260, 0
        %v3320 = vsel %vm3273, %v3261, 0
        %3322 = vmatprep.subr.mxu0 0.0
        %3323 = vmatpush1.msra.mxu0 0.0
        %3324 = vmatprep.subr.mxu0 0.0
        %3325 = vmatpush1.msra.mxu0 0.0
        %3326 = vmatprep.subr.mxu0 0.0
        %3327 = vmatpush1.msra.mxu0 0.0
        %3328 = vmatprep.subr.mxu0 0.0
        %3329 = vmatpush1.msra.mxu0 0.0
        %3330 = vmatprep.subr.mxu0 0.0
        %3331 = vmatpush1.msra.mxu0 0.0
        %3332 = vmatprep.subr.mxu0 0.0
        %3333 = vmatpush1.msra.mxu0 0.0
        %3334 = vmatprep.subr.mxu0 0.0
        %3335 = vmatpush1.msra.mxu0 0.0
        %3336 = vmatprep.subr.mxu0 0.0
        %3337 = vmatpush1.msra.mxu0 0.0
        %3338 = vmatprep.subr.mxu0 0.0
        %3339 = vmatpush1.msra.mxu0 0.0
        %3340 = vmatprep.subr.mxu0 0.0
        %3341 = vmatpush1.msra.mxu0 0.0
        %3342 = vmatprep.subr.mxu0 0.0
        %3343 = vmatpush1.msra.mxu0 0.0
        %3344 = vmatprep.subr.mxu0 0.0
        %3345 = vmatpush1.msra.mxu0 0.0
        %3346 = vmatprep.subr.mxu0 0.0
        %3347 = vmatpush1.msra.mxu0 %v3265
        %3348 = vmatprep.subr.mxu0 0.0
        %3349 = vmatpush1.msra.mxu0 %v3264
        %3350 = vmatprep.subr.mxu0 0.0
        %3351 = vmatpush1.msra.mxu0 %v3263
        %3352 = vmatprep.subr.mxu0 0.0
        %3353 = vmatpush1.msra.mxu0 %v3262
        %3354 = vmatprep.subr.mxu0 0.0
        %3355 = vmatpush2.msra.mxu0 0.0
        %3356 = vmatprep.subr.mxu0 0.0
        %3357 = vmatpush2.msra.mxu0 0.0
        %3358 = vmatprep.subr.mxu0 0.0
        %3359 = vmatpush2.msra.mxu0 0.0
        %3360 = vmatprep.subr.mxu0 0.0
        %3361 = vmatpush2.msra.mxu0 0.0
        %3362 = vmatprep.subr.mxu0 0.0
        %3363 = vmatpush2.msra.mxu0 0.0
        %3364 = vmatprep.subr.mxu0 0.0
        %3365 = vmatpush2.msra.mxu0 0.0
        %3366 = vmatprep.subr.mxu0 0.0
        %3367 = vmatpush2.msra.mxu0 0.0
        %3368 = vmatprep.subr.mxu0 0.0
        %3369 = vmatpush2.msra.mxu0 0.0
        %3370 = vmatprep.subr.mxu0 0.0
        %3371 = vmatpush2.msra.mxu0 0.0
        %3372 = vmatprep.subr.mxu0 0.0
        %3373 = vmatpush2.msra.mxu0 0.0
        %3374 = vmatprep.subr.mxu0 0.0
        %3375 = vmatpush2.msra.mxu0 0.0
        %3376 = vmatprep.subr.mxu0 0.0
        %3377 = vmatpush2.msra.mxu0 0.0
        %3378 = vmatprep.subr.mxu0 0.0
        %3379 = vmatpush2.msra.mxu0 0.0
        %3380 = vmatprep.subr.mxu0 0.0
        %3381 = vmatpush2.msra.mxu0 0.0
        %3382 = vmatprep.subr.mxu0 0.0
        %3383 = vmatpush2.msra.mxu0 0.0
        %3384 = vmatprep.subr.mxu0 0.0
        %3385 = vmatpush2.msra.mxu0 0.0
        %3386 = vmatprep.mubr.f32.mxu0 0.0
        %3387 = vmatmul.mubr.f32.gmra.mxu0 %v3275
        %v3388 = vpop.f32.mrf.mxu0
        %v3389 = vadd.f32 %v3271, %v3388
        %v3390 = vpop.f32.mrf.mxu0
        %3391 = vmatprep.mubr.f32.mxu0 0.0
        %3392 = vmatmul.mubr.f32.gmra.mxu0 %v3278
        %v3393 = vpop.f32.mrf.mxu0
        %v3394 = vadd.f32 %v3271, %v3393
        %v3395 = vpop.f32.mrf.mxu0
        %3396 = vmatprep.mubr.f32.mxu0 0.0
        %3397 = vmatmul.mubr.f32.gmra.mxu0 %v3281
        %v3398 = vpop.f32.mrf.mxu0
        %v3399 = vadd.f32 %v3271, %v3398
        %v3400 = vpop.f32.mrf.mxu0
        %3401 = vmatprep.mubr.f32.mxu0 0.0
        %3402 = vmatmul.mubr.f32.gmra.mxu0 %v3284
        %v3403 = vpop.f32.mrf.mxu0
        %v3404 = vadd.f32 %v3271, %v3403
        %v3405 = vpop.f32.mrf.mxu0
        %3406 = vmatprep.mubr.f32.mxu0 0.0
        %3407 = vmatmul.mubr.f32.gmra.mxu0 %v3287
        %v3408 = vpop.f32.mrf.mxu0
        %v3409 = vadd.f32 %v3271, %v3408
        %v3410 = vpop.f32.mrf.mxu0
        %3411 = vmatprep.mubr.f32.mxu0 0.0
        %3412 = vmatmul.mubr.f32.gmra.mxu0 %v3290
        %v3413 = vpop.f32.mrf.mxu0
        %v3414 = vadd.f32 %v3271, %v3413
        %v3415 = vpop.f32.mrf.mxu0
        %3416 = vmatprep.mubr.f32.mxu0 0.0
        %3417 = vmatmul.mubr.f32.gmra.mxu0 %v3293
        %v3418 = vpop.f32.mrf.mxu0
        %v3419 = vadd.f32 %v3271, %v3418
        %v3420 = vpop.f32.mrf.mxu0
        %3421 = vmatprep.mubr.f32.mxu0 0.0
        %3422 = vmatmul.mubr.f32.gmra.mxu0 %v3296
        %v3423 = vpop.f32.mrf.mxu0
        %v3424 = vadd.f32 %v3271, %v3423
        %v3425 = vpop.f32.mrf.mxu0
        %3426 = vmatprep.mubr.f32.mxu0 0.0
        %3427 = vmatmul.mubr.f32.gmra.mxu0 %v3299
        %v3428 = vpop.f32.mrf.mxu0
        %v3429 = vadd.f32 %v3271, %v3428
        %v3430 = vpop.f32.mrf.mxu0
        %3431 = vmatprep.mubr.f32.mxu0 0.0
        %3432 = vmatmul.mubr.f32.gmra.mxu0 %v3302
        %v3433 = vpop.f32.mrf.mxu0
        %v3434 = vadd.f32 %v3271, %v3433
        %v3435 = vpop.f32.mrf.mxu0
        %3436 = vmatprep.mubr.f32.mxu0 0.0
        %3437 = vmatmul.mubr.f32.gmra.mxu0 %v3305
        %v3438 = vpop.f32.mrf.mxu0
        %v3439 = vadd.f32 %v3271, %v3438
        %v3440 = vpop.f32.mrf.mxu0
        %3441 = vmatprep.mubr.f32.mxu0 0.0
        %3442 = vmatmul.mubr.f32.gmra.mxu0 %v3308
        %v3443 = vpop.f32.mrf.mxu0
        %v3444 = vadd.f32 %v3271, %v3443
        %v3445 = vpop.f32.mrf.mxu0
        %3446 = vmatprep.mubr.f32.mxu0 0.0
        %3447 = vmatmul.mubr.f32.gmra.mxu0 %v3311
        %v3448 = vpop.f32.mrf.mxu0
        %v3449 = vadd.f32 %v3271, %v3448
        %v3450 = vpop.f32.mrf.mxu0
        %3451 = vmatprep.mubr.f32.mxu0 0.0
        %3452 = vmatmul.mubr.f32.gmra.mxu0 %v3314
        %v3453 = vpop.f32.mrf.mxu0
        %v3454 = vadd.f32 %v3271, %v3453
        %v3455 = vpop.f32.mrf.mxu0
        %3456 = vmatprep.mubr.f32.mxu0 0.0
        %3457 = vmatmul.mubr.f32.gmra.mxu0 %v3317
        %v3458 = vpop.f32.mrf.mxu0
        %v3459 = vadd.f32 %v3271, %v3458
        %v3460 = vpop.f32.mrf.mxu0
        %3461 = vmatprep.mubr.f32.mxu0 0.0
        %3462 = vmatmul.mubr.f32.gmra.mxu0 %v3320
        %v3463 = vpop.f32.mrf.mxu0
        %v3464 = vadd.f32 %v3271, %v3463
        %v3465 = vpop.f32.mrf.mxu0
        %3466 = vdwg.mxu0
        %v3467 = vmax.f32 %v3389, 0.0
        %v3468 = vmax.f32 %v3394, 0.0
        %v3469 = vmax.f32 %v3399, 0.0
        %v3470 = vmax.f32 %v3404, 0.0
        %v3471 = vmax.f32 %v3409, 0.0
        %v3472 = vmax.f32 %v3414, 0.0
        %v3473 = vmax.f32 %v3419, 0.0
        %v3474 = vmax.f32 %v3424, 0.0
        %v3475 = vmax.f32 %v3429, 0.0
        %v3476 = vmax.f32 %v3434, 0.0
        %v3477 = vmax.f32 %v3439, 0.0
        %v3478 = vmax.f32 %v3444, 0.0
        %v3479 = vmax.f32 %v3449, 0.0
        %v3480 = vmax.f32 %v3454, 0.0
        %v3481 = vmax.f32 %v3459, 0.0
        %v3482 = vmax.f32 %v3464, 0.0
        %s3483 = scalar_lea.vmem %s5, 32
        %v3484 = vld [vmem:[%s3483] sm:$0xff]
        %v3485 = vld [vmem:[%s3483 + $0x8] sm:$0xff]
        %v3486 = vld [vmem:[%s3483 + $0x10] sm:$0xff]
        %v3487 = vld [vmem:[%s3483 + $0x18] sm:$0xff]
        %s3488 = scalar_lea.vmem %s6, 1
        %v3489 = vld [vmem:[%s3488] sm:$0x1]
        %v3491 = vlaneseq
        %v3492 = vshrl.u32 %v3491, 7
        %v3493 = vsub.s32 0, %v3492
        %v3494 = vrot.slane %v3489, %v3493
        %v3497 = vsel %vm3273, %v3467, 0
        %v3500 = vsel %vm3273, %v3468, 0
        %v3503 = vsel %vm3273, %v3469, 0
        %v3506 = vsel %vm3273, %v3470, 0
        %v3509 = vsel %vm3273, %v3471, 0
        %v3512 = vsel %vm3273, %v3472, 0
        %v3515 = vsel %vm3273, %v3473, 0
        %v3518 = vsel %vm3273, %v3474, 0
        %v3521 = vsel %vm3273, %v3475, 0
        %v3524 = vsel %vm3273, %v3476, 0
        %v3527 = vsel %vm3273, %v3477, 0
        %v3530 = vsel %vm3273, %v3478, 0
        %v3533 = vsel %vm3273, %v3479, 0
        %v3536 = vsel %vm3273, %v3480, 0
        %v3539 = vsel %vm3273, %v3481, 0
        %v3542 = vsel %vm3273, %v3482, 0
        %3544 = vmatprep.subr.mxu0 0.0
        %3545 = vmatpush1.msra.mxu0 0.0
        %3546 = vmatprep.subr.mxu0 0.0
        %3547 = vmatpush1.msra.mxu0 0.0
        %3548 = vmatprep.subr.mxu0 0.0
        %3549 = vmatpush1.msra.mxu0 0.0
        %3550 = vmatprep.subr.mxu0 0.0
        %3551 = vmatpush1.msra.mxu0 0.0
        %3552 = vmatprep.subr.mxu0 0.0
        %3553 = vmatpush1.msra.mxu0 0.0
        %3554 = vmatprep.subr.mxu0 0.0
        %3555 = vmatpush1.msra.mxu0 0.0
        %3556 = vmatprep.subr.mxu0 0.0
        %3557 = vmatpush1.msra.mxu0 0.0
        %3558 = vmatprep.subr.mxu0 0.0
        %3559 = vmatpush1.msra.mxu0 0.0
        %3560 = vmatprep.subr.mxu0 0.0
        %3561 = vmatpush1.msra.mxu0 0.0
        %3562 = vmatprep.subr.mxu0 0.0
        %3563 = vmatpush1.msra.mxu0 0.0
        %3564 = vmatprep.subr.mxu0 0.0
        %3565 = vmatpush1.msra.mxu0 0.0
        %3566 = vmatprep.subr.mxu0 0.0
        %3567 = vmatpush1.msra.mxu0 0.0
        %3568 = vmatprep.subr.mxu0 0.0
        %3569 = vmatpush1.msra.mxu0 %v3487
        %3570 = vmatprep.subr.mxu0 0.0
        %3571 = vmatpush1.msra.mxu0 %v3486
        %3572 = vmatprep.subr.mxu0 0.0
        %3573 = vmatpush1.msra.mxu0 %v3485
        %3574 = vmatprep.subr.mxu0 0.0
        %3575 = vmatpush1.msra.mxu0 %v3484
        %3576 = vmatprep.subr.mxu0 0.0
        %3577 = vmatpush2.msra.mxu0 0.0
        %3578 = vmatprep.subr.mxu0 0.0
        %3579 = vmatpush2.msra.mxu0 0.0
        %3580 = vmatprep.subr.mxu0 0.0
        %3581 = vmatpush2.msra.mxu0 0.0
        %3582 = vmatprep.subr.mxu0 0.0
        %3583 = vmatpush2.msra.mxu0 0.0
        %3584 = vmatprep.subr.mxu0 0.0
        %3585 = vmatpush2.msra.mxu0 0.0
        %3586 = vmatprep.subr.mxu0 0.0
        %3587 = vmatpush2.msra.mxu0 0.0
        %3588 = vmatprep.subr.mxu0 0.0
        %3589 = vmatpush2.msra.mxu0 0.0
        %3590 = vmatprep.subr.mxu0 0.0
        %3591 = vmatpush2.msra.mxu0 0.0
        %3592 = vmatprep.subr.mxu0 0.0
        %3593 = vmatpush2.msra.mxu0 0.0
        %3594 = vmatprep.subr.mxu0 0.0
        %3595 = vmatpush2.msra.mxu0 0.0
        %3596 = vmatprep.subr.mxu0 0.0
        %3597 = vmatpush2.msra.mxu0 0.0
        %3598 = vmatprep.subr.mxu0 0.0
        %3599 = vmatpush2.msra.mxu0 0.0
        %3600 = vmatprep.subr.mxu0 0.0
        %3601 = vmatpush2.msra.mxu0 0.0
        %3602 = vmatprep.subr.mxu0 0.0
        %3603 = vmatpush2.msra.mxu0 0.0
        %3604 = vmatprep.subr.mxu0 0.0
        %3605 = vmatpush2.msra.mxu0 0.0
        %3606 = vmatprep.subr.mxu0 0.0
        %3607 = vmatpush2.msra.mxu0 0.0
        %3608 = vmatprep.mubr.f32.mxu0 0.0
        %3609 = vmatmul.mubr.f32.gmra.mxu0 %v3497
        %v3610 = vpop.f32.mrf.mxu0
        %v3611 = vadd.f32 %v3494, %v3610
        %v3612 = vpop.f32.mrf.mxu0
        %3613 = vmatprep.mubr.f32.mxu0 0.0
        %3614 = vmatmul.mubr.f32.gmra.mxu0 %v3500
        %v3615 = vpop.f32.mrf.mxu0
        %v3616 = vadd.f32 %v3494, %v3615
        %v3617 = vpop.f32.mrf.mxu0
        %3618 = vmatprep.mubr.f32.mxu0 0.0
        %3619 = vmatmul.mubr.f32.gmra.mxu0 %v3503
        %v3620 = vpop.f32.mrf.mxu0
        %v3621 = vadd.f32 %v3494, %v3620
        %v3622 = vpop.f32.mrf.mxu0
        %3623 = vmatprep.mubr.f32.mxu0 0.0
        %3624 = vmatmul.mubr.f32.gmra.mxu0 %v3506
        %v3625 = vpop.f32.mrf.mxu0
        %v3626 = vadd.f32 %v3494, %v3625
        %v3627 = vpop.f32.mrf.mxu0
        %3628 = vmatprep.mubr.f32.mxu0 0.0
        %3629 = vmatmul.mubr.f32.gmra.mxu0 %v3509
        %v3630 = vpop.f32.mrf.mxu0
        %v3631 = vadd.f32 %v3494, %v3630
        %v3632 = vpop.f32.mrf.mxu0
        %3633 = vmatprep.mubr.f32.mxu0 0.0
        %3634 = vmatmul.mubr.f32.gmra.mxu0 %v3512
        %v3635 = vpop.f32.mrf.mxu0
        %v3636 = vadd.f32 %v3494, %v3635
        %v3637 = vpop.f32.mrf.mxu0
        %3638 = vmatprep.mubr.f32.mxu0 0.0
        %3639 = vmatmul.mubr.f32.gmra.mxu0 %v3515
        %v3640 = vpop.f32.mrf.mxu0
        %v3641 = vadd.f32 %v3494, %v3640
        %v3642 = vpop.f32.mrf.mxu0
        %3643 = vmatprep.mubr.f32.mxu0 0.0
        %3644 = vmatmul.mubr.f32.gmra.mxu0 %v3518
        %v3645 = vpop.f32.mrf.mxu0
        %v3646 = vadd.f32 %v3494, %v3645
        %v3647 = vpop.f32.mrf.mxu0
        %3648 = vmatprep.mubr.f32.mxu0 0.0
        %3649 = vmatmul.mubr.f32.gmra.mxu0 %v3521
        %v3650 = vpop.f32.mrf.mxu0
        %v3651 = vadd.f32 %v3494, %v3650
        %v3652 = vpop.f32.mrf.mxu0
        %3653 = vmatprep.mubr.f32.mxu0 0.0
        %3654 = vmatmul.mubr.f32.gmra.mxu0 %v3524
        %v3655 = vpop.f32.mrf.mxu0
        %v3656 = vadd.f32 %v3494, %v3655
        %v3657 = vpop.f32.mrf.mxu0
        %3658 = vmatprep.mubr.f32.mxu0 0.0
        %3659 = vmatmul.mubr.f32.gmra.mxu0 %v3527
        %v3660 = vpop.f32.mrf.mxu0
        %v3661 = vadd.f32 %v3494, %v3660
        %v3662 = vpop.f32.mrf.mxu0
        %3663 = vmatprep.mubr.f32.mxu0 0.0
        %3664 = vmatmul.mubr.f32.gmra.mxu0 %v3530
        %v3665 = vpop.f32.mrf.mxu0
        %v3666 = vadd.f32 %v3494, %v3665
        %v3667 = vpop.f32.mrf.mxu0
        %3668 = vmatprep.mubr.f32.mxu0 0.0
        %3669 = vmatmul.mubr.f32.gmra.mxu0 %v3533
        %v3670 = vpop.f32.mrf.mxu0
        %v3671 = vadd.f32 %v3494, %v3670
        %v3672 = vpop.f32.mrf.mxu0
        %3673 = vmatprep.mubr.f32.mxu0 0.0
        %3674 = vmatmul.mubr.f32.gmra.mxu0 %v3536
        %v3675 = vpop.f32.mrf.mxu0
        %v3676 = vadd.f32 %v3494, %v3675
        %v3677 = vpop.f32.mrf.mxu0
        %3678 = vmatprep.mubr.f32.mxu0 0.0
        %3679 = vmatmul.mubr.f32.gmra.mxu0 %v3539
        %v3680 = vpop.f32.mrf.mxu0
        %v3681 = vadd.f32 %v3494, %v3680
        %v3682 = vpop.f32.mrf.mxu0
        %3683 = vmatprep.mubr.f32.mxu0 0.0
        %3684 = vmatmul.mubr.f32.gmra.mxu0 %v3542
        %v3685 = vpop.f32.mrf.mxu0
        %v3686 = vadd.f32 %v3494, %v3685
        %v3687 = vpop.f32.mrf.mxu0
        %3688 = vdwg.mxu0
        %v3689 = vadd.f32 %v3230, %v3611
        %v3690 = vadd.f32 %v3231, %v3616
        %v3691 = vadd.f32 %v3232, %v3621
        %v3692 = vadd.f32 %v3233, %v3626
        %v3693 = vadd.f32 %v3234, %v3631
        %v3694 = vadd.f32 %v3235, %v3636
        %v3695 = vadd.f32 %v3236, %v3641
        %v3696 = vadd.f32 %v3237, %v3646
        %v3697 = vadd.f32 %v3238, %v3651
        %v3698 = vadd.f32 %v3239, %v3656
        %v3699 = vadd.f32 %v3240, %v3661
        %v3700 = vadd.f32 %v3241, %v3666
        %v3701 = vadd.f32 %v3242, %v3671
        %v3702 = vadd.f32 %v3243, %v3676
        %v3703 = vadd.f32 %v3244, %v3681
        %v3704 = vadd.f32 %v3245, %v3686
        %v3705 = vmax.f32 %v3689, 0.0
        %v3706 = vmax.f32 %v3690, 0.0
        %v3707 = vmax.f32 %v3691, 0.0
        %v3708 = vmax.f32 %v3692, 0.0
        %v3709 = vmax.f32 %v3693, 0.0
        %v3710 = vmax.f32 %v3694, 0.0
        %v3711 = vmax.f32 %v3695, 0.0
        %v3712 = vmax.f32 %v3696, 0.0
        %v3713 = vmax.f32 %v3697, 0.0
        %v3714 = vmax.f32 %v3698, 0.0
        %v3715 = vmax.f32 %v3699, 0.0
        %v3716 = vmax.f32 %v3700, 0.0
        %v3717 = vmax.f32 %v3701, 0.0
        %v3718 = vmax.f32 %v3702, 0.0
        %v3719 = vmax.f32 %v3703, 0.0
        %v3720 = vmax.f32 %v3704, 0.0
        %s3721 = scalar_lea.vmem %s5, 64
        %v3722 = vld [vmem:[%s3721] sm:$0xff]
        %v3723 = vld [vmem:[%s3721 + $0x8] sm:$0xff]
        %v3724 = vld [vmem:[%s3721 + $0x10] sm:$0xff]
        %v3725 = vld [vmem:[%s3721 + $0x18] sm:$0xff]
        %s3726 = scalar_lea.vmem %s6, 2
        %v3727 = vld [vmem:[%s3726] sm:$0x1]
        %v3729 = vlaneseq
        %v3730 = vshrl.u32 %v3729, 7
        %v3731 = vsub.s32 0, %v3730
        %v3732 = vrot.slane %v3727, %v3731
        %v3735 = vsel %vm3273, %v3705, 0
        %v3738 = vsel %vm3273, %v3706, 0
        %v3741 = vsel %vm3273, %v3707, 0
        %v3744 = vsel %vm3273, %v3708, 0
        %v3747 = vsel %vm3273, %v3709, 0
        %v3750 = vsel %vm3273, %v3710, 0
        %v3753 = vsel %vm3273, %v3711, 0
        %v3756 = vsel %vm3273, %v3712, 0
        %v3759 = vsel %vm3273, %v3713, 0
        %v3762 = vsel %vm3273, %v3714, 0
        %v3765 = vsel %vm3273, %v3715, 0
        %v3768 = vsel %vm3273, %v3716, 0
        %v3771 = vsel %vm3273, %v3717, 0
        %v3774 = vsel %vm3273, %v3718, 0
        %v3777 = vsel %vm3273, %v3719, 0
        %v3780 = vsel %vm3273, %v3720, 0
        %3782 = vmatprep.subr.mxu0 0.0
        %3783 = vmatpush1.msra.mxu0 0.0
        %3784 = vmatprep.subr.mxu0 0.0
        %3785 = vmatpush1.msra.mxu0 0.0
        %3786 = vmatprep.subr.mxu0 0.0
        %3787 = vmatpush1.msra.mxu0 0.0
        %3788 = vmatprep.subr.mxu0 0.0
        %3789 = vmatpush1.msra.mxu0 0.0
        %3790 = vmatprep.subr.mxu0 0.0
        %3791 = vmatpush1.msra.mxu0 0.0
        %3792 = vmatprep.subr.mxu0 0.0
        %3793 = vmatpush1.msra.mxu0 0.0
        %3794 = vmatprep.subr.mxu0 0.0
        %3795 = vmatpush1.msra.mxu0 0.0
        %3796 = vmatprep.subr.mxu0 0.0
        %3797 = vmatpush1.msra.mxu0 0.0
        %3798 = vmatprep.subr.mxu0 0.0
        %3799 = vmatpush1.msra.mxu0 0.0
        %3800 = vmatprep.subr.mxu0 0.0
        %3801 = vmatpush1.msra.mxu0 0.0
        %3802 = vmatprep.subr.mxu0 0.0
        %3803 = vmatpush1.msra.mxu0 0.0
        %3804 = vmatprep.subr.mxu0 0.0
        %3805 = vmatpush1.msra.mxu0 0.0
        %3806 = vmatprep.subr.mxu0 0.0
        %3807 = vmatpush1.msra.mxu0 %v3725
        %3808 = vmatprep.subr.mxu0 0.0
        %3809 = vmatpush1.msra.mxu0 %v3724
        %3810 = vmatprep.subr.mxu0 0.0
        %3811 = vmatpush1.msra.mxu0 %v3723
        %3812 = vmatprep.subr.mxu0 0.0
        %3813 = vmatpush1.msra.mxu0 %v3722
        %3814 = vmatprep.subr.mxu0 0.0
        %3815 = vmatpush2.msra.mxu0 0.0
        %3816 = vmatprep.subr.mxu0 0.0
        %3817 = vmatpush2.msra.mxu0 0.0
        %3818 = vmatprep.subr.mxu0 0.0
        %3819 = vmatpush2.msra.mxu0 0.0
        %3820 = vmatprep.subr.mxu0 0.0
        %3821 = vmatpush2.msra.mxu0 0.0
        %3822 = vmatprep.subr.mxu0 0.0
        %3823 = vmatpush2.msra.mxu0 0.0
        %3824 = vmatprep.subr.mxu0 0.0
        %3825 = vmatpush2.msra.mxu0 0.0
        %3826 = vmatprep.subr.mxu0 0.0
        %3827 = vmatpush2.msra.mxu0 0.0
        %3828 = vmatprep.subr.mxu0 0.0
        %3829 = vmatpush2.msra.mxu0 0.0
        %3830 = vmatprep.subr.mxu0 0.0
        %3831 = vmatpush2.msra.mxu0 0.0
        %3832 = vmatprep.subr.mxu0 0.0
        %3833 = vmatpush2.msra.mxu0 0.0
        %3834 = vmatprep.subr.mxu0 0.0
        %3835 = vmatpush2.msra.mxu0 0.0
        %3836 = vmatprep.subr.mxu0 0.0
        %3837 = vmatpush2.msra.mxu0 0.0
        %3838 = vmatprep.subr.mxu0 0.0
        %3839 = vmatpush2.msra.mxu0 0.0
        %3840 = vmatprep.subr.mxu0 0.0
        %3841 = vmatpush2.msra.mxu0 0.0
        %3842 = vmatprep.subr.mxu0 0.0
        %3843 = vmatpush2.msra.mxu0 0.0
        %3844 = vmatprep.subr.mxu0 0.0
        %3845 = vmatpush2.msra.mxu0 0.0
        %3846 = vmatprep.mubr.f32.mxu0 0.0
        %3847 = vmatmul.mubr.f32.gmra.mxu0 %v3735
        %v3848 = vpop.f32.mrf.mxu0
        %v3849 = vadd.f32 %v3732, %v3848
        %v3850 = vpop.f32.mrf.mxu0
        %3851 = vmatprep.mubr.f32.mxu0 0.0
        %3852 = vmatmul.mubr.f32.gmra.mxu0 %v3738
        %v3853 = vpop.f32.mrf.mxu0
        %v3854 = vadd.f32 %v3732, %v3853
        %v3855 = vpop.f32.mrf.mxu0
        %3856 = vmatprep.mubr.f32.mxu0 0.0
        %3857 = vmatmul.mubr.f32.gmra.mxu0 %v3741
        %v3858 = vpop.f32.mrf.mxu0
        %v3859 = vadd.f32 %v3732, %v3858
        %v3860 = vpop.f32.mrf.mxu0
        %3861 = vmatprep.mubr.f32.mxu0 0.0
        %3862 = vmatmul.mubr.f32.gmra.mxu0 %v3744
        %v3863 = vpop.f32.mrf.mxu0
        %v3864 = vadd.f32 %v3732, %v3863
        %v3865 = vpop.f32.mrf.mxu0
        %3866 = vmatprep.mubr.f32.mxu0 0.0
        %3867 = vmatmul.mubr.f32.gmra.mxu0 %v3747
        %v3868 = vpop.f32.mrf.mxu0
        %v3869 = vadd.f32 %v3732, %v3868
        %v3870 = vpop.f32.mrf.mxu0
        %3871 = vmatprep.mubr.f32.mxu0 0.0
        %3872 = vmatmul.mubr.f32.gmra.mxu0 %v3750
        %v3873 = vpop.f32.mrf.mxu0
        %v3874 = vadd.f32 %v3732, %v3873
        %v3875 = vpop.f32.mrf.mxu0
        %3876 = vmatprep.mubr.f32.mxu0 0.0
        %3877 = vmatmul.mubr.f32.gmra.mxu0 %v3753
        %v3878 = vpop.f32.mrf.mxu0
        %v3879 = vadd.f32 %v3732, %v3878
        %v3880 = vpop.f32.mrf.mxu0
        %3881 = vmatprep.mubr.f32.mxu0 0.0
        %3882 = vmatmul.mubr.f32.gmra.mxu0 %v3756
        %v3883 = vpop.f32.mrf.mxu0
        %v3884 = vadd.f32 %v3732, %v3883
        %v3885 = vpop.f32.mrf.mxu0
        %3886 = vmatprep.mubr.f32.mxu0 0.0
        %3887 = vmatmul.mubr.f32.gmra.mxu0 %v3759
        %v3888 = vpop.f32.mrf.mxu0
        %v3889 = vadd.f32 %v3732, %v3888
        %v3890 = vpop.f32.mrf.mxu0
        %3891 = vmatprep.mubr.f32.mxu0 0.0
        %3892 = vmatmul.mubr.f32.gmra.mxu0 %v3762
        %v3893 = vpop.f32.mrf.mxu0
        %v3894 = vadd.f32 %v3732, %v3893
        %v3895 = vpop.f32.mrf.mxu0
        %3896 = vmatprep.mubr.f32.mxu0 0.0
        %3897 = vmatmul.mubr.f32.gmra.mxu0 %v3765
        %v3898 = vpop.f32.mrf.mxu0
        %v3899 = vadd.f32 %v3732, %v3898
        %v3900 = vpop.f32.mrf.mxu0
        %3901 = vmatprep.mubr.f32.mxu0 0.0
        %3902 = vmatmul.mubr.f32.gmra.mxu0 %v3768
        %v3903 = vpop.f32.mrf.mxu0
        %v3904 = vadd.f32 %v3732, %v3903
        %v3905 = vpop.f32.mrf.mxu0
        %3906 = vmatprep.mubr.f32.mxu0 0.0
        %3907 = vmatmul.mubr.f32.gmra.mxu0 %v3771
        %v3908 = vpop.f32.mrf.mxu0
        %v3909 = vadd.f32 %v3732, %v3908
        %v3910 = vpop.f32.mrf.mxu0
        %3911 = vmatprep.mubr.f32.mxu0 0.0
        %3912 = vmatmul.mubr.f32.gmra.mxu0 %v3774
        %v3913 = vpop.f32.mrf.mxu0
        %v3914 = vadd.f32 %v3732, %v3913
        %v3915 = vpop.f32.mrf.mxu0
        %3916 = vmatprep.mubr.f32.mxu0 0.0
        %3917 = vmatmul.mubr.f32.gmra.mxu0 %v3777
        %v3918 = vpop.f32.mrf.mxu0
        %v3919 = vadd.f32 %v3732, %v3918
        %v3920 = vpop.f32.mrf.mxu0
        %3921 = vmatprep.mubr.f32.mxu0 0.0
        %3922 = vmatmul.mubr.f32.gmra.mxu0 %v3780
        %v3923 = vpop.f32.mrf.mxu0
        %v3924 = vadd.f32 %v3732, %v3923
        %v3925 = vpop.f32.mrf.mxu0
        %3926 = vdwg.mxu0
        %v3927 = vmax.f32 %v3849, 0.0
        %v3928 = vmax.f32 %v3854, 0.0
        %v3929 = vmax.f32 %v3859, 0.0
        %v3930 = vmax.f32 %v3864, 0.0
        %v3931 = vmax.f32 %v3869, 0.0
        %v3932 = vmax.f32 %v3874, 0.0
        %v3933 = vmax.f32 %v3879, 0.0
        %v3934 = vmax.f32 %v3884, 0.0
        %v3935 = vmax.f32 %v3889, 0.0
        %v3936 = vmax.f32 %v3894, 0.0
        %v3937 = vmax.f32 %v3899, 0.0
        %v3938 = vmax.f32 %v3904, 0.0
        %v3939 = vmax.f32 %v3909, 0.0
        %v3940 = vmax.f32 %v3914, 0.0
        %v3941 = vmax.f32 %v3919, 0.0
        %v3942 = vmax.f32 %v3924, 0.0
        %s3943 = scalar_lea.vmem %s5, 96
        %v3944 = vld [vmem:[%s3943] sm:$0xff]
        %v3945 = vld [vmem:[%s3943 + $0x8] sm:$0xff]
        %v3946 = vld [vmem:[%s3943 + $0x10] sm:$0xff]
        %v3947 = vld [vmem:[%s3943 + $0x18] sm:$0xff]
        %s3948 = scalar_lea.vmem %s6, 3
        %v3949 = vld [vmem:[%s3948] sm:$0x1]
        %v3951 = vlaneseq
        %v3952 = vshrl.u32 %v3951, 7
        %v3953 = vsub.s32 0, %v3952
        %v3954 = vrot.slane %v3949, %v3953
        %v3957 = vsel %vm3273, %v3927, 0
        %v3960 = vsel %vm3273, %v3928, 0
        %v3963 = vsel %vm3273, %v3929, 0
        %v3966 = vsel %vm3273, %v3930, 0
        %v3969 = vsel %vm3273, %v3931, 0
        %v3972 = vsel %vm3273, %v3932, 0
        %v3975 = vsel %vm3273, %v3933, 0
        %v3978 = vsel %vm3273, %v3934, 0
        %v3981 = vsel %vm3273, %v3935, 0
        %v3984 = vsel %vm3273, %v3936, 0
        %v3987 = vsel %vm3273, %v3937, 0
        %v3990 = vsel %vm3273, %v3938, 0
        %v3993 = vsel %vm3273, %v3939, 0
        %v3996 = vsel %vm3273, %v3940, 0
        %v3999 = vsel %vm3273, %v3941, 0
        %v4002 = vsel %vm3273, %v3942, 0
        %4004 = vmatprep.subr.mxu0 0.0
        %4005 = vmatpush1.msra.mxu0 0.0
        %4006 = vmatprep.subr.mxu0 0.0
        %4007 = vmatpush1.msra.mxu0 0.0
        %4008 = vmatprep.subr.mxu0 0.0
        %4009 = vmatpush1.msra.mxu0 0.0
        %4010 = vmatprep.subr.mxu0 0.0
        %4011 = vmatpush1.msra.mxu0 0.0
        %4012 = vmatprep.subr.mxu0 0.0
        %4013 = vmatpush1.msra.mxu0 0.0
        %4014 = vmatprep.subr.mxu0 0.0
        %4015 = vmatpush1.msra.mxu0 0.0
        %4016 = vmatprep.subr.mxu0 0.0
        %4017 = vmatpush1.msra.mxu0 0.0
        %4018 = vmatprep.subr.mxu0 0.0
        %4019 = vmatpush1.msra.mxu0 0.0
        %4020 = vmatprep.subr.mxu0 0.0
        %4021 = vmatpush1.msra.mxu0 0.0
        %4022 = vmatprep.subr.mxu0 0.0
        %4023 = vmatpush1.msra.mxu0 0.0
        %4024 = vmatprep.subr.mxu0 0.0
        %4025 = vmatpush1.msra.mxu0 0.0
        %4026 = vmatprep.subr.mxu0 0.0
        %4027 = vmatpush1.msra.mxu0 0.0
        %4028 = vmatprep.subr.mxu0 0.0
        %4029 = vmatpush1.msra.mxu0 %v3947
        %4030 = vmatprep.subr.mxu0 0.0
        %4031 = vmatpush1.msra.mxu0 %v3946
        %4032 = vmatprep.subr.mxu0 0.0
        %4033 = vmatpush1.msra.mxu0 %v3945
        %4034 = vmatprep.subr.mxu0 0.0
        %4035 = vmatpush1.msra.mxu0 %v3944
        %4036 = vmatprep.subr.mxu0 0.0
        %4037 = vmatpush2.msra.mxu0 0.0
        %4038 = vmatprep.subr.mxu0 0.0
        %4039 = vmatpush2.msra.mxu0 0.0
        %4040 = vmatprep.subr.mxu0 0.0
        %4041 = vmatpush2.msra.mxu0 0.0
        %4042 = vmatprep.subr.mxu0 0.0
        %4043 = vmatpush2.msra.mxu0 0.0
        %4044 = vmatprep.subr.mxu0 0.0
        %4045 = vmatpush2.msra.mxu0 0.0
        %4046 = vmatprep.subr.mxu0 0.0
        %4047 = vmatpush2.msra.mxu0 0.0
        %4048 = vmatprep.subr.mxu0 0.0
        %4049 = vmatpush2.msra.mxu0 0.0
        %4050 = vmatprep.subr.mxu0 0.0
        %4051 = vmatpush2.msra.mxu0 0.0
        %4052 = vmatprep.subr.mxu0 0.0
        %4053 = vmatpush2.msra.mxu0 0.0
        %4054 = vmatprep.subr.mxu0 0.0
        %4055 = vmatpush2.msra.mxu0 0.0
        %4056 = vmatprep.subr.mxu0 0.0
        %4057 = vmatpush2.msra.mxu0 0.0
        %4058 = vmatprep.subr.mxu0 0.0
        %4059 = vmatpush2.msra.mxu0 0.0
        %4060 = vmatprep.subr.mxu0 0.0
        %4061 = vmatpush2.msra.mxu0 0.0
        %4062 = vmatprep.subr.mxu0 0.0
        %4063 = vmatpush2.msra.mxu0 0.0
        %4064 = vmatprep.subr.mxu0 0.0
        %4065 = vmatpush2.msra.mxu0 0.0
        %4066 = vmatprep.subr.mxu0 0.0
        %4067 = vmatpush2.msra.mxu0 0.0
        %4068 = vmatprep.mubr.f32.mxu0 0.0
        %4069 = vmatmul.mubr.f32.gmra.mxu0 %v3957
        %v4070 = vpop.f32.mrf.mxu0
        %v4071 = vadd.f32 %v3954, %v4070
        %v4072 = vpop.f32.mrf.mxu0
        %4073 = vmatprep.mubr.f32.mxu0 0.0
        %4074 = vmatmul.mubr.f32.gmra.mxu0 %v3960
        %v4075 = vpop.f32.mrf.mxu0
        %v4076 = vadd.f32 %v3954, %v4075
        %v4077 = vpop.f32.mrf.mxu0
        %4078 = vmatprep.mubr.f32.mxu0 0.0
        %4079 = vmatmul.mubr.f32.gmra.mxu0 %v3963
        %v4080 = vpop.f32.mrf.mxu0
        %v4081 = vadd.f32 %v3954, %v4080
        %v4082 = vpop.f32.mrf.mxu0
        %4083 = vmatprep.mubr.f32.mxu0 0.0
        %4084 = vmatmul.mubr.f32.gmra.mxu0 %v3966
        %v4085 = vpop.f32.mrf.mxu0
        %v4086 = vadd.f32 %v3954, %v4085
        %v4087 = vpop.f32.mrf.mxu0
        %4088 = vmatprep.mubr.f32.mxu0 0.0
        %4089 = vmatmul.mubr.f32.gmra.mxu0 %v3969
        %v4090 = vpop.f32.mrf.mxu0
        %v4091 = vadd.f32 %v3954, %v4090
        %v4092 = vpop.f32.mrf.mxu0
        %4093 = vmatprep.mubr.f32.mxu0 0.0
        %4094 = vmatmul.mubr.f32.gmra.mxu0 %v3972
        %v4095 = vpop.f32.mrf.mxu0
        %v4096 = vadd.f32 %v3954, %v4095
        %v4097 = vpop.f32.mrf.mxu0
        %4098 = vmatprep.mubr.f32.mxu0 0.0
        %4099 = vmatmul.mubr.f32.gmra.mxu0 %v3975
        %v4100 = vpop.f32.mrf.mxu0
        %v4101 = vadd.f32 %v3954, %v4100
        %v4102 = vpop.f32.mrf.mxu0
        %4103 = vmatprep.mubr.f32.mxu0 0.0
        %4104 = vmatmul.mubr.f32.gmra.mxu0 %v3978
        %v4105 = vpop.f32.mrf.mxu0
        %v4106 = vadd.f32 %v3954, %v4105
        %v4107 = vpop.f32.mrf.mxu0
        %4108 = vmatprep.mubr.f32.mxu0 0.0
        %4109 = vmatmul.mubr.f32.gmra.mxu0 %v3981
        %v4110 = vpop.f32.mrf.mxu0
        %v4111 = vadd.f32 %v3954, %v4110
        %v4112 = vpop.f32.mrf.mxu0
        %4113 = vmatprep.mubr.f32.mxu0 0.0
        %4114 = vmatmul.mubr.f32.gmra.mxu0 %v3984
        %v4115 = vpop.f32.mrf.mxu0
        %v4116 = vadd.f32 %v3954, %v4115
        %v4117 = vpop.f32.mrf.mxu0
        %4118 = vmatprep.mubr.f32.mxu0 0.0
        %4119 = vmatmul.mubr.f32.gmra.mxu0 %v3987
        %v4120 = vpop.f32.mrf.mxu0
        %v4121 = vadd.f32 %v3954, %v4120
        %v4122 = vpop.f32.mrf.mxu0
        %4123 = vmatprep.mubr.f32.mxu0 0.0
        %4124 = vmatmul.mubr.f32.gmra.mxu0 %v3990
        %v4125 = vpop.f32.mrf.mxu0
        %v4126 = vadd.f32 %v3954, %v4125
        %v4127 = vpop.f32.mrf.mxu0
        %4128 = vmatprep.mubr.f32.mxu0 0.0
        %4129 = vmatmul.mubr.f32.gmra.mxu0 %v3993
        %v4130 = vpop.f32.mrf.mxu0
        %v4131 = vadd.f32 %v3954, %v4130
        %v4132 = vpop.f32.mrf.mxu0
        %4133 = vmatprep.mubr.f32.mxu0 0.0
        %4134 = vmatmul.mubr.f32.gmra.mxu0 %v3996
        %v4135 = vpop.f32.mrf.mxu0
        %v4136 = vadd.f32 %v3954, %v4135
        %v4137 = vpop.f32.mrf.mxu0
        %4138 = vmatprep.mubr.f32.mxu0 0.0
        %4139 = vmatmul.mubr.f32.gmra.mxu0 %v3999
        %v4140 = vpop.f32.mrf.mxu0
        %v4141 = vadd.f32 %v3954, %v4140
        %v4142 = vpop.f32.mrf.mxu0
        %4143 = vmatprep.mubr.f32.mxu0 0.0
        %4144 = vmatmul.mubr.f32.gmra.mxu0 %v4002
        %v4145 = vpop.f32.mrf.mxu0
        %v4146 = vadd.f32 %v3954, %v4145
        %v4147 = vpop.f32.mrf.mxu0
        %4148 = vdwg.mxu0
        %v4149 = vadd.f32 %v3689, %v4071
        %v4150 = vadd.f32 %v3690, %v4076
        %v4151 = vadd.f32 %v3691, %v4081
        %v4152 = vadd.f32 %v3692, %v4086
        %v4153 = vadd.f32 %v3693, %v4091
        %v4154 = vadd.f32 %v3694, %v4096
        %v4155 = vadd.f32 %v3695, %v4101
        %v4156 = vadd.f32 %v3696, %v4106
        %v4157 = vadd.f32 %v3697, %v4111
        %v4158 = vadd.f32 %v3698, %v4116
        %v4159 = vadd.f32 %v3699, %v4121
        %v4160 = vadd.f32 %v3700, %v4126
        %v4161 = vadd.f32 %v3701, %v4131
        %v4162 = vadd.f32 %v3702, %v4136
        %v4163 = vadd.f32 %v3703, %v4141
        %v4164 = vadd.f32 %v3704, %v4146
        %v4165 = vmax.f32 %v4149, 0.0
        %v4166 = vmax.f32 %v4150, 0.0
        %v4167 = vmax.f32 %v4151, 0.0
        %v4168 = vmax.f32 %v4152, 0.0
        %v4169 = vmax.f32 %v4153, 0.0
        %v4170 = vmax.f32 %v4154, 0.0
        %v4171 = vmax.f32 %v4155, 0.0
        %v4172 = vmax.f32 %v4156, 0.0
        %v4173 = vmax.f32 %v4157, 0.0
        %v4174 = vmax.f32 %v4158, 0.0
        %v4175 = vmax.f32 %v4159, 0.0
        %v4176 = vmax.f32 %v4160, 0.0
        %v4177 = vmax.f32 %v4161, 0.0
        %v4178 = vmax.f32 %v4162, 0.0
        %v4179 = vmax.f32 %v4163, 0.0
        %v4180 = vmax.f32 %v4164, 0.0
        %s4181 = scalar_lea.vmem %s5, 128
        %v4182 = vld [vmem:[%s4181] sm:$0xff]
        %v4183 = vld [vmem:[%s4181 + $0x8] sm:$0xff]
        %v4184 = vld [vmem:[%s4181 + $0x10] sm:$0xff]
        %v4185 = vld [vmem:[%s4181 + $0x18] sm:$0xff]
        %s4186 = scalar_lea.vmem %s6, 4
        %v4187 = vld [vmem:[%s4186] sm:$0x1]
        %v4189 = vlaneseq
        %v4190 = vshrl.u32 %v4189, 7
        %v4191 = vsub.s32 0, %v4190
        %v4192 = vrot.slane %v4187, %v4191
        %v4195 = vsel %vm3273, %v4165, 0
        %v4198 = vsel %vm3273, %v4166, 0
        %v4201 = vsel %vm3273, %v4167, 0
        %v4204 = vsel %vm3273, %v4168, 0
        %v4207 = vsel %vm3273, %v4169, 0
        %v4210 = vsel %vm3273, %v4170, 0
        %v4213 = vsel %vm3273, %v4171, 0
        %v4216 = vsel %vm3273, %v4172, 0
        %v4219 = vsel %vm3273, %v4173, 0
        %v4222 = vsel %vm3273, %v4174, 0
        %v4225 = vsel %vm3273, %v4175, 0
        %v4228 = vsel %vm3273, %v4176, 0
        %v4231 = vsel %vm3273, %v4177, 0
        %v4234 = vsel %vm3273, %v4178, 0
        %v4237 = vsel %vm3273, %v4179, 0
        %v4240 = vsel %vm3273, %v4180, 0
        %4242 = vmatprep.subr.mxu0 0.0
        %4243 = vmatpush1.msra.mxu0 0.0
        %4244 = vmatprep.subr.mxu0 0.0
        %4245 = vmatpush1.msra.mxu0 0.0
        %4246 = vmatprep.subr.mxu0 0.0
        %4247 = vmatpush1.msra.mxu0 0.0
        %4248 = vmatprep.subr.mxu0 0.0
        %4249 = vmatpush1.msra.mxu0 0.0
        %4250 = vmatprep.subr.mxu0 0.0
        %4251 = vmatpush1.msra.mxu0 0.0
        %4252 = vmatprep.subr.mxu0 0.0
        %4253 = vmatpush1.msra.mxu0 0.0
        %4254 = vmatprep.subr.mxu0 0.0
        %4255 = vmatpush1.msra.mxu0 0.0
        %4256 = vmatprep.subr.mxu0 0.0
        %4257 = vmatpush1.msra.mxu0 0.0
        %4258 = vmatprep.subr.mxu0 0.0
        %4259 = vmatpush1.msra.mxu0 0.0
        %4260 = vmatprep.subr.mxu0 0.0
        %4261 = vmatpush1.msra.mxu0 0.0
        %4262 = vmatprep.subr.mxu0 0.0
        %4263 = vmatpush1.msra.mxu0 0.0
        %4264 = vmatprep.subr.mxu0 0.0
        %4265 = vmatpush1.msra.mxu0 0.0
        %4266 = vmatprep.subr.mxu0 0.0
        %4267 = vmatpush1.msra.mxu0 %v4185
        %4268 = vmatprep.subr.mxu0 0.0
        %4269 = vmatpush1.msra.mxu0 %v4184
        %4270 = vmatprep.subr.mxu0 0.0
        %4271 = vmatpush1.msra.mxu0 %v4183
        %4272 = vmatprep.subr.mxu0 0.0
        %4273 = vmatpush1.msra.mxu0 %v4182
        %4274 = vmatprep.subr.mxu0 0.0
        %4275 = vmatpush2.msra.mxu0 0.0
        %4276 = vmatprep.subr.mxu0 0.0
        %4277 = vmatpush2.msra.mxu0 0.0
        %4278 = vmatprep.subr.mxu0 0.0
        %4279 = vmatpush2.msra.mxu0 0.0
        %4280 = vmatprep.subr.mxu0 0.0
        %4281 = vmatpush2.msra.mxu0 0.0
        %4282 = vmatprep.subr.mxu0 0.0
        %4283 = vmatpush2.msra.mxu0 0.0
        %4284 = vmatprep.subr.mxu0 0.0
        %4285 = vmatpush2.msra.mxu0 0.0
        %4286 = vmatprep.subr.mxu0 0.0
        %4287 = vmatpush2.msra.mxu0 0.0
        %4288 = vmatprep.subr.mxu0 0.0
        %4289 = vmatpush2.msra.mxu0 0.0
        %4290 = vmatprep.subr.mxu0 0.0
        %4291 = vmatpush2.msra.mxu0 0.0
        %4292 = vmatprep.subr.mxu0 0.0
        %4293 = vmatpush2.msra.mxu0 0.0
        %4294 = vmatprep.subr.mxu0 0.0
        %4295 = vmatpush2.msra.mxu0 0.0
        %4296 = vmatprep.subr.mxu0 0.0
        %4297 = vmatpush2.msra.mxu0 0.0
        %4298 = vmatprep.subr.mxu0 0.0
        %4299 = vmatpush2.msra.mxu0 0.0
        %4300 = vmatprep.subr.mxu0 0.0
        %4301 = vmatpush2.msra.mxu0 0.0
        %4302 = vmatprep.subr.mxu0 0.0
        %4303 = vmatpush2.msra.mxu0 0.0
        %4304 = vmatprep.subr.mxu0 0.0
        %4305 = vmatpush2.msra.mxu0 0.0
        %4306 = vmatprep.mubr.f32.mxu0 0.0
        %4307 = vmatmul.mubr.f32.gmra.mxu0 %v4195
        %v4308 = vpop.f32.mrf.mxu0
        %v4309 = vadd.f32 %v4192, %v4308
        %v4310 = vpop.f32.mrf.mxu0
        %4311 = vmatprep.mubr.f32.mxu0 0.0
        %4312 = vmatmul.mubr.f32.gmra.mxu0 %v4198
        %v4313 = vpop.f32.mrf.mxu0
        %v4314 = vadd.f32 %v4192, %v4313
        %v4315 = vpop.f32.mrf.mxu0
        %4316 = vmatprep.mubr.f32.mxu0 0.0
        %4317 = vmatmul.mubr.f32.gmra.mxu0 %v4201
        %v4318 = vpop.f32.mrf.mxu0
        %v4319 = vadd.f32 %v4192, %v4318
        %v4320 = vpop.f32.mrf.mxu0
        %4321 = vmatprep.mubr.f32.mxu0 0.0
        %4322 = vmatmul.mubr.f32.gmra.mxu0 %v4204
        %v4323 = vpop.f32.mrf.mxu0
        %v4324 = vadd.f32 %v4192, %v4323
        %v4325 = vpop.f32.mrf.mxu0
        %4326 = vmatprep.mubr.f32.mxu0 0.0
        %4327 = vmatmul.mubr.f32.gmra.mxu0 %v4207
        %v4328 = vpop.f32.mrf.mxu0
        %v4329 = vadd.f32 %v4192, %v4328
        %v4330 = vpop.f32.mrf.mxu0
        %4331 = vmatprep.mubr.f32.mxu0 0.0
        %4332 = vmatmul.mubr.f32.gmra.mxu0 %v4210
        %v4333 = vpop.f32.mrf.mxu0
        %v4334 = vadd.f32 %v4192, %v4333
        %v4335 = vpop.f32.mrf.mxu0
        %4336 = vmatprep.mubr.f32.mxu0 0.0
        %4337 = vmatmul.mubr.f32.gmra.mxu0 %v4213
        %v4338 = vpop.f32.mrf.mxu0
        %v4339 = vadd.f32 %v4192, %v4338
        %v4340 = vpop.f32.mrf.mxu0
        %4341 = vmatprep.mubr.f32.mxu0 0.0
        %4342 = vmatmul.mubr.f32.gmra.mxu0 %v4216
        %v4343 = vpop.f32.mrf.mxu0
        %v4344 = vadd.f32 %v4192, %v4343
        %v4345 = vpop.f32.mrf.mxu0
        %4346 = vmatprep.mubr.f32.mxu0 0.0
        %4347 = vmatmul.mubr.f32.gmra.mxu0 %v4219
        %v4348 = vpop.f32.mrf.mxu0
        %v4349 = vadd.f32 %v4192, %v4348
        %v4350 = vpop.f32.mrf.mxu0
        %4351 = vmatprep.mubr.f32.mxu0 0.0
        %4352 = vmatmul.mubr.f32.gmra.mxu0 %v4222
        %v4353 = vpop.f32.mrf.mxu0
        %v4354 = vadd.f32 %v4192, %v4353
        %v4355 = vpop.f32.mrf.mxu0
        %4356 = vmatprep.mubr.f32.mxu0 0.0
        %4357 = vmatmul.mubr.f32.gmra.mxu0 %v4225
        %v4358 = vpop.f32.mrf.mxu0
        %v4359 = vadd.f32 %v4192, %v4358
        %v4360 = vpop.f32.mrf.mxu0
        %4361 = vmatprep.mubr.f32.mxu0 0.0
        %4362 = vmatmul.mubr.f32.gmra.mxu0 %v4228
        %v4363 = vpop.f32.mrf.mxu0
        %v4364 = vadd.f32 %v4192, %v4363
        %v4365 = vpop.f32.mrf.mxu0
        %4366 = vmatprep.mubr.f32.mxu0 0.0
        %4367 = vmatmul.mubr.f32.gmra.mxu0 %v4231
        %v4368 = vpop.f32.mrf.mxu0
        %v4369 = vadd.f32 %v4192, %v4368
        %v4370 = vpop.f32.mrf.mxu0
        %4371 = vmatprep.mubr.f32.mxu0 0.0
        %4372 = vmatmul.mubr.f32.gmra.mxu0 %v4234
        %v4373 = vpop.f32.mrf.mxu0
        %v4374 = vadd.f32 %v4192, %v4373
        %v4375 = vpop.f32.mrf.mxu0
        %4376 = vmatprep.mubr.f32.mxu0 0.0
        %4377 = vmatmul.mubr.f32.gmra.mxu0 %v4237
        %v4378 = vpop.f32.mrf.mxu0
        %v4379 = vadd.f32 %v4192, %v4378
        %v4380 = vpop.f32.mrf.mxu0
        %4381 = vmatprep.mubr.f32.mxu0 0.0
        %4382 = vmatmul.mubr.f32.gmra.mxu0 %v4240
        %v4383 = vpop.f32.mrf.mxu0
        %v4384 = vadd.f32 %v4192, %v4383
        %v4385 = vpop.f32.mrf.mxu0
        %4386 = vdwg.mxu0
        %v4387 = vmax.f32 %v4309, 0.0
        %v4388 = vmax.f32 %v4314, 0.0
        %v4389 = vmax.f32 %v4319, 0.0
        %v4390 = vmax.f32 %v4324, 0.0
        %v4391 = vmax.f32 %v4329, 0.0
        %v4392 = vmax.f32 %v4334, 0.0
        %v4393 = vmax.f32 %v4339, 0.0
        %v4394 = vmax.f32 %v4344, 0.0
        %v4395 = vmax.f32 %v4349, 0.0
        %v4396 = vmax.f32 %v4354, 0.0
        %v4397 = vmax.f32 %v4359, 0.0
        %v4398 = vmax.f32 %v4364, 0.0
        %v4399 = vmax.f32 %v4369, 0.0
        %v4400 = vmax.f32 %v4374, 0.0
        %v4401 = vmax.f32 %v4379, 0.0
        %v4402 = vmax.f32 %v4384, 0.0
        %s4403 = scalar_lea.vmem %s5, 160
        %v4404 = vld [vmem:[%s4403] sm:$0xff]
        %v4405 = vld [vmem:[%s4403 + $0x8] sm:$0xff]
        %v4406 = vld [vmem:[%s4403 + $0x10] sm:$0xff]
        %v4407 = vld [vmem:[%s4403 + $0x18] sm:$0xff]
        %s4408 = scalar_lea.vmem %s6, 5
        %v4409 = vld [vmem:[%s4408] sm:$0x1]
        %v4411 = vlaneseq
        %v4412 = vshrl.u32 %v4411, 7
        %v4413 = vsub.s32 0, %v4412
        %v4414 = vrot.slane %v4409, %v4413
        %v4417 = vsel %vm3273, %v4387, 0
        %v4420 = vsel %vm3273, %v4388, 0
        %v4423 = vsel %vm3273, %v4389, 0
        %v4426 = vsel %vm3273, %v4390, 0
        %v4429 = vsel %vm3273, %v4391, 0
        %v4432 = vsel %vm3273, %v4392, 0
        %v4435 = vsel %vm3273, %v4393, 0
        %v4438 = vsel %vm3273, %v4394, 0
        %v4441 = vsel %vm3273, %v4395, 0
        %v4444 = vsel %vm3273, %v4396, 0
        %v4447 = vsel %vm3273, %v4397, 0
        %v4450 = vsel %vm3273, %v4398, 0
        %v4453 = vsel %vm3273, %v4399, 0
        %v4456 = vsel %vm3273, %v4400, 0
        %v4459 = vsel %vm3273, %v4401, 0
        %v4462 = vsel %vm3273, %v4402, 0
        %4464 = vmatprep.subr.mxu0 0.0
        %4465 = vmatpush1.msra.mxu0 0.0
        %4466 = vmatprep.subr.mxu0 0.0
        %4467 = vmatpush1.msra.mxu0 0.0
        %4468 = vmatprep.subr.mxu0 0.0
        %4469 = vmatpush1.msra.mxu0 0.0
        %4470 = vmatprep.subr.mxu0 0.0
        %4471 = vmatpush1.msra.mxu0 0.0
        %4472 = vmatprep.subr.mxu0 0.0
        %4473 = vmatpush1.msra.mxu0 0.0
        %4474 = vmatprep.subr.mxu0 0.0
        %4475 = vmatpush1.msra.mxu0 0.0
        %4476 = vmatprep.subr.mxu0 0.0
        %4477 = vmatpush1.msra.mxu0 0.0
        %4478 = vmatprep.subr.mxu0 0.0
        %4479 = vmatpush1.msra.mxu0 0.0
        %4480 = vmatprep.subr.mxu0 0.0
        %4481 = vmatpush1.msra.mxu0 0.0
        %4482 = vmatprep.subr.mxu0 0.0
        %4483 = vmatpush1.msra.mxu0 0.0
        %4484 = vmatprep.subr.mxu0 0.0
        %4485 = vmatpush1.msra.mxu0 0.0
        %4486 = vmatprep.subr.mxu0 0.0
        %4487 = vmatpush1.msra.mxu0 0.0
        %4488 = vmatprep.subr.mxu0 0.0
        %4489 = vmatpush1.msra.mxu0 %v4407
        %4490 = vmatprep.subr.mxu0 0.0
        %4491 = vmatpush1.msra.mxu0 %v4406
        %4492 = vmatprep.subr.mxu0 0.0
        %4493 = vmatpush1.msra.mxu0 %v4405
        %4494 = vmatprep.subr.mxu0 0.0
        %4495 = vmatpush1.msra.mxu0 %v4404
        %4496 = vmatprep.subr.mxu0 0.0
        %4497 = vmatpush2.msra.mxu0 0.0
        %4498 = vmatprep.subr.mxu0 0.0
        %4499 = vmatpush2.msra.mxu0 0.0
        %4500 = vmatprep.subr.mxu0 0.0
        %4501 = vmatpush2.msra.mxu0 0.0
        %4502 = vmatprep.subr.mxu0 0.0
        %4503 = vmatpush2.msra.mxu0 0.0
        %4504 = vmatprep.subr.mxu0 0.0
        %4505 = vmatpush2.msra.mxu0 0.0
        %4506 = vmatprep.subr.mxu0 0.0
        %4507 = vmatpush2.msra.mxu0 0.0
        %4508 = vmatprep.subr.mxu0 0.0
        %4509 = vmatpush2.msra.mxu0 0.0
        %4510 = vmatprep.subr.mxu0 0.0
        %4511 = vmatpush2.msra.mxu0 0.0
        %4512 = vmatprep.subr.mxu0 0.0
        %4513 = vmatpush2.msra.mxu0 0.0
        %4514 = vmatprep.subr.mxu0 0.0
        %4515 = vmatpush2.msra.mxu0 0.0
        %4516 = vmatprep.subr.mxu0 0.0
        %4517 = vmatpush2.msra.mxu0 0.0
        %4518 = vmatprep.subr.mxu0 0.0
        %4519 = vmatpush2.msra.mxu0 0.0
        %4520 = vmatprep.subr.mxu0 0.0
        %4521 = vmatpush2.msra.mxu0 0.0
        %4522 = vmatprep.subr.mxu0 0.0
        %4523 = vmatpush2.msra.mxu0 0.0
        %4524 = vmatprep.subr.mxu0 0.0
        %4525 = vmatpush2.msra.mxu0 0.0
        %4526 = vmatprep.subr.mxu0 0.0
        %4527 = vmatpush2.msra.mxu0 0.0
        %4528 = vmatprep.mubr.f32.mxu0 0.0
        %4529 = vmatmul.mubr.f32.gmra.mxu0 %v4417
        %v4530 = vpop.f32.mrf.mxu0
        %v4531 = vadd.f32 %v4414, %v4530
        %v4532 = vpop.f32.mrf.mxu0
        %4533 = vmatprep.mubr.f32.mxu0 0.0
        %4534 = vmatmul.mubr.f32.gmra.mxu0 %v4420
        %v4535 = vpop.f32.mrf.mxu0
        %v4536 = vadd.f32 %v4414, %v4535
        %v4537 = vpop.f32.mrf.mxu0
        %4538 = vmatprep.mubr.f32.mxu0 0.0
        %4539 = vmatmul.mubr.f32.gmra.mxu0 %v4423
        %v4540 = vpop.f32.mrf.mxu0
        %v4541 = vadd.f32 %v4414, %v4540
        %v4542 = vpop.f32.mrf.mxu0
        %4543 = vmatprep.mubr.f32.mxu0 0.0
        %4544 = vmatmul.mubr.f32.gmra.mxu0 %v4426
        %v4545 = vpop.f32.mrf.mxu0
        %v4546 = vadd.f32 %v4414, %v4545
        %v4547 = vpop.f32.mrf.mxu0
        %4548 = vmatprep.mubr.f32.mxu0 0.0
        %4549 = vmatmul.mubr.f32.gmra.mxu0 %v4429
        %v4550 = vpop.f32.mrf.mxu0
        %v4551 = vadd.f32 %v4414, %v4550
        %v4552 = vpop.f32.mrf.mxu0
        %4553 = vmatprep.mubr.f32.mxu0 0.0
        %4554 = vmatmul.mubr.f32.gmra.mxu0 %v4432
        %v4555 = vpop.f32.mrf.mxu0
        %v4556 = vadd.f32 %v4414, %v4555
        %v4557 = vpop.f32.mrf.mxu0
        %4558 = vmatprep.mubr.f32.mxu0 0.0
        %4559 = vmatmul.mubr.f32.gmra.mxu0 %v4435
        %v4560 = vpop.f32.mrf.mxu0
        %v4561 = vadd.f32 %v4414, %v4560
        %v4562 = vpop.f32.mrf.mxu0
        %4563 = vmatprep.mubr.f32.mxu0 0.0
        %4564 = vmatmul.mubr.f32.gmra.mxu0 %v4438
        %v4565 = vpop.f32.mrf.mxu0
        %v4566 = vadd.f32 %v4414, %v4565
        %v4567 = vpop.f32.mrf.mxu0
        %4568 = vmatprep.mubr.f32.mxu0 0.0
        %4569 = vmatmul.mubr.f32.gmra.mxu0 %v4441
        %v4570 = vpop.f32.mrf.mxu0
        %v4571 = vadd.f32 %v4414, %v4570
        %v4572 = vpop.f32.mrf.mxu0
        %4573 = vmatprep.mubr.f32.mxu0 0.0
        %4574 = vmatmul.mubr.f32.gmra.mxu0 %v4444
        %v4575 = vpop.f32.mrf.mxu0
        %v4576 = vadd.f32 %v4414, %v4575
        %v4577 = vpop.f32.mrf.mxu0
        %4578 = vmatprep.mubr.f32.mxu0 0.0
        %4579 = vmatmul.mubr.f32.gmra.mxu0 %v4447
        %v4580 = vpop.f32.mrf.mxu0
        %v4581 = vadd.f32 %v4414, %v4580
        %v4582 = vpop.f32.mrf.mxu0
        %4583 = vmatprep.mubr.f32.mxu0 0.0
        %4584 = vmatmul.mubr.f32.gmra.mxu0 %v4450
        %v4585 = vpop.f32.mrf.mxu0
        %v4586 = vadd.f32 %v4414, %v4585
        %v4587 = vpop.f32.mrf.mxu0
        %4588 = vmatprep.mubr.f32.mxu0 0.0
        %4589 = vmatmul.mubr.f32.gmra.mxu0 %v4453
        %v4590 = vpop.f32.mrf.mxu0
        %v4591 = vadd.f32 %v4414, %v4590
        %v4592 = vpop.f32.mrf.mxu0
        %4593 = vmatprep.mubr.f32.mxu0 0.0
        %4594 = vmatmul.mubr.f32.gmra.mxu0 %v4456
        %v4595 = vpop.f32.mrf.mxu0
        %v4596 = vadd.f32 %v4414, %v4595
        %v4597 = vpop.f32.mrf.mxu0
        %4598 = vmatprep.mubr.f32.mxu0 0.0
        %4599 = vmatmul.mubr.f32.gmra.mxu0 %v4459
        %v4600 = vpop.f32.mrf.mxu0
        %v4601 = vadd.f32 %v4414, %v4600
        %v4602 = vpop.f32.mrf.mxu0
        %4603 = vmatprep.mubr.f32.mxu0 0.0
        %4604 = vmatmul.mubr.f32.gmra.mxu0 %v4462
        %v4605 = vpop.f32.mrf.mxu0
        %v4606 = vadd.f32 %v4414, %v4605
        %v4607 = vpop.f32.mrf.mxu0
        %4608 = vdwg.mxu0
        %v4609 = vadd.f32 %v4149, %v4531
        %v4610 = vadd.f32 %v4150, %v4536
        %v4611 = vadd.f32 %v4151, %v4541
        %v4612 = vadd.f32 %v4152, %v4546
        %v4613 = vadd.f32 %v4153, %v4551
        %v4614 = vadd.f32 %v4154, %v4556
        %v4615 = vadd.f32 %v4155, %v4561
        %v4616 = vadd.f32 %v4156, %v4566
        %v4617 = vadd.f32 %v4157, %v4571
        %v4618 = vadd.f32 %v4158, %v4576
        %v4619 = vadd.f32 %v4159, %v4581
        %v4620 = vadd.f32 %v4160, %v4586
        %v4621 = vadd.f32 %v4161, %v4591
        %v4622 = vadd.f32 %v4162, %v4596
        %v4623 = vadd.f32 %v4163, %v4601
        %v4624 = vadd.f32 %v4164, %v4606
        %v4625 = vmax.f32 %v4609, 0.0
        %v4626 = vmax.f32 %v4610, 0.0
        %v4627 = vmax.f32 %v4611, 0.0
        %v4628 = vmax.f32 %v4612, 0.0
        %v4629 = vmax.f32 %v4613, 0.0
        %v4630 = vmax.f32 %v4614, 0.0
        %v4631 = vmax.f32 %v4615, 0.0
        %v4632 = vmax.f32 %v4616, 0.0
        %v4633 = vmax.f32 %v4617, 0.0
        %v4634 = vmax.f32 %v4618, 0.0
        %v4635 = vmax.f32 %v4619, 0.0
        %v4636 = vmax.f32 %v4620, 0.0
        %v4637 = vmax.f32 %v4621, 0.0
        %v4638 = vmax.f32 %v4622, 0.0
        %v4639 = vmax.f32 %v4623, 0.0
        %v4640 = vmax.f32 %v4624, 0.0
        %s4641 = scalar_lea.vmem %s5, 192
        %v4642 = vld [vmem:[%s4641] sm:$0xff]
        %v4643 = vld [vmem:[%s4641 + $0x8] sm:$0xff]
        %v4644 = vld [vmem:[%s4641 + $0x10] sm:$0xff]
        %v4645 = vld [vmem:[%s4641 + $0x18] sm:$0xff]
        %s4646 = scalar_lea.vmem %s6, 6
        %v4647 = vld [vmem:[%s4646] sm:$0x1]
        %v4649 = vlaneseq
        %v4650 = vshrl.u32 %v4649, 7
        %v4651 = vsub.s32 0, %v4650
        %v4652 = vrot.slane %v4647, %v4651
        %v4655 = vsel %vm3273, %v4625, 0
        %v4658 = vsel %vm3273, %v4626, 0
        %v4661 = vsel %vm3273, %v4627, 0
        %v4664 = vsel %vm3273, %v4628, 0
        %v4667 = vsel %vm3273, %v4629, 0
        %v4670 = vsel %vm3273, %v4630, 0
        %v4673 = vsel %vm3273, %v4631, 0
        %v4676 = vsel %vm3273, %v4632, 0
        %v4679 = vsel %vm3273, %v4633, 0
        %v4682 = vsel %vm3273, %v4634, 0
        %v4685 = vsel %vm3273, %v4635, 0
        %v4688 = vsel %vm3273, %v4636, 0
        %v4691 = vsel %vm3273, %v4637, 0
        %v4694 = vsel %vm3273, %v4638, 0
        %v4697 = vsel %vm3273, %v4639, 0
        %v4700 = vsel %vm3273, %v4640, 0
        %4702 = vmatprep.subr.mxu0 0.0
        %4703 = vmatpush1.msra.mxu0 0.0
        %4704 = vmatprep.subr.mxu0 0.0
        %4705 = vmatpush1.msra.mxu0 0.0
        %4706 = vmatprep.subr.mxu0 0.0
        %4707 = vmatpush1.msra.mxu0 0.0
        %4708 = vmatprep.subr.mxu0 0.0
        %4709 = vmatpush1.msra.mxu0 0.0
        %4710 = vmatprep.subr.mxu0 0.0
        %4711 = vmatpush1.msra.mxu0 0.0
        %4712 = vmatprep.subr.mxu0 0.0
        %4713 = vmatpush1.msra.mxu0 0.0
        %4714 = vmatprep.subr.mxu0 0.0
        %4715 = vmatpush1.msra.mxu0 0.0
        %4716 = vmatprep.subr.mxu0 0.0
        %4717 = vmatpush1.msra.mxu0 0.0
        %4718 = vmatprep.subr.mxu0 0.0
        %4719 = vmatpush1.msra.mxu0 0.0
        %4720 = vmatprep.subr.mxu0 0.0
        %4721 = vmatpush1.msra.mxu0 0.0
        %4722 = vmatprep.subr.mxu0 0.0
        %4723 = vmatpush1.msra.mxu0 0.0
        %4724 = vmatprep.subr.mxu0 0.0
        %4725 = vmatpush1.msra.mxu0 0.0
        %4726 = vmatprep.subr.mxu0 0.0
        %4727 = vmatpush1.msra.mxu0 %v4645
        %4728 = vmatprep.subr.mxu0 0.0
        %4729 = vmatpush1.msra.mxu0 %v4644
        %4730 = vmatprep.subr.mxu0 0.0
        %4731 = vmatpush1.msra.mxu0 %v4643
        %4732 = vmatprep.subr.mxu0 0.0
        %4733 = vmatpush1.msra.mxu0 %v4642
        %4734 = vmatprep.subr.mxu0 0.0
        %4735 = vmatpush2.msra.mxu0 0.0
        %4736 = vmatprep.subr.mxu0 0.0
        %4737 = vmatpush2.msra.mxu0 0.0
        %4738 = vmatprep.subr.mxu0 0.0
        %4739 = vmatpush2.msra.mxu0 0.0
        %4740 = vmatprep.subr.mxu0 0.0
        %4741 = vmatpush2.msra.mxu0 0.0
        %4742 = vmatprep.subr.mxu0 0.0
        %4743 = vmatpush2.msra.mxu0 0.0
        %4744 = vmatprep.subr.mxu0 0.0
        %4745 = vmatpush2.msra.mxu0 0.0
        %4746 = vmatprep.subr.mxu0 0.0
        %4747 = vmatpush2.msra.mxu0 0.0
        %4748 = vmatprep.subr.mxu0 0.0
        %4749 = vmatpush2.msra.mxu0 0.0
        %4750 = vmatprep.subr.mxu0 0.0
        %4751 = vmatpush2.msra.mxu0 0.0
        %4752 = vmatprep.subr.mxu0 0.0
        %4753 = vmatpush2.msra.mxu0 0.0
        %4754 = vmatprep.subr.mxu0 0.0
        %4755 = vmatpush2.msra.mxu0 0.0
        %4756 = vmatprep.subr.mxu0 0.0
        %4757 = vmatpush2.msra.mxu0 0.0
        %4758 = vmatprep.subr.mxu0 0.0
        %4759 = vmatpush2.msra.mxu0 0.0
        %4760 = vmatprep.subr.mxu0 0.0
        %4761 = vmatpush2.msra.mxu0 0.0
        %4762 = vmatprep.subr.mxu0 0.0
        %4763 = vmatpush2.msra.mxu0 0.0
        %4764 = vmatprep.subr.mxu0 0.0
        %4765 = vmatpush2.msra.mxu0 0.0
        %4766 = vmatprep.mubr.f32.mxu0 0.0
        %4767 = vmatmul.mubr.f32.gmra.mxu0 %v4655
        %v4768 = vpop.f32.mrf.mxu0
        %v4769 = vadd.f32 %v4652, %v4768
        %v4770 = vpop.f32.mrf.mxu0
        %4771 = vmatprep.mubr.f32.mxu0 0.0
        %4772 = vmatmul.mubr.f32.gmra.mxu0 %v4658
        %v4773 = vpop.f32.mrf.mxu0
        %v4774 = vadd.f32 %v4652, %v4773
        %v4775 = vpop.f32.mrf.mxu0
        %4776 = vmatprep.mubr.f32.mxu0 0.0
        %4777 = vmatmul.mubr.f32.gmra.mxu0 %v4661
        %v4778 = vpop.f32.mrf.mxu0
        %v4779 = vadd.f32 %v4652, %v4778
        %v4780 = vpop.f32.mrf.mxu0
        %4781 = vmatprep.mubr.f32.mxu0 0.0
        %4782 = vmatmul.mubr.f32.gmra.mxu0 %v4664
        %v4783 = vpop.f32.mrf.mxu0
        %v4784 = vadd.f32 %v4652, %v4783
        %v4785 = vpop.f32.mrf.mxu0
        %4786 = vmatprep.mubr.f32.mxu0 0.0
        %4787 = vmatmul.mubr.f32.gmra.mxu0 %v4667
        %v4788 = vpop.f32.mrf.mxu0
        %v4789 = vadd.f32 %v4652, %v4788
        %v4790 = vpop.f32.mrf.mxu0
        %4791 = vmatprep.mubr.f32.mxu0 0.0
        %4792 = vmatmul.mubr.f32.gmra.mxu0 %v4670
        %v4793 = vpop.f32.mrf.mxu0
        %v4794 = vadd.f32 %v4652, %v4793
        %v4795 = vpop.f32.mrf.mxu0
        %4796 = vmatprep.mubr.f32.mxu0 0.0
        %4797 = vmatmul.mubr.f32.gmra.mxu0 %v4673
        %v4798 = vpop.f32.mrf.mxu0
        %v4799 = vadd.f32 %v4652, %v4798
        %v4800 = vpop.f32.mrf.mxu0
        %4801 = vmatprep.mubr.f32.mxu0 0.0
        %4802 = vmatmul.mubr.f32.gmra.mxu0 %v4676
        %v4803 = vpop.f32.mrf.mxu0
        %v4804 = vadd.f32 %v4652, %v4803
        %v4805 = vpop.f32.mrf.mxu0
        %4806 = vmatprep.mubr.f32.mxu0 0.0
        %4807 = vmatmul.mubr.f32.gmra.mxu0 %v4679
        %v4808 = vpop.f32.mrf.mxu0
        %v4809 = vadd.f32 %v4652, %v4808
        %v4810 = vpop.f32.mrf.mxu0
        %4811 = vmatprep.mubr.f32.mxu0 0.0
        %4812 = vmatmul.mubr.f32.gmra.mxu0 %v4682
        %v4813 = vpop.f32.mrf.mxu0
        %v4814 = vadd.f32 %v4652, %v4813
        %v4815 = vpop.f32.mrf.mxu0
        %4816 = vmatprep.mubr.f32.mxu0 0.0
        %4817 = vmatmul.mubr.f32.gmra.mxu0 %v4685
        %v4818 = vpop.f32.mrf.mxu0
        %v4819 = vadd.f32 %v4652, %v4818
        %v4820 = vpop.f32.mrf.mxu0
        %4821 = vmatprep.mubr.f32.mxu0 0.0
        %4822 = vmatmul.mubr.f32.gmra.mxu0 %v4688
        %v4823 = vpop.f32.mrf.mxu0
        %v4824 = vadd.f32 %v4652, %v4823
        %v4825 = vpop.f32.mrf.mxu0
        %4826 = vmatprep.mubr.f32.mxu0 0.0
        %4827 = vmatmul.mubr.f32.gmra.mxu0 %v4691
        %v4828 = vpop.f32.mrf.mxu0
        %v4829 = vadd.f32 %v4652, %v4828
        %v4830 = vpop.f32.mrf.mxu0
        %4831 = vmatprep.mubr.f32.mxu0 0.0
        %4832 = vmatmul.mubr.f32.gmra.mxu0 %v4694
        %v4833 = vpop.f32.mrf.mxu0
        %v4834 = vadd.f32 %v4652, %v4833
        %v4835 = vpop.f32.mrf.mxu0
        %4836 = vmatprep.mubr.f32.mxu0 0.0
        %4837 = vmatmul.mubr.f32.gmra.mxu0 %v4697
        %v4838 = vpop.f32.mrf.mxu0
        %v4839 = vadd.f32 %v4652, %v4838
        %v4840 = vpop.f32.mrf.mxu0
        %4841 = vmatprep.mubr.f32.mxu0 0.0
        %4842 = vmatmul.mubr.f32.gmra.mxu0 %v4700
        %v4843 = vpop.f32.mrf.mxu0
        %v4844 = vadd.f32 %v4652, %v4843
        %v4845 = vpop.f32.mrf.mxu0
        %4846 = vdwg.mxu0
        %v4847 = vmax.f32 %v4769, 0.0
        %v4848 = vmax.f32 %v4774, 0.0
        %v4849 = vmax.f32 %v4779, 0.0
        %v4850 = vmax.f32 %v4784, 0.0
        %v4851 = vmax.f32 %v4789, 0.0
        %v4852 = vmax.f32 %v4794, 0.0
        %v4853 = vmax.f32 %v4799, 0.0
        %v4854 = vmax.f32 %v4804, 0.0
        %v4855 = vmax.f32 %v4809, 0.0
        %v4856 = vmax.f32 %v4814, 0.0
        %v4857 = vmax.f32 %v4819, 0.0
        %v4858 = vmax.f32 %v4824, 0.0
        %v4859 = vmax.f32 %v4829, 0.0
        %v4860 = vmax.f32 %v4834, 0.0
        %v4861 = vmax.f32 %v4839, 0.0
        %v4862 = vmax.f32 %v4844, 0.0
        %s4863 = scalar_lea.vmem %s5, 224
        %v4864 = vld [vmem:[%s4863] sm:$0xff]
        %v4865 = vld [vmem:[%s4863 + $0x8] sm:$0xff]
        %v4866 = vld [vmem:[%s4863 + $0x10] sm:$0xff]
        %v4867 = vld [vmem:[%s4863 + $0x18] sm:$0xff]
        %s4868 = scalar_lea.vmem %s6, 7
        %v4869 = vld [vmem:[%s4868] sm:$0x1]
        %v4871 = vlaneseq
        %v4872 = vshrl.u32 %v4871, 7
        %v4873 = vsub.s32 0, %v4872
        %v4874 = vrot.slane %v4869, %v4873
        %v4877 = vsel %vm3273, %v4847, 0
        %v4880 = vsel %vm3273, %v4848, 0
        %v4883 = vsel %vm3273, %v4849, 0
        %v4886 = vsel %vm3273, %v4850, 0
        %v4889 = vsel %vm3273, %v4851, 0
        %v4892 = vsel %vm3273, %v4852, 0
        %v4895 = vsel %vm3273, %v4853, 0
        %v4898 = vsel %vm3273, %v4854, 0
        %v4901 = vsel %vm3273, %v4855, 0
        %v4904 = vsel %vm3273, %v4856, 0
        %v4907 = vsel %vm3273, %v4857, 0
        %v4910 = vsel %vm3273, %v4858, 0
        %v4913 = vsel %vm3273, %v4859, 0
        %v4916 = vsel %vm3273, %v4860, 0
        %v4919 = vsel %vm3273, %v4861, 0
        %v4922 = vsel %vm3273, %v4862, 0
        %4924 = vmatprep.subr.mxu0 0.0
        %4925 = vmatpush1.msra.mxu0 0.0
        %4926 = vmatprep.subr.mxu0 0.0
        %4927 = vmatpush1.msra.mxu0 0.0
        %4928 = vmatprep.subr.mxu0 0.0
        %4929 = vmatpush1.msra.mxu0 0.0
        %4930 = vmatprep.subr.mxu0 0.0
        %4931 = vmatpush1.msra.mxu0 0.0
        %4932 = vmatprep.subr.mxu0 0.0
        %4933 = vmatpush1.msra.mxu0 0.0
        %4934 = vmatprep.subr.mxu0 0.0
        %4935 = vmatpush1.msra.mxu0 0.0
        %4936 = vmatprep.subr.mxu0 0.0
        %4937 = vmatpush1.msra.mxu0 0.0
        %4938 = vmatprep.subr.mxu0 0.0
        %4939 = vmatpush1.msra.mxu0 0.0
        %4940 = vmatprep.subr.mxu0 0.0
        %4941 = vmatpush1.msra.mxu0 0.0
        %4942 = vmatprep.subr.mxu0 0.0
        %4943 = vmatpush1.msra.mxu0 0.0
        %4944 = vmatprep.subr.mxu0 0.0
        %4945 = vmatpush1.msra.mxu0 0.0
        %4946 = vmatprep.subr.mxu0 0.0
        %4947 = vmatpush1.msra.mxu0 0.0
        %4948 = vmatprep.subr.mxu0 0.0
        %4949 = vmatpush1.msra.mxu0 %v4867
        %4950 = vmatprep.subr.mxu0 0.0
        %4951 = vmatpush1.msra.mxu0 %v4866
        %4952 = vmatprep.subr.mxu0 0.0
        %4953 = vmatpush1.msra.mxu0 %v4865
        %4954 = vmatprep.subr.mxu0 0.0
        %4955 = vmatpush1.msra.mxu0 %v4864
        %4956 = vmatprep.subr.mxu0 0.0
        %4957 = vmatpush2.msra.mxu0 0.0
        %4958 = vmatprep.subr.mxu0 0.0
        %4959 = vmatpush2.msra.mxu0 0.0
        %4960 = vmatprep.subr.mxu0 0.0
        %4961 = vmatpush2.msra.mxu0 0.0
        %4962 = vmatprep.subr.mxu0 0.0
        %4963 = vmatpush2.msra.mxu0 0.0
        %4964 = vmatprep.subr.mxu0 0.0
        %4965 = vmatpush2.msra.mxu0 0.0
        %4966 = vmatprep.subr.mxu0 0.0
        %4967 = vmatpush2.msra.mxu0 0.0
        %4968 = vmatprep.subr.mxu0 0.0
        %4969 = vmatpush2.msra.mxu0 0.0
        %4970 = vmatprep.subr.mxu0 0.0
        %4971 = vmatpush2.msra.mxu0 0.0
        %4972 = vmatprep.subr.mxu0 0.0
        %4973 = vmatpush2.msra.mxu0 0.0
        %4974 = vmatprep.subr.mxu0 0.0
        %4975 = vmatpush2.msra.mxu0 0.0
        %4976 = vmatprep.subr.mxu0 0.0
        %4977 = vmatpush2.msra.mxu0 0.0
        %4978 = vmatprep.subr.mxu0 0.0
        %4979 = vmatpush2.msra.mxu0 0.0
        %4980 = vmatprep.subr.mxu0 0.0
        %4981 = vmatpush2.msra.mxu0 0.0
        %4982 = vmatprep.subr.mxu0 0.0
        %4983 = vmatpush2.msra.mxu0 0.0
        %4984 = vmatprep.subr.mxu0 0.0
        %4985 = vmatpush2.msra.mxu0 0.0
        %4986 = vmatprep.subr.mxu0 0.0
        %4987 = vmatpush2.msra.mxu0 0.0
        %4988 = vmatprep.mubr.f32.mxu0 0.0
        %4989 = vmatmul.mubr.f32.gmra.mxu0 %v4877
        %v4990 = vpop.f32.mrf.mxu0
        %v4991 = vadd.f32 %v4874, %v4990
        %v4992 = vpop.f32.mrf.mxu0
        %4993 = vmatprep.mubr.f32.mxu0 0.0
        %4994 = vmatmul.mubr.f32.gmra.mxu0 %v4880
        %v4995 = vpop.f32.mrf.mxu0
        %v4996 = vadd.f32 %v4874, %v4995
        %v4997 = vpop.f32.mrf.mxu0
        %4998 = vmatprep.mubr.f32.mxu0 0.0
        %4999 = vmatmul.mubr.f32.gmra.mxu0 %v4883
        %v5000 = vpop.f32.mrf.mxu0
        %v5001 = vadd.f32 %v4874, %v5000
        %v5002 = vpop.f32.mrf.mxu0
        %5003 = vmatprep.mubr.f32.mxu0 0.0
        %5004 = vmatmul.mubr.f32.gmra.mxu0 %v4886
        %v5005 = vpop.f32.mrf.mxu0
        %v5006 = vadd.f32 %v4874, %v5005
        %v5007 = vpop.f32.mrf.mxu0
        %5008 = vmatprep.mubr.f32.mxu0 0.0
        %5009 = vmatmul.mubr.f32.gmra.mxu0 %v4889
        %v5010 = vpop.f32.mrf.mxu0
        %v5011 = vadd.f32 %v4874, %v5010
        %v5012 = vpop.f32.mrf.mxu0
        %5013 = vmatprep.mubr.f32.mxu0 0.0
        %5014 = vmatmul.mubr.f32.gmra.mxu0 %v4892
        %v5015 = vpop.f32.mrf.mxu0
        %v5016 = vadd.f32 %v4874, %v5015
        %v5017 = vpop.f32.mrf.mxu0
        %5018 = vmatprep.mubr.f32.mxu0 0.0
        %5019 = vmatmul.mubr.f32.gmra.mxu0 %v4895
        %v5020 = vpop.f32.mrf.mxu0
        %v5021 = vadd.f32 %v4874, %v5020
        %v5022 = vpop.f32.mrf.mxu0
        %5023 = vmatprep.mubr.f32.mxu0 0.0
        %5024 = vmatmul.mubr.f32.gmra.mxu0 %v4898
        %v5025 = vpop.f32.mrf.mxu0
        %v5026 = vadd.f32 %v4874, %v5025
        %v5027 = vpop.f32.mrf.mxu0
        %5028 = vmatprep.mubr.f32.mxu0 0.0
        %5029 = vmatmul.mubr.f32.gmra.mxu0 %v4901
        %v5030 = vpop.f32.mrf.mxu0
        %v5031 = vadd.f32 %v4874, %v5030
        %v5032 = vpop.f32.mrf.mxu0
        %5033 = vmatprep.mubr.f32.mxu0 0.0
        %5034 = vmatmul.mubr.f32.gmra.mxu0 %v4904
        %v5035 = vpop.f32.mrf.mxu0
        %v5036 = vadd.f32 %v4874, %v5035
        %v5037 = vpop.f32.mrf.mxu0
        %5038 = vmatprep.mubr.f32.mxu0 0.0
        %5039 = vmatmul.mubr.f32.gmra.mxu0 %v4907
        %v5040 = vpop.f32.mrf.mxu0
        %v5041 = vadd.f32 %v4874, %v5040
        %v5042 = vpop.f32.mrf.mxu0
        %5043 = vmatprep.mubr.f32.mxu0 0.0
        %5044 = vmatmul.mubr.f32.gmra.mxu0 %v4910
        %v5045 = vpop.f32.mrf.mxu0
        %v5046 = vadd.f32 %v4874, %v5045
        %v5047 = vpop.f32.mrf.mxu0
        %5048 = vmatprep.mubr.f32.mxu0 0.0
        %5049 = vmatmul.mubr.f32.gmra.mxu0 %v4913
        %v5050 = vpop.f32.mrf.mxu0
        %v5051 = vadd.f32 %v4874, %v5050
        %v5052 = vpop.f32.mrf.mxu0
        %5053 = vmatprep.mubr.f32.mxu0 0.0
        %5054 = vmatmul.mubr.f32.gmra.mxu0 %v4916
        %v5055 = vpop.f32.mrf.mxu0
        %v5056 = vadd.f32 %v4874, %v5055
        %v5057 = vpop.f32.mrf.mxu0
        %5058 = vmatprep.mubr.f32.mxu0 0.0
        %5059 = vmatmul.mubr.f32.gmra.mxu0 %v4919
        %v5060 = vpop.f32.mrf.mxu0
        %v5061 = vadd.f32 %v4874, %v5060
        %v5062 = vpop.f32.mrf.mxu0
        %5063 = vmatprep.mubr.f32.mxu0 0.0
        %5064 = vmatmul.mubr.f32.gmra.mxu0 %v4922
        %v5065 = vpop.f32.mrf.mxu0
        %v5066 = vadd.f32 %v4874, %v5065
        %v5067 = vpop.f32.mrf.mxu0
        %5068 = vdwg.mxu0
        %v5069 = vadd.f32 %v4609, %v4991
        %v5070 = vadd.f32 %v4610, %v4996
        %v5071 = vadd.f32 %v4611, %v5001
        %v5072 = vadd.f32 %v4612, %v5006
        %v5073 = vadd.f32 %v4613, %v5011
        %v5074 = vadd.f32 %v4614, %v5016
        %v5075 = vadd.f32 %v4615, %v5021
        %v5076 = vadd.f32 %v4616, %v5026
        %v5077 = vadd.f32 %v4617, %v5031
        %v5078 = vadd.f32 %v4618, %v5036
        %v5079 = vadd.f32 %v4619, %v5041
        %v5080 = vadd.f32 %v4620, %v5046
        %v5081 = vadd.f32 %v4621, %v5051
        %v5082 = vadd.f32 %v4622, %v5056
        %v5083 = vadd.f32 %v4623, %v5061
        %v5084 = vadd.f32 %v4624, %v5066
        %v5085 = vmax.f32 %v5069, 0.0
        %v5086 = vmax.f32 %v5070, 0.0
        %v5087 = vmax.f32 %v5071, 0.0
        %v5088 = vmax.f32 %v5072, 0.0
        %v5089 = vmax.f32 %v5073, 0.0
        %v5090 = vmax.f32 %v5074, 0.0
        %v5091 = vmax.f32 %v5075, 0.0
        %v5092 = vmax.f32 %v5076, 0.0
        %v5093 = vmax.f32 %v5077, 0.0
        %v5094 = vmax.f32 %v5078, 0.0
        %v5095 = vmax.f32 %v5079, 0.0
        %v5096 = vmax.f32 %v5080, 0.0
        %v5097 = vmax.f32 %v5081, 0.0
        %v5098 = vmax.f32 %v5082, 0.0
        %v5099 = vmax.f32 %v5083, 0.0
        %v5100 = vmax.f32 %v5084, 0.0
        %v5101 = vld [vmem:[%s7] sm:$0x1]
        %v5102 = vld [vmem:[#allocation2] sm:$0x1]
        %5104 = vset.pattern.permute.xlu0 0
        %5105 = vperm.xlu0 %5104, %v5102
        %v5106 = vpop.permute.xlu0 %5105
        %v5108 = vlaneseq
        %v5109 = vshrl.u32 %v5108, 7
        %v5110 = vsub.s32 0, %v5109
        %v5111 = vrot.slane %v5106, %v5110
        %v5113 = vsel %vm3273, %v5101, 0
        %v5116 = vsel %vm3273, %v5085, 0
        %v5119 = vsel %vm3273, %v5086, 0
        %v5122 = vsel %vm3273, %v5087, 0
        %v5125 = vsel %vm3273, %v5088, 0
        %v5128 = vsel %vm3273, %v5089, 0
        %v5131 = vsel %vm3273, %v5090, 0
        %v5134 = vsel %vm3273, %v5091, 0
        %v5137 = vsel %vm3273, %v5092, 0
        %v5140 = vsel %vm3273, %v5093, 0
        %v5143 = vsel %vm3273, %v5094, 0
        %v5146 = vsel %vm3273, %v5095, 0
        %v5149 = vsel %vm3273, %v5096, 0
        %v5152 = vsel %vm3273, %v5097, 0
        %v5155 = vsel %vm3273, %v5098, 0
        %v5158 = vsel %vm3273, %v5099, 0
        %v5161 = vsel %vm3273, %v5100, 0
        %5163 = vmatprep.subr.mxu0 0.0
        %5164 = vmatpush1.xpose.msra.mxu0 %v5161
        %5165 = vmatprep.subr.mxu0 0.0
        %5166 = vmatpush1.xpose.msra.mxu0 %v5158
        %5167 = vmatprep.subr.mxu0 0.0
        %5168 = vmatpush1.xpose.msra.mxu0 %v5155
        %5169 = vmatprep.subr.mxu0 0.0
        %5170 = vmatpush1.xpose.msra.mxu0 %v5152
        %5171 = vmatprep.subr.mxu0 0.0
        %5172 = vmatpush1.xpose.msra.mxu0 %v5149
        %5173 = vmatprep.subr.mxu0 0.0
        %5174 = vmatpush1.xpose.msra.mxu0 %v5146
        %5175 = vmatprep.subr.mxu0 0.0
        %5176 = vmatpush1.xpose.msra.mxu0 %v5143
        %5177 = vmatprep.subr.mxu0 0.0
        %5178 = vmatpush1.xpose.msra.mxu0 %v5140
        %5179 = vmatprep.subr.mxu0 0.0
        %5180 = vmatpush1.xpose.msra.mxu0 %v5137
        %5181 = vmatprep.subr.mxu0 0.0
        %5182 = vmatpush1.xpose.msra.mxu0 %v5134
        %5183 = vmatprep.subr.mxu0 0.0
        %5184 = vmatpush1.xpose.msra.mxu0 %v5131
        %5185 = vmatprep.subr.mxu0 0.0
        %5186 = vmatpush1.xpose.msra.mxu0 %v5128
        %5187 = vmatprep.subr.mxu0 0.0
        %5188 = vmatpush1.xpose.msra.mxu0 %v5125
        %5189 = vmatprep.subr.mxu0 0.0
        %5190 = vmatpush1.xpose.msra.mxu0 %v5122
        %5191 = vmatprep.subr.mxu0 0.0
        %5192 = vmatpush1.xpose.msra.mxu0 %v5119
        %5193 = vmatprep.subr.mxu0 0.0
        %5194 = vmatpush1.xpose.msra.mxu0 %v5116
        %5195 = vmatprep.subr.mxu0 0.0
        %5196 = vmatpush2.xpose.msra.mxu0 0.0
        %5197 = vmatprep.subr.mxu0 0.0
        %5198 = vmatpush2.xpose.msra.mxu0 0.0
        %5199 = vmatprep.subr.mxu0 0.0
        %5200 = vmatpush2.xpose.msra.mxu0 0.0
        %5201 = vmatprep.subr.mxu0 0.0
        %5202 = vmatpush2.xpose.msra.mxu0 0.0
        %5203 = vmatprep.subr.mxu0 0.0
        %5204 = vmatpush2.xpose.msra.mxu0 0.0
        %5205 = vmatprep.subr.mxu0 0.0
        %5206 = vmatpush2.xpose.msra.mxu0 0.0
        %5207 = vmatprep.subr.mxu0 0.0
        %5208 = vmatpush2.xpose.msra.mxu0 0.0
        %5209 = vmatprep.subr.mxu0 0.0
        %5210 = vmatpush2.xpose.msra.mxu0 0.0
        %5211 = vmatprep.subr.mxu0 0.0
        %5212 = vmatpush2.xpose.msra.mxu0 0.0
        %5213 = vmatprep.subr.mxu0 0.0
        %5214 = vmatpush2.xpose.msra.mxu0 0.0
        %5215 = vmatprep.subr.mxu0 0.0
        %5216 = vmatpush2.xpose.msra.mxu0 0.0
        %5217 = vmatprep.subr.mxu0 0.0
        %5218 = vmatpush2.xpose.msra.mxu0 0.0
        %5219 = vmatprep.subr.mxu0 0.0
        %5220 = vmatpush2.xpose.msra.mxu0 0.0
        %5221 = vmatprep.subr.mxu0 0.0
        %5222 = vmatpush2.xpose.msra.mxu0 0.0
        %5223 = vmatprep.subr.mxu0 0.0
        %5224 = vmatpush2.xpose.msra.mxu0 0.0
        %5225 = vmatprep.subr.mxu0 0.0
        %5226 = vmatpush2.xpose.msra.mxu0 0.0
        %5227 = vmatprep.mubr.f32.mxu0 0.0
        %5228 = vmatmul.mubr.f32.gmra.mxu0 %v5113
        %v5229 = vpop.f32.mrf.mxu0
        %v5230 = vadd.f32 %v5111, %v5229
        %v5231 = vpop.f32.mrf.mxu0
        %5232 = vdwg.mxu0
        %5233 = vst [vmem:[%s390] sm:$0x1] %v5230
        %s5234 = sand.u32 %s258, 1
        %s5235 = scalar_lea.sflag [#allocation4], %s5234
        %s5236 = sand.u32 %s258, 1
        %s5237 = scalar_lea.vmem [#allocation3], %s5236
        // Predicated region
        $region64: #{tpu_custom_call.1} parent=55 // pred_check
          %p5238 = pneg %p268
        $region65: #{tpu_custom_call.1} parent=55 // pred_check_branch
          %5240 = sbr.rel (%p5238) target = $region67
        $region66: #{tpu_custom_call.1} parent=55 // pred_region
          %s5242 = ssub.s32 16, 16
          %5243 = vsyncadd %s5235, %s5242
          %s5244 = smul.addr %s29, 2
          %s5245 = sadd.s32 %s30, %s5244
          %s5246 = smul.addr %s5245, 16
          %s5247 = scalar_lea.hbm %s9, %s5246
          %s5249 = sshll.u32 %s5237, 4
          %s5250 = int_to_ptr.vmem [resolvable:$true] %s5249
          %5252 = dma.vmem_to_hbm [thread:$0]  %s5250, 16, %s5247, %s5235
        $region67: #{tpu_custom_call.1} parent=55 // pred_fallthru
          _
      $region56: #{tpu_custom_call.1} parent=5 // pred_fallthru
        _
      %p5253 = scmp.le.s32.totalorder 2, %s20
      // Predicated region
      $region68: #{tpu_custom_call.1} parent=5 // pred_check
        %p5254 = pneg %p5253
      $region69: #{tpu_custom_call.1} parent=5 // pred_check_branch
        %5256 = sbr.rel (%p5254) target = $region71
      $region70: #{tpu_custom_call.1} parent=5 // pred_region
        %s5257 = ssub.s32 %s20, 2
        // Predicated region
        $region72: #{tpu_custom_call.1} parent=70 // pred_check
          %p5258 = pneg %p274
        $region73: #{tpu_custom_call.1} parent=70 // pred_check_branch
          %5260 = sbr.rel (%p5258) target = $region75
        $region74: #{tpu_custom_call.1} parent=70 // pred_region
          %s5261 = sand.u32 %s259, 1
          %s5262 = scalar_lea.sflag [#allocation4], %s5261
          %s5263 = sand.u32 %s259, 1
          %s5264 = scalar_lea.vmem [#allocation3], %s5263
          %5265 = dma.done %s5262, 16
        $region75: #{tpu_custom_call.1} parent=70 // pred_fallthru
          _
      $region71: #{tpu_custom_call.1} parent=5 // pred_fallthru
        _
    $region6: #{tpu_custom_call.1} parent=1 // loop_footer
      %s24 = sadd.s32 1, %s20
    $region7: #{tpu_custom_call.1} parent=1 // loop_footer_branch
      %19 = sbr.rel target = $region3
    $region8: #{tpu_custom_call.1} parent=1 // loop_exit
      _
    %5266 = vsyncpa [#allocation4], 1
    %s5267 = scalar_lea.sflag [#allocation4], 1
    %5268 = vsyncpa %s5267, 1

// kernel: tpu_custom_call.1
$region0: #{tpu_custom_call.1}
  #allocation0 [shape = 'u32[]', space=smem, size = 0x4, offset = 0x4, fixed_abs, tag = 'smem constant byte address 0x4 - core index']
  #allocation1 [shape = 'u32[144,128]{1,0:T(1,128)}', space=vmem, size = 0x12000, scoped, tag = 'internal scratch']
  #allocation2 [shape = 'f32[1,1]{1,0:T(1,128)S(1)}', space=vmem, size = 0x200, scoped, tag = 'scoped memory for tpu_custom_call.1']
  %s0 = inlined_call_operand.vmem [shape: f32[2,256,3], index: 0, kind: input, shape index: {}]
  %s1 = inlined_call_operand.vmem [shape: f32[2,1,44], index: 1, kind: input, shape index: {}]
  %s2 = inlined_call_operand.vmem [shape: f32[2,3,32], index: 2, kind: input, shape index: {}]
  %s3 = inlined_call_operand.vmem [shape: f32[2,256,16], index: 3, kind: input, shape index: {}]
  %s4 = inlined_call_operand.vmem [shape: f32[16,32], index: 4, kind: input, shape index: {}]
  %s5 = inlined_call_operand.vmem [shape: f32[8,32,32], index: 5, kind: input, shape index: {}]
  %s6 = inlined_call_operand.vmem [shape: f32[8,1,32], index: 6, kind: input, shape index: {}]
  %s7 = inlined_call_operand.vmem [shape: f32[1,32], index: 7, kind: input, shape index: {}]
  %s8 = inlined_call_operand.<no memory space> [shape: f32[1,1], index: 8, kind: input, shape index: {}]
  %s9 = inlined_call_operand.hbm [shape: f32[2,1,256], index: 9, kind: output, shape index: {}]
  %s10 = sld [smem:[#allocation0]]
  $region76: #{tpu_custom_call.1} parent=0
    _
  %s12 = ssub.s32 1, %s10
  %s13 = scalar_select 0, %s12, %s10
  %v14 = vstv %s8
  %15 = vst [vmem:[#allocation2] sm:$0x1] %v14
  $region1: #{tpu_custom_call.1} parent=0
    #allocation3 [shape = 'u8[1024]{0}', space=vmem, size = 0x400, scoped, tag = 'output window, operand 0']
    #allocation4 [shape = 's32[2]{0}', space=sflag, size = 0x8, scoped, tag = 'scoped memory for tpu_custom_call.1']
    %16 = vsyncpa [#allocation4], 0
    %s17 = scalar_lea.sflag [#allocation4], 1
    %18 = vsyncpa %s17, 0
    loop: start=0, step=1, limit=6
    $region2: #{tpu_custom_call.1} parent=1 // loop_pre_header
      _
    $region3: #{tpu_custom_call.1} parent=1 // loop_header
      %s20 = sphi 0, %s24
      %p21 = scmp.ge.s32.totalorder %s20, 6
      %s27 = sphi 0, %s39
      %s28 = sphi 0, %s35
      %s29 = sphi 0, %s27
      %s30 = sphi 0, %s28
      %s31 = sphi 0, %s29
      %s32 = sphi 0, %s30
      %s44 = sphi 0, %s46
      %s47 = sphi 0, %s44
      %s48 = sphi 0, %s47
      %s64 = sphi 0, %s48
      %s70 = sphi 0, %s72
      %s73 = sphi 0, %s70
      %s74 = sphi 0, %s73
      %s90 = sphi 0, %s74
      %s96 = sphi 0, %s98
      %s99 = sphi 0, %s96
      %s100 = sphi 0, %s99
      %s116 = sphi 0, %s100
      %s122 = sphi 0, %s124
      %s125 = sphi 0, %s122
      %s126 = sphi 0, %s125
      %s142 = sphi 0, %s126
      %s146 = sphi 0, %s146
      %s148 = sphi 0, %s146
      %s149 = sphi 0, %s148
      %s163 = sphi 0, %s149
      %s167 = sphi 0, %s167
      %s169 = sphi 0, %s167
      %s170 = sphi 0, %s169
      %s184 = sphi 0, %s170
      %s188 = sphi 0, %s188
      %s190 = sphi 0, %s188
      %s191 = sphi 0, %s190
      %s205 = sphi 0, %s191
      %s209 = sphi 0, %s209
      %s211 = sphi 0, %s209
      %s212 = sphi 0, %s211
      %s226 = sphi 0, %s212
      %s230 = sphi 0, %s230
      %s232 = sphi 0, %s230
      %s233 = sphi 0, %s232
      %s247 = sphi 0, %s233
      %s255 = sphi 0, %s257
      %s258 = sphi 0, %s255
      %s259 = sphi 0, %s258
      %s275 = sphi 0, %s259
    $region4: #{tpu_custom_call.1} parent=1 // loop_header_branch
      %23 = sbr.rel (%p21) target = $region8
    $region5: #{tpu_custom_call.1} parent=1 // loop_body
      %s25 = ssub.s32 %s20, 1
      %s26 = ssub.s32 %s20, 2
      %s33 = sadd.s32 1, %s28
      %p34 = scmp.ge.s32.totalorder %s33, 2
      %s35 = scalar_select %p34, 0, %s33
      %s36 = sadd.s32 1, %s27
      %s37 = scalar_select %p34, %s36, %s27
      %p38 = scmp.ge.s32.totalorder %s37, 2
      %s39 = scalar_select %p38, 0, %s37
      %s40 = ssub.s32 %s27, %s39
      %s41 = ssub.s32 %s28, %s35
      %s42 = sor.u32 %s40, %s41
      %p43 = scmp.eq.s32.totalorder %s42, 0
      %s45 = sadd.s32 %s44, 1
      %s46 = scalar_select %p43, %s44, %s45
      %p49 = pneg %p43
      %p50 = scmp.eq.s32.totalorder %s20, 3
      %p51 = por %p49, %p50
      %p52 = scmp.ne.s32.totalorder %s44, %s47
      %p53 = scmp.eq.s32.totalorder %s20, 0
      %p54 = por %p52, %p53
      %p55 = scmp.ne.s32.totalorder %s44, %s47
      %p56 = scmp.eq.s32.totalorder %s25, 3
      %p57 = por %p55, %p56
      %p58 = scmp.ne.s32.totalorder %s47, %s48
      %p59 = scmp.eq.s32.totalorder %s25, 0
      %p60 = por %p58, %p59
      %p61 = scmp.ne.s32.totalorder %s47, %s48
      %p62 = scmp.eq.s32.totalorder %s26, 3
      %p63 = por %p61, %p62
      %p65 = scmp.ne.s32.totalorder %s48, %s64
      %p66 = scmp.eq.s32.totalorder %s26, 0
      %p67 = por %p65, %p66
      %s68 = ssub.s32 %s27, %s39
      %p69 = scmp.eq.s32.totalorder %s68, 0
      %s71 = sadd.s32 %s70, 1
      %s72 = scalar_select %p69, %s70, %s71
      %p75 = pneg %p69
      %p76 = scmp.eq.s32.totalorder %s20, 3
      %p77 = por %p75, %p76
      %p78 = scmp.ne.s32.totalorder %s70, %s73
      %p79 = scmp.eq.s32.totalorder %s20, 0
      %p80 = por %p78, %p79
      %p81 = scmp.ne.s32.totalorder %s70, %s73
      %p82 = scmp.eq.s32.totalorder %s25, 3
      %p83 = por %p81, %p82
      %p84 = scmp.ne.s32.totalorder %s73, %s74
      %p85 = scmp.eq.s32.totalorder %s25, 0
      %p86 = por %p84, %p85
      %p87 = scmp.ne.s32.totalorder %s73, %s74
      %p88 = scmp.eq.s32.totalorder %s26, 3
      %p89 = por %p87, %p88
      %p91 = scmp.ne.s32.totalorder %s74, %s90
      %p92 = scmp.eq.s32.totalorder %s26, 0
      %p93 = por %p91, %p92
      %s94 = ssub.s32 %s27, %s39
      %p95 = scmp.eq.s32.totalorder %s94, 0
      %s97 = sadd.s32 %s96, 1
      %s98 = scalar_select %p95, %s96, %s97
      %p101 = pneg %p95
      %p102 = scmp.eq.s32.totalorder %s20, 3
      %p103 = por %p101, %p102
      %p104 = scmp.ne.s32.totalorder %s96, %s99
      %p105 = scmp.eq.s32.totalorder %s20, 0
      %p106 = por %p104, %p105
      %p107 = scmp.ne.s32.totalorder %s96, %s99
      %p108 = scmp.eq.s32.totalorder %s25, 3
      %p109 = por %p107, %p108
      %p110 = scmp.ne.s32.totalorder %s99, %s100
      %p111 = scmp.eq.s32.totalorder %s25, 0
      %p112 = por %p110, %p111
      %p113 = scmp.ne.s32.totalorder %s99, %s100
      %p114 = scmp.eq.s32.totalorder %s26, 3
      %p115 = por %p113, %p114
      %p117 = scmp.ne.s32.totalorder %s100, %s116
      %p118 = scmp.eq.s32.totalorder %s26, 0
      %p119 = por %p117, %p118
      %s120 = ssub.s32 %s27, %s39
      %p121 = scmp.eq.s32.totalorder %s120, 0
      %s123 = sadd.s32 %s122, 1
      %s124 = scalar_select %p121, %s122, %s123
      %p127 = pneg %p121
      %p128 = scmp.eq.s32.totalorder %s20, 3
      %p129 = por %p127, %p128
      %p130 = scmp.ne.s32.totalorder %s122, %s125
      %p131 = scmp.eq.s32.totalorder %s20, 0
      %p132 = por %p130, %p131
      %p133 = scmp.ne.s32.totalorder %s122, %s125
      %p134 = scmp.eq.s32.totalorder %s25, 3
      %p135 = por %p133, %p134
      %p136 = scmp.ne.s32.totalorder %s125, %s126
      %p137 = scmp.eq.s32.totalorder %s25, 0
      %p138 = por %p136, %p137
      %p139 = scmp.ne.s32.totalorder %s125, %s126
      %p140 = scmp.eq.s32.totalorder %s26, 3
      %p141 = por %p139, %p140
      %p143 = scmp.ne.s32.totalorder %s126, %s142
      %p144 = scmp.eq.s32.totalorder %s26, 0
      %p145 = por %p143, %p144
      %s147 = sadd.s32 %s146, 1
      %p150 = scmp.eq.s32.totalorder %s20, 3
      %p151 = scmp.ne.s32.totalorder %s146, %s148
      %p152 = scmp.eq.s32.totalorder %s20, 0
      %p153 = por %p151, %p152
      %p154 = scmp.ne.s32.totalorder %s146, %s148
      %p155 = scmp.eq.s32.totalorder %s25, 3
      %p156 = por %p154, %p155
      %p157 = scmp.ne.s32.totalorder %s148, %s149
      %p158 = scmp.eq.s32.totalorder %s25, 0
      %p159 = por %p157, %p158
      %p160 = scmp.ne.s32.totalorder %s148, %s149
      %p161 = scmp.eq.s32.totalorder %s26, 3
      %p162 = por %p160, %p161
      %p164 = scmp.ne.s32.totalorder %s149, %s163
      %p165 = scmp.eq.s32.totalorder %s26, 0
      %p166 = por %p164, %p165
      %s168 = sadd.s32 %s167, 1
      %p171 = scmp.eq.s32.totalorder %s20, 3
      %p172 = scmp.ne.s32.totalorder %s167, %s169
      %p173 = scmp.eq.s32.totalorder %s20, 0
      %p174 = por %p172, %p173
      %p175 = scmp.ne.s32.totalorder %s167, %s169
      %p176 = scmp.eq.s32.totalorder %s25, 3
      %p177 = por %p175, %p176
      %p178 = scmp.ne.s32.totalorder %s169, %s170
      %p179 = scmp.eq.s32.totalorder %s25, 0
      %p180 = por %p178, %p179
      %p181 = scmp.ne.s32.totalorder %s169, %s170
      %p182 = scmp.eq.s32.totalorder %s26, 3
      %p183 = por %p181, %p182
      %p185 = scmp.ne.s32.totalorder %s170, %s184
      %p186 = scmp.eq.s32.totalorder %s26, 0
      %p187 = por %p185, %p186
      %s189 = sadd.s32 %s188, 1
      %p192 = scmp.eq.s32.totalorder %s20, 3
      %p193 = scmp.ne.s32.totalorder %s188, %s190
      %p194 = scmp.eq.s32.totalorder %s20, 0
      %p195 = por %p193, %p194
      %p196 = scmp.ne.s32.totalorder %s188, %s190
      %p197 = scmp.eq.s32.totalorder %s25, 3
      %p198 = por %p196, %p197
      %p199 = scmp.ne.s32.totalorder %s190, %s191
      %p200 = scmp.eq.s32.totalorder %s25, 0
      %p201 = por %p199, %p200
      %p202 = scmp.ne.s32.totalorder %s190, %s191
      %p203 = scmp.eq.s32.totalorder %s26, 3
      %p204 = por %p202, %p203
      %p206 = scmp.ne.s32.totalorder %s191, %s205
      %p207 = scmp.eq.s32.totalorder %s26, 0
      %p208 = por %p206, %p207
      %s210 = sadd.s32 %s209, 1
      %p213 = scmp.eq.s32.totalorder %s20, 3
      %p214 = scmp.ne.s32.totalorder %s209, %s211
      %p215 = scmp.eq.s32.totalorder %s20, 0
      %p216 = por %p214, %p215
      %p217 = scmp.ne.s32.totalorder %s209, %s211
      %p218 = scmp.eq.s32.totalorder %s25, 3
      %p219 = por %p217, %p218
      %p220 = scmp.ne.s32.totalorder %s211, %s212
      %p221 = scmp.eq.s32.totalorder %s25, 0
      %p222 = por %p220, %p221
      %p223 = scmp.ne.s32.totalorder %s211, %s212
      %p224 = scmp.eq.s32.totalorder %s26, 3
      %p225 = por %p223, %p224
      %p227 = scmp.ne.s32.totalorder %s212, %s226
      %p228 = scmp.eq.s32.totalorder %s26, 0
      %p229 = por %p227, %p228
      %s231 = sadd.s32 %s230, 1
      %p234 = scmp.eq.s32.totalorder %s20, 3
      %p235 = scmp.ne.s32.totalorder %s230, %s232
      %p236 = scmp.eq.s32.totalorder %s20, 0
      %p237 = por %p235, %p236
      %p238 = scmp.ne.s32.totalorder %s230, %s232
      %p239 = scmp.eq.s32.totalorder %s25, 3
      %p240 = por %p238, %p239
      %p241 = scmp.ne.s32.totalorder %s232, %s233
      %p242 = scmp.eq.s32.totalorder %s25, 0
      %p243 = por %p241, %p242
      %p244 = scmp.ne.s32.totalorder %s232, %s233
      %p245 = scmp.eq.s32.totalorder %s26, 3
      %p246 = por %p244, %p245
      %p248 = scmp.ne.s32.totalorder %s233, %s247
      %p249 = scmp.eq.s32.totalorder %s26, 0
      %p250 = por %p248, %p249
      %s251 = ssub.s32 %s27, %s39
      %s252 = ssub.s32 %s28, %s35
      %s253 = sor.u32 %s251, %s252
      %p254 = scmp.eq.s32.totalorder %s253, 0
      %s256 = sadd.s32 %s255, 1
      %s257 = scalar_select %p254, %s255, %s256
      %p260 = pneg %p254
      %p261 = scmp.eq.s32.totalorder %s20, 3
      %p262 = por %p260, %p261
      %p263 = scmp.ne.s32.totalorder %s255, %s258
      %p264 = scmp.eq.s32.totalorder %s20, 0
      %p265 = por %p263, %p264
      %p266 = scmp.ne.s32.totalorder %s255, %s258
      %p267 = scmp.eq.s32.totalorder %s25, 3
      %p268 = por %p266, %p267
      %p269 = scmp.ne.s32.totalorder %s258, %s259
      %p270 = scmp.eq.s32.totalorder %s25, 0
      %p271 = por %p269, %p270
      %p272 = scmp.ne.s32.totalorder %s258, %s259
      %p273 = scmp.eq.s32.totalorder %s26, 3
      %p274 = por %p272, %p273
      %p276 = scmp.ne.s32.totalorder %s259, %s275
      %p277 = scmp.eq.s32.totalorder %s26, 0
      %p278 = por %p276, %p277
      %p279 = scmp.le.s32.totalorder 1, %s20
      %p280 = scmp.lt.s32.totalorder %s20, 5
      %p281 = pnand %p279, %p280
      %p282 = pneg %p281
      // Predicated region
      $region9: #{tpu_custom_call.1} parent=5 // pred_check
        _
      $region10: #{tpu_custom_call.1} parent=5 // pred_check_branch
        %284 = sbr.rel (%p281) target = $region12
      $region11: #{tpu_custom_call.1} parent=5 // pred_region
        %s285 = ssub.s32 %s20, 1
        // Predicated region
        $region13: #{tpu_custom_call.1} parent=11 // pred_check
          %p286 = pneg %p159
        $region14: #{tpu_custom_call.1} parent=11 // pred_check_branch
          %288 = sbr.rel (%p286) target = $region16
        $region15: #{tpu_custom_call.1} parent=11 // pred_region
          _
        $region16: #{tpu_custom_call.1} parent=11 // pred_fallthru
          _
        // Predicated region
        $region17: #{tpu_custom_call.1} parent=11 // pred_check
          %p289 = pneg %p180
        $region18: #{tpu_custom_call.1} parent=11 // pred_check_branch
          %291 = sbr.rel (%p289) target = $region20
        $region19: #{tpu_custom_call.1} parent=11 // pred_region
          _
        $region20: #{tpu_custom_call.1} parent=11 // pred_fallthru
          _
        // Predicated region
        $region21: #{tpu_custom_call.1} parent=11 // pred_check
          %p292 = pneg %p201
        $region22: #{tpu_custom_call.1} parent=11 // pred_check_branch
          %294 = sbr.rel (%p292) target = $region24
        $region23: #{tpu_custom_call.1} parent=11 // pred_region
          _
        $region24: #{tpu_custom_call.1} parent=11 // pred_fallthru
          _
        // Predicated region
        $region25: #{tpu_custom_call.1} parent=11 // pred_check
          %p295 = pneg %p222
        $region26: #{tpu_custom_call.1} parent=11 // pred_check_branch
          %297 = sbr.rel (%p295) target = $region28
        $region27: #{tpu_custom_call.1} parent=11 // pred_region
          _
        $region28: #{tpu_custom_call.1} parent=11 // pred_fallthru
          _
        // Predicated region
        $region29: #{tpu_custom_call.1} parent=11 // pred_check
          %p298 = pneg %p243
        $region30: #{tpu_custom_call.1} parent=11 // pred_check_branch
          %300 = sbr.rel (%p298) target = $region32
        $region31: #{tpu_custom_call.1} parent=11 // pred_region
          _
        $region32: #{tpu_custom_call.1} parent=11 // pred_fallthru
          _
      $region12: #{tpu_custom_call.1} parent=5 // pred_fallthru
        _
      %p301 = scmp.lt.s32.totalorder %s20, 4
      // Predicated region
      $region33: #{tpu_custom_call.1} parent=5 // pred_check
        %p302 = pneg %p301
      $region34: #{tpu_custom_call.1} parent=5 // pred_check_branch
        %304 = sbr.rel (%p302) target = $region36
      $region35: #{tpu_custom_call.1} parent=5 // pred_region
        // Predicated region
        $region37: #{tpu_custom_call.1} parent=35 // pred_check
          %p305 = pneg %p54
        $region38: #{tpu_custom_call.1} parent=35 // pred_check_branch
          %307 = sbr.rel (%p305) target = $region40
        $region39: #{tpu_custom_call.1} parent=35 // pred_region
          %s308 = smul.u32 16, %s28
          %p309 = scmp.lt.s32.totalorder %s27, 1
          %s310 = scalar_select %p309, %s27, 1
          %p311 = scmp.lt.s32.totalorder %s308, 31
          %s312 = scalar_select %p311, %s308, 31
          %s313 = smul.addr %s310, 32
          %s314 = sadd.s32 %s312, %s313
          %s315 = smul.addr %s314, 8
          %s316 = scalar_lea.vmem %s0, %s315
          %s317 = smul.u32 16, %s28
        $region40: #{tpu_custom_call.1} parent=35 // pred_fallthru
          _
        // Predicated region
        $region41: #{tpu_custom_call.1} parent=35 // pred_check
          %p318 = pneg %p80
        $region42: #{tpu_custom_call.1} parent=35 // pred_check_branch
          %320 = sbr.rel (%p318) target = $region44
        $region43: #{tpu_custom_call.1} parent=35 // pred_region
          %p321 = scmp.lt.s32.totalorder %s27, 1
          %s322 = scalar_select %p321, %s27, 1
          %s323 = scalar_lea.vmem %s1, %s322
        $region44: #{tpu_custom_call.1} parent=35 // pred_fallthru
          _
        // Predicated region
        $region45: #{tpu_custom_call.1} parent=35 // pred_check
          %p324 = pneg %p106
        $region46: #{tpu_custom_call.1} parent=35 // pred_check_branch
          %326 = sbr.rel (%p324) target = $region48
        $region47: #{tpu_custom_call.1} parent=35 // pred_region
          %p327 = scmp.lt.s32.totalorder %s27, 1
          %s328 = scalar_select %p327, %s27, 1
          %s329 = smul.addr %s328, 4
          %s330 = scalar_lea.vmem %s2, %s329
        $region48: #{tpu_custom_call.1} parent=35 // pred_fallthru
          _
        // Predicated region
        $region49: #{tpu_custom_call.1} parent=35 // pred_check
          %p331 = pneg %p132
        $region50: #{tpu_custom_call.1} parent=35 // pred_check_branch
          %333 = sbr.rel (%p331) target = $region52
        $region51: #{tpu_custom_call.1} parent=35 // pred_region
          %p334 = scmp.lt.s32.totalorder %s27, 1
          %s335 = scalar_select %p334, %s27, 1
          %s336 = smul.addr %s335, 32
          %s337 = smul.addr %s336, 8
          %s338 = scalar_lea.vmem %s3, %s337
        $region52: #{tpu_custom_call.1} parent=35 // pred_fallthru
          _
      $region36: #{tpu_custom_call.1} parent=5 // pred_fallthru
        _
      %p339 = scmp.le.s32.totalorder 1, %s20
      %p340 = scmp.lt.s32.totalorder %s20, 5
      %p341 = pnand %p339, %p340
      %p342 = pneg %p341
      // Predicated region
      $region53: #{tpu_custom_call.1} parent=5 // pred_check
        _
      $region54: #{tpu_custom_call.1} parent=5 // pred_check_branch
        %344 = sbr.rel (%p341) target = $region56
      $region55: #{tpu_custom_call.1} parent=5 // pred_region
        %s345 = ssub.s32 %s20, 1
        %s346 = smul.u32 16, %s30
        %p347 = scmp.lt.s32.totalorder %s29, 1
        %s348 = scalar_select %p347, %s29, 1
        %p349 = scmp.lt.s32.totalorder %s346, 31
        %s350 = scalar_select %p349, %s346, 31
        %s351 = smul.addr %s348, 32
        %s352 = sadd.s32 %s350, %s351
        %s353 = smul.addr %s352, 8
        %s354 = scalar_lea.vmem %s0, %s353
        %p355 = pneg %p60
        %p356 = pneg %p57
        %p357 = scmp.lt.s32.totalorder %s29, 1
        %s358 = scalar_select %p357, %s29, 1
        %s359 = scalar_lea.vmem %s1, %s358
        %p360 = pneg %p86
        %p361 = pneg %p83
        %p362 = scmp.lt.s32.totalorder %s29, 1
        %s363 = scalar_select %p362, %s29, 1
        %s364 = smul.addr %s363, 4
        %s365 = scalar_lea.vmem %s2, %s364
        %p366 = pneg %p112
        %p367 = pneg %p109
        %p368 = scmp.lt.s32.totalorder %s29, 1
        %s369 = scalar_select %p368, %s29, 1
        %s370 = smul.addr %s369, 32
        %s371 = smul.addr %s370, 8
        %s372 = scalar_lea.vmem %s3, %s371
        %p373 = pneg %p138
        %p374 = pneg %p135
        %p375 = pneg %p159
        %p376 = pneg %p156
        %p377 = pneg %p180
        %p378 = pneg %p177
        %p379 = pneg %p201
        %p380 = pneg %p198
        %p381 = pneg %p222
        %p382 = pneg %p219
        %p383 = pneg %p243
        %p384 = pneg %p240
        %p385 = pneg %p271
        %p386 = pneg %p268
        %s387 = sand.u32 %s258, 1
        %s388 = scalar_lea.sflag [#allocation4], %s387
        %s389 = sand.u32 %s258, 1
        %s390 = scalar_lea.vmem [#allocation3], %s389
        %s391 = smul.u32 16, %s30
        %p392 = scmp.lt.s32.totalorder %s29, 1
        %s393 = scalar_select %p392, %s29, 1
        %p394 = scmp.lt.s32.totalorder %s391, 31
        %s395 = scalar_select %p394, %s391, 31
        %s396 = smul.addr %s393, 32
        %s397 = sadd.s32 %s395, %s396
        %s398 = smul.addr %s397, 8
        %s399 = scalar_lea.vmem %s0, %s398
        %s400 = smul.u32 16, %s30
        %p401 = scmp.lt.s32.totalorder %s29, 1
        %s402 = scalar_select %p401, %s29, 1
        %s403 = scalar_lea.vmem %s1, %s402
        %p404 = scmp.lt.s32.totalorder %s29, 1
        %s405 = scalar_select %p404, %s29, 1
        %s406 = smul.addr %s405, 4
        %s407 = scalar_lea.vmem %s2, %s406
        %p408 = scmp.lt.s32.totalorder %s29, 1
        %s409 = scalar_select %p408, %s29, 1
        %s410 = smul.addr %s409, 32
        %s411 = smul.addr %s410, 8
        %s412 = scalar_lea.vmem %s3, %s411
        %v413 = vld [vmem:[%s403] sm:$0x1]
        %v414 = vld [vmem:[%s399] sm:$0xff]
        %v415 = vld [vmem:[%s399 + $0x8] sm:$0xff]
        %v416 = vld [vmem:[%s399 + $0x10] sm:$0xff]
        %v417 = vld [vmem:[%s399 + $0x18] sm:$0xff]
        %v418 = vld [vmem:[%s399 + $0x20] sm:$0xff]
        %v419 = vld [vmem:[%s399 + $0x28] sm:$0xff]
        %v420 = vld [vmem:[%s399 + $0x30] sm:$0xff]
        %v421 = vld [vmem:[%s399 + $0x38] sm:$0xff]
        %v422 = vld [vmem:[%s399 + $0x40] sm:$0xff]
        %v423 = vld [vmem:[%s399 + $0x48] sm:$0xff]
        %v424 = vld [vmem:[%s399 + $0x50] sm:$0xff]
        %v425 = vld [vmem:[%s399 + $0x58] sm:$0xff]
        %v426 = vld [vmem:[%s399 + $0x60] sm:$0xff]
        %v427 = vld [vmem:[%s399 + $0x68] sm:$0xff]
        %v428 = vld [vmem:[%s399 + $0x70] sm:$0xff]
        %v429 = vld [vmem:[%s399 + $0x78] sm:$0xff]
        %431 = vset.pattern.permute.xlu0 0
        %432 = vperm.xlu0 %431, %v414
        %v433 = vpop.permute.xlu0 %432
        %436 = vset.pattern.permute.xlu0 0
        %437 = vperm.xlu0 %436, %v415
        %v438 = vpop.permute.xlu0 %437
        %441 = vset.pattern.permute.xlu0 0
        %442 = vperm.xlu0 %441, %v416
        %v443 = vpop.permute.xlu0 %442
        %446 = vset.pattern.permute.xlu0 0
        %447 = vperm.xlu0 %446, %v417
        %v448 = vpop.permute.xlu0 %447
        %451 = vset.pattern.permute.xlu0 0
        %452 = vperm.xlu0 %451, %v418
        %v453 = vpop.permute.xlu0 %452
        %456 = vset.pattern.permute.xlu0 0
        %457 = vperm.xlu0 %456, %v419
        %v458 = vpop.permute.xlu0 %457
        %461 = vset.pattern.permute.xlu0 0
        %462 = vperm.xlu0 %461, %v420
        %v463 = vpop.permute.xlu0 %462
        %466 = vset.pattern.permute.xlu0 0
        %467 = vperm.xlu0 %466, %v421
        %v468 = vpop.permute.xlu0 %467
        %471 = vset.pattern.permute.xlu0 0
        %472 = vperm.xlu0 %471, %v422
        %v473 = vpop.permute.xlu0 %472
        %476 = vset.pattern.permute.xlu0 0
        %477 = vperm.xlu0 %476, %v423
        %v478 = vpop.permute.xlu0 %477
        %481 = vset.pattern.permute.xlu0 0
        %482 = vperm.xlu0 %481, %v424
        %v483 = vpop.permute.xlu0 %482
        %486 = vset.pattern.permute.xlu0 0
        %487 = vperm.xlu0 %486, %v425
        %v488 = vpop.permute.xlu0 %487
        %491 = vset.pattern.permute.xlu0 0
        %492 = vperm.xlu0 %491, %v426
        %v493 = vpop.permute.xlu0 %492
        %496 = vset.pattern.permute.xlu0 0
        %497 = vperm.xlu0 %496, %v427
        %v498 = vpop.permute.xlu0 %497
        %501 = vset.pattern.permute.xlu0 0
        %502 = vperm.xlu0 %501, %v428
        %v503 = vpop.permute.xlu0 %502
        %506 = vset.pattern.permute.xlu0 0
        %507 = vperm.xlu0 %506, %v429
        %v508 = vpop.permute.xlu0 %507
        %v511 = vlaneseq
        %v512 = vshrl.u32 %v511, 7
        %v513 = vsub.s32 0, %v512
        %v514 = vrot.slane %v413, %v513
        %v516 = vmul.f32 %v433, %v514
        %v517 = vmul.f32 %v438, %v514
        %v518 = vmul.f32 %v443, %v514
        %v519 = vmul.f32 %v448, %v514
        %v520 = vmul.f32 %v453, %v514
        %v521 = vmul.f32 %v458, %v514
        %v522 = vmul.f32 %v463, %v514
        %v523 = vmul.f32 %v468, %v514
        %v524 = vmul.f32 %v473, %v514
        %v525 = vmul.f32 %v478, %v514
        %v526 = vmul.f32 %v483, %v514
        %v527 = vmul.f32 %v488, %v514
        %v528 = vmul.f32 %v493, %v514
        %v529 = vmul.f32 %v498, %v514
        %v530 = vmul.f32 %v503, %v514
        %v531 = vmul.f32 %v508, %v514
        %532 = vset.pattern.permute.xlu0 1
        %533 = vperm.xlu0 %532, %v414
        %v534 = vpop.permute.xlu0 %533
        %536 = vset.pattern.permute.xlu0 1
        %537 = vperm.xlu0 %536, %v415
        %v538 = vpop.permute.xlu0 %537
        %540 = vset.pattern.permute.xlu0 1
        %541 = vperm.xlu0 %540, %v416
        %v542 = vpop.permute.xlu0 %541
        %544 = vset.pattern.permute.xlu0 1
        %545 = vperm.xlu0 %544, %v417
        %v546 = vpop.permute.xlu0 %545
        %548 = vset.pattern.permute.xlu0 1
        %549 = vperm.xlu0 %548, %v418
        %v550 = vpop.permute.xlu0 %549
        %552 = vset.pattern.permute.xlu0 1
        %553 = vperm.xlu0 %552, %v419
        %v554 = vpop.permute.xlu0 %553
        %556 = vset.pattern.permute.xlu0 1
        %557 = vperm.xlu0 %556, %v420
        %v558 = vpop.permute.xlu0 %557
        %560 = vset.pattern.permute.xlu0 1
        %561 = vperm.xlu0 %560, %v421
        %v562 = vpop.permute.xlu0 %561
        %564 = vset.pattern.permute.xlu0 1
        %565 = vperm.xlu0 %564, %v422
        %v566 = vpop.permute.xlu0 %565
        %568 = vset.pattern.permute.xlu0 1
        %569 = vperm.xlu0 %568, %v423
        %v570 = vpop.permute.xlu0 %569
        %572 = vset.pattern.permute.xlu0 1
        %573 = vperm.xlu0 %572, %v424
        %v574 = vpop.permute.xlu0 %573
        %576 = vset.pattern.permute.xlu0 1
        %577 = vperm.xlu0 %576, %v425
        %v578 = vpop.permute.xlu0 %577
        %580 = vset.pattern.permute.xlu0 1
        %581 = vperm.xlu0 %580, %v426
        %v582 = vpop.permute.xlu0 %581
        %584 = vset.pattern.permute.xlu0 1
        %585 = vperm.xlu0 %584, %v427
        %v586 = vpop.permute.xlu0 %585
        %588 = vset.pattern.permute.xlu0 1
        %589 = vperm.xlu0 %588, %v428
        %v590 = vpop.permute.xlu0 %589
        %592 = vset.pattern.permute.xlu0 1
        %593 = vperm.xlu0 %592, %v429
        %v594 = vpop.permute.xlu0 %593
        %v596 = vmul.f32 %v534, %v514
        %v597 = vmul.f32 %v538, %v514
        %v598 = vmul.f32 %v542, %v514
        %v599 = vmul.f32 %v546, %v514
        %v600 = vmul.f32 %v550, %v514
        %v601 = vmul.f32 %v554, %v514
        %v602 = vmul.f32 %v558, %v514
        %v603 = vmul.f32 %v562, %v514
        %v604 = vmul.f32 %v566, %v514
        %v605 = vmul.f32 %v570, %v514
        %v606 = vmul.f32 %v574, %v514
        %v607 = vmul.f32 %v578, %v514
        %v608 = vmul.f32 %v582, %v514
        %v609 = vmul.f32 %v586, %v514
        %v610 = vmul.f32 %v590, %v514
        %v611 = vmul.f32 %v594, %v514
        %628 = vrot.lane.b32.xlu0 %v596, 125
        %v629 = vpop.permute.xlu0 %628
        %630 = vrot.lane.b32.xlu0 %v597, 125
        %v631 = vpop.permute.xlu0 %630
        %632 = vrot.lane.b32.xlu0 %v598, 125
        %v633 = vpop.permute.xlu0 %632
        %634 = vrot.lane.b32.xlu0 %v599, 125
        %v635 = vpop.permute.xlu0 %634
        %636 = vrot.lane.b32.xlu0 %v600, 125
        %v637 = vpop.permute.xlu0 %636
        %638 = vrot.lane.b32.xlu0 %v601, 125
        %v639 = vpop.permute.xlu0 %638
        %640 = vrot.lane.b32.xlu0 %v602, 125
        %v641 = vpop.permute.xlu0 %640
        %642 = vrot.lane.b32.xlu0 %v603, 125
        %v643 = vpop.permute.xlu0 %642
        %644 = vrot.lane.b32.xlu0 %v604, 125
        %v645 = vpop.permute.xlu0 %644
        %646 = vrot.lane.b32.xlu0 %v605, 125
        %v647 = vpop.permute.xlu0 %646
        %648 = vrot.lane.b32.xlu0 %v606, 125
        %v649 = vpop.permute.xlu0 %648
        %650 = vrot.lane.b32.xlu0 %v607, 125
        %v651 = vpop.permute.xlu0 %650
        %652 = vrot.lane.b32.xlu0 %v608, 125
        %v653 = vpop.permute.xlu0 %652
        %654 = vrot.lane.b32.xlu0 %v609, 125
        %v655 = vpop.permute.xlu0 %654
        %656 = vrot.lane.b32.xlu0 %v610, 125
        %v657 = vpop.permute.xlu0 %656
        %658 = vrot.lane.b32.xlu0 %v611, 125
        %v659 = vpop.permute.xlu0 %658
        %v676 = vadd.f32 %v516, %v629
        %v677 = vadd.f32 %v517, %v631
        %v678 = vadd.f32 %v518, %v633
        %v679 = vadd.f32 %v519, %v635
        %v680 = vadd.f32 %v520, %v637
        %v681 = vadd.f32 %v521, %v639
        %v682 = vadd.f32 %v522, %v641
        %v683 = vadd.f32 %v523, %v643
        %v684 = vadd.f32 %v524, %v645
        %v685 = vadd.f32 %v525, %v647
        %v686 = vadd.f32 %v526, %v649
        %v687 = vadd.f32 %v527, %v651
        %v688 = vadd.f32 %v528, %v653
        %v689 = vadd.f32 %v529, %v655
        %v690 = vadd.f32 %v530, %v657
        %v691 = vadd.f32 %v531, %v659
        %692 = vset.pattern.permute.xlu0 2
        %693 = vperm.xlu0 %692, %v414
        %v694 = vpop.permute.xlu0 %693
        %696 = vset.pattern.permute.xlu0 2
        %697 = vperm.xlu0 %696, %v415
        %v698 = vpop.permute.xlu0 %697
        %700 = vset.pattern.permute.xlu0 2
        %701 = vperm.xlu0 %700, %v416
        %v702 = vpop.permute.xlu0 %701
        %704 = vset.pattern.permute.xlu0 2
        %705 = vperm.xlu0 %704, %v417
        %v706 = vpop.permute.xlu0 %705
        %708 = vset.pattern.permute.xlu0 2
        %709 = vperm.xlu0 %708, %v418
        %v710 = vpop.permute.xlu0 %709
        %712 = vset.pattern.permute.xlu0 2
        %713 = vperm.xlu0 %712, %v419
        %v714 = vpop.permute.xlu0 %713
        %716 = vset.pattern.permute.xlu0 2
        %717 = vperm.xlu0 %716, %v420
        %v718 = vpop.permute.xlu0 %717
        %720 = vset.pattern.permute.xlu0 2
        %721 = vperm.xlu0 %720, %v421
        %v722 = vpop.permute.xlu0 %721
        %724 = vset.pattern.permute.xlu0 2
        %725 = vperm.xlu0 %724, %v422
        %v726 = vpop.permute.xlu0 %725
        %728 = vset.pattern.permute.xlu0 2
        %729 = vperm.xlu0 %728, %v423
        %v730 = vpop.permute.xlu0 %729
        %732 = vset.pattern.permute.xlu0 2
        %733 = vperm.xlu0 %732, %v424
        %v734 = vpop.permute.xlu0 %733
        %736 = vset.pattern.permute.xlu0 2
        %737 = vperm.xlu0 %736, %v425
        %v738 = vpop.permute.xlu0 %737
        %740 = vset.pattern.permute.xlu0 2
        %741 = vperm.xlu0 %740, %v426
        %v742 = vpop.permute.xlu0 %741
        %744 = vset.pattern.permute.xlu0 2
        %745 = vperm.xlu0 %744, %v427
        %v746 = vpop.permute.xlu0 %745
        %748 = vset.pattern.permute.xlu0 2
        %749 = vperm.xlu0 %748, %v428
        %v750 = vpop.permute.xlu0 %749
        %752 = vset.pattern.permute.xlu0 2
        %753 = vperm.xlu0 %752, %v429
        %v754 = vpop.permute.xlu0 %753
        %v756 = vmul.f32 %v694, %v514
        %v757 = vmul.f32 %v698, %v514
        %v758 = vmul.f32 %v702, %v514
        %v759 = vmul.f32 %v706, %v514
        %v760 = vmul.f32 %v710, %v514
        %v761 = vmul.f32 %v714, %v514
        %v762 = vmul.f32 %v718, %v514
        %v763 = vmul.f32 %v722, %v514
        %v764 = vmul.f32 %v726, %v514
        %v765 = vmul.f32 %v730, %v514
        %v766 = vmul.f32 %v734, %v514
        %v767 = vmul.f32 %v738, %v514
        %v768 = vmul.f32 %v742, %v514
        %v769 = vmul.f32 %v746, %v514
        %v770 = vmul.f32 %v750, %v514
        %v771 = vmul.f32 %v754, %v514
        %788 = vrot.lane.b32.xlu0 %v756, 122
        %v789 = vpop.permute.xlu0 %788
        %790 = vrot.lane.b32.xlu0 %v757, 122
        %v791 = vpop.permute.xlu0 %790
        %792 = vrot.lane.b32.xlu0 %v758, 122
        %v793 = vpop.permute.xlu0 %792
        %794 = vrot.lane.b32.xlu0 %v759, 122
        %v795 = vpop.permute.xlu0 %794
        %796 = vrot.lane.b32.xlu0 %v760, 122
        %v797 = vpop.permute.xlu0 %796
        %798 = vrot.lane.b32.xlu0 %v761, 122
        %v799 = vpop.permute.xlu0 %798
        %800 = vrot.lane.b32.xlu0 %v762, 122
        %v801 = vpop.permute.xlu0 %800
        %802 = vrot.lane.b32.xlu0 %v763, 122
        %v803 = vpop.permute.xlu0 %802
        %804 = vrot.lane.b32.xlu0 %v764, 122
        %v805 = vpop.permute.xlu0 %804
        %806 = vrot.lane.b32.xlu0 %v765, 122
        %v807 = vpop.permute.xlu0 %806
        %808 = vrot.lane.b32.xlu0 %v766, 122
        %v809 = vpop.permute.xlu0 %808
        %810 = vrot.lane.b32.xlu0 %v767, 122
        %v811 = vpop.permute.xlu0 %810
        %812 = vrot.lane.b32.xlu0 %v768, 122
        %v813 = vpop.permute.xlu0 %812
        %814 = vrot.lane.b32.xlu0 %v769, 122
        %v815 = vpop.permute.xlu0 %814
        %816 = vrot.lane.b32.xlu0 %v770, 122
        %v817 = vpop.permute.xlu0 %816
        %818 = vrot.lane.b32.xlu0 %v771, 122
        %v819 = vpop.permute.xlu0 %818
        %v836 = vadd.f32 %v676, %v789
        %v837 = vadd.f32 %v677, %v791
        %v838 = vadd.f32 %v678, %v793
        %v839 = vadd.f32 %v679, %v795
        %v840 = vadd.f32 %v680, %v797
        %v841 = vadd.f32 %v681, %v799
        %v842 = vadd.f32 %v682, %v801
        %v843 = vadd.f32 %v683, %v803
        %v844 = vadd.f32 %v684, %v805
        %v845 = vadd.f32 %v685, %v807
        %v846 = vadd.f32 %v686, %v809
        %v847 = vadd.f32 %v687, %v811
        %v848 = vadd.f32 %v688, %v813
        %v849 = vadd.f32 %v689, %v815
        %v850 = vadd.f32 %v690, %v817
        %v851 = vadd.f32 %v691, %v819
        %852 = vrot.lane.b32.xlu0 %v514, 119
        %v853 = vpop.permute.xlu0 %852
        %v855 = vadd.f32 %v836, %v853
        %v856 = vadd.f32 %v837, %v853
        %v857 = vadd.f32 %v838, %v853
        %v858 = vadd.f32 %v839, %v853
        %v859 = vadd.f32 %v840, %v853
        %v860 = vadd.f32 %v841, %v853
        %v861 = vadd.f32 %v842, %v853
        %v862 = vadd.f32 %v843, %v853
        %v863 = vadd.f32 %v844, %v853
        %v864 = vadd.f32 %v845, %v853
        %v865 = vadd.f32 %v846, %v853
        %v866 = vadd.f32 %v847, %v853
        %v867 = vadd.f32 %v848, %v853
        %v868 = vadd.f32 %v849, %v853
        %v869 = vadd.f32 %v850, %v853
        %v870 = vadd.f32 %v851, %v853
        %v871 = vand.u32 2147483647, %v855
        %v872 = vand.u32 2147483647, %v856
        %v873 = vand.u32 2147483647, %v857
        %v874 = vand.u32 2147483647, %v858
        %v875 = vand.u32 2147483647, %v859
        %v876 = vand.u32 2147483647, %v860
        %v877 = vand.u32 2147483647, %v861
        %v878 = vand.u32 2147483647, %v862
        %v879 = vand.u32 2147483647, %v863
        %v880 = vand.u32 2147483647, %v864
        %v881 = vand.u32 2147483647, %v865
        %v882 = vand.u32 2147483647, %v866
        %v883 = vand.u32 2147483647, %v867
        %v884 = vand.u32 2147483647, %v868
        %v885 = vand.u32 2147483647, %v869
        %v886 = vand.u32 2147483647, %v870
        %v887 = vadd.f32 %v871, 1e-05
        %v888 = vadd.f32 %v872, 1e-05
        %v889 = vadd.f32 %v873, 1e-05
        %v890 = vadd.f32 %v874, 1e-05
        %v891 = vadd.f32 %v875, 1e-05
        %v892 = vadd.f32 %v876, 1e-05
        %v893 = vadd.f32 %v877, 1e-05
        %v894 = vadd.f32 %v878, 1e-05
        %v895 = vadd.f32 %v879, 1e-05
        %v896 = vadd.f32 %v880, 1e-05
        %v897 = vadd.f32 %v881, 1e-05
        %v898 = vadd.f32 %v882, 1e-05
        %v899 = vadd.f32 %v883, 1e-05
        %v900 = vadd.f32 %v884, 1e-05
        %v901 = vadd.f32 %v885, 1e-05
        %v902 = vadd.f32 %v886, 1e-05
        %v903 = vmul.f32 %v855, 2.0
        %v904 = vmul.f32 %v856, 2.0
        %v905 = vmul.f32 %v857, 2.0
        %v906 = vmul.f32 %v858, 2.0
        %v907 = vmul.f32 %v859, 2.0
        %v908 = vmul.f32 %v860, 2.0
        %v909 = vmul.f32 %v861, 2.0
        %v910 = vmul.f32 %v862, 2.0
        %v911 = vmul.f32 %v863, 2.0
        %v912 = vmul.f32 %v864, 2.0
        %v913 = vmul.f32 %v865, 2.0
        %v914 = vmul.f32 %v866, 2.0
        %v915 = vmul.f32 %v867, 2.0
        %v916 = vmul.f32 %v868, 2.0
        %v917 = vmul.f32 %v869, 2.0
        %v918 = vmul.f32 %v870, 2.0
        %935 = vrot.lane.b32.xlu0 %v887, 126
        %v936 = vpop.permute.xlu0 %935
        %937 = vrot.lane.b32.xlu0 %v888, 126
        %v938 = vpop.permute.xlu0 %937
        %939 = vrot.lane.b32.xlu0 %v889, 126
        %v940 = vpop.permute.xlu0 %939
        %941 = vrot.lane.b32.xlu0 %v890, 126
        %v942 = vpop.permute.xlu0 %941
        %943 = vrot.lane.b32.xlu0 %v891, 126
        %v944 = vpop.permute.xlu0 %943
        %945 = vrot.lane.b32.xlu0 %v892, 126
        %v946 = vpop.permute.xlu0 %945
        %947 = vrot.lane.b32.xlu0 %v893, 126
        %v948 = vpop.permute.xlu0 %947
        %949 = vrot.lane.b32.xlu0 %v894, 126
        %v950 = vpop.permute.xlu0 %949
        %951 = vrot.lane.b32.xlu0 %v895, 126
        %v952 = vpop.permute.xlu0 %951
        %953 = vrot.lane.b32.xlu0 %v896, 126
        %v954 = vpop.permute.xlu0 %953
        %955 = vrot.lane.b32.xlu0 %v897, 126
        %v956 = vpop.permute.xlu0 %955
        %957 = vrot.lane.b32.xlu0 %v898, 126
        %v958 = vpop.permute.xlu0 %957
        %959 = vrot.lane.b32.xlu0 %v899, 126
        %v960 = vpop.permute.xlu0 %959
        %961 = vrot.lane.b32.xlu0 %v900, 126
        %v962 = vpop.permute.xlu0 %961
        %963 = vrot.lane.b32.xlu0 %v901, 126
        %v964 = vpop.permute.xlu0 %963
        %965 = vrot.lane.b32.xlu0 %v902, 126
        %v966 = vpop.permute.xlu0 %965
        %v983 = vrcp.pop %v936
        %v984 = vmul.f32 %v903, %v983
        %v985 = vrcp.pop %v938
        %v986 = vmul.f32 %v904, %v985
        %v987 = vrcp.pop %v940
        %v988 = vmul.f32 %v905, %v987
        %v989 = vrcp.pop %v942
        %v990 = vmul.f32 %v906, %v989
        %v991 = vrcp.pop %v944
        %v992 = vmul.f32 %v907, %v991
        %v993 = vrcp.pop %v946
        %v994 = vmul.f32 %v908, %v993
        %v995 = vrcp.pop %v948
        %v996 = vmul.f32 %v909, %v995
        %v997 = vrcp.pop %v950
        %v998 = vmul.f32 %v910, %v997
        %v999 = vrcp.pop %v952
        %v1000 = vmul.f32 %v911, %v999
        %v1001 = vrcp.pop %v954
        %v1002 = vmul.f32 %v912, %v1001
        %v1003 = vrcp.pop %v956
        %v1004 = vmul.f32 %v913, %v1003
        %v1005 = vrcp.pop %v958
        %v1006 = vmul.f32 %v914, %v1005
        %v1007 = vrcp.pop %v960
        %v1008 = vmul.f32 %v915, %v1007
        %v1009 = vrcp.pop %v962
        %v1010 = vmul.f32 %v916, %v1009
        %v1011 = vrcp.pop %v964
        %v1012 = vmul.f32 %v917, %v1011
        %v1013 = vrcp.pop %v966
        %v1014 = vmul.f32 %v918, %v1013
        %1015 = vrot.lane.b32.xlu0 %v887, 127
        %v1016 = vpop.permute.xlu0 %1015
        %1017 = vrot.lane.b32.xlu0 %v888, 127
        %v1018 = vpop.permute.xlu0 %1017
        %1019 = vrot.lane.b32.xlu0 %v889, 127
        %v1020 = vpop.permute.xlu0 %1019
        %1021 = vrot.lane.b32.xlu0 %v890, 127
        %v1022 = vpop.permute.xlu0 %1021
        %1023 = vrot.lane.b32.xlu0 %v891, 127
        %v1024 = vpop.permute.xlu0 %1023
        %1025 = vrot.lane.b32.xlu0 %v892, 127
        %v1026 = vpop.permute.xlu0 %1025
        %1027 = vrot.lane.b32.xlu0 %v893, 127
        %v1028 = vpop.permute.xlu0 %1027
        %1029 = vrot.lane.b32.xlu0 %v894, 127
        %v1030 = vpop.permute.xlu0 %1029
        %1031 = vrot.lane.b32.xlu0 %v895, 127
        %v1032 = vpop.permute.xlu0 %1031
        %1033 = vrot.lane.b32.xlu0 %v896, 127
        %v1034 = vpop.permute.xlu0 %1033
        %1035 = vrot.lane.b32.xlu0 %v897, 127
        %v1036 = vpop.permute.xlu0 %1035
        %1037 = vrot.lane.b32.xlu0 %v898, 127
        %v1038 = vpop.permute.xlu0 %1037
        %1039 = vrot.lane.b32.xlu0 %v899, 127
        %v1040 = vpop.permute.xlu0 %1039
        %1041 = vrot.lane.b32.xlu0 %v900, 127
        %v1042 = vpop.permute.xlu0 %1041
        %1043 = vrot.lane.b32.xlu0 %v901, 127
        %v1044 = vpop.permute.xlu0 %1043
        %1045 = vrot.lane.b32.xlu0 %v902, 127
        %v1046 = vpop.permute.xlu0 %1045
        %v1063 = vrcp.pop %v1016
        %v1064 = vmul.f32 %v903, %v1063
        %v1065 = vrcp.pop %v1018
        %v1066 = vmul.f32 %v904, %v1065
        %v1067 = vrcp.pop %v1020
        %v1068 = vmul.f32 %v905, %v1067
        %v1069 = vrcp.pop %v1022
        %v1070 = vmul.f32 %v906, %v1069
        %v1071 = vrcp.pop %v1024
        %v1072 = vmul.f32 %v907, %v1071
        %v1073 = vrcp.pop %v1026
        %v1074 = vmul.f32 %v908, %v1073
        %v1075 = vrcp.pop %v1028
        %v1076 = vmul.f32 %v909, %v1075
        %v1077 = vrcp.pop %v1030
        %v1078 = vmul.f32 %v910, %v1077
        %v1079 = vrcp.pop %v1032
        %v1080 = vmul.f32 %v911, %v1079
        %v1081 = vrcp.pop %v1034
        %v1082 = vmul.f32 %v912, %v1081
        %v1083 = vrcp.pop %v1036
        %v1084 = vmul.f32 %v913, %v1083
        %v1085 = vrcp.pop %v1038
        %v1086 = vmul.f32 %v914, %v1085
        %v1087 = vrcp.pop %v1040
        %v1088 = vmul.f32 %v915, %v1087
        %v1089 = vrcp.pop %v1042
        %v1090 = vmul.f32 %v916, %v1089
        %v1091 = vrcp.pop %v1044
        %v1092 = vmul.f32 %v917, %v1091
        %v1093 = vrcp.pop %v1046
        %v1094 = vmul.f32 %v918, %v1093
        %v1095 = vadd.f32 %v984, 1.0
        %v1096 = vadd.f32 %v986, 1.0
        %v1097 = vadd.f32 %v988, 1.0
        %v1098 = vadd.f32 %v990, 1.0
        %v1099 = vadd.f32 %v992, 1.0
        %v1100 = vadd.f32 %v994, 1.0
        %v1101 = vadd.f32 %v996, 1.0
        %v1102 = vadd.f32 %v998, 1.0
        %v1103 = vadd.f32 %v1000, 1.0
        %v1104 = vadd.f32 %v1002, 1.0
        %v1105 = vadd.f32 %v1004, 1.0
        %v1106 = vadd.f32 %v1006, 1.0
        %v1107 = vadd.f32 %v1008, 1.0
        %v1108 = vadd.f32 %v1010, 1.0
        %v1109 = vadd.f32 %v1012, 1.0
        %v1110 = vadd.f32 %v1014, 1.0
        %v1111 = vmul.f32 %v1095, 16.0
        %v1112 = vmul.f32 %v1096, 16.0
        %v1113 = vmul.f32 %v1097, 16.0
        %v1114 = vmul.f32 %v1098, 16.0
        %v1115 = vmul.f32 %v1099, 16.0
        %v1116 = vmul.f32 %v1100, 16.0
        %v1117 = vmul.f32 %v1101, 16.0
        %v1118 = vmul.f32 %v1102, 16.0
        %v1119 = vmul.f32 %v1103, 16.0
        %v1120 = vmul.f32 %v1104, 16.0
        %v1121 = vmul.f32 %v1105, 16.0
        %v1122 = vmul.f32 %v1106, 16.0
        %v1123 = vmul.f32 %v1107, 16.0
        %v1124 = vmul.f32 %v1108, 16.0
        %v1125 = vmul.f32 %v1109, 16.0
        %v1126 = vmul.f32 %v1110, 16.0
        %v1127 = vsub.f32 %v1111, 1.0
        %v1128 = vsub.f32 %v1112, 1.0
        %v1129 = vsub.f32 %v1113, 1.0
        %v1130 = vsub.f32 %v1114, 1.0
        %v1131 = vsub.f32 %v1115, 1.0
        %v1132 = vsub.f32 %v1116, 1.0
        %v1133 = vsub.f32 %v1117, 1.0
        %v1134 = vsub.f32 %v1118, 1.0
        %v1135 = vsub.f32 %v1119, 1.0
        %v1136 = vsub.f32 %v1120, 1.0
        %v1137 = vsub.f32 %v1121, 1.0
        %v1138 = vsub.f32 %v1122, 1.0
        %v1139 = vsub.f32 %v1123, 1.0
        %v1140 = vsub.f32 %v1124, 1.0
        %v1141 = vsub.f32 %v1125, 1.0
        %v1142 = vsub.f32 %v1126, 1.0
        %v1143 = vmul.f32 %v1127, 0.5
        %v1144 = vmul.f32 %v1128, 0.5
        %v1145 = vmul.f32 %v1129, 0.5
        %v1146 = vmul.f32 %v1130, 0.5
        %v1147 = vmul.f32 %v1131, 0.5
        %v1148 = vmul.f32 %v1132, 0.5
        %v1149 = vmul.f32 %v1133, 0.5
        %v1150 = vmul.f32 %v1134, 0.5
        %v1151 = vmul.f32 %v1135, 0.5
        %v1152 = vmul.f32 %v1136, 0.5
        %v1153 = vmul.f32 %v1137, 0.5
        %v1154 = vmul.f32 %v1138, 0.5
        %v1155 = vmul.f32 %v1139, 0.5
        %v1156 = vmul.f32 %v1140, 0.5
        %v1157 = vmul.f32 %v1141, 0.5
        %v1158 = vmul.f32 %v1142, 0.5
        %v1159 = vmax.f32 %v1143, 0.0
        %v1160 = vmax.f32 %v1144, 0.0
        %v1161 = vmax.f32 %v1145, 0.0
        %v1162 = vmax.f32 %v1146, 0.0
        %v1163 = vmax.f32 %v1147, 0.0
        %v1164 = vmax.f32 %v1148, 0.0
        %v1165 = vmax.f32 %v1149, 0.0
        %v1166 = vmax.f32 %v1150, 0.0
        %v1167 = vmax.f32 %v1151, 0.0
        %v1168 = vmax.f32 %v1152, 0.0
        %v1169 = vmax.f32 %v1153, 0.0
        %v1170 = vmax.f32 %v1154, 0.0
        %v1171 = vmax.f32 %v1155, 0.0
        %v1172 = vmax.f32 %v1156, 0.0
        %v1173 = vmax.f32 %v1157, 0.0
        %v1174 = vmax.f32 %v1158, 0.0
        %v1175 = vmin.f32 %v1159, 15.0
        %v1176 = vmin.f32 %v1160, 15.0
        %v1177 = vmin.f32 %v1161, 15.0
        %v1178 = vmin.f32 %v1162, 15.0
        %v1179 = vmin.f32 %v1163, 15.0
        %v1180 = vmin.f32 %v1164, 15.0
        %v1181 = vmin.f32 %v1165, 15.0
        %v1182 = vmin.f32 %v1166, 15.0
        %v1183 = vmin.f32 %v1167, 15.0
        %v1184 = vmin.f32 %v1168, 15.0
        %v1185 = vmin.f32 %v1169, 15.0
        %v1186 = vmin.f32 %v1170, 15.0
        %v1187 = vmin.f32 %v1171, 15.0
        %v1188 = vmin.f32 %v1172, 15.0
        %v1189 = vmin.f32 %v1173, 15.0
        %v1190 = vmin.f32 %v1174, 15.0
        %v1191 = vadd.f32 %v1064, 1.0
        %v1192 = vadd.f32 %v1066, 1.0
        %v1193 = vadd.f32 %v1068, 1.0
        %v1194 = vadd.f32 %v1070, 1.0
        %v1195 = vadd.f32 %v1072, 1.0
        %v1196 = vadd.f32 %v1074, 1.0
        %v1197 = vadd.f32 %v1076, 1.0
        %v1198 = vadd.f32 %v1078, 1.0
        %v1199 = vadd.f32 %v1080, 1.0
        %v1200 = vadd.f32 %v1082, 1.0
        %v1201 = vadd.f32 %v1084, 1.0
        %v1202 = vadd.f32 %v1086, 1.0
        %v1203 = vadd.f32 %v1088, 1.0
        %v1204 = vadd.f32 %v1090, 1.0
        %v1205 = vadd.f32 %v1092, 1.0
        %v1206 = vadd.f32 %v1094, 1.0
        %v1207 = vmul.f32 %v1191, 16.0
        %v1208 = vmul.f32 %v1192, 16.0
        %v1209 = vmul.f32 %v1193, 16.0
        %v1210 = vmul.f32 %v1194, 16.0
        %v1211 = vmul.f32 %v1195, 16.0
        %v1212 = vmul.f32 %v1196, 16.0
        %v1213 = vmul.f32 %v1197, 16.0
        %v1214 = vmul.f32 %v1198, 16.0
        %v1215 = vmul.f32 %v1199, 16.0
        %v1216 = vmul.f32 %v1200, 16.0
        %v1217 = vmul.f32 %v1201, 16.0
        %v1218 = vmul.f32 %v1202, 16.0
        %v1219 = vmul.f32 %v1203, 16.0
        %v1220 = vmul.f32 %v1204, 16.0
        %v1221 = vmul.f32 %v1205, 16.0
        %v1222 = vmul.f32 %v1206, 16.0
        %v1223 = vsub.f32 %v1207, 1.0
        %v1224 = vsub.f32 %v1208, 1.0
        %v1225 = vsub.f32 %v1209, 1.0
        %v1226 = vsub.f32 %v1210, 1.0
        %v1227 = vsub.f32 %v1211, 1.0
        %v1228 = vsub.f32 %v1212, 1.0
        %v1229 = vsub.f32 %v1213, 1.0
        %v1230 = vsub.f32 %v1214, 1.0
        %v1231 = vsub.f32 %v1215, 1.0
        %v1232 = vsub.f32 %v1216, 1.0
        %v1233 = vsub.f32 %v1217, 1.0
        %v1234 = vsub.f32 %v1218, 1.0
        %v1235 = vsub.f32 %v1219, 1.0
        %v1236 = vsub.f32 %v1220, 1.0
        %v1237 = vsub.f32 %v1221, 1.0
        %v1238 = vsub.f32 %v1222, 1.0
        %v1239 = vmul.f32 %v1223, 0.5
        %v1240 = vmul.f32 %v1224, 0.5
        %v1241 = vmul.f32 %v1225, 0.5
        %v1242 = vmul.f32 %v1226, 0.5
        %v1243 = vmul.f32 %v1227, 0.5
        %v1244 = vmul.f32 %v1228, 0.5
        %v1245 = vmul.f32 %v1229, 0.5
        %v1246 = vmul.f32 %v1230, 0.5
        %v1247 = vmul.f32 %v1231, 0.5
        %v1248 = vmul.f32 %v1232, 0.5
        %v1249 = vmul.f32 %v1233, 0.5
        %v1250 = vmul.f32 %v1234, 0.5
        %v1251 = vmul.f32 %v1235, 0.5
        %v1252 = vmul.f32 %v1236, 0.5
        %v1253 = vmul.f32 %v1237, 0.5
        %v1254 = vmul.f32 %v1238, 0.5
        %v1255 = vmax.f32 %v1239, 0.0
        %v1256 = vmax.f32 %v1240, 0.0
        %v1257 = vmax.f32 %v1241, 0.0
        %v1258 = vmax.f32 %v1242, 0.0
        %v1259 = vmax.f32 %v1243, 0.0
        %v1260 = vmax.f32 %v1244, 0.0
        %v1261 = vmax.f32 %v1245, 0.0
        %v1262 = vmax.f32 %v1246, 0.0
        %v1263 = vmax.f32 %v1247, 0.0
        %v1264 = vmax.f32 %v1248, 0.0
        %v1265 = vmax.f32 %v1249, 0.0
        %v1266 = vmax.f32 %v1250, 0.0
        %v1267 = vmax.f32 %v1251, 0.0
        %v1268 = vmax.f32 %v1252, 0.0
        %v1269 = vmax.f32 %v1253, 0.0
        %v1270 = vmax.f32 %v1254, 0.0
        %v1271 = vmin.f32 %v1255, 15.0
        %v1272 = vmin.f32 %v1256, 15.0
        %v1273 = vmin.f32 %v1257, 15.0
        %v1274 = vmin.f32 %v1258, 15.0
        %v1275 = vmin.f32 %v1259, 15.0
        %v1276 = vmin.f32 %v1260, 15.0
        %v1277 = vmin.f32 %v1261, 15.0
        %v1278 = vmin.f32 %v1262, 15.0
        %v1279 = vmin.f32 %v1263, 15.0
        %v1280 = vmin.f32 %v1264, 15.0
        %v1281 = vmin.f32 %v1265, 15.0
        %v1282 = vmin.f32 %v1266, 15.0
        %v1283 = vmin.f32 %v1267, 15.0
        %v1284 = vmin.f32 %v1268, 15.0
        %v1285 = vmin.f32 %v1269, 15.0
        %v1286 = vmin.f32 %v1270, 15.0
        %v1287 = vfloor.f32 %v1175
        %v1288 = vfloor.f32 %v1176
        %v1289 = vfloor.f32 %v1177
        %v1290 = vfloor.f32 %v1178
        %v1291 = vfloor.f32 %v1179
        %v1292 = vfloor.f32 %v1180
        %v1293 = vfloor.f32 %v1181
        %v1294 = vfloor.f32 %v1182
        %v1295 = vfloor.f32 %v1183
        %v1296 = vfloor.f32 %v1184
        %v1297 = vfloor.f32 %v1185
        %v1298 = vfloor.f32 %v1186
        %v1299 = vfloor.f32 %v1187
        %v1300 = vfloor.f32 %v1188
        %v1301 = vfloor.f32 %v1189
        %v1302 = vfloor.f32 %v1190
        %v1303 = vfloor.f32 %v1271
        %v1304 = vfloor.f32 %v1272
        %v1305 = vfloor.f32 %v1273
        %v1306 = vfloor.f32 %v1274
        %v1307 = vfloor.f32 %v1275
        %v1308 = vfloor.f32 %v1276
        %v1309 = vfloor.f32 %v1277
        %v1310 = vfloor.f32 %v1278
        %v1311 = vfloor.f32 %v1279
        %v1312 = vfloor.f32 %v1280
        %v1313 = vfloor.f32 %v1281
        %v1314 = vfloor.f32 %v1282
        %v1315 = vfloor.f32 %v1283
        %v1316 = vfloor.f32 %v1284
        %v1317 = vfloor.f32 %v1285
        %v1318 = vfloor.f32 %v1286
        %v1319 = vsub.f32 %v1175, %v1287
        %v1320 = vsub.f32 %v1176, %v1288
        %v1321 = vsub.f32 %v1177, %v1289
        %v1322 = vsub.f32 %v1178, %v1290
        %v1323 = vsub.f32 %v1179, %v1291
        %v1324 = vsub.f32 %v1180, %v1292
        %v1325 = vsub.f32 %v1181, %v1293
        %v1326 = vsub.f32 %v1182, %v1294
        %v1327 = vsub.f32 %v1183, %v1295
        %v1328 = vsub.f32 %v1184, %v1296
        %v1329 = vsub.f32 %v1185, %v1297
        %v1330 = vsub.f32 %v1186, %v1298
        %v1331 = vsub.f32 %v1187, %v1299
        %v1332 = vsub.f32 %v1188, %v1300
        %v1333 = vsub.f32 %v1189, %v1301
        %v1334 = vsub.f32 %v1190, %v1302
        %v1335 = vsub.f32 %v1271, %v1303
        %v1336 = vsub.f32 %v1272, %v1304
        %v1337 = vsub.f32 %v1273, %v1305
        %v1338 = vsub.f32 %v1274, %v1306
        %v1339 = vsub.f32 %v1275, %v1307
        %v1340 = vsub.f32 %v1276, %v1308
        %v1341 = vsub.f32 %v1277, %v1309
        %v1342 = vsub.f32 %v1278, %v1310
        %v1343 = vsub.f32 %v1279, %v1311
        %v1344 = vsub.f32 %v1280, %v1312
        %v1345 = vsub.f32 %v1281, %v1313
        %v1346 = vsub.f32 %v1282, %v1314
        %v1347 = vsub.f32 %v1283, %v1315
        %v1348 = vsub.f32 %v1284, %v1316
        %v1349 = vsub.f32 %v1285, %v1317
        %v1350 = vsub.f32 %v1286, %v1318
        %v1351 = vcvt.f32.s32.to.zero.pseudo %v1287
        %v1352 = vcvt.f32.s32.to.zero.pseudo %v1288
        %v1353 = vcvt.f32.s32.to.zero.pseudo %v1289
        %v1354 = vcvt.f32.s32.to.zero.pseudo %v1290
        %v1355 = vcvt.f32.s32.to.zero.pseudo %v1291
        %v1356 = vcvt.f32.s32.to.zero.pseudo %v1292
        %v1357 = vcvt.f32.s32.to.zero.pseudo %v1293
        %v1358 = vcvt.f32.s32.to.zero.pseudo %v1294
        %v1359 = vcvt.f32.s32.to.zero.pseudo %v1295
        %v1360 = vcvt.f32.s32.to.zero.pseudo %v1296
        %v1361 = vcvt.f32.s32.to.zero.pseudo %v1297
        %v1362 = vcvt.f32.s32.to.zero.pseudo %v1298
        %v1363 = vcvt.f32.s32.to.zero.pseudo %v1299
        %v1364 = vcvt.f32.s32.to.zero.pseudo %v1300
        %v1365 = vcvt.f32.s32.to.zero.pseudo %v1301
        %v1366 = vcvt.f32.s32.to.zero.pseudo %v1302
        %v1367 = vcvt.f32.s32.to.zero.pseudo %v1303
        %v1368 = vcvt.f32.s32.to.zero.pseudo %v1304
        %v1369 = vcvt.f32.s32.to.zero.pseudo %v1305
        %v1370 = vcvt.f32.s32.to.zero.pseudo %v1306
        %v1371 = vcvt.f32.s32.to.zero.pseudo %v1307
        %v1372 = vcvt.f32.s32.to.zero.pseudo %v1308
        %v1373 = vcvt.f32.s32.to.zero.pseudo %v1309
        %v1374 = vcvt.f32.s32.to.zero.pseudo %v1310
        %v1375 = vcvt.f32.s32.to.zero.pseudo %v1311
        %v1376 = vcvt.f32.s32.to.zero.pseudo %v1312
        %v1377 = vcvt.f32.s32.to.zero.pseudo %v1313
        %v1378 = vcvt.f32.s32.to.zero.pseudo %v1314
        %v1379 = vcvt.f32.s32.to.zero.pseudo %v1315
        %v1380 = vcvt.f32.s32.to.zero.pseudo %v1316
        %v1381 = vcvt.f32.s32.to.zero.pseudo %v1317
        %v1382 = vcvt.f32.s32.to.zero.pseudo %v1318
        %v1383 = vadd.s32 %v1351, 1
        %v1384 = vadd.s32 %v1352, 1
        %v1385 = vadd.s32 %v1353, 1
        %v1386 = vadd.s32 %v1354, 1
        %v1387 = vadd.s32 %v1355, 1
        %v1388 = vadd.s32 %v1356, 1
        %v1389 = vadd.s32 %v1357, 1
        %v1390 = vadd.s32 %v1358, 1
        %v1391 = vadd.s32 %v1359, 1
        %v1392 = vadd.s32 %v1360, 1
        %v1393 = vadd.s32 %v1361, 1
        %v1394 = vadd.s32 %v1362, 1
        %v1395 = vadd.s32 %v1363, 1
        %v1396 = vadd.s32 %v1364, 1
        %v1397 = vadd.s32 %v1365, 1
        %v1398 = vadd.s32 %v1366, 1
        %vm1399 = vcmp.lt.s32.totalorder %v1383, 15
        %v1400 = vsel %vm1399, %v1383, 15
        %vm1401 = vcmp.lt.s32.totalorder %v1384, 15
        %v1402 = vsel %vm1401, %v1384, 15
        %vm1403 = vcmp.lt.s32.totalorder %v1385, 15
        %v1404 = vsel %vm1403, %v1385, 15
        %vm1405 = vcmp.lt.s32.totalorder %v1386, 15
        %v1406 = vsel %vm1405, %v1386, 15
        %vm1407 = vcmp.lt.s32.totalorder %v1387, 15
        %v1408 = vsel %vm1407, %v1387, 15
        %vm1409 = vcmp.lt.s32.totalorder %v1388, 15
        %v1410 = vsel %vm1409, %v1388, 15
        %vm1411 = vcmp.lt.s32.totalorder %v1389, 15
        %v1412 = vsel %vm1411, %v1389, 15
        %vm1413 = vcmp.lt.s32.totalorder %v1390, 15
        %v1414 = vsel %vm1413, %v1390, 15
        %vm1415 = vcmp.lt.s32.totalorder %v1391, 15
        %v1416 = vsel %vm1415, %v1391, 15
        %vm1417 = vcmp.lt.s32.totalorder %v1392, 15
        %v1418 = vsel %vm1417, %v1392, 15
        %vm1419 = vcmp.lt.s32.totalorder %v1393, 15
        %v1420 = vsel %vm1419, %v1393, 15
        %vm1421 = vcmp.lt.s32.totalorder %v1394, 15
        %v1422 = vsel %vm1421, %v1394, 15
        %vm1423 = vcmp.lt.s32.totalorder %v1395, 15
        %v1424 = vsel %vm1423, %v1395, 15
        %vm1425 = vcmp.lt.s32.totalorder %v1396, 15
        %v1426 = vsel %vm1425, %v1396, 15
        %vm1427 = vcmp.lt.s32.totalorder %v1397, 15
        %v1428 = vsel %vm1427, %v1397, 15
        %vm1429 = vcmp.lt.s32.totalorder %v1398, 15
        %v1430 = vsel %vm1429, %v1398, 15
        %v1431 = vadd.s32 %v1367, 1
        %v1432 = vadd.s32 %v1368, 1
        %v1433 = vadd.s32 %v1369, 1
        %v1434 = vadd.s32 %v1370, 1
        %v1435 = vadd.s32 %v1371, 1
        %v1436 = vadd.s32 %v1372, 1
        %v1437 = vadd.s32 %v1373, 1
        %v1438 = vadd.s32 %v1374, 1
        %v1439 = vadd.s32 %v1375, 1
        %v1440 = vadd.s32 %v1376, 1
        %v1441 = vadd.s32 %v1377, 1
        %v1442 = vadd.s32 %v1378, 1
        %v1443 = vadd.s32 %v1379, 1
        %v1444 = vadd.s32 %v1380, 1
        %v1445 = vadd.s32 %v1381, 1
        %v1446 = vadd.s32 %v1382, 1
        %vm1447 = vcmp.lt.s32.totalorder %v1431, 15
        %v1448 = vsel %vm1447, %v1431, 15
        %vm1449 = vcmp.lt.s32.totalorder %v1432, 15
        %v1450 = vsel %vm1449, %v1432, 15
        %vm1451 = vcmp.lt.s32.totalorder %v1433, 15
        %v1452 = vsel %vm1451, %v1433, 15
        %vm1453 = vcmp.lt.s32.totalorder %v1434, 15
        %v1454 = vsel %vm1453, %v1434, 15
        %vm1455 = vcmp.lt.s32.totalorder %v1435, 15
        %v1456 = vsel %vm1455, %v1435, 15
        %vm1457 = vcmp.lt.s32.totalorder %v1436, 15
        %v1458 = vsel %vm1457, %v1436, 15
        %vm1459 = vcmp.lt.s32.totalorder %v1437, 15
        %v1460 = vsel %vm1459, %v1437, 15
        %vm1461 = vcmp.lt.s32.totalorder %v1438, 15
        %v1462 = vsel %vm1461, %v1438, 15
        %vm1463 = vcmp.lt.s32.totalorder %v1439, 15
        %v1464 = vsel %vm1463, %v1439, 15
        %vm1465 = vcmp.lt.s32.totalorder %v1440, 15
        %v1466 = vsel %vm1465, %v1440, 15
        %vm1467 = vcmp.lt.s32.totalorder %v1441, 15
        %v1468 = vsel %vm1467, %v1441, 15
        %vm1469 = vcmp.lt.s32.totalorder %v1442, 15
        %v1470 = vsel %vm1469, %v1442, 15
        %vm1471 = vcmp.lt.s32.totalorder %v1443, 15
        %v1472 = vsel %vm1471, %v1443, 15
        %vm1473 = vcmp.lt.s32.totalorder %v1444, 15
        %v1474 = vsel %vm1473, %v1444, 15
        %vm1475 = vcmp.lt.s32.totalorder %v1445, 15
        %v1476 = vsel %vm1475, %v1445, 15
        %vm1477 = vcmp.lt.s32.totalorder %v1446, 15
        %v1478 = vsel %vm1477, %v1446, 15
        %v1479 = vmul.u32 %v1367, 16
        %v1480 = vmul.u32 %v1368, 16
        %v1481 = vmul.u32 %v1369, 16
        %v1482 = vmul.u32 %v1370, 16
        %v1483 = vmul.u32 %v1371, 16
        %v1484 = vmul.u32 %v1372, 16
        %v1485 = vmul.u32 %v1373, 16
        %v1486 = vmul.u32 %v1374, 16
        %v1487 = vmul.u32 %v1375, 16
        %v1488 = vmul.u32 %v1376, 16
        %v1489 = vmul.u32 %v1377, 16
        %v1490 = vmul.u32 %v1378, 16
        %v1491 = vmul.u32 %v1379, 16
        %v1492 = vmul.u32 %v1380, 16
        %v1493 = vmul.u32 %v1381, 16
        %v1494 = vmul.u32 %v1382, 16
        %1495 = vrot.lane.b32.xlu0 %v1351, 1
        %v1496 = vpop.permute.xlu0 %1495
        %1497 = vrot.lane.b32.xlu0 %v1352, 1
        %v1498 = vpop.permute.xlu0 %1497
        %1499 = vrot.lane.b32.xlu0 %v1353, 1
        %v1500 = vpop.permute.xlu0 %1499
        %1501 = vrot.lane.b32.xlu0 %v1354, 1
        %v1502 = vpop.permute.xlu0 %1501
        %1503 = vrot.lane.b32.xlu0 %v1355, 1
        %v1504 = vpop.permute.xlu0 %1503
        %1505 = vrot.lane.b32.xlu0 %v1356, 1
        %v1506 = vpop.permute.xlu0 %1505
        %1507 = vrot.lane.b32.xlu0 %v1357, 1
        %v1508 = vpop.permute.xlu0 %1507
        %1509 = vrot.lane.b32.xlu0 %v1358, 1
        %v1510 = vpop.permute.xlu0 %1509
        %1511 = vrot.lane.b32.xlu0 %v1359, 1
        %v1512 = vpop.permute.xlu0 %1511
        %1513 = vrot.lane.b32.xlu0 %v1360, 1
        %v1514 = vpop.permute.xlu0 %1513
        %1515 = vrot.lane.b32.xlu0 %v1361, 1
        %v1516 = vpop.permute.xlu0 %1515
        %1517 = vrot.lane.b32.xlu0 %v1362, 1
        %v1518 = vpop.permute.xlu0 %1517
        %1519 = vrot.lane.b32.xlu0 %v1363, 1
        %v1520 = vpop.permute.xlu0 %1519
        %1521 = vrot.lane.b32.xlu0 %v1364, 1
        %v1522 = vpop.permute.xlu0 %1521
        %1523 = vrot.lane.b32.xlu0 %v1365, 1
        %v1524 = vpop.permute.xlu0 %1523
        %1525 = vrot.lane.b32.xlu0 %v1366, 1
        %v1526 = vpop.permute.xlu0 %1525
        %v1527 = vadd.s32 %v1479, %v1496
        %v1528 = vadd.s32 %v1480, %v1498
        %v1529 = vadd.s32 %v1481, %v1500
        %v1530 = vadd.s32 %v1482, %v1502
        %v1531 = vadd.s32 %v1483, %v1504
        %v1532 = vadd.s32 %v1484, %v1506
        %v1533 = vadd.s32 %v1485, %v1508
        %v1534 = vadd.s32 %v1486, %v1510
        %v1535 = vadd.s32 %v1487, %v1512
        %v1536 = vadd.s32 %v1488, %v1514
        %v1537 = vadd.s32 %v1489, %v1516
        %v1538 = vadd.s32 %v1490, %v1518
        %v1539 = vadd.s32 %v1491, %v1520
        %v1540 = vadd.s32 %v1492, %v1522
        %v1541 = vadd.s32 %v1493, %v1524
        %v1542 = vadd.s32 %v1494, %v1526
        %v1543 = vsub.s32 %v1400, %v1351
        %v1544 = vsub.s32 %v1402, %v1352
        %v1545 = vsub.s32 %v1404, %v1353
        %v1546 = vsub.s32 %v1406, %v1354
        %v1547 = vsub.s32 %v1408, %v1355
        %v1548 = vsub.s32 %v1410, %v1356
        %v1549 = vsub.s32 %v1412, %v1357
        %v1550 = vsub.s32 %v1414, %v1358
        %v1551 = vsub.s32 %v1416, %v1359
        %v1552 = vsub.s32 %v1418, %v1360
        %v1553 = vsub.s32 %v1420, %v1361
        %v1554 = vsub.s32 %v1422, %v1362
        %v1555 = vsub.s32 %v1424, %v1363
        %v1556 = vsub.s32 %v1426, %v1364
        %v1557 = vsub.s32 %v1428, %v1365
        %v1558 = vsub.s32 %v1430, %v1366
        %v1559 = vsub.s32 %v1448, %v1367
        %v1560 = vsub.s32 %v1450, %v1368
        %v1561 = vsub.s32 %v1452, %v1369
        %v1562 = vsub.s32 %v1454, %v1370
        %v1563 = vsub.s32 %v1456, %v1371
        %v1564 = vsub.s32 %v1458, %v1372
        %v1565 = vsub.s32 %v1460, %v1373
        %v1566 = vsub.s32 %v1462, %v1374
        %v1567 = vsub.s32 %v1464, %v1375
        %v1568 = vsub.s32 %v1466, %v1376
        %v1569 = vsub.s32 %v1468, %v1377
        %v1570 = vsub.s32 %v1470, %v1378
        %v1571 = vsub.s32 %v1472, %v1379
        %v1572 = vsub.s32 %v1474, %v1380
        %v1573 = vsub.s32 %v1476, %v1381
        %v1574 = vsub.s32 %v1478, %v1382
        %v1575 = vmul.u32 %v1559, 16
        %v1576 = vmul.u32 %v1560, 16
        %v1577 = vmul.u32 %v1561, 16
        %v1578 = vmul.u32 %v1562, 16
        %v1579 = vmul.u32 %v1563, 16
        %v1580 = vmul.u32 %v1564, 16
        %v1581 = vmul.u32 %v1565, 16
        %v1582 = vmul.u32 %v1566, 16
        %v1583 = vmul.u32 %v1567, 16
        %v1584 = vmul.u32 %v1568, 16
        %v1585 = vmul.u32 %v1569, 16
        %v1586 = vmul.u32 %v1570, 16
        %v1587 = vmul.u32 %v1571, 16
        %v1588 = vmul.u32 %v1572, 16
        %v1589 = vmul.u32 %v1573, 16
        %v1590 = vmul.u32 %v1574, 16
        %1591 = vrot.lane.b32.xlu0 %v1543, 1
        %v1592 = vpop.permute.xlu0 %1591
        %1593 = vrot.lane.b32.xlu0 %v1544, 1
        %v1594 = vpop.permute.xlu0 %1593
        %1595 = vrot.lane.b32.xlu0 %v1545, 1
        %v1596 = vpop.permute.xlu0 %1595
        %1597 = vrot.lane.b32.xlu0 %v1546, 1
        %v1598 = vpop.permute.xlu0 %1597
        %1599 = vrot.lane.b32.xlu0 %v1547, 1
        %v1600 = vpop.permute.xlu0 %1599
        %1601 = vrot.lane.b32.xlu0 %v1548, 1
        %v1602 = vpop.permute.xlu0 %1601
        %1603 = vrot.lane.b32.xlu0 %v1549, 1
        %v1604 = vpop.permute.xlu0 %1603
        %1605 = vrot.lane.b32.xlu0 %v1550, 1
        %v1606 = vpop.permute.xlu0 %1605
        %1607 = vrot.lane.b32.xlu0 %v1551, 1
        %v1608 = vpop.permute.xlu0 %1607
        %1609 = vrot.lane.b32.xlu0 %v1552, 1
        %v1610 = vpop.permute.xlu0 %1609
        %1611 = vrot.lane.b32.xlu0 %v1553, 1
        %v1612 = vpop.permute.xlu0 %1611
        %1613 = vrot.lane.b32.xlu0 %v1554, 1
        %v1614 = vpop.permute.xlu0 %1613
        %1615 = vrot.lane.b32.xlu0 %v1555, 1
        %v1616 = vpop.permute.xlu0 %1615
        %1617 = vrot.lane.b32.xlu0 %v1556, 1
        %v1618 = vpop.permute.xlu0 %1617
        %1619 = vrot.lane.b32.xlu0 %v1557, 1
        %v1620 = vpop.permute.xlu0 %1619
        %1621 = vrot.lane.b32.xlu0 %v1558, 1
        %v1622 = vpop.permute.xlu0 %1621
        %v1623 = vadd.s32 %v1527, %v1592
        %v1624 = vadd.s32 %v1528, %v1594
        %v1625 = vadd.s32 %v1529, %v1596
        %v1626 = vadd.s32 %v1530, %v1598
        %v1627 = vadd.s32 %v1531, %v1600
        %v1628 = vadd.s32 %v1532, %v1602
        %v1629 = vadd.s32 %v1533, %v1604
        %v1630 = vadd.s32 %v1534, %v1606
        %v1631 = vadd.s32 %v1535, %v1608
        %v1632 = vadd.s32 %v1536, %v1610
        %v1633 = vadd.s32 %v1537, %v1612
        %v1634 = vadd.s32 %v1538, %v1614
        %v1635 = vadd.s32 %v1539, %v1616
        %v1636 = vadd.s32 %v1540, %v1618
        %v1637 = vadd.s32 %v1541, %v1620
        %v1638 = vadd.s32 %v1542, %v1622
        %v1639 = vadd.s32 %v1527, %v1575
        %v1640 = vadd.s32 %v1528, %v1576
        %v1641 = vadd.s32 %v1529, %v1577
        %v1642 = vadd.s32 %v1530, %v1578
        %v1643 = vadd.s32 %v1531, %v1579
        %v1644 = vadd.s32 %v1532, %v1580
        %v1645 = vadd.s32 %v1533, %v1581
        %v1646 = vadd.s32 %v1534, %v1582
        %v1647 = vadd.s32 %v1535, %v1583
        %v1648 = vadd.s32 %v1536, %v1584
        %v1649 = vadd.s32 %v1537, %v1585
        %v1650 = vadd.s32 %v1538, %v1586
        %v1651 = vadd.s32 %v1539, %v1587
        %v1652 = vadd.s32 %v1540, %v1588
        %v1653 = vadd.s32 %v1541, %v1589
        %v1654 = vadd.s32 %v1542, %v1590
        %v1655 = vadd.s32 %v1639, %v1592
        %v1656 = vadd.s32 %v1640, %v1594
        %v1657 = vadd.s32 %v1641, %v1596
        %v1658 = vadd.s32 %v1642, %v1598
        %v1659 = vadd.s32 %v1643, %v1600
        %v1660 = vadd.s32 %v1644, %v1602
        %v1661 = vadd.s32 %v1645, %v1604
        %v1662 = vadd.s32 %v1646, %v1606
        %v1663 = vadd.s32 %v1647, %v1608
        %v1664 = vadd.s32 %v1648, %v1610
        %v1665 = vadd.s32 %v1649, %v1612
        %v1666 = vadd.s32 %v1650, %v1614
        %v1667 = vadd.s32 %v1651, %v1616
        %v1668 = vadd.s32 %v1652, %v1618
        %v1669 = vadd.s32 %v1653, %v1620
        %v1670 = vadd.s32 %v1654, %v1622
        %v1671 = vsub.f32 1.0, %v1335
        %v1672 = vsub.f32 1.0, %v1336
        %v1673 = vsub.f32 1.0, %v1337
        %v1674 = vsub.f32 1.0, %v1338
        %v1675 = vsub.f32 1.0, %v1339
        %v1676 = vsub.f32 1.0, %v1340
        %v1677 = vsub.f32 1.0, %v1341
        %v1678 = vsub.f32 1.0, %v1342
        %v1679 = vsub.f32 1.0, %v1343
        %v1680 = vsub.f32 1.0, %v1344
        %v1681 = vsub.f32 1.0, %v1345
        %v1682 = vsub.f32 1.0, %v1346
        %v1683 = vsub.f32 1.0, %v1347
        %v1684 = vsub.f32 1.0, %v1348
        %v1685 = vsub.f32 1.0, %v1349
        %v1686 = vsub.f32 1.0, %v1350
        %v1687 = vsub.f32 1.0, %v1319
        %v1688 = vsub.f32 1.0, %v1320
        %v1689 = vsub.f32 1.0, %v1321
        %v1690 = vsub.f32 1.0, %v1322
        %v1691 = vsub.f32 1.0, %v1323
        %v1692 = vsub.f32 1.0, %v1324
        %v1693 = vsub.f32 1.0, %v1325
        %v1694 = vsub.f32 1.0, %v1326
        %v1695 = vsub.f32 1.0, %v1327
        %v1696 = vsub.f32 1.0, %v1328
        %v1697 = vsub.f32 1.0, %v1329
        %v1698 = vsub.f32 1.0, %v1330
        %v1699 = vsub.f32 1.0, %v1331
        %v1700 = vsub.f32 1.0, %v1332
        %v1701 = vsub.f32 1.0, %v1333
        %v1702 = vsub.f32 1.0, %v1334
        %1719 = vrot.lane.b32.xlu0 %v1687, 1
        %v1720 = vpop.permute.xlu0 %1719
        %1721 = vrot.lane.b32.xlu0 %v1688, 1
        %v1722 = vpop.permute.xlu0 %1721
        %1723 = vrot.lane.b32.xlu0 %v1689, 1
        %v1724 = vpop.permute.xlu0 %1723
        %1725 = vrot.lane.b32.xlu0 %v1690, 1
        %v1726 = vpop.permute.xlu0 %1725
        %1727 = vrot.lane.b32.xlu0 %v1691, 1
        %v1728 = vpop.permute.xlu0 %1727
        %1729 = vrot.lane.b32.xlu0 %v1692, 1
        %v1730 = vpop.permute.xlu0 %1729
        %1731 = vrot.lane.b32.xlu0 %v1693, 1
        %v1732 = vpop.permute.xlu0 %1731
        %1733 = vrot.lane.b32.xlu0 %v1694, 1
        %v1734 = vpop.permute.xlu0 %1733
        %1735 = vrot.lane.b32.xlu0 %v1695, 1
        %v1736 = vpop.permute.xlu0 %1735
        %1737 = vrot.lane.b32.xlu0 %v1696, 1
        %v1738 = vpop.permute.xlu0 %1737
        %1739 = vrot.lane.b32.xlu0 %v1697, 1
        %v1740 = vpop.permute.xlu0 %1739
        %1741 = vrot.lane.b32.xlu0 %v1698, 1
        %v1742 = vpop.permute.xlu0 %1741
        %1743 = vrot.lane.b32.xlu0 %v1699, 1
        %v1744 = vpop.permute.xlu0 %1743
        %1745 = vrot.lane.b32.xlu0 %v1700, 1
        %v1746 = vpop.permute.xlu0 %1745
        %1747 = vrot.lane.b32.xlu0 %v1701, 1
        %v1748 = vpop.permute.xlu0 %1747
        %1749 = vrot.lane.b32.xlu0 %v1702, 1
        %v1750 = vpop.permute.xlu0 %1749
        %v1767 = vmul.f32 %v1671, %v1720
        %v1768 = vmul.f32 %v1672, %v1722
        %v1769 = vmul.f32 %v1673, %v1724
        %v1770 = vmul.f32 %v1674, %v1726
        %v1771 = vmul.f32 %v1675, %v1728
        %v1772 = vmul.f32 %v1676, %v1730
        %v1773 = vmul.f32 %v1677, %v1732
        %v1774 = vmul.f32 %v1678, %v1734
        %v1775 = vmul.f32 %v1679, %v1736
        %v1776 = vmul.f32 %v1680, %v1738
        %v1777 = vmul.f32 %v1681, %v1740
        %v1778 = vmul.f32 %v1682, %v1742
        %v1779 = vmul.f32 %v1683, %v1744
        %v1780 = vmul.f32 %v1684, %v1746
        %v1781 = vmul.f32 %v1685, %v1748
        %v1782 = vmul.f32 %v1686, %v1750
        %1799 = vrot.lane.b32.xlu0 %v1319, 1
        %v1800 = vpop.permute.xlu0 %1799
        %1801 = vrot.lane.b32.xlu0 %v1320, 1
        %v1802 = vpop.permute.xlu0 %1801
        %1803 = vrot.lane.b32.xlu0 %v1321, 1
        %v1804 = vpop.permute.xlu0 %1803
        %1805 = vrot.lane.b32.xlu0 %v1322, 1
        %v1806 = vpop.permute.xlu0 %1805
        %1807 = vrot.lane.b32.xlu0 %v1323, 1
        %v1808 = vpop.permute.xlu0 %1807
        %1809 = vrot.lane.b32.xlu0 %v1324, 1
        %v1810 = vpop.permute.xlu0 %1809
        %1811 = vrot.lane.b32.xlu0 %v1325, 1
        %v1812 = vpop.permute.xlu0 %1811
        %1813 = vrot.lane.b32.xlu0 %v1326, 1
        %v1814 = vpop.permute.xlu0 %1813
        %1815 = vrot.lane.b32.xlu0 %v1327, 1
        %v1816 = vpop.permute.xlu0 %1815
        %1817 = vrot.lane.b32.xlu0 %v1328, 1
        %v1818 = vpop.permute.xlu0 %1817
        %1819 = vrot.lane.b32.xlu0 %v1329, 1
        %v1820 = vpop.permute.xlu0 %1819
        %1821 = vrot.lane.b32.xlu0 %v1330, 1
        %v1822 = vpop.permute.xlu0 %1821
        %1823 = vrot.lane.b32.xlu0 %v1331, 1
        %v1824 = vpop.permute.xlu0 %1823
        %1825 = vrot.lane.b32.xlu0 %v1332, 1
        %v1826 = vpop.permute.xlu0 %1825
        %1827 = vrot.lane.b32.xlu0 %v1333, 1
        %v1828 = vpop.permute.xlu0 %1827
        %1829 = vrot.lane.b32.xlu0 %v1334, 1
        %v1830 = vpop.permute.xlu0 %1829
        %v1847 = vmul.f32 %v1671, %v1800
        %v1848 = vmul.f32 %v1672, %v1802
        %v1849 = vmul.f32 %v1673, %v1804
        %v1850 = vmul.f32 %v1674, %v1806
        %v1851 = vmul.f32 %v1675, %v1808
        %v1852 = vmul.f32 %v1676, %v1810
        %v1853 = vmul.f32 %v1677, %v1812
        %v1854 = vmul.f32 %v1678, %v1814
        %v1855 = vmul.f32 %v1679, %v1816
        %v1856 = vmul.f32 %v1680, %v1818
        %v1857 = vmul.f32 %v1681, %v1820
        %v1858 = vmul.f32 %v1682, %v1822
        %v1859 = vmul.f32 %v1683, %v1824
        %v1860 = vmul.f32 %v1684, %v1826
        %v1861 = vmul.f32 %v1685, %v1828
        %v1862 = vmul.f32 %v1686, %v1830
        %v1863 = vmul.f32 %v1335, %v1720
        %v1864 = vmul.f32 %v1336, %v1722
        %v1865 = vmul.f32 %v1337, %v1724
        %v1866 = vmul.f32 %v1338, %v1726
        %v1867 = vmul.f32 %v1339, %v1728
        %v1868 = vmul.f32 %v1340, %v1730
        %v1869 = vmul.f32 %v1341, %v1732
        %v1870 = vmul.f32 %v1342, %v1734
        %v1871 = vmul.f32 %v1343, %v1736
        %v1872 = vmul.f32 %v1344, %v1738
        %v1873 = vmul.f32 %v1345, %v1740
        %v1874 = vmul.f32 %v1346, %v1742
        %v1875 = vmul.f32 %v1347, %v1744
        %v1876 = vmul.f32 %v1348, %v1746
        %v1877 = vmul.f32 %v1349, %v1748
        %v1878 = vmul.f32 %v1350, %v1750
        %v1879 = vmul.f32 %v1335, %v1800
        %v1880 = vmul.f32 %v1336, %v1802
        %v1881 = vmul.f32 %v1337, %v1804
        %v1882 = vmul.f32 %v1338, %v1806
        %v1883 = vmul.f32 %v1339, %v1808
        %v1884 = vmul.f32 %v1340, %v1810
        %v1885 = vmul.f32 %v1341, %v1812
        %v1886 = vmul.f32 %v1342, %v1814
        %v1887 = vmul.f32 %v1343, %v1816
        %v1888 = vmul.f32 %v1344, %v1818
        %v1889 = vmul.f32 %v1345, %v1820
        %v1890 = vmul.f32 %v1346, %v1822
        %v1891 = vmul.f32 %v1347, %v1824
        %v1892 = vmul.f32 %v1348, %v1826
        %v1893 = vmul.f32 %v1349, %v1828
        %v1894 = vmul.f32 %v1350, %v1830
        %v1895 = vlaneseq
        %v1896 = vand.u32 %v1895, 127
        loop: start=0, step=1, limit=2
        $region57: #{tpu_custom_call.1} parent=55 // loop_pre_header
          _
        $region58: #{tpu_custom_call.1} parent=55 // loop_header
          %s1898 = sphi 0, %s1902
          %p1899 = scmp.ge.s32.totalorder %s1898, 2
          %v1903 = vphi 0.0, %v2835
          %v1904 = vphi 0.0, %v2836
          %v1905 = vphi 0.0, %v2837
          %v1906 = vphi 0.0, %v2838
          %v1907 = vphi 0.0, %v2839
          %v1908 = vphi 0.0, %v2840
          %v1909 = vphi 0.0, %v2841
          %v1910 = vphi 0.0, %v2842
          %v1911 = vphi 0.0, %v2843
          %v1912 = vphi 0.0, %v2844
          %v1913 = vphi 0.0, %v2845
          %v1914 = vphi 0.0, %v2846
          %v1915 = vphi 0.0, %v2847
          %v1916 = vphi 0.0, %v2848
          %v1917 = vphi 0.0, %v2849
          %v1918 = vphi 0.0, %v2850
        $region59: #{tpu_custom_call.1} parent=55 // loop_header_branch
          %1901 = sbr.rel (%p1899) target = $region63
        $region60: #{tpu_custom_call.1} parent=55 // loop_body
          %s1919 = smul.u32 %s1898, 128
          %v1920 = vstv %s1919
          %v1921 = vsub.s32 %v1527, %v1920
          %v1922 = vsub.s32 %v1528, %v1920
          %v1923 = vsub.s32 %v1529, %v1920
          %v1924 = vsub.s32 %v1530, %v1920
          %v1925 = vsub.s32 %v1531, %v1920
          %v1926 = vsub.s32 %v1532, %v1920
          %v1927 = vsub.s32 %v1533, %v1920
          %v1928 = vsub.s32 %v1534, %v1920
          %v1929 = vsub.s32 %v1535, %v1920
          %v1930 = vsub.s32 %v1536, %v1920
          %v1931 = vsub.s32 %v1537, %v1920
          %v1932 = vsub.s32 %v1538, %v1920
          %v1933 = vsub.s32 %v1539, %v1920
          %v1934 = vsub.s32 %v1540, %v1920
          %v1935 = vsub.s32 %v1541, %v1920
          %v1936 = vsub.s32 %v1542, %v1920
          %1937 = vset.pattern.permute.xlu0 33
          %1938 = vperm.xlu0 %1937, %v1921
          %v1939 = vpop.permute.xlu0 %1938
          %1940 = vset.pattern.permute.xlu0 33
          %1941 = vperm.xlu0 %1940, %v1922
          %v1942 = vpop.permute.xlu0 %1941
          %1943 = vset.pattern.permute.xlu0 33
          %1944 = vperm.xlu0 %1943, %v1923
          %v1945 = vpop.permute.xlu0 %1944
          %1946 = vset.pattern.permute.xlu0 33
          %1947 = vperm.xlu0 %1946, %v1924
          %v1948 = vpop.permute.xlu0 %1947
          %1949 = vset.pattern.permute.xlu0 33
          %1950 = vperm.xlu0 %1949, %v1925
          %v1951 = vpop.permute.xlu0 %1950
          %1952 = vset.pattern.permute.xlu0 33
          %1953 = vperm.xlu0 %1952, %v1926
          %v1954 = vpop.permute.xlu0 %1953
          %1955 = vset.pattern.permute.xlu0 33
          %1956 = vperm.xlu0 %1955, %v1927
          %v1957 = vpop.permute.xlu0 %1956
          %1958 = vset.pattern.permute.xlu0 33
          %1959 = vperm.xlu0 %1958, %v1928
          %v1960 = vpop.permute.xlu0 %1959
          %1961 = vset.pattern.permute.xlu0 33
          %1962 = vperm.xlu0 %1961, %v1929
          %v1963 = vpop.permute.xlu0 %1962
          %1964 = vset.pattern.permute.xlu0 33
          %1965 = vperm.xlu0 %1964, %v1930
          %v1966 = vpop.permute.xlu0 %1965
          %1967 = vset.pattern.permute.xlu0 33
          %1968 = vperm.xlu0 %1967, %v1931
          %v1969 = vpop.permute.xlu0 %1968
          %1970 = vset.pattern.permute.xlu0 33
          %1971 = vperm.xlu0 %1970, %v1932
          %v1972 = vpop.permute.xlu0 %1971
          %1973 = vset.pattern.permute.xlu0 33
          %1974 = vperm.xlu0 %1973, %v1933
          %v1975 = vpop.permute.xlu0 %1974
          %1976 = vset.pattern.permute.xlu0 33
          %1977 = vperm.xlu0 %1976, %v1934
          %v1978 = vpop.permute.xlu0 %1977
          %1979 = vset.pattern.permute.xlu0 33
          %1980 = vperm.xlu0 %1979, %v1935
          %v1981 = vpop.permute.xlu0 %1980
          %1982 = vset.pattern.permute.xlu0 33
          %1983 = vperm.xlu0 %1982, %v1936
          %v1984 = vpop.permute.xlu0 %1983
          %vm1985 = vcmp.eq.s32.totalorder %v1896, %v1939
          %vm1986 = vcmp.eq.s32.totalorder %v1896, %v1942
          %vm1987 = vcmp.eq.s32.totalorder %v1896, %v1945
          %vm1988 = vcmp.eq.s32.totalorder %v1896, %v1948
          %vm1989 = vcmp.eq.s32.totalorder %v1896, %v1951
          %vm1990 = vcmp.eq.s32.totalorder %v1896, %v1954
          %vm1991 = vcmp.eq.s32.totalorder %v1896, %v1957
          %vm1992 = vcmp.eq.s32.totalorder %v1896, %v1960
          %vm1993 = vcmp.eq.s32.totalorder %v1896, %v1963
          %vm1994 = vcmp.eq.s32.totalorder %v1896, %v1966
          %vm1995 = vcmp.eq.s32.totalorder %v1896, %v1969
          %vm1996 = vcmp.eq.s32.totalorder %v1896, %v1972
          %vm1997 = vcmp.eq.s32.totalorder %v1896, %v1975
          %vm1998 = vcmp.eq.s32.totalorder %v1896, %v1978
          %vm1999 = vcmp.eq.s32.totalorder %v1896, %v1981
          %vm2000 = vcmp.eq.s32.totalorder %v1896, %v1984
          %2002 = vset.pattern.permute.xlu0 33
          %2003 = vperm.xlu0 %2002, %v1767
          %v2004 = vpop.permute.xlu0 %2003
          %2007 = vset.pattern.permute.xlu0 33
          %2008 = vperm.xlu0 %2007, %v1768
          %v2009 = vpop.permute.xlu0 %2008
          %2012 = vset.pattern.permute.xlu0 33
          %2013 = vperm.xlu0 %2012, %v1769
          %v2014 = vpop.permute.xlu0 %2013
          %2017 = vset.pattern.permute.xlu0 33
          %2018 = vperm.xlu0 %2017, %v1770
          %v2019 = vpop.permute.xlu0 %2018
          %2022 = vset.pattern.permute.xlu0 33
          %2023 = vperm.xlu0 %2022, %v1771
          %v2024 = vpop.permute.xlu0 %2023
          %2027 = vset.pattern.permute.xlu0 33
          %2028 = vperm.xlu0 %2027, %v1772
          %v2029 = vpop.permute.xlu0 %2028
          %2032 = vset.pattern.permute.xlu0 33
          %2033 = vperm.xlu0 %2032, %v1773
          %v2034 = vpop.permute.xlu0 %2033
          %2037 = vset.pattern.permute.xlu0 33
          %2038 = vperm.xlu0 %2037, %v1774
          %v2039 = vpop.permute.xlu0 %2038
          %2042 = vset.pattern.permute.xlu0 33
          %2043 = vperm.xlu0 %2042, %v1775
          %v2044 = vpop.permute.xlu0 %2043
          %2047 = vset.pattern.permute.xlu0 33
          %2048 = vperm.xlu0 %2047, %v1776
          %v2049 = vpop.permute.xlu0 %2048
          %2052 = vset.pattern.permute.xlu0 33
          %2053 = vperm.xlu0 %2052, %v1777
          %v2054 = vpop.permute.xlu0 %2053
          %2057 = vset.pattern.permute.xlu0 33
          %2058 = vperm.xlu0 %2057, %v1778
          %v2059 = vpop.permute.xlu0 %2058
          %2062 = vset.pattern.permute.xlu0 33
          %2063 = vperm.xlu0 %2062, %v1779
          %v2064 = vpop.permute.xlu0 %2063
          %2067 = vset.pattern.permute.xlu0 33
          %2068 = vperm.xlu0 %2067, %v1780
          %v2069 = vpop.permute.xlu0 %2068
          %2072 = vset.pattern.permute.xlu0 33
          %2073 = vperm.xlu0 %2072, %v1781
          %v2074 = vpop.permute.xlu0 %2073
          %2077 = vset.pattern.permute.xlu0 33
          %2078 = vperm.xlu0 %2077, %v1782
          %v2079 = vpop.permute.xlu0 %2078
          %v2081 = vsel %vm1985, %v2004, 0.0
          %v2082 = vsel %vm1986, %v2009, 0.0
          %v2083 = vsel %vm1987, %v2014, 0.0
          %v2084 = vsel %vm1988, %v2019, 0.0
          %v2085 = vsel %vm1989, %v2024, 0.0
          %v2086 = vsel %vm1990, %v2029, 0.0
          %v2087 = vsel %vm1991, %v2034, 0.0
          %v2088 = vsel %vm1992, %v2039, 0.0
          %v2089 = vsel %vm1993, %v2044, 0.0
          %v2090 = vsel %vm1994, %v2049, 0.0
          %v2091 = vsel %vm1995, %v2054, 0.0
          %v2092 = vsel %vm1996, %v2059, 0.0
          %v2093 = vsel %vm1997, %v2064, 0.0
          %v2094 = vsel %vm1998, %v2069, 0.0
          %v2095 = vsel %vm1999, %v2074, 0.0
          %v2096 = vsel %vm2000, %v2079, 0.0
          %v2097 = vsub.s32 %v1623, %v1920
          %v2098 = vsub.s32 %v1624, %v1920
          %v2099 = vsub.s32 %v1625, %v1920
          %v2100 = vsub.s32 %v1626, %v1920
          %v2101 = vsub.s32 %v1627, %v1920
          %v2102 = vsub.s32 %v1628, %v1920
          %v2103 = vsub.s32 %v1629, %v1920
          %v2104 = vsub.s32 %v1630, %v1920
          %v2105 = vsub.s32 %v1631, %v1920
          %v2106 = vsub.s32 %v1632, %v1920
          %v2107 = vsub.s32 %v1633, %v1920
          %v2108 = vsub.s32 %v1634, %v1920
          %v2109 = vsub.s32 %v1635, %v1920
          %v2110 = vsub.s32 %v1636, %v1920
          %v2111 = vsub.s32 %v1637, %v1920
          %v2112 = vsub.s32 %v1638, %v1920
          %2113 = vset.pattern.permute.xlu0 33
          %2114 = vperm.xlu0 %2113, %v2097
          %v2115 = vpop.permute.xlu0 %2114
          %2116 = vset.pattern.permute.xlu0 33
          %2117 = vperm.xlu0 %2116, %v2098
          %v2118 = vpop.permute.xlu0 %2117
          %2119 = vset.pattern.permute.xlu0 33
          %2120 = vperm.xlu0 %2119, %v2099
          %v2121 = vpop.permute.xlu0 %2120
          %2122 = vset.pattern.permute.xlu0 33
          %2123 = vperm.xlu0 %2122, %v2100
          %v2124 = vpop.permute.xlu0 %2123
          %2125 = vset.pattern.permute.xlu0 33
          %2126 = vperm.xlu0 %2125, %v2101
          %v2127 = vpop.permute.xlu0 %2126
          %2128 = vset.pattern.permute.xlu0 33
          %2129 = vperm.xlu0 %2128, %v2102
          %v2130 = vpop.permute.xlu0 %2129
          %2131 = vset.pattern.permute.xlu0 33
          %2132 = vperm.xlu0 %2131, %v2103
          %v2133 = vpop.permute.xlu0 %2132
          %2134 = vset.pattern.permute.xlu0 33
          %2135 = vperm.xlu0 %2134, %v2104
          %v2136 = vpop.permute.xlu0 %2135
          %2137 = vset.pattern.permute.xlu0 33
          %2138 = vperm.xlu0 %2137, %v2105
          %v2139 = vpop.permute.xlu0 %2138
          %2140 = vset.pattern.permute.xlu0 33
          %2141 = vperm.xlu0 %2140, %v2106
          %v2142 = vpop.permute.xlu0 %2141
          %2143 = vset.pattern.permute.xlu0 33
          %2144 = vperm.xlu0 %2143, %v2107
          %v2145 = vpop.permute.xlu0 %2144
          %2146 = vset.pattern.permute.xlu0 33
          %2147 = vperm.xlu0 %2146, %v2108
          %v2148 = vpop.permute.xlu0 %2147
          %2149 = vset.pattern.permute.xlu0 33
          %2150 = vperm.xlu0 %2149, %v2109
          %v2151 = vpop.permute.xlu0 %2150
          %2152 = vset.pattern.permute.xlu0 33
          %2153 = vperm.xlu0 %2152, %v2110
          %v2154 = vpop.permute.xlu0 %2153
          %2155 = vset.pattern.permute.xlu0 33
          %2156 = vperm.xlu0 %2155, %v2111
          %v2157 = vpop.permute.xlu0 %2156
          %2158 = vset.pattern.permute.xlu0 33
          %2159 = vperm.xlu0 %2158, %v2112
          %v2160 = vpop.permute.xlu0 %2159
          %vm2161 = vcmp.eq.s32.totalorder %v1896, %v2115
          %vm2162 = vcmp.eq.s32.totalorder %v1896, %v2118
          %vm2163 = vcmp.eq.s32.totalorder %v1896, %v2121
          %vm2164 = vcmp.eq.s32.totalorder %v1896, %v2124
          %vm2165 = vcmp.eq.s32.totalorder %v1896, %v2127
          %vm2166 = vcmp.eq.s32.totalorder %v1896, %v2130
          %vm2167 = vcmp.eq.s32.totalorder %v1896, %v2133
          %vm2168 = vcmp.eq.s32.totalorder %v1896, %v2136
          %vm2169 = vcmp.eq.s32.totalorder %v1896, %v2139
          %vm2170 = vcmp.eq.s32.totalorder %v1896, %v2142
          %vm2171 = vcmp.eq.s32.totalorder %v1896, %v2145
          %vm2172 = vcmp.eq.s32.totalorder %v1896, %v2148
          %vm2173 = vcmp.eq.s32.totalorder %v1896, %v2151
          %vm2174 = vcmp.eq.s32.totalorder %v1896, %v2154
          %vm2175 = vcmp.eq.s32.totalorder %v1896, %v2157
          %vm2176 = vcmp.eq.s32.totalorder %v1896, %v2160
          %2178 = vset.pattern.permute.xlu0 33
          %2179 = vperm.xlu0 %2178, %v1847
          %v2180 = vpop.permute.xlu0 %2179
          %2183 = vset.pattern.permute.xlu0 33
          %2184 = vperm.xlu0 %2183, %v1848
          %v2185 = vpop.permute.xlu0 %2184
          %2188 = vset.pattern.permute.xlu0 33
          %2189 = vperm.xlu0 %2188, %v1849
          %v2190 = vpop.permute.xlu0 %2189
          %2193 = vset.pattern.permute.xlu0 33
          %2194 = vperm.xlu0 %2193, %v1850
          %v2195 = vpop.permute.xlu0 %2194
          %2198 = vset.pattern.permute.xlu0 33
          %2199 = vperm.xlu0 %2198, %v1851
          %v2200 = vpop.permute.xlu0 %2199
          %2203 = vset.pattern.permute.xlu0 33
          %2204 = vperm.xlu0 %2203, %v1852
          %v2205 = vpop.permute.xlu0 %2204
          %2208 = vset.pattern.permute.xlu0 33
          %2209 = vperm.xlu0 %2208, %v1853
          %v2210 = vpop.permute.xlu0 %2209
          %2213 = vset.pattern.permute.xlu0 33
          %2214 = vperm.xlu0 %2213, %v1854
          %v2215 = vpop.permute.xlu0 %2214
          %2218 = vset.pattern.permute.xlu0 33
          %2219 = vperm.xlu0 %2218, %v1855
          %v2220 = vpop.permute.xlu0 %2219
          %2223 = vset.pattern.permute.xlu0 33
          %2224 = vperm.xlu0 %2223, %v1856
          %v2225 = vpop.permute.xlu0 %2224
          %2228 = vset.pattern.permute.xlu0 33
          %2229 = vperm.xlu0 %2228, %v1857
          %v2230 = vpop.permute.xlu0 %2229
          %2233 = vset.pattern.permute.xlu0 33
          %2234 = vperm.xlu0 %2233, %v1858
          %v2235 = vpop.permute.xlu0 %2234
          %2238 = vset.pattern.permute.xlu0 33
          %2239 = vperm.xlu0 %2238, %v1859
          %v2240 = vpop.permute.xlu0 %2239
          %2243 = vset.pattern.permute.xlu0 33
          %2244 = vperm.xlu0 %2243, %v1860
          %v2245 = vpop.permute.xlu0 %2244
          %2248 = vset.pattern.permute.xlu0 33
          %2249 = vperm.xlu0 %2248, %v1861
          %v2250 = vpop.permute.xlu0 %2249
          %2253 = vset.pattern.permute.xlu0 33
          %2254 = vperm.xlu0 %2253, %v1862
          %v2255 = vpop.permute.xlu0 %2254
          %v2257 = vsel %vm2161, %v2180, 0.0
          %v2258 = vsel %vm2162, %v2185, 0.0
          %v2259 = vsel %vm2163, %v2190, 0.0
          %v2260 = vsel %vm2164, %v2195, 0.0
          %v2261 = vsel %vm2165, %v2200, 0.0
          %v2262 = vsel %vm2166, %v2205, 0.0
          %v2263 = vsel %vm2167, %v2210, 0.0
          %v2264 = vsel %vm2168, %v2215, 0.0
          %v2265 = vsel %vm2169, %v2220, 0.0
          %v2266 = vsel %vm2170, %v2225, 0.0
          %v2267 = vsel %vm2171, %v2230, 0.0
          %v2268 = vsel %vm2172, %v2235, 0.0
          %v2269 = vsel %vm2173, %v2240, 0.0
          %v2270 = vsel %vm2174, %v2245, 0.0
          %v2271 = vsel %vm2175, %v2250, 0.0
          %v2272 = vsel %vm2176, %v2255, 0.0
          %v2273 = vadd.f32 %v2081, %v2257
          %v2274 = vadd.f32 %v2082, %v2258
          %v2275 = vadd.f32 %v2083, %v2259
          %v2276 = vadd.f32 %v2084, %v2260
          %v2277 = vadd.f32 %v2085, %v2261
          %v2278 = vadd.f32 %v2086, %v2262
          %v2279 = vadd.f32 %v2087, %v2263
          %v2280 = vadd.f32 %v2088, %v2264
          %v2281 = vadd.f32 %v2089, %v2265
          %v2282 = vadd.f32 %v2090, %v2266
          %v2283 = vadd.f32 %v2091, %v2267
          %v2284 = vadd.f32 %v2092, %v2268
          %v2285 = vadd.f32 %v2093, %v2269
          %v2286 = vadd.f32 %v2094, %v2270
          %v2287 = vadd.f32 %v2095, %v2271
          %v2288 = vadd.f32 %v2096, %v2272
          %v2289 = vsub.s32 %v1639, %v1920
          %v2290 = vsub.s32 %v1640, %v1920
          %v2291 = vsub.s32 %v1641, %v1920
          %v2292 = vsub.s32 %v1642, %v1920
          %v2293 = vsub.s32 %v1643, %v1920
          %v2294 = vsub.s32 %v1644, %v1920
          %v2295 = vsub.s32 %v1645, %v1920
          %v2296 = vsub.s32 %v1646, %v1920
          %v2297 = vsub.s32 %v1647, %v1920
          %v2298 = vsub.s32 %v1648, %v1920
          %v2299 = vsub.s32 %v1649, %v1920
          %v2300 = vsub.s32 %v1650, %v1920
          %v2301 = vsub.s32 %v1651, %v1920
          %v2302 = vsub.s32 %v1652, %v1920
          %v2303 = vsub.s32 %v1653, %v1920
          %v2304 = vsub.s32 %v1654, %v1920
          %2305 = vset.pattern.permute.xlu0 33
          %2306 = vperm.xlu0 %2305, %v2289
          %v2307 = vpop.permute.xlu0 %2306
          %2308 = vset.pattern.permute.xlu0 33
          %2309 = vperm.xlu0 %2308, %v2290
          %v2310 = vpop.permute.xlu0 %2309
          %2311 = vset.pattern.permute.xlu0 33
          %2312 = vperm.xlu0 %2311, %v2291
          %v2313 = vpop.permute.xlu0 %2312
          %2314 = vset.pattern.permute.xlu0 33
          %2315 = vperm.xlu0 %2314, %v2292
          %v2316 = vpop.permute.xlu0 %2315
          %2317 = vset.pattern.permute.xlu0 33
          %2318 = vperm.xlu0 %2317, %v2293
          %v2319 = vpop.permute.xlu0 %2318
          %2320 = vset.pattern.permute.xlu0 33
          %2321 = vperm.xlu0 %2320, %v2294
          %v2322 = vpop.permute.xlu0 %2321
          %2323 = vset.pattern.permute.xlu0 33
          %2324 = vperm.xlu0 %2323, %v2295
          %v2325 = vpop.permute.xlu0 %2324
          %2326 = vset.pattern.permute.xlu0 33
          %2327 = vperm.xlu0 %2326, %v2296
          %v2328 = vpop.permute.xlu0 %2327
          %2329 = vset.pattern.permute.xlu0 33
          %2330 = vperm.xlu0 %2329, %v2297
          %v2331 = vpop.permute.xlu0 %2330
          %2332 = vset.pattern.permute.xlu0 33
          %2333 = vperm.xlu0 %2332, %v2298
          %v2334 = vpop.permute.xlu0 %2333
          %2335 = vset.pattern.permute.xlu0 33
          %2336 = vperm.xlu0 %2335, %v2299
          %v2337 = vpop.permute.xlu0 %2336
          %2338 = vset.pattern.permute.xlu0 33
          %2339 = vperm.xlu0 %2338, %v2300
          %v2340 = vpop.permute.xlu0 %2339
          %2341 = vset.pattern.permute.xlu0 33
          %2342 = vperm.xlu0 %2341, %v2301
          %v2343 = vpop.permute.xlu0 %2342
          %2344 = vset.pattern.permute.xlu0 33
          %2345 = vperm.xlu0 %2344, %v2302
          %v2346 = vpop.permute.xlu0 %2345
          %2347 = vset.pattern.permute.xlu0 33
          %2348 = vperm.xlu0 %2347, %v2303
          %v2349 = vpop.permute.xlu0 %2348
          %2350 = vset.pattern.permute.xlu0 33
          %2351 = vperm.xlu0 %2350, %v2304
          %v2352 = vpop.permute.xlu0 %2351
          %vm2353 = vcmp.eq.s32.totalorder %v1896, %v2307
          %vm2354 = vcmp.eq.s32.totalorder %v1896, %v2310
          %vm2355 = vcmp.eq.s32.totalorder %v1896, %v2313
          %vm2356 = vcmp.eq.s32.totalorder %v1896, %v2316
          %vm2357 = vcmp.eq.s32.totalorder %v1896, %v2319
          %vm2358 = vcmp.eq.s32.totalorder %v1896, %v2322
          %vm2359 = vcmp.eq.s32.totalorder %v1896, %v2325
          %vm2360 = vcmp.eq.s32.totalorder %v1896, %v2328
          %vm2361 = vcmp.eq.s32.totalorder %v1896, %v2331
          %vm2362 = vcmp.eq.s32.totalorder %v1896, %v2334
          %vm2363 = vcmp.eq.s32.totalorder %v1896, %v2337
          %vm2364 = vcmp.eq.s32.totalorder %v1896, %v2340
          %vm2365 = vcmp.eq.s32.totalorder %v1896, %v2343
          %vm2366 = vcmp.eq.s32.totalorder %v1896, %v2346
          %vm2367 = vcmp.eq.s32.totalorder %v1896, %v2349
          %vm2368 = vcmp.eq.s32.totalorder %v1896, %v2352
          %2370 = vset.pattern.permute.xlu0 33
          %2371 = vperm.xlu0 %2370, %v1863
          %v2372 = vpop.permute.xlu0 %2371
          %2375 = vset.pattern.permute.xlu0 33
          %2376 = vperm.xlu0 %2375, %v1864
          %v2377 = vpop.permute.xlu0 %2376
          %2380 = vset.pattern.permute.xlu0 33
          %2381 = vperm.xlu0 %2380, %v1865
          %v2382 = vpop.permute.xlu0 %2381
          %2385 = vset.pattern.permute.xlu0 33
          %2386 = vperm.xlu0 %2385, %v1866
          %v2387 = vpop.permute.xlu0 %2386
          %2390 = vset.pattern.permute.xlu0 33
          %2391 = vperm.xlu0 %2390, %v1867
          %v2392 = vpop.permute.xlu0 %2391
          %2395 = vset.pattern.permute.xlu0 33
          %2396 = vperm.xlu0 %2395, %v1868
          %v2397 = vpop.permute.xlu0 %2396
          %2400 = vset.pattern.permute.xlu0 33
          %2401 = vperm.xlu0 %2400, %v1869
          %v2402 = vpop.permute.xlu0 %2401
          %2405 = vset.pattern.permute.xlu0 33
          %2406 = vperm.xlu0 %2405, %v1870
          %v2407 = vpop.permute.xlu0 %2406
          %2410 = vset.pattern.permute.xlu0 33
          %2411 = vperm.xlu0 %2410, %v1871
          %v2412 = vpop.permute.xlu0 %2411
          %2415 = vset.pattern.permute.xlu0 33
          %2416 = vperm.xlu0 %2415, %v1872
          %v2417 = vpop.permute.xlu0 %2416
          %2420 = vset.pattern.permute.xlu0 33
          %2421 = vperm.xlu0 %2420, %v1873
          %v2422 = vpop.permute.xlu0 %2421
          %2425 = vset.pattern.permute.xlu0 33
          %2426 = vperm.xlu0 %2425, %v1874
          %v2427 = vpop.permute.xlu0 %2426
          %2430 = vset.pattern.permute.xlu0 33
          %2431 = vperm.xlu0 %2430, %v1875
          %v2432 = vpop.permute.xlu0 %2431
          %2435 = vset.pattern.permute.xlu0 33
          %2436 = vperm.xlu0 %2435, %v1876
          %v2437 = vpop.permute.xlu0 %2436
          %2440 = vset.pattern.permute.xlu0 33
          %2441 = vperm.xlu0 %2440, %v1877
          %v2442 = vpop.permute.xlu0 %2441
          %2445 = vset.pattern.permute.xlu0 33
          %2446 = vperm.xlu0 %2445, %v1878
          %v2447 = vpop.permute.xlu0 %2446
          %v2449 = vsel %vm2353, %v2372, 0.0
          %v2450 = vsel %vm2354, %v2377, 0.0
          %v2451 = vsel %vm2355, %v2382, 0.0
          %v2452 = vsel %vm2356, %v2387, 0.0
          %v2453 = vsel %vm2357, %v2392, 0.0
          %v2454 = vsel %vm2358, %v2397, 0.0
          %v2455 = vsel %vm2359, %v2402, 0.0
          %v2456 = vsel %vm2360, %v2407, 0.0
          %v2457 = vsel %vm2361, %v2412, 0.0
          %v2458 = vsel %vm2362, %v2417, 0.0
          %v2459 = vsel %vm2363, %v2422, 0.0
          %v2460 = vsel %vm2364, %v2427, 0.0
          %v2461 = vsel %vm2365, %v2432, 0.0
          %v2462 = vsel %vm2366, %v2437, 0.0
          %v2463 = vsel %vm2367, %v2442, 0.0
          %v2464 = vsel %vm2368, %v2447, 0.0
          %v2465 = vadd.f32 %v2273, %v2449
          %v2466 = vadd.f32 %v2274, %v2450
          %v2467 = vadd.f32 %v2275, %v2451
          %v2468 = vadd.f32 %v2276, %v2452
          %v2469 = vadd.f32 %v2277, %v2453
          %v2470 = vadd.f32 %v2278, %v2454
          %v2471 = vadd.f32 %v2279, %v2455
          %v2472 = vadd.f32 %v2280, %v2456
          %v2473 = vadd.f32 %v2281, %v2457
          %v2474 = vadd.f32 %v2282, %v2458
          %v2475 = vadd.f32 %v2283, %v2459
          %v2476 = vadd.f32 %v2284, %v2460
          %v2477 = vadd.f32 %v2285, %v2461
          %v2478 = vadd.f32 %v2286, %v2462
          %v2479 = vadd.f32 %v2287, %v2463
          %v2480 = vadd.f32 %v2288, %v2464
          %v2481 = vsub.s32 %v1655, %v1920
          %v2482 = vsub.s32 %v1656, %v1920
          %v2483 = vsub.s32 %v1657, %v1920
          %v2484 = vsub.s32 %v1658, %v1920
          %v2485 = vsub.s32 %v1659, %v1920
          %v2486 = vsub.s32 %v1660, %v1920
          %v2487 = vsub.s32 %v1661, %v1920
          %v2488 = vsub.s32 %v1662, %v1920
          %v2489 = vsub.s32 %v1663, %v1920
          %v2490 = vsub.s32 %v1664, %v1920
          %v2491 = vsub.s32 %v1665, %v1920
          %v2492 = vsub.s32 %v1666, %v1920
          %v2493 = vsub.s32 %v1667, %v1920
          %v2494 = vsub.s32 %v1668, %v1920
          %v2495 = vsub.s32 %v1669, %v1920
          %v2496 = vsub.s32 %v1670, %v1920
          %2497 = vset.pattern.permute.xlu0 33
          %2498 = vperm.xlu0 %2497, %v2481
          %v2499 = vpop.permute.xlu0 %2498
          %2500 = vset.pattern.permute.xlu0 33
          %2501 = vperm.xlu0 %2500, %v2482
          %v2502 = vpop.permute.xlu0 %2501
          %2503 = vset.pattern.permute.xlu0 33
          %2504 = vperm.xlu0 %2503, %v2483
          %v2505 = vpop.permute.xlu0 %2504
          %2506 = vset.pattern.permute.xlu0 33
          %2507 = vperm.xlu0 %2506, %v2484
          %v2508 = vpop.permute.xlu0 %2507
          %2509 = vset.pattern.permute.xlu0 33
          %2510 = vperm.xlu0 %2509, %v2485
          %v2511 = vpop.permute.xlu0 %2510
          %2512 = vset.pattern.permute.xlu0 33
          %2513 = vperm.xlu0 %2512, %v2486
          %v2514 = vpop.permute.xlu0 %2513
          %2515 = vset.pattern.permute.xlu0 33
          %2516 = vperm.xlu0 %2515, %v2487
          %v2517 = vpop.permute.xlu0 %2516
          %2518 = vset.pattern.permute.xlu0 33
          %2519 = vperm.xlu0 %2518, %v2488
          %v2520 = vpop.permute.xlu0 %2519
          %2521 = vset.pattern.permute.xlu0 33
          %2522 = vperm.xlu0 %2521, %v2489
          %v2523 = vpop.permute.xlu0 %2522
          %2524 = vset.pattern.permute.xlu0 33
          %2525 = vperm.xlu0 %2524, %v2490
          %v2526 = vpop.permute.xlu0 %2525
          %2527 = vset.pattern.permute.xlu0 33
          %2528 = vperm.xlu0 %2527, %v2491
          %v2529 = vpop.permute.xlu0 %2528
          %2530 = vset.pattern.permute.xlu0 33
          %2531 = vperm.xlu0 %2530, %v2492
          %v2532 = vpop.permute.xlu0 %2531
          %2533 = vset.pattern.permute.xlu0 33
          %2534 = vperm.xlu0 %2533, %v2493
          %v2535 = vpop.permute.xlu0 %2534
          %2536 = vset.pattern.permute.xlu0 33
          %2537 = vperm.xlu0 %2536, %v2494
          %v2538 = vpop.permute.xlu0 %2537
          %2539 = vset.pattern.permute.xlu0 33
          %2540 = vperm.xlu0 %2539, %v2495
          %v2541 = vpop.permute.xlu0 %2540
          %2542 = vset.pattern.permute.xlu0 33
          %2543 = vperm.xlu0 %2542, %v2496
          %v2544 = vpop.permute.xlu0 %2543
          %vm2545 = vcmp.eq.s32.totalorder %v1896, %v2499
          %vm2546 = vcmp.eq.s32.totalorder %v1896, %v2502
          %vm2547 = vcmp.eq.s32.totalorder %v1896, %v2505
          %vm2548 = vcmp.eq.s32.totalorder %v1896, %v2508
          %vm2549 = vcmp.eq.s32.totalorder %v1896, %v2511
          %vm2550 = vcmp.eq.s32.totalorder %v1896, %v2514
          %vm2551 = vcmp.eq.s32.totalorder %v1896, %v2517
          %vm2552 = vcmp.eq.s32.totalorder %v1896, %v2520
          %vm2553 = vcmp.eq.s32.totalorder %v1896, %v2523
          %vm2554 = vcmp.eq.s32.totalorder %v1896, %v2526
          %vm2555 = vcmp.eq.s32.totalorder %v1896, %v2529
          %vm2556 = vcmp.eq.s32.totalorder %v1896, %v2532
          %vm2557 = vcmp.eq.s32.totalorder %v1896, %v2535
          %vm2558 = vcmp.eq.s32.totalorder %v1896, %v2538
          %vm2559 = vcmp.eq.s32.totalorder %v1896, %v2541
          %vm2560 = vcmp.eq.s32.totalorder %v1896, %v2544
          %2562 = vset.pattern.permute.xlu0 33
          %2563 = vperm.xlu0 %2562, %v1879
          %v2564 = vpop.permute.xlu0 %2563
          %2567 = vset.pattern.permute.xlu0 33
          %2568 = vperm.xlu0 %2567, %v1880
          %v2569 = vpop.permute.xlu0 %2568
          %2572 = vset.pattern.permute.xlu0 33
          %2573 = vperm.xlu0 %2572, %v1881
          %v2574 = vpop.permute.xlu0 %2573
          %2577 = vset.pattern.permute.xlu0 33
          %2578 = vperm.xlu0 %2577, %v1882
          %v2579 = vpop.permute.xlu0 %2578
          %2582 = vset.pattern.permute.xlu0 33
          %2583 = vperm.xlu0 %2582, %v1883
          %v2584 = vpop.permute.xlu0 %2583
          %2587 = vset.pattern.permute.xlu0 33
          %2588 = vperm.xlu0 %2587, %v1884
          %v2589 = vpop.permute.xlu0 %2588
          %2592 = vset.pattern.permute.xlu0 33
          %2593 = vperm.xlu0 %2592, %v1885
          %v2594 = vpop.permute.xlu0 %2593
          %2597 = vset.pattern.permute.xlu0 33
          %2598 = vperm.xlu0 %2597, %v1886
          %v2599 = vpop.permute.xlu0 %2598
          %2602 = vset.pattern.permute.xlu0 33
          %2603 = vperm.xlu0 %2602, %v1887
          %v2604 = vpop.permute.xlu0 %2603
          %2607 = vset.pattern.permute.xlu0 33
          %2608 = vperm.xlu0 %2607, %v1888
          %v2609 = vpop.permute.xlu0 %2608
          %2612 = vset.pattern.permute.xlu0 33
          %2613 = vperm.xlu0 %2612, %v1889
          %v2614 = vpop.permute.xlu0 %2613
          %2617 = vset.pattern.permute.xlu0 33
          %2618 = vperm.xlu0 %2617, %v1890
          %v2619 = vpop.permute.xlu0 %2618
          %2622 = vset.pattern.permute.xlu0 33
          %2623 = vperm.xlu0 %2622, %v1891
          %v2624 = vpop.permute.xlu0 %2623
          %2627 = vset.pattern.permute.xlu0 33
          %2628 = vperm.xlu0 %2627, %v1892
          %v2629 = vpop.permute.xlu0 %2628
          %2632 = vset.pattern.permute.xlu0 33
          %2633 = vperm.xlu0 %2632, %v1893
          %v2634 = vpop.permute.xlu0 %2633
          %2637 = vset.pattern.permute.xlu0 33
          %2638 = vperm.xlu0 %2637, %v1894
          %v2639 = vpop.permute.xlu0 %2638
          %v2641 = vsel %vm2545, %v2564, 0.0
          %v2642 = vsel %vm2546, %v2569, 0.0
          %v2643 = vsel %vm2547, %v2574, 0.0
          %v2644 = vsel %vm2548, %v2579, 0.0
          %v2645 = vsel %vm2549, %v2584, 0.0
          %v2646 = vsel %vm2550, %v2589, 0.0
          %v2647 = vsel %vm2551, %v2594, 0.0
          %v2648 = vsel %vm2552, %v2599, 0.0
          %v2649 = vsel %vm2553, %v2604, 0.0
          %v2650 = vsel %vm2554, %v2609, 0.0
          %v2651 = vsel %vm2555, %v2614, 0.0
          %v2652 = vsel %vm2556, %v2619, 0.0
          %v2653 = vsel %vm2557, %v2624, 0.0
          %v2654 = vsel %vm2558, %v2629, 0.0
          %v2655 = vsel %vm2559, %v2634, 0.0
          %v2656 = vsel %vm2560, %v2639, 0.0
          %v2657 = vadd.f32 %v2465, %v2641
          %v2658 = vadd.f32 %v2466, %v2642
          %v2659 = vadd.f32 %v2467, %v2643
          %v2660 = vadd.f32 %v2468, %v2644
          %v2661 = vadd.f32 %v2469, %v2645
          %v2662 = vadd.f32 %v2470, %v2646
          %v2663 = vadd.f32 %v2471, %v2647
          %v2664 = vadd.f32 %v2472, %v2648
          %v2665 = vadd.f32 %v2473, %v2649
          %v2666 = vadd.f32 %v2474, %v2650
          %v2667 = vadd.f32 %v2475, %v2651
          %v2668 = vadd.f32 %v2476, %v2652
          %v2669 = vadd.f32 %v2477, %v2653
          %v2670 = vadd.f32 %v2478, %v2654
          %v2671 = vadd.f32 %v2479, %v2655
          %v2672 = vadd.f32 %v2480, %v2656
          %s2673 = scalar_lea.vmem %s412, %s1919
          %v2674 = vld [vmem:[%s2673] sm:$0xff]
          %v2675 = vld [vmem:[%s2673 + $0x8] sm:$0xff]
          %v2676 = vld [vmem:[%s2673 + $0x10] sm:$0xff]
          %v2677 = vld [vmem:[%s2673 + $0x18] sm:$0xff]
          %v2678 = vld [vmem:[%s2673 + $0x20] sm:$0xff]
          %v2679 = vld [vmem:[%s2673 + $0x28] sm:$0xff]
          %v2680 = vld [vmem:[%s2673 + $0x30] sm:$0xff]
          %v2681 = vld [vmem:[%s2673 + $0x38] sm:$0xff]
          %v2682 = vld [vmem:[%s2673 + $0x40] sm:$0xff]
          %v2683 = vld [vmem:[%s2673 + $0x48] sm:$0xff]
          %v2684 = vld [vmem:[%s2673 + $0x50] sm:$0xff]
          %v2685 = vld [vmem:[%s2673 + $0x58] sm:$0xff]
          %v2686 = vld [vmem:[%s2673 + $0x60] sm:$0xff]
          %v2687 = vld [vmem:[%s2673 + $0x68] sm:$0xff]
          %v2688 = vld [vmem:[%s2673 + $0x70] sm:$0xff]
          %v2689 = vld [vmem:[%s2673 + $0x78] sm:$0xff]
          %2690 = vmatprep.subr.mxu0 0.0
          %2691 = vmatpush1.msra.mxu0 %v2689
          %2692 = vmatprep.subr.mxu0 0.0
          %2693 = vmatpush1.msra.mxu0 %v2688
          %2694 = vmatprep.subr.mxu0 0.0
          %2695 = vmatpush1.msra.mxu0 %v2687
          %2696 = vmatprep.subr.mxu0 0.0
          %2697 = vmatpush1.msra.mxu0 %v2686
          %2698 = vmatprep.subr.mxu0 0.0
          %2699 = vmatpush1.msra.mxu0 %v2685
          %2700 = vmatprep.subr.mxu0 0.0
          %2701 = vmatpush1.msra.mxu0 %v2684
          %2702 = vmatprep.subr.mxu0 0.0
          %2703 = vmatpush1.msra.mxu0 %v2683
          %2704 = vmatprep.subr.mxu0 0.0
          %2705 = vmatpush1.msra.mxu0 %v2682
          %2706 = vmatprep.subr.mxu0 0.0
          %2707 = vmatpush1.msra.mxu0 %v2681
          %2708 = vmatprep.subr.mxu0 0.0
          %2709 = vmatpush1.msra.mxu0 %v2680
          %2710 = vmatprep.subr.mxu0 0.0
          %2711 = vmatpush1.msra.mxu0 %v2679
          %2712 = vmatprep.subr.mxu0 0.0
          %2713 = vmatpush1.msra.mxu0 %v2678
          %2714 = vmatprep.subr.mxu0 0.0
          %2715 = vmatpush1.msra.mxu0 %v2677
          %2716 = vmatprep.subr.mxu0 0.0
          %2717 = vmatpush1.msra.mxu0 %v2676
          %2718 = vmatprep.subr.mxu0 0.0
          %2719 = vmatpush1.msra.mxu0 %v2675
          %2720 = vmatprep.subr.mxu0 0.0
          %2721 = vmatpush1.msra.mxu0 %v2674
          %2722 = vmatprep.subr.mxu0 0.0
          %2723 = vmatpush2.msra.mxu0 0.0
          %2724 = vmatprep.subr.mxu0 0.0
          %2725 = vmatpush2.msra.mxu0 0.0
          %2726 = vmatprep.subr.mxu0 0.0
          %2727 = vmatpush2.msra.mxu0 0.0
          %2728 = vmatprep.subr.mxu0 0.0
          %2729 = vmatpush2.msra.mxu0 0.0
          %2730 = vmatprep.subr.mxu0 0.0
          %2731 = vmatpush2.msra.mxu0 0.0
          %2732 = vmatprep.subr.mxu0 0.0
          %2733 = vmatpush2.msra.mxu0 0.0
          %2734 = vmatprep.subr.mxu0 0.0
          %2735 = vmatpush2.msra.mxu0 0.0
          %2736 = vmatprep.subr.mxu0 0.0
          %2737 = vmatpush2.msra.mxu0 0.0
          %2738 = vmatprep.subr.mxu0 0.0
          %2739 = vmatpush2.msra.mxu0 0.0
          %2740 = vmatprep.subr.mxu0 0.0
          %2741 = vmatpush2.msra.mxu0 0.0
          %2742 = vmatprep.subr.mxu0 0.0
          %2743 = vmatpush2.msra.mxu0 0.0
          %2744 = vmatprep.subr.mxu0 0.0
          %2745 = vmatpush2.msra.mxu0 0.0
          %2746 = vmatprep.subr.mxu0 0.0
          %2747 = vmatpush2.msra.mxu0 0.0
          %2748 = vmatprep.subr.mxu0 0.0
          %2749 = vmatpush2.msra.mxu0 0.0
          %2750 = vmatprep.subr.mxu0 0.0
          %2751 = vmatpush2.msra.mxu0 0.0
          %2752 = vmatprep.subr.mxu0 0.0
          %2753 = vmatpush2.msra.mxu0 0.0
          %2754 = vmatprep.mubr.f32.mxu0 0.0
          %2755 = vmatmul.mubr.f32.gmra.mxu0 %v2657
          %v2756 = vpop.f32.mrf.mxu0
          %v2757 = vadd.f32 0.0, %v2756
          %v2758 = vpop.f32.mrf.mxu0
          %2759 = vmatprep.mubr.f32.mxu0 0.0
          %2760 = vmatmul.mubr.f32.gmra.mxu0 %v2658
          %v2761 = vpop.f32.mrf.mxu0
          %v2762 = vadd.f32 0.0, %v2761
          %v2763 = vpop.f32.mrf.mxu0
          %2764 = vmatprep.mubr.f32.mxu0 0.0
          %2765 = vmatmul.mubr.f32.gmra.mxu0 %v2659
          %v2766 = vpop.f32.mrf.mxu0
          %v2767 = vadd.f32 0.0, %v2766
          %v2768 = vpop.f32.mrf.mxu0
          %2769 = vmatprep.mubr.f32.mxu0 0.0
          %2770 = vmatmul.mubr.f32.gmra.mxu0 %v2660
          %v2771 = vpop.f32.mrf.mxu0
          %v2772 = vadd.f32 0.0, %v2771
          %v2773 = vpop.f32.mrf.mxu0
          %2774 = vmatprep.mubr.f32.mxu0 0.0
          %2775 = vmatmul.mubr.f32.gmra.mxu0 %v2661
          %v2776 = vpop.f32.mrf.mxu0
          %v2777 = vadd.f32 0.0, %v2776
          %v2778 = vpop.f32.mrf.mxu0
          %2779 = vmatprep.mubr.f32.mxu0 0.0
          %2780 = vmatmul.mubr.f32.gmra.mxu0 %v2662
          %v2781 = vpop.f32.mrf.mxu0
          %v2782 = vadd.f32 0.0, %v2781
          %v2783 = vpop.f32.mrf.mxu0
          %2784 = vmatprep.mubr.f32.mxu0 0.0
          %2785 = vmatmul.mubr.f32.gmra.mxu0 %v2663
          %v2786 = vpop.f32.mrf.mxu0
          %v2787 = vadd.f32 0.0, %v2786
          %v2788 = vpop.f32.mrf.mxu0
          %2789 = vmatprep.mubr.f32.mxu0 0.0
          %2790 = vmatmul.mubr.f32.gmra.mxu0 %v2664
          %v2791 = vpop.f32.mrf.mxu0
          %v2792 = vadd.f32 0.0, %v2791
          %v2793 = vpop.f32.mrf.mxu0
          %2794 = vmatprep.mubr.f32.mxu0 0.0
          %2795 = vmatmul.mubr.f32.gmra.mxu0 %v2665
          %v2796 = vpop.f32.mrf.mxu0
          %v2797 = vadd.f32 0.0, %v2796
          %v2798 = vpop.f32.mrf.mxu0
          %2799 = vmatprep.mubr.f32.mxu0 0.0
          %2800 = vmatmul.mubr.f32.gmra.mxu0 %v2666
          %v2801 = vpop.f32.mrf.mxu0
          %v2802 = vadd.f32 0.0, %v2801
          %v2803 = vpop.f32.mrf.mxu0
          %2804 = vmatprep.mubr.f32.mxu0 0.0
          %2805 = vmatmul.mubr.f32.gmra.mxu0 %v2667
          %v2806 = vpop.f32.mrf.mxu0
          %v2807 = vadd.f32 0.0, %v2806
          %v2808 = vpop.f32.mrf.mxu0
          %2809 = vmatprep.mubr.f32.mxu0 0.0
          %2810 = vmatmul.mubr.f32.gmra.mxu0 %v2668
          %v2811 = vpop.f32.mrf.mxu0
          %v2812 = vadd.f32 0.0, %v2811
          %v2813 = vpop.f32.mrf.mxu0
          %2814 = vmatprep.mubr.f32.mxu0 0.0
          %2815 = vmatmul.mubr.f32.gmra.mxu0 %v2669
          %v2816 = vpop.f32.mrf.mxu0
          %v2817 = vadd.f32 0.0, %v2816
          %v2818 = vpop.f32.mrf.mxu0
          %2819 = vmatprep.mubr.f32.mxu0 0.0
          %2820 = vmatmul.mubr.f32.gmra.mxu0 %v2670
          %v2821 = vpop.f32.mrf.mxu0
          %v2822 = vadd.f32 0.0, %v2821
          %v2823 = vpop.f32.mrf.mxu0
          %2824 = vmatprep.mubr.f32.mxu0 0.0
          %2825 = vmatmul.mubr.f32.gmra.mxu0 %v2671
          %v2826 = vpop.f32.mrf.mxu0
          %v2827 = vadd.f32 0.0, %v2826
          %v2828 = vpop.f32.mrf.mxu0
          %2829 = vmatprep.mubr.f32.mxu0 0.0
          %2830 = vmatmul.mubr.f32.gmra.mxu0 %v2672
          %v2831 = vpop.f32.mrf.mxu0
          %v2832 = vadd.f32 0.0, %v2831
          %v2833 = vpop.f32.mrf.mxu0
          %2834 = vdwg.mxu0
          %v2835 = vadd.f32 %v1903, %v2757
          %v2836 = vadd.f32 %v1904, %v2762
          %v2837 = vadd.f32 %v1905, %v2767
          %v2838 = vadd.f32 %v1906, %v2772
          %v2839 = vadd.f32 %v1907, %v2777
          %v2840 = vadd.f32 %v1908, %v2782
          %v2841 = vadd.f32 %v1909, %v2787
          %v2842 = vadd.f32 %v1910, %v2792
          %v2843 = vadd.f32 %v1911, %v2797
          %v2844 = vadd.f32 %v1912, %v2802
          %v2845 = vadd.f32 %v1913, %v2807
          %v2846 = vadd.f32 %v1914, %v2812
          %v2847 = vadd.f32 %v1915, %v2817
          %v2848 = vadd.f32 %v1916, %v2822
          %v2849 = vadd.f32 %v1917, %v2827
          %v2850 = vadd.f32 %v1918, %v2832
        $region61: #{tpu_custom_call.1} parent=55 // loop_footer
          %s1902 = sadd.s32 1, %s1898
        $region62: #{tpu_custom_call.1} parent=55 // loop_footer_branch
          %1897 = sbr.rel target = $region58
        $region63: #{tpu_custom_call.1} parent=55 // loop_exit
          _
        %v2851 = vld [vmem:[%s407] sm:$0x7]
        %vm2852 = vcmask 23552
        %v2853 = vsel %vm2852, %v414, 0
        %v2855 = vsel %vm2852, %v415, 0
        %v2857 = vsel %vm2852, %v416, 0
        %v2859 = vsel %vm2852, %v417, 0
        %v2861 = vsel %vm2852, %v418, 0
        %v2863 = vsel %vm2852, %v419, 0
        %v2865 = vsel %vm2852, %v420, 0
        %v2867 = vsel %vm2852, %v421, 0
        %v2869 = vsel %vm2852, %v422, 0
        %v2871 = vsel %vm2852, %v423, 0
        %v2873 = vsel %vm2852, %v424, 0
        %v2875 = vsel %vm2852, %v425, 0
        %v2877 = vsel %vm2852, %v426, 0
        %v2879 = vsel %vm2852, %v427, 0
        %v2881 = vsel %vm2852, %v428, 0
        %v2883 = vsel %vm2852, %v429, 0
        %vm2885 = vcmask 1042432
        %v2887 = vsel %vm2885, %v2851, 0
        %2889 = vmatprep.subr.mxu0 0.0
        %2890 = vmatpush1.msra.mxu0 0.0
        %2891 = vmatprep.subr.mxu0 0.0
        %2892 = vmatpush1.msra.mxu0 0.0
        %2893 = vmatprep.subr.mxu0 0.0
        %2894 = vmatpush1.msra.mxu0 0.0
        %2895 = vmatprep.subr.mxu0 0.0
        %2896 = vmatpush1.msra.mxu0 0.0
        %2897 = vmatprep.subr.mxu0 0.0
        %2898 = vmatpush1.msra.mxu0 0.0
        %2899 = vmatprep.subr.mxu0 0.0
        %2900 = vmatpush1.msra.mxu0 0.0
        %2901 = vmatprep.subr.mxu0 0.0
        %2902 = vmatpush1.msra.mxu0 0.0
        %2903 = vmatprep.subr.mxu0 0.0
        %2904 = vmatpush1.msra.mxu0 0.0
        %2905 = vmatprep.subr.mxu0 0.0
        %2906 = vmatpush1.msra.mxu0 0.0
        %2907 = vmatprep.subr.mxu0 0.0
        %2908 = vmatpush1.msra.mxu0 0.0
        %2909 = vmatprep.subr.mxu0 0.0
        %2910 = vmatpush1.msra.mxu0 0.0
        %2911 = vmatprep.subr.mxu0 0.0
        %2912 = vmatpush1.msra.mxu0 0.0
        %2913 = vmatprep.subr.mxu0 0.0
        %2914 = vmatpush1.msra.mxu0 0.0
        %2915 = vmatprep.subr.mxu0 0.0
        %2916 = vmatpush1.msra.mxu0 0.0
        %2917 = vmatprep.subr.mxu0 0.0
        %2918 = vmatpush1.msra.mxu0 0.0
        %2919 = vmatprep.subr.mxu0 0.0
        %2920 = vmatpush1.msra.mxu0 %v2887
        %2921 = vmatprep.subr.mxu0 0.0
        %2922 = vmatpush2.msra.mxu0 0.0
        %2923 = vmatprep.subr.mxu0 0.0
        %2924 = vmatpush2.msra.mxu0 0.0
        %2925 = vmatprep.subr.mxu0 0.0
        %2926 = vmatpush2.msra.mxu0 0.0
        %2927 = vmatprep.subr.mxu0 0.0
        %2928 = vmatpush2.msra.mxu0 0.0
        %2929 = vmatprep.subr.mxu0 0.0
        %2930 = vmatpush2.msra.mxu0 0.0
        %2931 = vmatprep.subr.mxu0 0.0
        %2932 = vmatpush2.msra.mxu0 0.0
        %2933 = vmatprep.subr.mxu0 0.0
        %2934 = vmatpush2.msra.mxu0 0.0
        %2935 = vmatprep.subr.mxu0 0.0
        %2936 = vmatpush2.msra.mxu0 0.0
        %2937 = vmatprep.subr.mxu0 0.0
        %2938 = vmatpush2.msra.mxu0 0.0
        %2939 = vmatprep.subr.mxu0 0.0
        %2940 = vmatpush2.msra.mxu0 0.0
        %2941 = vmatprep.subr.mxu0 0.0
        %2942 = vmatpush2.msra.mxu0 0.0
        %2943 = vmatprep.subr.mxu0 0.0
        %2944 = vmatpush2.msra.mxu0 0.0
        %2945 = vmatprep.subr.mxu0 0.0
        %2946 = vmatpush2.msra.mxu0 0.0
        %2947 = vmatprep.subr.mxu0 0.0
        %2948 = vmatpush2.msra.mxu0 0.0
        %2949 = vmatprep.subr.mxu0 0.0
        %2950 = vmatpush2.msra.mxu0 0.0
        %2951 = vmatprep.subr.mxu0 0.0
        %2952 = vmatpush2.msra.mxu0 0.0
        %2953 = vmatprep.mubr.f32.mxu0 0.0
        %2954 = vmatmul.mubr.f32.gmra.mxu0 %v2853
        %v2955 = vpop.f32.mrf.mxu0
        %v2956 = vadd.f32 %v514, %v2955
        %v2957 = vpop.f32.mrf.mxu0
        %2958 = vmatprep.mubr.f32.mxu0 0.0
        %2959 = vmatmul.mubr.f32.gmra.mxu0 %v2855
        %v2960 = vpop.f32.mrf.mxu0
        %v2961 = vadd.f32 %v514, %v2960
        %v2962 = vpop.f32.mrf.mxu0
        %2963 = vmatprep.mubr.f32.mxu0 0.0
        %2964 = vmatmul.mubr.f32.gmra.mxu0 %v2857
        %v2965 = vpop.f32.mrf.mxu0
        %v2966 = vadd.f32 %v514, %v2965
        %v2967 = vpop.f32.mrf.mxu0
        %2968 = vmatprep.mubr.f32.mxu0 0.0
        %2969 = vmatmul.mubr.f32.gmra.mxu0 %v2859
        %v2970 = vpop.f32.mrf.mxu0
        %v2971 = vadd.f32 %v514, %v2970
        %v2972 = vpop.f32.mrf.mxu0
        %2973 = vmatprep.mubr.f32.mxu0 0.0
        %2974 = vmatmul.mubr.f32.gmra.mxu0 %v2861
        %v2975 = vpop.f32.mrf.mxu0
        %v2976 = vadd.f32 %v514, %v2975
        %v2977 = vpop.f32.mrf.mxu0
        %2978 = vmatprep.mubr.f32.mxu0 0.0
        %2979 = vmatmul.mubr.f32.gmra.mxu0 %v2863
        %v2980 = vpop.f32.mrf.mxu0
        %v2981 = vadd.f32 %v514, %v2980
        %v2982 = vpop.f32.mrf.mxu0
        %2983 = vmatprep.mubr.f32.mxu0 0.0
        %2984 = vmatmul.mubr.f32.gmra.mxu0 %v2865
        %v2985 = vpop.f32.mrf.mxu0
        %v2986 = vadd.f32 %v514, %v2985
        %v2987 = vpop.f32.mrf.mxu0
        %2988 = vmatprep.mubr.f32.mxu0 0.0
        %2989 = vmatmul.mubr.f32.gmra.mxu0 %v2867
        %v2990 = vpop.f32.mrf.mxu0
        %v2991 = vadd.f32 %v514, %v2990
        %v2992 = vpop.f32.mrf.mxu0
        %2993 = vmatprep.mubr.f32.mxu0 0.0
        %2994 = vmatmul.mubr.f32.gmra.mxu0 %v2869
        %v2995 = vpop.f32.mrf.mxu0
        %v2996 = vadd.f32 %v514, %v2995
        %v2997 = vpop.f32.mrf.mxu0
        %2998 = vmatprep.mubr.f32.mxu0 0.0
        %2999 = vmatmul.mubr.f32.gmra.mxu0 %v2871
        %v3000 = vpop.f32.mrf.mxu0
        %v3001 = vadd.f32 %v514, %v3000
        %v3002 = vpop.f32.mrf.mxu0
        %3003 = vmatprep.mubr.f32.mxu0 0.0
        %3004 = vmatmul.mubr.f32.gmra.mxu0 %v2873
        %v3005 = vpop.f32.mrf.mxu0
        %v3006 = vadd.f32 %v514, %v3005
        %v3007 = vpop.f32.mrf.mxu0
        %3008 = vmatprep.mubr.f32.mxu0 0.0
        %3009 = vmatmul.mubr.f32.gmra.mxu0 %v2875
        %v3010 = vpop.f32.mrf.mxu0
        %v3011 = vadd.f32 %v514, %v3010
        %v3012 = vpop.f32.mrf.mxu0
        %3013 = vmatprep.mubr.f32.mxu0 0.0
        %3014 = vmatmul.mubr.f32.gmra.mxu0 %v2877
        %v3015 = vpop.f32.mrf.mxu0
        %v3016 = vadd.f32 %v514, %v3015
        %v3017 = vpop.f32.mrf.mxu0
        %3018 = vmatprep.mubr.f32.mxu0 0.0
        %3019 = vmatmul.mubr.f32.gmra.mxu0 %v2879
        %v3020 = vpop.f32.mrf.mxu0
        %v3021 = vadd.f32 %v514, %v3020
        %v3022 = vpop.f32.mrf.mxu0
        %3023 = vmatprep.mubr.f32.mxu0 0.0
        %3024 = vmatmul.mubr.f32.gmra.mxu0 %v2881
        %v3025 = vpop.f32.mrf.mxu0
        %v3026 = vadd.f32 %v514, %v3025
        %v3027 = vpop.f32.mrf.mxu0
        %3028 = vmatprep.mubr.f32.mxu0 0.0
        %3029 = vmatmul.mubr.f32.gmra.mxu0 %v2883
        %v3030 = vpop.f32.mrf.mxu0
        %v3031 = vadd.f32 %v514, %v3030
        %v3032 = vpop.f32.mrf.mxu0
        %3033 = vdwg.mxu0
        %v3034 = vld [vmem:[%s4] sm:$0xff]
        %v3035 = vld [vmem:[%s4 + $0x8] sm:$0xff]
        %vm3036 = vcmask 130048
        %v3038 = vsel %vm3036, %v1903, 0
        %v3041 = vsel %vm3036, %v1904, 0
        %v3044 = vsel %vm3036, %v1905, 0
        %v3047 = vsel %vm3036, %v1906, 0
        %v3050 = vsel %vm3036, %v1907, 0
        %v3053 = vsel %vm3036, %v1908, 0
        %v3056 = vsel %vm3036, %v1909, 0
        %v3059 = vsel %vm3036, %v1910, 0
        %v3062 = vsel %vm3036, %v1911, 0
        %v3065 = vsel %vm3036, %v1912, 0
        %v3068 = vsel %vm3036, %v1913, 0
        %v3071 = vsel %vm3036, %v1914, 0
        %v3074 = vsel %vm3036, %v1915, 0
        %v3077 = vsel %vm3036, %v1916, 0
        %v3080 = vsel %vm3036, %v1917, 0
        %v3083 = vsel %vm3036, %v1918, 0
        %3085 = vmatprep.subr.mxu0 0.0
        %3086 = vmatpush1.msra.mxu0 0.0
        %3087 = vmatprep.subr.mxu0 0.0
        %3088 = vmatpush1.msra.mxu0 0.0
        %3089 = vmatprep.subr.mxu0 0.0
        %3090 = vmatpush1.msra.mxu0 0.0
        %3091 = vmatprep.subr.mxu0 0.0
        %3092 = vmatpush1.msra.mxu0 0.0
        %3093 = vmatprep.subr.mxu0 0.0
        %3094 = vmatpush1.msra.mxu0 0.0
        %3095 = vmatprep.subr.mxu0 0.0
        %3096 = vmatpush1.msra.mxu0 0.0
        %3097 = vmatprep.subr.mxu0 0.0
        %3098 = vmatpush1.msra.mxu0 0.0
        %3099 = vmatprep.subr.mxu0 0.0
        %3100 = vmatpush1.msra.mxu0 0.0
        %3101 = vmatprep.subr.mxu0 0.0
        %3102 = vmatpush1.msra.mxu0 0.0
        %3103 = vmatprep.subr.mxu0 0.0
        %3104 = vmatpush1.msra.mxu0 0.0
        %3105 = vmatprep.subr.mxu0 0.0
        %3106 = vmatpush1.msra.mxu0 0.0
        %3107 = vmatprep.subr.mxu0 0.0
        %3108 = vmatpush1.msra.mxu0 0.0
        %3109 = vmatprep.subr.mxu0 0.0
        %3110 = vmatpush1.msra.mxu0 0.0
        %3111 = vmatprep.subr.mxu0 0.0
        %3112 = vmatpush1.msra.mxu0 0.0
        %3113 = vmatprep.subr.mxu0 0.0
        %3114 = vmatpush1.msra.mxu0 %v3035
        %3115 = vmatprep.subr.mxu0 0.0
        %3116 = vmatpush1.msra.mxu0 %v3034
        %3117 = vmatprep.subr.mxu0 0.0
        %3118 = vmatpush2.msra.mxu0 0.0
        %3119 = vmatprep.subr.mxu0 0.0
        %3120 = vmatpush2.msra.mxu0 0.0
        %3121 = vmatprep.subr.mxu0 0.0
        %3122 = vmatpush2.msra.mxu0 0.0
        %3123 = vmatprep.subr.mxu0 0.0
        %3124 = vmatpush2.msra.mxu0 0.0
        %3125 = vmatprep.subr.mxu0 0.0
        %3126 = vmatpush2.msra.mxu0 0.0
        %3127 = vmatprep.subr.mxu0 0.0
        %3128 = vmatpush2.msra.mxu0 0.0
        %3129 = vmatprep.subr.mxu0 0.0
        %3130 = vmatpush2.msra.mxu0 0.0
        %3131 = vmatprep.subr.mxu0 0.0
        %3132 = vmatpush2.msra.mxu0 0.0
        %3133 = vmatprep.subr.mxu0 0.0
        %3134 = vmatpush2.msra.mxu0 0.0
        %3135 = vmatprep.subr.mxu0 0.0
        %3136 = vmatpush2.msra.mxu0 0.0
        %3137 = vmatprep.subr.mxu0 0.0
        %3138 = vmatpush2.msra.mxu0 0.0
        %3139 = vmatprep.subr.mxu0 0.0
        %3140 = vmatpush2.msra.mxu0 0.0
        %3141 = vmatprep.subr.mxu0 0.0
        %3142 = vmatpush2.msra.mxu0 0.0
        %3143 = vmatprep.subr.mxu0 0.0
        %3144 = vmatpush2.msra.mxu0 0.0
        %3145 = vmatprep.subr.mxu0 0.0
        %3146 = vmatpush2.msra.mxu0 0.0
        %3147 = vmatprep.subr.mxu0 0.0
        %3148 = vmatpush2.msra.mxu0 0.0
        %3149 = vmatprep.mubr.f32.mxu0 0.0
        %3150 = vmatmul.mubr.f32.gmra.mxu0 %v3038
        %v3151 = vpop.f32.mrf.mxu0
        %v3152 = vadd.f32 0.0, %v3151
        %v3153 = vpop.f32.mrf.mxu0
        %3154 = vmatprep.mubr.f32.mxu0 0.0
        %3155 = vmatmul.mubr.f32.gmra.mxu0 %v3041
        %v3156 = vpop.f32.mrf.mxu0
        %v3157 = vadd.f32 0.0, %v3156
        %v3158 = vpop.f32.mrf.mxu0
        %3159 = vmatprep.mubr.f32.mxu0 0.0
        %3160 = vmatmul.mubr.f32.gmra.mxu0 %v3044
        %v3161 = vpop.f32.mrf.mxu0
        %v3162 = vadd.f32 0.0, %v3161
        %v3163 = vpop.f32.mrf.mxu0
        %3164 = vmatprep.mubr.f32.mxu0 0.0
        %3165 = vmatmul.mubr.f32.gmra.mxu0 %v3047
        %v3166 = vpop.f32.mrf.mxu0
        %v3167 = vadd.f32 0.0, %v3166
        %v3168 = vpop.f32.mrf.mxu0
        %3169 = vmatprep.mubr.f32.mxu0 0.0
        %3170 = vmatmul.mubr.f32.gmra.mxu0 %v3050
        %v3171 = vpop.f32.mrf.mxu0
        %v3172 = vadd.f32 0.0, %v3171
        %v3173 = vpop.f32.mrf.mxu0
        %3174 = vmatprep.mubr.f32.mxu0 0.0
        %3175 = vmatmul.mubr.f32.gmra.mxu0 %v3053
        %v3176 = vpop.f32.mrf.mxu0
        %v3177 = vadd.f32 0.0, %v3176
        %v3178 = vpop.f32.mrf.mxu0
        %3179 = vmatprep.mubr.f32.mxu0 0.0
        %3180 = vmatmul.mubr.f32.gmra.mxu0 %v3056
        %v3181 = vpop.f32.mrf.mxu0
        %v3182 = vadd.f32 0.0, %v3181
        %v3183 = vpop.f32.mrf.mxu0
        %3184 = vmatprep.mubr.f32.mxu0 0.0
        %3185 = vmatmul.mubr.f32.gmra.mxu0 %v3059
        %v3186 = vpop.f32.mrf.mxu0
        %v3187 = vadd.f32 0.0, %v3186
        %v3188 = vpop.f32.mrf.mxu0
        %3189 = vmatprep.mubr.f32.mxu0 0.0
        %3190 = vmatmul.mubr.f32.gmra.mxu0 %v3062
        %v3191 = vpop.f32.mrf.mxu0
        %v3192 = vadd.f32 0.0, %v3191
        %v3193 = vpop.f32.mrf.mxu0
        %3194 = vmatprep.mubr.f32.mxu0 0.0
        %3195 = vmatmul.mubr.f32.gmra.mxu0 %v3065
        %v3196 = vpop.f32.mrf.mxu0
        %v3197 = vadd.f32 0.0, %v3196
        %v3198 = vpop.f32.mrf.mxu0
        %3199 = vmatprep.mubr.f32.mxu0 0.0
        %3200 = vmatmul.mubr.f32.gmra.mxu0 %v3068
        %v3201 = vpop.f32.mrf.mxu0
        %v3202 = vadd.f32 0.0, %v3201
        %v3203 = vpop.f32.mrf.mxu0
        %3204 = vmatprep.mubr.f32.mxu0 0.0
        %3205 = vmatmul.mubr.f32.gmra.mxu0 %v3071
        %v3206 = vpop.f32.mrf.mxu0
        %v3207 = vadd.f32 0.0, %v3206
        %v3208 = vpop.f32.mrf.mxu0
        %3209 = vmatprep.mubr.f32.mxu0 0.0
        %3210 = vmatmul.mubr.f32.gmra.mxu0 %v3074
        %v3211 = vpop.f32.mrf.mxu0
        %v3212 = vadd.f32 0.0, %v3211
        %v3213 = vpop.f32.mrf.mxu0
        %3214 = vmatprep.mubr.f32.mxu0 0.0
        %3215 = vmatmul.mubr.f32.gmra.mxu0 %v3077
        %v3216 = vpop.f32.mrf.mxu0
        %v3217 = vadd.f32 0.0, %v3216
        %v3218 = vpop.f32.mrf.mxu0
        %3219 = vmatprep.mubr.f32.mxu0 0.0
        %3220 = vmatmul.mubr.f32.gmra.mxu0 %v3080
        %v3221 = vpop.f32.mrf.mxu0
        %v3222 = vadd.f32 0.0, %v3221
        %v3223 = vpop.f32.mrf.mxu0
        %3224 = vmatprep.mubr.f32.mxu0 0.0
        %3225 = vmatmul.mubr.f32.gmra.mxu0 %v3083
        %v3226 = vpop.f32.mrf.mxu0
        %v3227 = vadd.f32 0.0, %v3226
        %v3228 = vpop.f32.mrf.mxu0
        %3229 = vdwg.mxu0
        %v3230 = vadd.f32 %v2956, %v3152
        %v3231 = vadd.f32 %v2961, %v3157
        %v3232 = vadd.f32 %v2966, %v3162
        %v3233 = vadd.f32 %v2971, %v3167
        %v3234 = vadd.f32 %v2976, %v3172
        %v3235 = vadd.f32 %v2981, %v3177
        %v3236 = vadd.f32 %v2986, %v3182
        %v3237 = vadd.f32 %v2991, %v3187
        %v3238 = vadd.f32 %v2996, %v3192
        %v3239 = vadd.f32 %v3001, %v3197
        %v3240 = vadd.f32 %v3006, %v3202
        %v3241 = vadd.f32 %v3011, %v3207
        %v3242 = vadd.f32 %v3016, %v3212
        %v3243 = vadd.f32 %v3021, %v3217
        %v3244 = vadd.f32 %v3026, %v3222
        %v3245 = vadd.f32 %v3031, %v3227
        %v3246 = vmax.f32 %v3230, 0.0
        %v3247 = vmax.f32 %v3231, 0.0
        %v3248 = vmax.f32 %v3232, 0.0
        %v3249 = vmax.f32 %v3233, 0.0
        %v3250 = vmax.f32 %v3234, 0.0
        %v3251 = vmax.f32 %v3235, 0.0
        %v3252 = vmax.f32 %v3236, 0.0
        %v3253 = vmax.f32 %v3237, 0.0
        %v3254 = vmax.f32 %v3238, 0.0
        %v3255 = vmax.f32 %v3239, 0.0
        %v3256 = vmax.f32 %v3240, 0.0
        %v3257 = vmax.f32 %v3241, 0.0
        %v3258 = vmax.f32 %v3242, 0.0
        %v3259 = vmax.f32 %v3243, 0.0
        %v3260 = vmax.f32 %v3244, 0.0
        %v3261 = vmax.f32 %v3245, 0.0
        %v3262 = vld [vmem:[%s5] sm:$0xff]
        %v3263 = vld [vmem:[%s5 + $0x8] sm:$0xff]
        %v3264 = vld [vmem:[%s5 + $0x10] sm:$0xff]
        %v3265 = vld [vmem:[%s5 + $0x18] sm:$0xff]
        %v3266 = vld [vmem:[%s6] sm:$0x1]
        %v3268 = vlaneseq
        %v3269 = vshrl.u32 %v3268, 7
        %v3270 = vsub.s32 0, %v3269
        %v3271 = vrot.slane %v3266, %v3270
        %vm3273 = vcmask 261120
        %v3275 = vsel %vm3273, %v3246, 0
        %v3278 = vsel %vm3273, %v3247, 0
        %v3281 = vsel %vm3273, %v3248, 0
        %v3284 = vsel %vm3273, %v3249, 0
        %v3287 = vsel %vm3273, %v3250, 0
        %v3290 = vsel %vm3273, %v3251, 0
        %v3293 = vsel %vm3273, %v3252, 0
        %v3296 = vsel %vm3273, %v3253, 0
        %v3299 = vsel %vm3273, %v3254, 0
        %v3302 = vsel %vm3273, %v3255, 0
        %v3305 = vsel %vm3273, %v3256, 0
        %v3308 = vsel %vm3273, %v3257, 0
        %v3311 = vsel %vm3273, %v3258, 0
        %v3314 = vsel %vm3273, %v3259, 0
        %v3317 = vsel %vm3273, %v3260, 0
        %v3320 = vsel %vm3273, %v3261, 0
        %3322 = vmatprep.subr.mxu0 0.0
        %3323 = vmatpush1.msra.mxu0 0.0
        %3324 = vmatprep.subr.mxu0 0.0
        %3325 = vmatpush1.msra.mxu0 0.0
        %3326 = vmatprep.subr.mxu0 0.0
        %3327 = vmatpush1.msra.mxu0 0.0
        %3328 = vmatprep.subr.mxu0 0.0
        %3329 = vmatpush1.msra.mxu0 0.0
        %3330 = vmatprep.subr.mxu0 0.0
        %3331 = vmatpush1.msra.mxu0 0.0
        %3332 = vmatprep.subr.mxu0 0.0
        %3333 = vmatpush1.msra.mxu0 0.0
        %3334 = vmatprep.subr.mxu0 0.0
        %3335 = vmatpush1.msra.mxu0 0.0
        %3336 = vmatprep.subr.mxu0 0.0
        %3337 = vmatpush1.msra.mxu0 0.0
        %3338 = vmatprep.subr.mxu0 0.0
        %3339 = vmatpush1.msra.mxu0 0.0
        %3340 = vmatprep.subr.mxu0 0.0
        %3341 = vmatpush1.msra.mxu0 0.0
        %3342 = vmatprep.subr.mxu0 0.0
        %3343 = vmatpush1.msra.mxu0 0.0
        %3344 = vmatprep.subr.mxu0 0.0
        %3345 = vmatpush1.msra.mxu0 0.0
        %3346 = vmatprep.subr.mxu0 0.0
        %3347 = vmatpush1.msra.mxu0 %v3265
        %3348 = vmatprep.subr.mxu0 0.0
        %3349 = vmatpush1.msra.mxu0 %v3264
        %3350 = vmatprep.subr.mxu0 0.0
        %3351 = vmatpush1.msra.mxu0 %v3263
        %3352 = vmatprep.subr.mxu0 0.0
        %3353 = vmatpush1.msra.mxu0 %v3262
        %3354 = vmatprep.subr.mxu0 0.0
        %3355 = vmatpush2.msra.mxu0 0.0
        %3356 = vmatprep.subr.mxu0 0.0
        %3357 = vmatpush2.msra.mxu0 0.0
        %3358 = vmatprep.subr.mxu0 0.0
        %3359 = vmatpush2.msra.mxu0 0.0
        %3360 = vmatprep.subr.mxu0 0.0
        %3361 = vmatpush2.msra.mxu0 0.0
        %3362 = vmatprep.subr.mxu0 0.0
        %3363 = vmatpush2.msra.mxu0 0.0
        %3364 = vmatprep.subr.mxu0 0.0
        %3365 = vmatpush2.msra.mxu0 0.0
        %3366 = vmatprep.subr.mxu0 0.0
        %3367 = vmatpush2.msra.mxu0 0.0
        %3368 = vmatprep.subr.mxu0 0.0
        %3369 = vmatpush2.msra.mxu0 0.0
        %3370 = vmatprep.subr.mxu0 0.0
        %3371 = vmatpush2.msra.mxu0 0.0
        %3372 = vmatprep.subr.mxu0 0.0
        %3373 = vmatpush2.msra.mxu0 0.0
        %3374 = vmatprep.subr.mxu0 0.0
        %3375 = vmatpush2.msra.mxu0 0.0
        %3376 = vmatprep.subr.mxu0 0.0
        %3377 = vmatpush2.msra.mxu0 0.0
        %3378 = vmatprep.subr.mxu0 0.0
        %3379 = vmatpush2.msra.mxu0 0.0
        %3380 = vmatprep.subr.mxu0 0.0
        %3381 = vmatpush2.msra.mxu0 0.0
        %3382 = vmatprep.subr.mxu0 0.0
        %3383 = vmatpush2.msra.mxu0 0.0
        %3384 = vmatprep.subr.mxu0 0.0
        %3385 = vmatpush2.msra.mxu0 0.0
        %3386 = vmatprep.mubr.f32.mxu0 0.0
        %3387 = vmatmul.mubr.f32.gmra.mxu0 %v3275
        %v3388 = vpop.f32.mrf.mxu0
        %v3389 = vadd.f32 %v3271, %v3388
        %v3390 = vpop.f32.mrf.mxu0
        %3391 = vmatprep.mubr.f32.mxu0 0.0
        %3392 = vmatmul.mubr.f32.gmra.mxu0 %v3278
        %v3393 = vpop.f32.mrf.mxu0
        %v3394 = vadd.f32 %v3271, %v3393
        %v3395 = vpop.f32.mrf.mxu0
        %3396 = vmatprep.mubr.f32.mxu0 0.0
        %3397 = vmatmul.mubr.f32.gmra.mxu0 %v3281
        %v3398 = vpop.f32.mrf.mxu0
        %v3399 = vadd.f32 %v3271, %v3398
        %v3400 = vpop.f32.mrf.mxu0
        %3401 = vmatprep.mubr.f32.mxu0 0.0
        %3402 = vmatmul.mubr.f32.gmra.mxu0 %v3284
        %v3403 = vpop.f32.mrf.mxu0
        %v3404 = vadd.f32 %v3271, %v3403
        %v3405 = vpop.f32.mrf.mxu0
        %3406 = vmatprep.mubr.f32.mxu0 0.0
        %3407 = vmatmul.mubr.f32.gmra.mxu0 %v3287
        %v3408 = vpop.f32.mrf.mxu0
        %v3409 = vadd.f32 %v3271, %v3408
        %v3410 = vpop.f32.mrf.mxu0
        %3411 = vmatprep.mubr.f32.mxu0 0.0
        %3412 = vmatmul.mubr.f32.gmra.mxu0 %v3290
        %v3413 = vpop.f32.mrf.mxu0
        %v3414 = vadd.f32 %v3271, %v3413
        %v3415 = vpop.f32.mrf.mxu0
        %3416 = vmatprep.mubr.f32.mxu0 0.0
        %3417 = vmatmul.mubr.f32.gmra.mxu0 %v3293
        %v3418 = vpop.f32.mrf.mxu0
        %v3419 = vadd.f32 %v3271, %v3418
        %v3420 = vpop.f32.mrf.mxu0
        %3421 = vmatprep.mubr.f32.mxu0 0.0
        %3422 = vmatmul.mubr.f32.gmra.mxu0 %v3296
        %v3423 = vpop.f32.mrf.mxu0
        %v3424 = vadd.f32 %v3271, %v3423
        %v3425 = vpop.f32.mrf.mxu0
        %3426 = vmatprep.mubr.f32.mxu0 0.0
        %3427 = vmatmul.mubr.f32.gmra.mxu0 %v3299
        %v3428 = vpop.f32.mrf.mxu0
        %v3429 = vadd.f32 %v3271, %v3428
        %v3430 = vpop.f32.mrf.mxu0
        %3431 = vmatprep.mubr.f32.mxu0 0.0
        %3432 = vmatmul.mubr.f32.gmra.mxu0 %v3302
        %v3433 = vpop.f32.mrf.mxu0
        %v3434 = vadd.f32 %v3271, %v3433
        %v3435 = vpop.f32.mrf.mxu0
        %3436 = vmatprep.mubr.f32.mxu0 0.0
        %3437 = vmatmul.mubr.f32.gmra.mxu0 %v3305
        %v3438 = vpop.f32.mrf.mxu0
        %v3439 = vadd.f32 %v3271, %v3438
        %v3440 = vpop.f32.mrf.mxu0
        %3441 = vmatprep.mubr.f32.mxu0 0.0
        %3442 = vmatmul.mubr.f32.gmra.mxu0 %v3308
        %v3443 = vpop.f32.mrf.mxu0
        %v3444 = vadd.f32 %v3271, %v3443
        %v3445 = vpop.f32.mrf.mxu0
        %3446 = vmatprep.mubr.f32.mxu0 0.0
        %3447 = vmatmul.mubr.f32.gmra.mxu0 %v3311
        %v3448 = vpop.f32.mrf.mxu0
        %v3449 = vadd.f32 %v3271, %v3448
        %v3450 = vpop.f32.mrf.mxu0
        %3451 = vmatprep.mubr.f32.mxu0 0.0
        %3452 = vmatmul.mubr.f32.gmra.mxu0 %v3314
        %v3453 = vpop.f32.mrf.mxu0
        %v3454 = vadd.f32 %v3271, %v3453
        %v3455 = vpop.f32.mrf.mxu0
        %3456 = vmatprep.mubr.f32.mxu0 0.0
        %3457 = vmatmul.mubr.f32.gmra.mxu0 %v3317
        %v3458 = vpop.f32.mrf.mxu0
        %v3459 = vadd.f32 %v3271, %v3458
        %v3460 = vpop.f32.mrf.mxu0
        %3461 = vmatprep.mubr.f32.mxu0 0.0
        %3462 = vmatmul.mubr.f32.gmra.mxu0 %v3320
        %v3463 = vpop.f32.mrf.mxu0
        %v3464 = vadd.f32 %v3271, %v3463
        %v3465 = vpop.f32.mrf.mxu0
        %3466 = vdwg.mxu0
        %v3467 = vmax.f32 %v3389, 0.0
        %v3468 = vmax.f32 %v3394, 0.0
        %v3469 = vmax.f32 %v3399, 0.0
        %v3470 = vmax.f32 %v3404, 0.0
        %v3471 = vmax.f32 %v3409, 0.0
        %v3472 = vmax.f32 %v3414, 0.0
        %v3473 = vmax.f32 %v3419, 0.0
        %v3474 = vmax.f32 %v3424, 0.0
        %v3475 = vmax.f32 %v3429, 0.0
        %v3476 = vmax.f32 %v3434, 0.0
        %v3477 = vmax.f32 %v3439, 0.0
        %v3478 = vmax.f32 %v3444, 0.0
        %v3479 = vmax.f32 %v3449, 0.0
        %v3480 = vmax.f32 %v3454, 0.0
        %v3481 = vmax.f32 %v3459, 0.0
        %v3482 = vmax.f32 %v3464, 0.0
        %s3483 = scalar_lea.vmem %s5, 32
        %v3484 = vld [vmem:[%s3483] sm:$0xff]
        %v3485 = vld [vmem:[%s3483 + $0x8] sm:$0xff]
        %v3486 = vld [vmem:[%s3483 + $0x10] sm:$0xff]
        %v3487 = vld [vmem:[%s3483 + $0x18] sm:$0xff]
        %s3488 = scalar_lea.vmem %s6, 1
        %v3489 = vld [vmem:[%s3488] sm:$0x1]
        %v3491 = vlaneseq
        %v3492 = vshrl.u32 %v3491, 7
        %v3493 = vsub.s32 0, %v3492
        %v3494 = vrot.slane %v3489, %v3493
        %v3497 = vsel %vm3273, %v3467, 0
        %v3500 = vsel %vm3273, %v3468, 0
        %v3503 = vsel %vm3273, %v3469, 0
        %v3506 = vsel %vm3273, %v3470, 0
        %v3509 = vsel %vm3273, %v3471, 0
        %v3512 = vsel %vm3273, %v3472, 0
        %v3515 = vsel %vm3273, %v3473, 0
        %v3518 = vsel %vm3273, %v3474, 0
        %v3521 = vsel %vm3273, %v3475, 0
        %v3524 = vsel %vm3273, %v3476, 0
        %v3527 = vsel %vm3273, %v3477, 0
        %v3530 = vsel %vm3273, %v3478, 0
        %v3533 = vsel %vm3273, %v3479, 0
        %v3536 = vsel %vm3273, %v3480, 0
        %v3539 = vsel %vm3273, %v3481, 0
        %v3542 = vsel %vm3273, %v3482, 0
        %3544 = vmatprep.subr.mxu0 0.0
        %3545 = vmatpush1.msra.mxu0 0.0
        %3546 = vmatprep.subr.mxu0 0.0
        %3547 = vmatpush1.msra.mxu0 0.0
        %3548 = vmatprep.subr.mxu0 0.0
        %3549 = vmatpush1.msra.mxu0 0.0
        %3550 = vmatprep.subr.mxu0 0.0
        %3551 = vmatpush1.msra.mxu0 0.0
        %3552 = vmatprep.subr.mxu0 0.0
        %3553 = vmatpush1.msra.mxu0 0.0
        %3554 = vmatprep.subr.mxu0 0.0
        %3555 = vmatpush1.msra.mxu0 0.0
        %3556 = vmatprep.subr.mxu0 0.0
        %3557 = vmatpush1.msra.mxu0 0.0
        %3558 = vmatprep.subr.mxu0 0.0
        %3559 = vmatpush1.msra.mxu0 0.0
        %3560 = vmatprep.subr.mxu0 0.0
        %3561 = vmatpush1.msra.mxu0 0.0
        %3562 = vmatprep.subr.mxu0 0.0
        %3563 = vmatpush1.msra.mxu0 0.0
        %3564 = vmatprep.subr.mxu0 0.0
        %3565 = vmatpush1.msra.mxu0 0.0
        %3566 = vmatprep.subr.mxu0 0.0
        %3567 = vmatpush1.msra.mxu0 0.0
        %3568 = vmatprep.subr.mxu0 0.0
        %3569 = vmatpush1.msra.mxu0 %v3487
        %3570 = vmatprep.subr.mxu0 0.0
        %3571 = vmatpush1.msra.mxu0 %v3486
        %3572 = vmatprep.subr.mxu0 0.0
        %3573 = vmatpush1.msra.mxu0 %v3485
        %3574 = vmatprep.subr.mxu0 0.0
        %3575 = vmatpush1.msra.mxu0 %v3484
        %3576 = vmatprep.subr.mxu0 0.0
        %3577 = vmatpush2.msra.mxu0 0.0
        %3578 = vmatprep.subr.mxu0 0.0
        %3579 = vmatpush2.msra.mxu0 0.0
        %3580 = vmatprep.subr.mxu0 0.0
        %3581 = vmatpush2.msra.mxu0 0.0
        %3582 = vmatprep.subr.mxu0 0.0
        %3583 = vmatpush2.msra.mxu0 0.0
        %3584 = vmatprep.subr.mxu0 0.0
        %3585 = vmatpush2.msra.mxu0 0.0
        %3586 = vmatprep.subr.mxu0 0.0
        %3587 = vmatpush2.msra.mxu0 0.0
        %3588 = vmatprep.subr.mxu0 0.0
        %3589 = vmatpush2.msra.mxu0 0.0
        %3590 = vmatprep.subr.mxu0 0.0
        %3591 = vmatpush2.msra.mxu0 0.0
        %3592 = vmatprep.subr.mxu0 0.0
        %3593 = vmatpush2.msra.mxu0 0.0
        %3594 = vmatprep.subr.mxu0 0.0
        %3595 = vmatpush2.msra.mxu0 0.0
        %3596 = vmatprep.subr.mxu0 0.0
        %3597 = vmatpush2.msra.mxu0 0.0
        %3598 = vmatprep.subr.mxu0 0.0
        %3599 = vmatpush2.msra.mxu0 0.0
        %3600 = vmatprep.subr.mxu0 0.0
        %3601 = vmatpush2.msra.mxu0 0.0
        %3602 = vmatprep.subr.mxu0 0.0
        %3603 = vmatpush2.msra.mxu0 0.0
        %3604 = vmatprep.subr.mxu0 0.0
        %3605 = vmatpush2.msra.mxu0 0.0
        %3606 = vmatprep.subr.mxu0 0.0
        %3607 = vmatpush2.msra.mxu0 0.0
        %3608 = vmatprep.mubr.f32.mxu0 0.0
        %3609 = vmatmul.mubr.f32.gmra.mxu0 %v3497
        %v3610 = vpop.f32.mrf.mxu0
        %v3611 = vadd.f32 %v3494, %v3610
        %v3612 = vpop.f32.mrf.mxu0
        %3613 = vmatprep.mubr.f32.mxu0 0.0
        %3614 = vmatmul.mubr.f32.gmra.mxu0 %v3500
        %v3615 = vpop.f32.mrf.mxu0
        %v3616 = vadd.f32 %v3494, %v3615
        %v3617 = vpop.f32.mrf.mxu0
        %3618 = vmatprep.mubr.f32.mxu0 0.0
        %3619 = vmatmul.mubr.f32.gmra.mxu0 %v3503
        %v3620 = vpop.f32.mrf.mxu0
        %v3621 = vadd.f32 %v3494, %v3620
        %v3622 = vpop.f32.mrf.mxu0
        %3623 = vmatprep.mubr.f32.mxu0 0.0
        %3624 = vmatmul.mubr.f32.gmra.mxu0 %v3506
        %v3625 = vpop.f32.mrf.mxu0
        %v3626 = vadd.f32 %v3494, %v3625
        %v3627 = vpop.f32.mrf.mxu0
        %3628 = vmatprep.mubr.f32.mxu0 0.0
        %3629 = vmatmul.mubr.f32.gmra.mxu0 %v3509
        %v3630 = vpop.f32.mrf.mxu0
        %v3631 = vadd.f32 %v3494, %v3630
        %v3632 = vpop.f32.mrf.mxu0
        %3633 = vmatprep.mubr.f32.mxu0 0.0
        %3634 = vmatmul.mubr.f32.gmra.mxu0 %v3512
        %v3635 = vpop.f32.mrf.mxu0
        %v3636 = vadd.f32 %v3494, %v3635
        %v3637 = vpop.f32.mrf.mxu0
        %3638 = vmatprep.mubr.f32.mxu0 0.0
        %3639 = vmatmul.mubr.f32.gmra.mxu0 %v3515
        %v3640 = vpop.f32.mrf.mxu0
        %v3641 = vadd.f32 %v3494, %v3640
        %v3642 = vpop.f32.mrf.mxu0
        %3643 = vmatprep.mubr.f32.mxu0 0.0
        %3644 = vmatmul.mubr.f32.gmra.mxu0 %v3518
        %v3645 = vpop.f32.mrf.mxu0
        %v3646 = vadd.f32 %v3494, %v3645
        %v3647 = vpop.f32.mrf.mxu0
        %3648 = vmatprep.mubr.f32.mxu0 0.0
        %3649 = vmatmul.mubr.f32.gmra.mxu0 %v3521
        %v3650 = vpop.f32.mrf.mxu0
        %v3651 = vadd.f32 %v3494, %v3650
        %v3652 = vpop.f32.mrf.mxu0
        %3653 = vmatprep.mubr.f32.mxu0 0.0
        %3654 = vmatmul.mubr.f32.gmra.mxu0 %v3524
        %v3655 = vpop.f32.mrf.mxu0
        %v3656 = vadd.f32 %v3494, %v3655
        %v3657 = vpop.f32.mrf.mxu0
        %3658 = vmatprep.mubr.f32.mxu0 0.0
        %3659 = vmatmul.mubr.f32.gmra.mxu0 %v3527
        %v3660 = vpop.f32.mrf.mxu0
        %v3661 = vadd.f32 %v3494, %v3660
        %v3662 = vpop.f32.mrf.mxu0
        %3663 = vmatprep.mubr.f32.mxu0 0.0
        %3664 = vmatmul.mubr.f32.gmra.mxu0 %v3530
        %v3665 = vpop.f32.mrf.mxu0
        %v3666 = vadd.f32 %v3494, %v3665
        %v3667 = vpop.f32.mrf.mxu0
        %3668 = vmatprep.mubr.f32.mxu0 0.0
        %3669 = vmatmul.mubr.f32.gmra.mxu0 %v3533
        %v3670 = vpop.f32.mrf.mxu0
        %v3671 = vadd.f32 %v3494, %v3670
        %v3672 = vpop.f32.mrf.mxu0
        %3673 = vmatprep.mubr.f32.mxu0 0.0
        %3674 = vmatmul.mubr.f32.gmra.mxu0 %v3536
        %v3675 = vpop.f32.mrf.mxu0
        %v3676 = vadd.f32 %v3494, %v3675
        %v3677 = vpop.f32.mrf.mxu0
        %3678 = vmatprep.mubr.f32.mxu0 0.0
        %3679 = vmatmul.mubr.f32.gmra.mxu0 %v3539
        %v3680 = vpop.f32.mrf.mxu0
        %v3681 = vadd.f32 %v3494, %v3680
        %v3682 = vpop.f32.mrf.mxu0
        %3683 = vmatprep.mubr.f32.mxu0 0.0
        %3684 = vmatmul.mubr.f32.gmra.mxu0 %v3542
        %v3685 = vpop.f32.mrf.mxu0
        %v3686 = vadd.f32 %v3494, %v3685
        %v3687 = vpop.f32.mrf.mxu0
        %3688 = vdwg.mxu0
        %v3689 = vadd.f32 %v3230, %v3611
        %v3690 = vadd.f32 %v3231, %v3616
        %v3691 = vadd.f32 %v3232, %v3621
        %v3692 = vadd.f32 %v3233, %v3626
        %v3693 = vadd.f32 %v3234, %v3631
        %v3694 = vadd.f32 %v3235, %v3636
        %v3695 = vadd.f32 %v3236, %v3641
        %v3696 = vadd.f32 %v3237, %v3646
        %v3697 = vadd.f32 %v3238, %v3651
        %v3698 = vadd.f32 %v3239, %v3656
        %v3699 = vadd.f32 %v3240, %v3661
        %v3700 = vadd.f32 %v3241, %v3666
        %v3701 = vadd.f32 %v3242, %v3671
        %v3702 = vadd.f32 %v3243, %v3676
        %v3703 = vadd.f32 %v3244, %v3681
        %v3704 = vadd.f32 %v3245, %v3686
        %v3705 = vmax.f32 %v3689, 0.0
        %v3706 = vmax.f32 %v3690, 0.0
        %v3707 = vmax.f32 %v3691, 0.0
        %v3708 = vmax.f32 %v3692, 0.0
        %v3709 = vmax.f32 %v3693, 0.0
        %v3710 = vmax.f32 %v3694, 0.0
        %v3711 = vmax.f32 %v3695, 0.0
        %v3712 = vmax.f32 %v3696, 0.0
        %v3713 = vmax.f32 %v3697, 0.0
        %v3714 = vmax.f32 %v3698, 0.0
        %v3715 = vmax.f32 %v3699, 0.0
        %v3716 = vmax.f32 %v3700, 0.0
        %v3717 = vmax.f32 %v3701, 0.0
        %v3718 = vmax.f32 %v3702, 0.0
        %v3719 = vmax.f32 %v3703, 0.0
        %v3720 = vmax.f32 %v3704, 0.0
        %s3721 = scalar_lea.vmem %s5, 64
        %v3722 = vld [vmem:[%s3721] sm:$0xff]
        %v3723 = vld [vmem:[%s3721 + $0x8] sm:$0xff]
        %v3724 = vld [vmem:[%s3721 + $0x10] sm:$0xff]
        %v3725 = vld [vmem:[%s3721 + $0x18] sm:$0xff]
        %s3726 = scalar_lea.vmem %s6, 2
        %v3727 = vld [vmem:[%s3726] sm:$0x1]
        %v3729 = vlaneseq
        %v3730 = vshrl.u32 %v3729, 7
        %v3731 = vsub.s32 0, %v3730
        %v3732 = vrot.slane %v3727, %v3731
        %v3735 = vsel %vm3273, %v3705, 0
        %v3738 = vsel %vm3273, %v3706, 0
        %v3741 = vsel %vm3273, %v3707, 0
        %v3744 = vsel %vm3273, %v3708, 0
        %v3747 = vsel %vm3273, %v3709, 0
        %v3750 = vsel %vm3273, %v3710, 0
        %v3753 = vsel %vm3273, %v3711, 0
        %v3756 = vsel %vm3273, %v3712, 0
        %v3759 = vsel %vm3273, %v3713, 0
        %v3762 = vsel %vm3273, %v3714, 0
        %v3765 = vsel %vm3273, %v3715, 0
        %v3768 = vsel %vm3273, %v3716, 0
        %v3771 = vsel %vm3273, %v3717, 0
        %v3774 = vsel %vm3273, %v3718, 0
        %v3777 = vsel %vm3273, %v3719, 0
        %v3780 = vsel %vm3273, %v3720, 0
        %3782 = vmatprep.subr.mxu0 0.0
        %3783 = vmatpush1.msra.mxu0 0.0
        %3784 = vmatprep.subr.mxu0 0.0
        %3785 = vmatpush1.msra.mxu0 0.0
        %3786 = vmatprep.subr.mxu0 0.0
        %3787 = vmatpush1.msra.mxu0 0.0
        %3788 = vmatprep.subr.mxu0 0.0
        %3789 = vmatpush1.msra.mxu0 0.0
        %3790 = vmatprep.subr.mxu0 0.0
        %3791 = vmatpush1.msra.mxu0 0.0
        %3792 = vmatprep.subr.mxu0 0.0
        %3793 = vmatpush1.msra.mxu0 0.0
        %3794 = vmatprep.subr.mxu0 0.0
        %3795 = vmatpush1.msra.mxu0 0.0
        %3796 = vmatprep.subr.mxu0 0.0
        %3797 = vmatpush1.msra.mxu0 0.0
        %3798 = vmatprep.subr.mxu0 0.0
        %3799 = vmatpush1.msra.mxu0 0.0
        %3800 = vmatprep.subr.mxu0 0.0
        %3801 = vmatpush1.msra.mxu0 0.0
        %3802 = vmatprep.subr.mxu0 0.0
        %3803 = vmatpush1.msra.mxu0 0.0
        %3804 = vmatprep.subr.mxu0 0.0
        %3805 = vmatpush1.msra.mxu0 0.0
        %3806 = vmatprep.subr.mxu0 0.0
        %3807 = vmatpush1.msra.mxu0 %v3725
        %3808 = vmatprep.subr.mxu0 0.0
        %3809 = vmatpush1.msra.mxu0 %v3724
        %3810 = vmatprep.subr.mxu0 0.0
        %3811 = vmatpush1.msra.mxu0 %v3723
        %3812 = vmatprep.subr.mxu0 0.0
        %3813 = vmatpush1.msra.mxu0 %v3722
        %3814 = vmatprep.subr.mxu0 0.0
        %3815 = vmatpush2.msra.mxu0 0.0
        %3816 = vmatprep.subr.mxu0 0.0
        %3817 = vmatpush2.msra.mxu0 0.0
        %3818 = vmatprep.subr.mxu0 0.0
        %3819 = vmatpush2.msra.mxu0 0.0
        %3820 = vmatprep.subr.mxu0 0.0
        %3821 = vmatpush2.msra.mxu0 0.0
        %3822 = vmatprep.subr.mxu0 0.0
        %3823 = vmatpush2.msra.mxu0 0.0
        %3824 = vmatprep.subr.mxu0 0.0
        %3825 = vmatpush2.msra.mxu0 0.0
        %3826 = vmatprep.subr.mxu0 0.0
        %3827 = vmatpush2.msra.mxu0 0.0
        %3828 = vmatprep.subr.mxu0 0.0
        %3829 = vmatpush2.msra.mxu0 0.0
        %3830 = vmatprep.subr.mxu0 0.0
        %3831 = vmatpush2.msra.mxu0 0.0
        %3832 = vmatprep.subr.mxu0 0.0
        %3833 = vmatpush2.msra.mxu0 0.0
        %3834 = vmatprep.subr.mxu0 0.0
        %3835 = vmatpush2.msra.mxu0 0.0
        %3836 = vmatprep.subr.mxu0 0.0
        %3837 = vmatpush2.msra.mxu0 0.0
        %3838 = vmatprep.subr.mxu0 0.0
        %3839 = vmatpush2.msra.mxu0 0.0
        %3840 = vmatprep.subr.mxu0 0.0
        %3841 = vmatpush2.msra.mxu0 0.0
        %3842 = vmatprep.subr.mxu0 0.0
        %3843 = vmatpush2.msra.mxu0 0.0
        %3844 = vmatprep.subr.mxu0 0.0
        %3845 = vmatpush2.msra.mxu0 0.0
        %3846 = vmatprep.mubr.f32.mxu0 0.0
        %3847 = vmatmul.mubr.f32.gmra.mxu0 %v3735
        %v3848 = vpop.f32.mrf.mxu0
        %v3849 = vadd.f32 %v3732, %v3848
        %v3850 = vpop.f32.mrf.mxu0
        %3851 = vmatprep.mubr.f32.mxu0 0.0
        %3852 = vmatmul.mubr.f32.gmra.mxu0 %v3738
        %v3853 = vpop.f32.mrf.mxu0
        %v3854 = vadd.f32 %v3732, %v3853
        %v3855 = vpop.f32.mrf.mxu0
        %3856 = vmatprep.mubr.f32.mxu0 0.0
        %3857 = vmatmul.mubr.f32.gmra.mxu0 %v3741
        %v3858 = vpop.f32.mrf.mxu0
        %v3859 = vadd.f32 %v3732, %v3858
        %v3860 = vpop.f32.mrf.mxu0
        %3861 = vmatprep.mubr.f32.mxu0 0.0
        %3862 = vmatmul.mubr.f32.gmra.mxu0 %v3744
        %v3863 = vpop.f32.mrf.mxu0
        %v3864 = vadd.f32 %v3732, %v3863
        %v3865 = vpop.f32.mrf.mxu0
        %3866 = vmatprep.mubr.f32.mxu0 0.0
        %3867 = vmatmul.mubr.f32.gmra.mxu0 %v3747
        %v3868 = vpop.f32.mrf.mxu0
        %v3869 = vadd.f32 %v3732, %v3868
        %v3870 = vpop.f32.mrf.mxu0
        %3871 = vmatprep.mubr.f32.mxu0 0.0
        %3872 = vmatmul.mubr.f32.gmra.mxu0 %v3750
        %v3873 = vpop.f32.mrf.mxu0
        %v3874 = vadd.f32 %v3732, %v3873
        %v3875 = vpop.f32.mrf.mxu0
        %3876 = vmatprep.mubr.f32.mxu0 0.0
        %3877 = vmatmul.mubr.f32.gmra.mxu0 %v3753
        %v3878 = vpop.f32.mrf.mxu0
        %v3879 = vadd.f32 %v3732, %v3878
        %v3880 = vpop.f32.mrf.mxu0
        %3881 = vmatprep.mubr.f32.mxu0 0.0
        %3882 = vmatmul.mubr.f32.gmra.mxu0 %v3756
        %v3883 = vpop.f32.mrf.mxu0
        %v3884 = vadd.f32 %v3732, %v3883
        %v3885 = vpop.f32.mrf.mxu0
        %3886 = vmatprep.mubr.f32.mxu0 0.0
        %3887 = vmatmul.mubr.f32.gmra.mxu0 %v3759
        %v3888 = vpop.f32.mrf.mxu0
        %v3889 = vadd.f32 %v3732, %v3888
        %v3890 = vpop.f32.mrf.mxu0
        %3891 = vmatprep.mubr.f32.mxu0 0.0
        %3892 = vmatmul.mubr.f32.gmra.mxu0 %v3762
        %v3893 = vpop.f32.mrf.mxu0
        %v3894 = vadd.f32 %v3732, %v3893
        %v3895 = vpop.f32.mrf.mxu0
        %3896 = vmatprep.mubr.f32.mxu0 0.0
        %3897 = vmatmul.mubr.f32.gmra.mxu0 %v3765
        %v3898 = vpop.f32.mrf.mxu0
        %v3899 = vadd.f32 %v3732, %v3898
        %v3900 = vpop.f32.mrf.mxu0
        %3901 = vmatprep.mubr.f32.mxu0 0.0
        %3902 = vmatmul.mubr.f32.gmra.mxu0 %v3768
        %v3903 = vpop.f32.mrf.mxu0
        %v3904 = vadd.f32 %v3732, %v3903
        %v3905 = vpop.f32.mrf.mxu0
        %3906 = vmatprep.mubr.f32.mxu0 0.0
        %3907 = vmatmul.mubr.f32.gmra.mxu0 %v3771
        %v3908 = vpop.f32.mrf.mxu0
        %v3909 = vadd.f32 %v3732, %v3908
        %v3910 = vpop.f32.mrf.mxu0
        %3911 = vmatprep.mubr.f32.mxu0 0.0
        %3912 = vmatmul.mubr.f32.gmra.mxu0 %v3774
        %v3913 = vpop.f32.mrf.mxu0
        %v3914 = vadd.f32 %v3732, %v3913
        %v3915 = vpop.f32.mrf.mxu0
        %3916 = vmatprep.mubr.f32.mxu0 0.0
        %3917 = vmatmul.mubr.f32.gmra.mxu0 %v3777
        %v3918 = vpop.f32.mrf.mxu0
        %v3919 = vadd.f32 %v3732, %v3918
        %v3920 = vpop.f32.mrf.mxu0
        %3921 = vmatprep.mubr.f32.mxu0 0.0
        %3922 = vmatmul.mubr.f32.gmra.mxu0 %v3780
        %v3923 = vpop.f32.mrf.mxu0
        %v3924 = vadd.f32 %v3732, %v3923
        %v3925 = vpop.f32.mrf.mxu0
        %3926 = vdwg.mxu0
        %v3927 = vmax.f32 %v3849, 0.0
        %v3928 = vmax.f32 %v3854, 0.0
        %v3929 = vmax.f32 %v3859, 0.0
        %v3930 = vmax.f32 %v3864, 0.0
        %v3931 = vmax.f32 %v3869, 0.0
        %v3932 = vmax.f32 %v3874, 0.0
        %v3933 = vmax.f32 %v3879, 0.0
        %v3934 = vmax.f32 %v3884, 0.0
        %v3935 = vmax.f32 %v3889, 0.0
        %v3936 = vmax.f32 %v3894, 0.0
        %v3937 = vmax.f32 %v3899, 0.0
        %v3938 = vmax.f32 %v3904, 0.0
        %v3939 = vmax.f32 %v3909, 0.0
        %v3940 = vmax.f32 %v3914, 0.0
        %v3941 = vmax.f32 %v3919, 0.0
        %v3942 = vmax.f32 %v3924, 0.0
        %s3943 = scalar_lea.vmem %s5, 96
        %v3944 = vld [vmem:[%s3943] sm:$0xff]
        %v3945 = vld [vmem:[%s3943 + $0x8] sm:$0xff]
        %v3946 = vld [vmem:[%s3943 + $0x10] sm:$0xff]
        %v3947 = vld [vmem:[%s3943 + $0x18] sm:$0xff]
        %s3948 = scalar_lea.vmem %s6, 3
        %v3949 = vld [vmem:[%s3948] sm:$0x1]
        %v3951 = vlaneseq
        %v3952 = vshrl.u32 %v3951, 7
        %v3953 = vsub.s32 0, %v3952
        %v3954 = vrot.slane %v3949, %v3953
        %v3957 = vsel %vm3273, %v3927, 0
        %v3960 = vsel %vm3273, %v3928, 0
        %v3963 = vsel %vm3273, %v3929, 0
        %v3966 = vsel %vm3273, %v3930, 0
        %v3969 = vsel %vm3273, %v3931, 0
        %v3972 = vsel %vm3273, %v3932, 0
        %v3975 = vsel %vm3273, %v3933, 0
        %v3978 = vsel %vm3273, %v3934, 0
        %v3981 = vsel %vm3273, %v3935, 0
        %v3984 = vsel %vm3273, %v3936, 0
        %v3987 = vsel %vm3273, %v3937, 0
        %v3990 = vsel %vm3273, %v3938, 0
        %v3993 = vsel %vm3273, %v3939, 0
        %v3996 = vsel %vm3273, %v3940, 0
        %v3999 = vsel %vm3273, %v3941, 0
        %v4002 = vsel %vm3273, %v3942, 0
        %4004 = vmatprep.subr.mxu0 0.0
        %4005 = vmatpush1.msra.mxu0 0.0
        %4006 = vmatprep.subr.mxu0 0.0
        %4007 = vmatpush1.msra.mxu0 0.0
        %4008 = vmatprep.subr.mxu0 0.0
        %4009 = vmatpush1.msra.mxu0 0.0
        %4010 = vmatprep.subr.mxu0 0.0
        %4011 = vmatpush1.msra.mxu0 0.0
        %4012 = vmatprep.subr.mxu0 0.0
        %4013 = vmatpush1.msra.mxu0 0.0
        %4014 = vmatprep.subr.mxu0 0.0
        %4015 = vmatpush1.msra.mxu0 0.0
        %4016 = vmatprep.subr.mxu0 0.0
        %4017 = vmatpush1.msra.mxu0 0.0
        %4018 = vmatprep.subr.mxu0 0.0
        %4019 = vmatpush1.msra.mxu0 0.0
        %4020 = vmatprep.subr.mxu0 0.0
        %4021 = vmatpush1.msra.mxu0 0.0
        %4022 = vmatprep.subr.mxu0 0.0
        %4023 = vmatpush1.msra.mxu0 0.0
        %4024 = vmatprep.subr.mxu0 0.0
        %4025 = vmatpush1.msra.mxu0 0.0
        %4026 = vmatprep.subr.mxu0 0.0
        %4027 = vmatpush1.msra.mxu0 0.0
        %4028 = vmatprep.subr.mxu0 0.0
        %4029 = vmatpush1.msra.mxu0 %v3947
        %4030 = vmatprep.subr.mxu0 0.0
        %4031 = vmatpush1.msra.mxu0 %v3946
        %4032 = vmatprep.subr.mxu0 0.0
        %4033 = vmatpush1.msra.mxu0 %v3945
        %4034 = vmatprep.subr.mxu0 0.0
        %4035 = vmatpush1.msra.mxu0 %v3944
        %4036 = vmatprep.subr.mxu0 0.0
        %4037 = vmatpush2.msra.mxu0 0.0
        %4038 = vmatprep.subr.mxu0 0.0
        %4039 = vmatpush2.msra.mxu0 0.0
        %4040 = vmatprep.subr.mxu0 0.0
        %4041 = vmatpush2.msra.mxu0 0.0
        %4042 = vmatprep.subr.mxu0 0.0
        %4043 = vmatpush2.msra.mxu0 0.0
        %4044 = vmatprep.subr.mxu0 0.0
        %4045 = vmatpush2.msra.mxu0 0.0
        %4046 = vmatprep.subr.mxu0 0.0
        %4047 = vmatpush2.msra.mxu0 0.0
        %4048 = vmatprep.subr.mxu0 0.0
        %4049 = vmatpush2.msra.mxu0 0.0
        %4050 = vmatprep.subr.mxu0 0.0
        %4051 = vmatpush2.msra.mxu0 0.0
        %4052 = vmatprep.subr.mxu0 0.0
        %4053 = vmatpush2.msra.mxu0 0.0
        %4054 = vmatprep.subr.mxu0 0.0
        %4055 = vmatpush2.msra.mxu0 0.0
        %4056 = vmatprep.subr.mxu0 0.0
        %4057 = vmatpush2.msra.mxu0 0.0
        %4058 = vmatprep.subr.mxu0 0.0
        %4059 = vmatpush2.msra.mxu0 0.0
        %4060 = vmatprep.subr.mxu0 0.0
        %4061 = vmatpush2.msra.mxu0 0.0
        %4062 = vmatprep.subr.mxu0 0.0
        %4063 = vmatpush2.msra.mxu0 0.0
        %4064 = vmatprep.subr.mxu0 0.0
        %4065 = vmatpush2.msra.mxu0 0.0
        %4066 = vmatprep.subr.mxu0 0.0
        %4067 = vmatpush2.msra.mxu0 0.0
        %4068 = vmatprep.mubr.f32.mxu0 0.0
        %4069 = vmatmul.mubr.f32.gmra.mxu0 %v3957
        %v4070 = vpop.f32.mrf.mxu0
        %v4071 = vadd.f32 %v3954, %v4070
        %v4072 = vpop.f32.mrf.mxu0
        %4073 = vmatprep.mubr.f32.mxu0 0.0
        %4074 = vmatmul.mubr.f32.gmra.mxu0 %v3960
        %v4075 = vpop.f32.mrf.mxu0
        %v4076 = vadd.f32 %v3954, %v4075
        %v4077 = vpop.f32.mrf.mxu0
        %4078 = vmatprep.mubr.f32.mxu0 0.0
        %4079 = vmatmul.mubr.f32.gmra.mxu0 %v3963
        %v4080 = vpop.f32.mrf.mxu0
        %v4081 = vadd.f32 %v3954, %v4080
        %v4082 = vpop.f32.mrf.mxu0
        %4083 = vmatprep.mubr.f32.mxu0 0.0
        %4084 = vmatmul.mubr.f32.gmra.mxu0 %v3966
        %v4085 = vpop.f32.mrf.mxu0
        %v4086 = vadd.f32 %v3954, %v4085
        %v4087 = vpop.f32.mrf.mxu0
        %4088 = vmatprep.mubr.f32.mxu0 0.0
        %4089 = vmatmul.mubr.f32.gmra.mxu0 %v3969
        %v4090 = vpop.f32.mrf.mxu0
        %v4091 = vadd.f32 %v3954, %v4090
        %v4092 = vpop.f32.mrf.mxu0
        %4093 = vmatprep.mubr.f32.mxu0 0.0
        %4094 = vmatmul.mubr.f32.gmra.mxu0 %v3972
        %v4095 = vpop.f32.mrf.mxu0
        %v4096 = vadd.f32 %v3954, %v4095
        %v4097 = vpop.f32.mrf.mxu0
        %4098 = vmatprep.mubr.f32.mxu0 0.0
        %4099 = vmatmul.mubr.f32.gmra.mxu0 %v3975
        %v4100 = vpop.f32.mrf.mxu0
        %v4101 = vadd.f32 %v3954, %v4100
        %v4102 = vpop.f32.mrf.mxu0
        %4103 = vmatprep.mubr.f32.mxu0 0.0
        %4104 = vmatmul.mubr.f32.gmra.mxu0 %v3978
        %v4105 = vpop.f32.mrf.mxu0
        %v4106 = vadd.f32 %v3954, %v4105
        %v4107 = vpop.f32.mrf.mxu0
        %4108 = vmatprep.mubr.f32.mxu0 0.0
        %4109 = vmatmul.mubr.f32.gmra.mxu0 %v3981
        %v4110 = vpop.f32.mrf.mxu0
        %v4111 = vadd.f32 %v3954, %v4110
        %v4112 = vpop.f32.mrf.mxu0
        %4113 = vmatprep.mubr.f32.mxu0 0.0
        %4114 = vmatmul.mubr.f32.gmra.mxu0 %v3984
        %v4115 = vpop.f32.mrf.mxu0
        %v4116 = vadd.f32 %v3954, %v4115
        %v4117 = vpop.f32.mrf.mxu0
        %4118 = vmatprep.mubr.f32.mxu0 0.0
        %4119 = vmatmul.mubr.f32.gmra.mxu0 %v3987
        %v4120 = vpop.f32.mrf.mxu0
        %v4121 = vadd.f32 %v3954, %v4120
        %v4122 = vpop.f32.mrf.mxu0
        %4123 = vmatprep.mubr.f32.mxu0 0.0
        %4124 = vmatmul.mubr.f32.gmra.mxu0 %v3990
        %v4125 = vpop.f32.mrf.mxu0
        %v4126 = vadd.f32 %v3954, %v4125
        %v4127 = vpop.f32.mrf.mxu0
        %4128 = vmatprep.mubr.f32.mxu0 0.0
        %4129 = vmatmul.mubr.f32.gmra.mxu0 %v3993
        %v4130 = vpop.f32.mrf.mxu0
        %v4131 = vadd.f32 %v3954, %v4130
        %v4132 = vpop.f32.mrf.mxu0
        %4133 = vmatprep.mubr.f32.mxu0 0.0
        %4134 = vmatmul.mubr.f32.gmra.mxu0 %v3996
        %v4135 = vpop.f32.mrf.mxu0
        %v4136 = vadd.f32 %v3954, %v4135
        %v4137 = vpop.f32.mrf.mxu0
        %4138 = vmatprep.mubr.f32.mxu0 0.0
        %4139 = vmatmul.mubr.f32.gmra.mxu0 %v3999
        %v4140 = vpop.f32.mrf.mxu0
        %v4141 = vadd.f32 %v3954, %v4140
        %v4142 = vpop.f32.mrf.mxu0
        %4143 = vmatprep.mubr.f32.mxu0 0.0
        %4144 = vmatmul.mubr.f32.gmra.mxu0 %v4002
        %v4145 = vpop.f32.mrf.mxu0
        %v4146 = vadd.f32 %v3954, %v4145
        %v4147 = vpop.f32.mrf.mxu0
        %4148 = vdwg.mxu0
        %v4149 = vadd.f32 %v3689, %v4071
        %v4150 = vadd.f32 %v3690, %v4076
        %v4151 = vadd.f32 %v3691, %v4081
        %v4152 = vadd.f32 %v3692, %v4086
        %v4153 = vadd.f32 %v3693, %v4091
        %v4154 = vadd.f32 %v3694, %v4096
        %v4155 = vadd.f32 %v3695, %v4101
        %v4156 = vadd.f32 %v3696, %v4106
        %v4157 = vadd.f32 %v3697, %v4111
        %v4158 = vadd.f32 %v3698, %v4116
        %v4159 = vadd.f32 %v3699, %v4121
        %v4160 = vadd.f32 %v3700, %v4126
        %v4161 = vadd.f32 %v3701, %v4131
        %v4162 = vadd.f32 %v3702, %v4136
        %v4163 = vadd.f32 %v3703, %v4141
        %v4164 = vadd.f32 %v3704, %v4146
        %v4165 = vmax.f32 %v4149, 0.0
        %v4166 = vmax.f32 %v4150, 0.0
        %v4167 = vmax.f32 %v4151, 0.0
        %v4168 = vmax.f32 %v4152, 0.0
        %v4169 = vmax.f32 %v4153, 0.0
        %v4170 = vmax.f32 %v4154, 0.0
        %v4171 = vmax.f32 %v4155, 0.0
        %v4172 = vmax.f32 %v4156, 0.0
        %v4173 = vmax.f32 %v4157, 0.0
        %v4174 = vmax.f32 %v4158, 0.0
        %v4175 = vmax.f32 %v4159, 0.0
        %v4176 = vmax.f32 %v4160, 0.0
        %v4177 = vmax.f32 %v4161, 0.0
        %v4178 = vmax.f32 %v4162, 0.0
        %v4179 = vmax.f32 %v4163, 0.0
        %v4180 = vmax.f32 %v4164, 0.0
        %s4181 = scalar_lea.vmem %s5, 128
        %v4182 = vld [vmem:[%s4181] sm:$0xff]
        %v4183 = vld [vmem:[%s4181 + $0x8] sm:$0xff]
        %v4184 = vld [vmem:[%s4181 + $0x10] sm:$0xff]
        %v4185 = vld [vmem:[%s4181 + $0x18] sm:$0xff]
        %s4186 = scalar_lea.vmem %s6, 4
        %v4187 = vld [vmem:[%s4186] sm:$0x1]
        %v4189 = vlaneseq
        %v4190 = vshrl.u32 %v4189, 7
        %v4191 = vsub.s32 0, %v4190
        %v4192 = vrot.slane %v4187, %v4191
        %v4195 = vsel %vm3273, %v4165, 0
        %v4198 = vsel %vm3273, %v4166, 0
        %v4201 = vsel %vm3273, %v4167, 0
        %v4204 = vsel %vm3273, %v4168, 0
        %v4207 = vsel %vm3273, %v4169, 0
        %v4210 = vsel %vm3273, %v4170, 0
        %v4213 = vsel %vm3273, %v4171, 0
        %v4216 = vsel %vm3273, %v4172, 0
        %v4219 = vsel %vm3273, %v4173, 0
        %v4222 = vsel %vm3273, %v4174, 0
        %v4225 = vsel %vm3273, %v4175, 0
        %v4228 = vsel %vm3273, %v4176, 0
        %v4231 = vsel %vm3273, %v4177, 0
        %v4234 = vsel %vm3273, %v4178, 0
        %v4237 = vsel %vm3273, %v4179, 0
        %v4240 = vsel %vm3273, %v4180, 0
        %4242 = vmatprep.subr.mxu0 0.0
        %4243 = vmatpush1.msra.mxu0 0.0
        %4244 = vmatprep.subr.mxu0 0.0
        %4245 = vmatpush1.msra.mxu0 0.0
        %4246 = vmatprep.subr.mxu0 0.0
        %4247 = vmatpush1.msra.mxu0 0.0
        %4248 = vmatprep.subr.mxu0 0.0
        %4249 = vmatpush1.msra.mxu0 0.0
        %4250 = vmatprep.subr.mxu0 0.0
        %4251 = vmatpush1.msra.mxu0 0.0
        %4252 = vmatprep.subr.mxu0 0.0
        %4253 = vmatpush1.msra.mxu0 0.0
        %4254 = vmatprep.subr.mxu0 0.0
        %4255 = vmatpush1.msra.mxu0 0.0
        %4256 = vmatprep.subr.mxu0 0.0
        %4257 = vmatpush1.msra.mxu0 0.0
        %4258 = vmatprep.subr.mxu0 0.0
        %4259 = vmatpush1.msra.mxu0 0.0
        %4260 = vmatprep.subr.mxu0 0.0
        %4261 = vmatpush1.msra.mxu0 0.0
        %4262 = vmatprep.subr.mxu0 0.0
        %4263 = vmatpush1.msra.mxu0 0.0
        %4264 = vmatprep.subr.mxu0 0.0
        %4265 = vmatpush1.msra.mxu0 0.0
        %4266 = vmatprep.subr.mxu0 0.0
        %4267 = vmatpush1.msra.mxu0 %v4185
        %4268 = vmatprep.subr.mxu0 0.0
        %4269 = vmatpush1.msra.mxu0 %v4184
        %4270 = vmatprep.subr.mxu0 0.0
        %4271 = vmatpush1.msra.mxu0 %v4183
        %4272 = vmatprep.subr.mxu0 0.0
        %4273 = vmatpush1.msra.mxu0 %v4182
        %4274 = vmatprep.subr.mxu0 0.0
        %4275 = vmatpush2.msra.mxu0 0.0
        %4276 = vmatprep.subr.mxu0 0.0
        %4277 = vmatpush2.msra.mxu0 0.0
        %4278 = vmatprep.subr.mxu0 0.0
        %4279 = vmatpush2.msra.mxu0 0.0
        %4280 = vmatprep.subr.mxu0 0.0
        %4281 = vmatpush2.msra.mxu0 0.0
        %4282 = vmatprep.subr.mxu0 0.0
        %4283 = vmatpush2.msra.mxu0 0.0
        %4284 = vmatprep.subr.mxu0 0.0
        %4285 = vmatpush2.msra.mxu0 0.0
        %4286 = vmatprep.subr.mxu0 0.0
        %4287 = vmatpush2.msra.mxu0 0.0
        %4288 = vmatprep.subr.mxu0 0.0
        %4289 = vmatpush2.msra.mxu0 0.0
        %4290 = vmatprep.subr.mxu0 0.0
        %4291 = vmatpush2.msra.mxu0 0.0
        %4292 = vmatprep.subr.mxu0 0.0
        %4293 = vmatpush2.msra.mxu0 0.0
        %4294 = vmatprep.subr.mxu0 0.0
        %4295 = vmatpush2.msra.mxu0 0.0
        %4296 = vmatprep.subr.mxu0 0.0
        %4297 = vmatpush2.msra.mxu0 0.0
        %4298 = vmatprep.subr.mxu0 0.0
        %4299 = vmatpush2.msra.mxu0 0.0
        %4300 = vmatprep.subr.mxu0 0.0
        %4301 = vmatpush2.msra.mxu0 0.0
        %4302 = vmatprep.subr.mxu0 0.0
        %4303 = vmatpush2.msra.mxu0 0.0
        %4304 = vmatprep.subr.mxu0 0.0
        %4305 = vmatpush2.msra.mxu0 0.0
        %4306 = vmatprep.mubr.f32.mxu0 0.0
        %4307 = vmatmul.mubr.f32.gmra.mxu0 %v4195
        %v4308 = vpop.f32.mrf.mxu0
        %v4309 = vadd.f32 %v4192, %v4308
        %v4310 = vpop.f32.mrf.mxu0
        %4311 = vmatprep.mubr.f32.mxu0 0.0
        %4312 = vmatmul.mubr.f32.gmra.mxu0 %v4198
        %v4313 = vpop.f32.mrf.mxu0
        %v4314 = vadd.f32 %v4192, %v4313
        %v4315 = vpop.f32.mrf.mxu0
        %4316 = vmatprep.mubr.f32.mxu0 0.0
        %4317 = vmatmul.mubr.f32.gmra.mxu0 %v4201
        %v4318 = vpop.f32.mrf.mxu0
        %v4319 = vadd.f32 %v4192, %v4318
        %v4320 = vpop.f32.mrf.mxu0
        %4321 = vmatprep.mubr.f32.mxu0 0.0
        %4322 = vmatmul.mubr.f32.gmra.mxu0 %v4204
        %v4323 = vpop.f32.mrf.mxu0
        %v4324 = vadd.f32 %v4192, %v4323
        %v4325 = vpop.f32.mrf.mxu0
        %4326 = vmatprep.mubr.f32.mxu0 0.0
        %4327 = vmatmul.mubr.f32.gmra.mxu0 %v4207
        %v4328 = vpop.f32.mrf.mxu0
        %v4329 = vadd.f32 %v4192, %v4328
        %v4330 = vpop.f32.mrf.mxu0
        %4331 = vmatprep.mubr.f32.mxu0 0.0
        %4332 = vmatmul.mubr.f32.gmra.mxu0 %v4210
        %v4333 = vpop.f32.mrf.mxu0
        %v4334 = vadd.f32 %v4192, %v4333
        %v4335 = vpop.f32.mrf.mxu0
        %4336 = vmatprep.mubr.f32.mxu0 0.0
        %4337 = vmatmul.mubr.f32.gmra.mxu0 %v4213
        %v4338 = vpop.f32.mrf.mxu0
        %v4339 = vadd.f32 %v4192, %v4338
        %v4340 = vpop.f32.mrf.mxu0
        %4341 = vmatprep.mubr.f32.mxu0 0.0
        %4342 = vmatmul.mubr.f32.gmra.mxu0 %v4216
        %v4343 = vpop.f32.mrf.mxu0
        %v4344 = vadd.f32 %v4192, %v4343
        %v4345 = vpop.f32.mrf.mxu0
        %4346 = vmatprep.mubr.f32.mxu0 0.0
        %4347 = vmatmul.mubr.f32.gmra.mxu0 %v4219
        %v4348 = vpop.f32.mrf.mxu0
        %v4349 = vadd.f32 %v4192, %v4348
        %v4350 = vpop.f32.mrf.mxu0
        %4351 = vmatprep.mubr.f32.mxu0 0.0
        %4352 = vmatmul.mubr.f32.gmra.mxu0 %v4222
        %v4353 = vpop.f32.mrf.mxu0
        %v4354 = vadd.f32 %v4192, %v4353
        %v4355 = vpop.f32.mrf.mxu0
        %4356 = vmatprep.mubr.f32.mxu0 0.0
        %4357 = vmatmul.mubr.f32.gmra.mxu0 %v4225
        %v4358 = vpop.f32.mrf.mxu0
        %v4359 = vadd.f32 %v4192, %v4358
        %v4360 = vpop.f32.mrf.mxu0
        %4361 = vmatprep.mubr.f32.mxu0 0.0
        %4362 = vmatmul.mubr.f32.gmra.mxu0 %v4228
        %v4363 = vpop.f32.mrf.mxu0
        %v4364 = vadd.f32 %v4192, %v4363
        %v4365 = vpop.f32.mrf.mxu0
        %4366 = vmatprep.mubr.f32.mxu0 0.0
        %4367 = vmatmul.mubr.f32.gmra.mxu0 %v4231
        %v4368 = vpop.f32.mrf.mxu0
        %v4369 = vadd.f32 %v4192, %v4368
        %v4370 = vpop.f32.mrf.mxu0
        %4371 = vmatprep.mubr.f32.mxu0 0.0
        %4372 = vmatmul.mubr.f32.gmra.mxu0 %v4234
        %v4373 = vpop.f32.mrf.mxu0
        %v4374 = vadd.f32 %v4192, %v4373
        %v4375 = vpop.f32.mrf.mxu0
        %4376 = vmatprep.mubr.f32.mxu0 0.0
        %4377 = vmatmul.mubr.f32.gmra.mxu0 %v4237
        %v4378 = vpop.f32.mrf.mxu0
        %v4379 = vadd.f32 %v4192, %v4378
        %v4380 = vpop.f32.mrf.mxu0
        %4381 = vmatprep.mubr.f32.mxu0 0.0
        %4382 = vmatmul.mubr.f32.gmra.mxu0 %v4240
        %v4383 = vpop.f32.mrf.mxu0
        %v4384 = vadd.f32 %v4192, %v4383
        %v4385 = vpop.f32.mrf.mxu0
        %4386 = vdwg.mxu0
        %v4387 = vmax.f32 %v4309, 0.0
        %v4388 = vmax.f32 %v4314, 0.0
        %v4389 = vmax.f32 %v4319, 0.0
        %v4390 = vmax.f32 %v4324, 0.0
        %v4391 = vmax.f32 %v4329, 0.0
        %v4392 = vmax.f32 %v4334, 0.0
        %v4393 = vmax.f32 %v4339, 0.0
        %v4394 = vmax.f32 %v4344, 0.0
        %v4395 = vmax.f32 %v4349, 0.0
        %v4396 = vmax.f32 %v4354, 0.0
        %v4397 = vmax.f32 %v4359, 0.0
        %v4398 = vmax.f32 %v4364, 0.0
        %v4399 = vmax.f32 %v4369, 0.0
        %v4400 = vmax.f32 %v4374, 0.0
        %v4401 = vmax.f32 %v4379, 0.0
        %v4402 = vmax.f32 %v4384, 0.0
        %s4403 = scalar_lea.vmem %s5, 160
        %v4404 = vld [vmem:[%s4403] sm:$0xff]
        %v4405 = vld [vmem:[%s4403 + $0x8] sm:$0xff]
        %v4406 = vld [vmem:[%s4403 + $0x10] sm:$0xff]
        %v4407 = vld [vmem:[%s4403 + $0x18] sm:$0xff]
        %s4408 = scalar_lea.vmem %s6, 5
        %v4409 = vld [vmem:[%s4408] sm:$0x1]
        %v4411 = vlaneseq
        %v4412 = vshrl.u32 %v4411, 7
        %v4413 = vsub.s32 0, %v4412
        %v4414 = vrot.slane %v4409, %v4413
        %v4417 = vsel %vm3273, %v4387, 0
        %v4420 = vsel %vm3273, %v4388, 0
        %v4423 = vsel %vm3273, %v4389, 0
        %v4426 = vsel %vm3273, %v4390, 0
        %v4429 = vsel %vm3273, %v4391, 0
        %v4432 = vsel %vm3273, %v4392, 0
        %v4435 = vsel %vm3273, %v4393, 0
        %v4438 = vsel %vm3273, %v4394, 0
        %v4441 = vsel %vm3273, %v4395, 0
        %v4444 = vsel %vm3273, %v4396, 0
        %v4447 = vsel %vm3273, %v4397, 0
        %v4450 = vsel %vm3273, %v4398, 0
        %v4453 = vsel %vm3273, %v4399, 0
        %v4456 = vsel %vm3273, %v4400, 0
        %v4459 = vsel %vm3273, %v4401, 0
        %v4462 = vsel %vm3273, %v4402, 0
        %4464 = vmatprep.subr.mxu0 0.0
        %4465 = vmatpush1.msra.mxu0 0.0
        %4466 = vmatprep.subr.mxu0 0.0
        %4467 = vmatpush1.msra.mxu0 0.0
        %4468 = vmatprep.subr.mxu0 0.0
        %4469 = vmatpush1.msra.mxu0 0.0
        %4470 = vmatprep.subr.mxu0 0.0
        %4471 = vmatpush1.msra.mxu0 0.0
        %4472 = vmatprep.subr.mxu0 0.0
        %4473 = vmatpush1.msra.mxu0 0.0
        %4474 = vmatprep.subr.mxu0 0.0
        %4475 = vmatpush1.msra.mxu0 0.0
        %4476 = vmatprep.subr.mxu0 0.0
        %4477 = vmatpush1.msra.mxu0 0.0
        %4478 = vmatprep.subr.mxu0 0.0
        %4479 = vmatpush1.msra.mxu0 0.0
        %4480 = vmatprep.subr.mxu0 0.0
        %4481 = vmatpush1.msra.mxu0 0.0
        %4482 = vmatprep.subr.mxu0 0.0
        %4483 = vmatpush1.msra.mxu0 0.0
        %4484 = vmatprep.subr.mxu0 0.0
        %4485 = vmatpush1.msra.mxu0 0.0
        %4486 = vmatprep.subr.mxu0 0.0
        %4487 = vmatpush1.msra.mxu0 0.0
        %4488 = vmatprep.subr.mxu0 0.0
        %4489 = vmatpush1.msra.mxu0 %v4407
        %4490 = vmatprep.subr.mxu0 0.0
        %4491 = vmatpush1.msra.mxu0 %v4406
        %4492 = vmatprep.subr.mxu0 0.0
        %4493 = vmatpush1.msra.mxu0 %v4405
        %4494 = vmatprep.subr.mxu0 0.0
        %4495 = vmatpush1.msra.mxu0 %v4404
        %4496 = vmatprep.subr.mxu0 0.0
        %4497 = vmatpush2.msra.mxu0 0.0
        %4498 = vmatprep.subr.mxu0 0.0
        %4499 = vmatpush2.msra.mxu0 0.0
        %4500 = vmatprep.subr.mxu0 0.0
        %4501 = vmatpush2.msra.mxu0 0.0
        %4502 = vmatprep.subr.mxu0 0.0
        %4503 = vmatpush2.msra.mxu0 0.0
        %4504 = vmatprep.subr.mxu0 0.0
        %4505 = vmatpush2.msra.mxu0 0.0
        %4506 = vmatprep.subr.mxu0 0.0
        %4507 = vmatpush2.msra.mxu0 0.0
        %4508 = vmatprep.subr.mxu0 0.0
        %4509 = vmatpush2.msra.mxu0 0.0
        %4510 = vmatprep.subr.mxu0 0.0
        %4511 = vmatpush2.msra.mxu0 0.0
        %4512 = vmatprep.subr.mxu0 0.0
        %4513 = vmatpush2.msra.mxu0 0.0
        %4514 = vmatprep.subr.mxu0 0.0
        %4515 = vmatpush2.msra.mxu0 0.0
        %4516 = vmatprep.subr.mxu0 0.0
        %4517 = vmatpush2.msra.mxu0 0.0
        %4518 = vmatprep.subr.mxu0 0.0
        %4519 = vmatpush2.msra.mxu0 0.0
        %4520 = vmatprep.subr.mxu0 0.0
        %4521 = vmatpush2.msra.mxu0 0.0
        %4522 = vmatprep.subr.mxu0 0.0
        %4523 = vmatpush2.msra.mxu0 0.0
        %4524 = vmatprep.subr.mxu0 0.0
        %4525 = vmatpush2.msra.mxu0 0.0
        %4526 = vmatprep.subr.mxu0 0.0
        %4527 = vmatpush2.msra.mxu0 0.0
        %4528 = vmatprep.mubr.f32.mxu0 0.0
        %4529 = vmatmul.mubr.f32.gmra.mxu0 %v4417
        %v4530 = vpop.f32.mrf.mxu0
        %v4531 = vadd.f32 %v4414, %v4530
        %v4532 = vpop.f32.mrf.mxu0
        %4533 = vmatprep.mubr.f32.mxu0 0.0
        %4534 = vmatmul.mubr.f32.gmra.mxu0 %v4420
        %v4535 = vpop.f32.mrf.mxu0
        %v4536 = vadd.f32 %v4414, %v4535
        %v4537 = vpop.f32.mrf.mxu0
        %4538 = vmatprep.mubr.f32.mxu0 0.0
        %4539 = vmatmul.mubr.f32.gmra.mxu0 %v4423
        %v4540 = vpop.f32.mrf.mxu0
        %v4541 = vadd.f32 %v4414, %v4540
        %v4542 = vpop.f32.mrf.mxu0
        %4543 = vmatprep.mubr.f32.mxu0 0.0
        %4544 = vmatmul.mubr.f32.gmra.mxu0 %v4426
        %v4545 = vpop.f32.mrf.mxu0
        %v4546 = vadd.f32 %v4414, %v4545
        %v4547 = vpop.f32.mrf.mxu0
        %4548 = vmatprep.mubr.f32.mxu0 0.0
        %4549 = vmatmul.mubr.f32.gmra.mxu0 %v4429
        %v4550 = vpop.f32.mrf.mxu0
        %v4551 = vadd.f32 %v4414, %v4550
        %v4552 = vpop.f32.mrf.mxu0
        %4553 = vmatprep.mubr.f32.mxu0 0.0
        %4554 = vmatmul.mubr.f32.gmra.mxu0 %v4432
        %v4555 = vpop.f32.mrf.mxu0
        %v4556 = vadd.f32 %v4414, %v4555
        %v4557 = vpop.f32.mrf.mxu0
        %4558 = vmatprep.mubr.f32.mxu0 0.0
        %4559 = vmatmul.mubr.f32.gmra.mxu0 %v4435
        %v4560 = vpop.f32.mrf.mxu0
        %v4561 = vadd.f32 %v4414, %v4560
        %v4562 = vpop.f32.mrf.mxu0
        %4563 = vmatprep.mubr.f32.mxu0 0.0
        %4564 = vmatmul.mubr.f32.gmra.mxu0 %v4438
        %v4565 = vpop.f32.mrf.mxu0
        %v4566 = vadd.f32 %v4414, %v4565
        %v4567 = vpop.f32.mrf.mxu0
        %4568 = vmatprep.mubr.f32.mxu0 0.0
        %4569 = vmatmul.mubr.f32.gmra.mxu0 %v4441
        %v4570 = vpop.f32.mrf.mxu0
        %v4571 = vadd.f32 %v4414, %v4570
        %v4572 = vpop.f32.mrf.mxu0
        %4573 = vmatprep.mubr.f32.mxu0 0.0
        %4574 = vmatmul.mubr.f32.gmra.mxu0 %v4444
        %v4575 = vpop.f32.mrf.mxu0
        %v4576 = vadd.f32 %v4414, %v4575
        %v4577 = vpop.f32.mrf.mxu0
        %4578 = vmatprep.mubr.f32.mxu0 0.0
        %4579 = vmatmul.mubr.f32.gmra.mxu0 %v4447
        %v4580 = vpop.f32.mrf.mxu0
        %v4581 = vadd.f32 %v4414, %v4580
        %v4582 = vpop.f32.mrf.mxu0
        %4583 = vmatprep.mubr.f32.mxu0 0.0
        %4584 = vmatmul.mubr.f32.gmra.mxu0 %v4450
        %v4585 = vpop.f32.mrf.mxu0
        %v4586 = vadd.f32 %v4414, %v4585
        %v4587 = vpop.f32.mrf.mxu0
        %4588 = vmatprep.mubr.f32.mxu0 0.0
        %4589 = vmatmul.mubr.f32.gmra.mxu0 %v4453
        %v4590 = vpop.f32.mrf.mxu0
        %v4591 = vadd.f32 %v4414, %v4590
        %v4592 = vpop.f32.mrf.mxu0
        %4593 = vmatprep.mubr.f32.mxu0 0.0
        %4594 = vmatmul.mubr.f32.gmra.mxu0 %v4456
        %v4595 = vpop.f32.mrf.mxu0
        %v4596 = vadd.f32 %v4414, %v4595
        %v4597 = vpop.f32.mrf.mxu0
        %4598 = vmatprep.mubr.f32.mxu0 0.0
        %4599 = vmatmul.mubr.f32.gmra.mxu0 %v4459
        %v4600 = vpop.f32.mrf.mxu0
        %v4601 = vadd.f32 %v4414, %v4600
        %v4602 = vpop.f32.mrf.mxu0
        %4603 = vmatprep.mubr.f32.mxu0 0.0
        %4604 = vmatmul.mubr.f32.gmra.mxu0 %v4462
        %v4605 = vpop.f32.mrf.mxu0
        %v4606 = vadd.f32 %v4414, %v4605
        %v4607 = vpop.f32.mrf.mxu0
        %4608 = vdwg.mxu0
        %v4609 = vadd.f32 %v4149, %v4531
        %v4610 = vadd.f32 %v4150, %v4536
        %v4611 = vadd.f32 %v4151, %v4541
        %v4612 = vadd.f32 %v4152, %v4546
        %v4613 = vadd.f32 %v4153, %v4551
        %v4614 = vadd.f32 %v4154, %v4556
        %v4615 = vadd.f32 %v4155, %v4561
        %v4616 = vadd.f32 %v4156, %v4566
        %v4617 = vadd.f32 %v4157, %v4571
        %v4618 = vadd.f32 %v4158, %v4576
        %v4619 = vadd.f32 %v4159, %v4581
        %v4620 = vadd.f32 %v4160, %v4586
        %v4621 = vadd.f32 %v4161, %v4591
        %v4622 = vadd.f32 %v4162, %v4596
        %v4623 = vadd.f32 %v4163, %v4601
        %v4624 = vadd.f32 %v4164, %v4606
        %v4625 = vmax.f32 %v4609, 0.0
        %v4626 = vmax.f32 %v4610, 0.0
        %v4627 = vmax.f32 %v4611, 0.0
        %v4628 = vmax.f32 %v4612, 0.0
        %v4629 = vmax.f32 %v4613, 0.0
        %v4630 = vmax.f32 %v4614, 0.0
        %v4631 = vmax.f32 %v4615, 0.0
        %v4632 = vmax.f32 %v4616, 0.0
        %v4633 = vmax.f32 %v4617, 0.0
        %v4634 = vmax.f32 %v4618, 0.0
        %v4635 = vmax.f32 %v4619, 0.0
        %v4636 = vmax.f32 %v4620, 0.0
        %v4637 = vmax.f32 %v4621, 0.0
        %v4638 = vmax.f32 %v4622, 0.0
        %v4639 = vmax.f32 %v4623, 0.0
        %v4640 = vmax.f32 %v4624, 0.0
        %s4641 = scalar_lea.vmem %s5, 192
        %v4642 = vld [vmem:[%s4641] sm:$0xff]
        %v4643 = vld [vmem:[%s4641 + $0x8] sm:$0xff]
        %v4644 = vld [vmem:[%s4641 + $0x10] sm:$0xff]
        %v4645 = vld [vmem:[%s4641 + $0x18] sm:$0xff]
        %s4646 = scalar_lea.vmem %s6, 6
        %v4647 = vld [vmem:[%s4646] sm:$0x1]
        %v4649 = vlaneseq
        %v4650 = vshrl.u32 %v4649, 7
        %v4651 = vsub.s32 0, %v4650
        %v4652 = vrot.slane %v4647, %v4651
        %v4655 = vsel %vm3273, %v4625, 0
        %v4658 = vsel %vm3273, %v4626, 0
        %v4661 = vsel %vm3273, %v4627, 0
        %v4664 = vsel %vm3273, %v4628, 0
        %v4667 = vsel %vm3273, %v4629, 0
        %v4670 = vsel %vm3273, %v4630, 0
        %v4673 = vsel %vm3273, %v4631, 0
        %v4676 = vsel %vm3273, %v4632, 0
        %v4679 = vsel %vm3273, %v4633, 0
        %v4682 = vsel %vm3273, %v4634, 0
        %v4685 = vsel %vm3273, %v4635, 0
        %v4688 = vsel %vm3273, %v4636, 0
        %v4691 = vsel %vm3273, %v4637, 0
        %v4694 = vsel %vm3273, %v4638, 0
        %v4697 = vsel %vm3273, %v4639, 0
        %v4700 = vsel %vm3273, %v4640, 0
        %4702 = vmatprep.subr.mxu0 0.0
        %4703 = vmatpush1.msra.mxu0 0.0
        %4704 = vmatprep.subr.mxu0 0.0
        %4705 = vmatpush1.msra.mxu0 0.0
        %4706 = vmatprep.subr.mxu0 0.0
        %4707 = vmatpush1.msra.mxu0 0.0
        %4708 = vmatprep.subr.mxu0 0.0
        %4709 = vmatpush1.msra.mxu0 0.0
        %4710 = vmatprep.subr.mxu0 0.0
        %4711 = vmatpush1.msra.mxu0 0.0
        %4712 = vmatprep.subr.mxu0 0.0
        %4713 = vmatpush1.msra.mxu0 0.0
        %4714 = vmatprep.subr.mxu0 0.0
        %4715 = vmatpush1.msra.mxu0 0.0
        %4716 = vmatprep.subr.mxu0 0.0
        %4717 = vmatpush1.msra.mxu0 0.0
        %4718 = vmatprep.subr.mxu0 0.0
        %4719 = vmatpush1.msra.mxu0 0.0
        %4720 = vmatprep.subr.mxu0 0.0
        %4721 = vmatpush1.msra.mxu0 0.0
        %4722 = vmatprep.subr.mxu0 0.0
        %4723 = vmatpush1.msra.mxu0 0.0
        %4724 = vmatprep.subr.mxu0 0.0
        %4725 = vmatpush1.msra.mxu0 0.0
        %4726 = vmatprep.subr.mxu0 0.0
        %4727 = vmatpush1.msra.mxu0 %v4645
        %4728 = vmatprep.subr.mxu0 0.0
        %4729 = vmatpush1.msra.mxu0 %v4644
        %4730 = vmatprep.subr.mxu0 0.0
        %4731 = vmatpush1.msra.mxu0 %v4643
        %4732 = vmatprep.subr.mxu0 0.0
        %4733 = vmatpush1.msra.mxu0 %v4642
        %4734 = vmatprep.subr.mxu0 0.0
        %4735 = vmatpush2.msra.mxu0 0.0
        %4736 = vmatprep.subr.mxu0 0.0
        %4737 = vmatpush2.msra.mxu0 0.0
        %4738 = vmatprep.subr.mxu0 0.0
        %4739 = vmatpush2.msra.mxu0 0.0
        %4740 = vmatprep.subr.mxu0 0.0
        %4741 = vmatpush2.msra.mxu0 0.0
        %4742 = vmatprep.subr.mxu0 0.0
        %4743 = vmatpush2.msra.mxu0 0.0
        %4744 = vmatprep.subr.mxu0 0.0
        %4745 = vmatpush2.msra.mxu0 0.0
        %4746 = vmatprep.subr.mxu0 0.0
        %4747 = vmatpush2.msra.mxu0 0.0
        %4748 = vmatprep.subr.mxu0 0.0
        %4749 = vmatpush2.msra.mxu0 0.0
        %4750 = vmatprep.subr.mxu0 0.0
        %4751 = vmatpush2.msra.mxu0 0.0
        %4752 = vmatprep.subr.mxu0 0.0
        %4753 = vmatpush2.msra.mxu0 0.0
        %4754 = vmatprep.subr.mxu0 0.0
        %4755 = vmatpush2.msra.mxu0 0.0
        %4756 = vmatprep.subr.mxu0 0.0
        %4757 = vmatpush2.msra.mxu0 0.0
        %4758 = vmatprep.subr.mxu0 0.0
        %4759 = vmatpush2.msra.mxu0 0.0
        %4760 = vmatprep.subr.mxu0 0.0
        %4761 = vmatpush2.msra.mxu0 0.0
        %4762 = vmatprep.subr.mxu0 0.0
        %4763 = vmatpush2.msra.mxu0 0.0
        %4764 = vmatprep.subr.mxu0 0.0
        %4765 = vmatpush2.msra.mxu0 0.0
        %4766 = vmatprep.mubr.f32.mxu0 0.0
        %4767 = vmatmul.mubr.f32.gmra.mxu0 %v4655
        %v4768 = vpop.f32.mrf.mxu0
        %v4769 = vadd.f32 %v4652, %v4768
        %v4770 = vpop.f32.mrf.mxu0
        %4771 = vmatprep.mubr.f32.mxu0 0.0
        %4772 = vmatmul.mubr.f32.gmra.mxu0 %v4658
        %v4773 = vpop.f32.mrf.mxu0
        %v4774 = vadd.f32 %v4652, %v4773
        %v4775 = vpop.f32.mrf.mxu0
        %4776 = vmatprep.mubr.f32.mxu0 0.0
        %4777 = vmatmul.mubr.f32.gmra.mxu0 %v4661
        %v4778 = vpop.f32.mrf.mxu0
        %v4779 = vadd.f32 %v4652, %v4778
        %v4780 = vpop.f32.mrf.mxu0
        %4781 = vmatprep.mubr.f32.mxu0 0.0
        %4782 = vmatmul.mubr.f32.gmra.mxu0 %v4664
        %v4783 = vpop.f32.mrf.mxu0
        %v4784 = vadd.f32 %v4652, %v4783
        %v4785 = vpop.f32.mrf.mxu0
        %4786 = vmatprep.mubr.f32.mxu0 0.0
        %4787 = vmatmul.mubr.f32.gmra.mxu0 %v4667
        %v4788 = vpop.f32.mrf.mxu0
        %v4789 = vadd.f32 %v4652, %v4788
        %v4790 = vpop.f32.mrf.mxu0
        %4791 = vmatprep.mubr.f32.mxu0 0.0
        %4792 = vmatmul.mubr.f32.gmra.mxu0 %v4670
        %v4793 = vpop.f32.mrf.mxu0
        %v4794 = vadd.f32 %v4652, %v4793
        %v4795 = vpop.f32.mrf.mxu0
        %4796 = vmatprep.mubr.f32.mxu0 0.0
        %4797 = vmatmul.mubr.f32.gmra.mxu0 %v4673
        %v4798 = vpop.f32.mrf.mxu0
        %v4799 = vadd.f32 %v4652, %v4798
        %v4800 = vpop.f32.mrf.mxu0
        %4801 = vmatprep.mubr.f32.mxu0 0.0
        %4802 = vmatmul.mubr.f32.gmra.mxu0 %v4676
        %v4803 = vpop.f32.mrf.mxu0
        %v4804 = vadd.f32 %v4652, %v4803
        %v4805 = vpop.f32.mrf.mxu0
        %4806 = vmatprep.mubr.f32.mxu0 0.0
        %4807 = vmatmul.mubr.f32.gmra.mxu0 %v4679
        %v4808 = vpop.f32.mrf.mxu0
        %v4809 = vadd.f32 %v4652, %v4808
        %v4810 = vpop.f32.mrf.mxu0
        %4811 = vmatprep.mubr.f32.mxu0 0.0
        %4812 = vmatmul.mubr.f32.gmra.mxu0 %v4682
        %v4813 = vpop.f32.mrf.mxu0
        %v4814 = vadd.f32 %v4652, %v4813
        %v4815 = vpop.f32.mrf.mxu0
        %4816 = vmatprep.mubr.f32.mxu0 0.0
        %4817 = vmatmul.mubr.f32.gmra.mxu0 %v4685
        %v4818 = vpop.f32.mrf.mxu0
        %v4819 = vadd.f32 %v4652, %v4818
        %v4820 = vpop.f32.mrf.mxu0
        %4821 = vmatprep.mubr.f32.mxu0 0.0
        %4822 = vmatmul.mubr.f32.gmra.mxu0 %v4688
        %v4823 = vpop.f32.mrf.mxu0
        %v4824 = vadd.f32 %v4652, %v4823
        %v4825 = vpop.f32.mrf.mxu0
        %4826 = vmatprep.mubr.f32.mxu0 0.0
        %4827 = vmatmul.mubr.f32.gmra.mxu0 %v4691
        %v4828 = vpop.f32.mrf.mxu0
        %v4829 = vadd.f32 %v4652, %v4828
        %v4830 = vpop.f32.mrf.mxu0
        %4831 = vmatprep.mubr.f32.mxu0 0.0
        %4832 = vmatmul.mubr.f32.gmra.mxu0 %v4694
        %v4833 = vpop.f32.mrf.mxu0
        %v4834 = vadd.f32 %v4652, %v4833
        %v4835 = vpop.f32.mrf.mxu0
        %4836 = vmatprep.mubr.f32.mxu0 0.0
        %4837 = vmatmul.mubr.f32.gmra.mxu0 %v4697
        %v4838 = vpop.f32.mrf.mxu0
        %v4839 = vadd.f32 %v4652, %v4838
        %v4840 = vpop.f32.mrf.mxu0
        %4841 = vmatprep.mubr.f32.mxu0 0.0
        %4842 = vmatmul.mubr.f32.gmra.mxu0 %v4700
        %v4843 = vpop.f32.mrf.mxu0
        %v4844 = vadd.f32 %v4652, %v4843
        %v4845 = vpop.f32.mrf.mxu0
        %4846 = vdwg.mxu0
        %v4847 = vmax.f32 %v4769, 0.0
        %v4848 = vmax.f32 %v4774, 0.0
        %v4849 = vmax.f32 %v4779, 0.0
        %v4850 = vmax.f32 %v4784, 0.0
        %v4851 = vmax.f32 %v4789, 0.0
        %v4852 = vmax.f32 %v4794, 0.0
        %v4853 = vmax.f32 %v4799, 0.0
        %v4854 = vmax.f32 %v4804, 0.0
        %v4855 = vmax.f32 %v4809, 0.0
        %v4856 = vmax.f32 %v4814, 0.0
        %v4857 = vmax.f32 %v4819, 0.0
        %v4858 = vmax.f32 %v4824, 0.0
        %v4859 = vmax.f32 %v4829, 0.0
        %v4860 = vmax.f32 %v4834, 0.0
        %v4861 = vmax.f32 %v4839, 0.0
        %v4862 = vmax.f32 %v4844, 0.0
        %s4863 = scalar_lea.vmem %s5, 224
        %v4864 = vld [vmem:[%s4863] sm:$0xff]
        %v4865 = vld [vmem:[%s4863 + $0x8] sm:$0xff]
        %v4866 = vld [vmem:[%s4863 + $0x10] sm:$0xff]
        %v4867 = vld [vmem:[%s4863 + $0x18] sm:$0xff]
        %s4868 = scalar_lea.vmem %s6, 7
        %v4869 = vld [vmem:[%s4868] sm:$0x1]
        %v4871 = vlaneseq
        %v4872 = vshrl.u32 %v4871, 7
        %v4873 = vsub.s32 0, %v4872
        %v4874 = vrot.slane %v4869, %v4873
        %v4877 = vsel %vm3273, %v4847, 0
        %v4880 = vsel %vm3273, %v4848, 0
        %v4883 = vsel %vm3273, %v4849, 0
        %v4886 = vsel %vm3273, %v4850, 0
        %v4889 = vsel %vm3273, %v4851, 0
        %v4892 = vsel %vm3273, %v4852, 0
        %v4895 = vsel %vm3273, %v4853, 0
        %v4898 = vsel %vm3273, %v4854, 0
        %v4901 = vsel %vm3273, %v4855, 0
        %v4904 = vsel %vm3273, %v4856, 0
        %v4907 = vsel %vm3273, %v4857, 0
        %v4910 = vsel %vm3273, %v4858, 0
        %v4913 = vsel %vm3273, %v4859, 0
        %v4916 = vsel %vm3273, %v4860, 0
        %v4919 = vsel %vm3273, %v4861, 0
        %v4922 = vsel %vm3273, %v4862, 0
        %4924 = vmatprep.subr.mxu0 0.0
        %4925 = vmatpush1.msra.mxu0 0.0
        %4926 = vmatprep.subr.mxu0 0.0
        %4927 = vmatpush1.msra.mxu0 0.0
        %4928 = vmatprep.subr.mxu0 0.0
        %4929 = vmatpush1.msra.mxu0 0.0
        %4930 = vmatprep.subr.mxu0 0.0
        %4931 = vmatpush1.msra.mxu0 0.0
        %4932 = vmatprep.subr.mxu0 0.0
        %4933 = vmatpush1.msra.mxu0 0.0
        %4934 = vmatprep.subr.mxu0 0.0
        %4935 = vmatpush1.msra.mxu0 0.0
        %4936 = vmatprep.subr.mxu0 0.0
        %4937 = vmatpush1.msra.mxu0 0.0
        %4938 = vmatprep.subr.mxu0 0.0
        %4939 = vmatpush1.msra.mxu0 0.0
        %4940 = vmatprep.subr.mxu0 0.0
        %4941 = vmatpush1.msra.mxu0 0.0
        %4942 = vmatprep.subr.mxu0 0.0
        %4943 = vmatpush1.msra.mxu0 0.0
        %4944 = vmatprep.subr.mxu0 0.0
        %4945 = vmatpush1.msra.mxu0 0.0
        %4946 = vmatprep.subr.mxu0 0.0
        %4947 = vmatpush1.msra.mxu0 0.0
        %4948 = vmatprep.subr.mxu0 0.0
        %4949 = vmatpush1.msra.mxu0 %v4867
        %4950 = vmatprep.subr.mxu0 0.0
        %4951 = vmatpush1.msra.mxu0 %v4866
        %4952 = vmatprep.subr.mxu0 0.0
        %4953 = vmatpush1.msra.mxu0 %v4865
        %4954 = vmatprep.subr.mxu0 0.0
        %4955 = vmatpush1.msra.mxu0 %v4864
        %4956 = vmatprep.subr.mxu0 0.0
        %4957 = vmatpush2.msra.mxu0 0.0
        %4958 = vmatprep.subr.mxu0 0.0
        %4959 = vmatpush2.msra.mxu0 0.0
        %4960 = vmatprep.subr.mxu0 0.0
        %4961 = vmatpush2.msra.mxu0 0.0
        %4962 = vmatprep.subr.mxu0 0.0
        %4963 = vmatpush2.msra.mxu0 0.0
        %4964 = vmatprep.subr.mxu0 0.0
        %4965 = vmatpush2.msra.mxu0 0.0
        %4966 = vmatprep.subr.mxu0 0.0
        %4967 = vmatpush2.msra.mxu0 0.0
        %4968 = vmatprep.subr.mxu0 0.0
        %4969 = vmatpush2.msra.mxu0 0.0
        %4970 = vmatprep.subr.mxu0 0.0
        %4971 = vmatpush2.msra.mxu0 0.0
        %4972 = vmatprep.subr.mxu0 0.0
        %4973 = vmatpush2.msra.mxu0 0.0
        %4974 = vmatprep.subr.mxu0 0.0
        %4975 = vmatpush2.msra.mxu0 0.0
        %4976 = vmatprep.subr.mxu0 0.0
        %4977 = vmatpush2.msra.mxu0 0.0
        %4978 = vmatprep.subr.mxu0 0.0
        %4979 = vmatpush2.msra.mxu0 0.0
        %4980 = vmatprep.subr.mxu0 0.0
        %4981 = vmatpush2.msra.mxu0 0.0
        %4982 = vmatprep.subr.mxu0 0.0
        %4983 = vmatpush2.msra.mxu0 0.0
        %4984 = vmatprep.subr.mxu0 0.0
        %4985 = vmatpush2.msra.mxu0 0.0
        %4986 = vmatprep.subr.mxu0 0.0
        %4987 = vmatpush2.msra.mxu0 0.0
        %4988 = vmatprep.mubr.f32.mxu0 0.0
        %4989 = vmatmul.mubr.f32.gmra.mxu0 %v4877
        %v4990 = vpop.f32.mrf.mxu0
        %v4991 = vadd.f32 %v4874, %v4990
        %v4992 = vpop.f32.mrf.mxu0
        %4993 = vmatprep.mubr.f32.mxu0 0.0
        %4994 = vmatmul.mubr.f32.gmra.mxu0 %v4880
        %v4995 = vpop.f32.mrf.mxu0
        %v4996 = vadd.f32 %v4874, %v4995
        %v4997 = vpop.f32.mrf.mxu0
        %4998 = vmatprep.mubr.f32.mxu0 0.0
        %4999 = vmatmul.mubr.f32.gmra.mxu0 %v4883
        %v5000 = vpop.f32.mrf.mxu0
        %v5001 = vadd.f32 %v4874, %v5000
        %v5002 = vpop.f32.mrf.mxu0
        %5003 = vmatprep.mubr.f32.mxu0 0.0
        %5004 = vmatmul.mubr.f32.gmra.mxu0 %v4886
        %v5005 = vpop.f32.mrf.mxu0
        %v5006 = vadd.f32 %v4874, %v5005
        %v5007 = vpop.f32.mrf.mxu0
        %5008 = vmatprep.mubr.f32.mxu0 0.0
        %5009 = vmatmul.mubr.f32.gmra.mxu0 %v4889
        %v5010 = vpop.f32.mrf.mxu0
        %v5011 = vadd.f32 %v4874, %v5010
        %v5012 = vpop.f32.mrf.mxu0
        %5013 = vmatprep.mubr.f32.mxu0 0.0
        %5014 = vmatmul.mubr.f32.gmra.mxu0 %v4892
        %v5015 = vpop.f32.mrf.mxu0
        %v5016 = vadd.f32 %v4874, %v5015
        %v5017 = vpop.f32.mrf.mxu0
        %5018 = vmatprep.mubr.f32.mxu0 0.0
        %5019 = vmatmul.mubr.f32.gmra.mxu0 %v4895
        %v5020 = vpop.f32.mrf.mxu0
        %v5021 = vadd.f32 %v4874, %v5020
        %v5022 = vpop.f32.mrf.mxu0
        %5023 = vmatprep.mubr.f32.mxu0 0.0
        %5024 = vmatmul.mubr.f32.gmra.mxu0 %v4898
        %v5025 = vpop.f32.mrf.mxu0
        %v5026 = vadd.f32 %v4874, %v5025
        %v5027 = vpop.f32.mrf.mxu0
        %5028 = vmatprep.mubr.f32.mxu0 0.0
        %5029 = vmatmul.mubr.f32.gmra.mxu0 %v4901
        %v5030 = vpop.f32.mrf.mxu0
        %v5031 = vadd.f32 %v4874, %v5030
        %v5032 = vpop.f32.mrf.mxu0
        %5033 = vmatprep.mubr.f32.mxu0 0.0
        %5034 = vmatmul.mubr.f32.gmra.mxu0 %v4904
        %v5035 = vpop.f32.mrf.mxu0
        %v5036 = vadd.f32 %v4874, %v5035
        %v5037 = vpop.f32.mrf.mxu0
        %5038 = vmatprep.mubr.f32.mxu0 0.0
        %5039 = vmatmul.mubr.f32.gmra.mxu0 %v4907
        %v5040 = vpop.f32.mrf.mxu0
        %v5041 = vadd.f32 %v4874, %v5040
        %v5042 = vpop.f32.mrf.mxu0
        %5043 = vmatprep.mubr.f32.mxu0 0.0
        %5044 = vmatmul.mubr.f32.gmra.mxu0 %v4910
        %v5045 = vpop.f32.mrf.mxu0
        %v5046 = vadd.f32 %v4874, %v5045
        %v5047 = vpop.f32.mrf.mxu0
        %5048 = vmatprep.mubr.f32.mxu0 0.0
        %5049 = vmatmul.mubr.f32.gmra.mxu0 %v4913
        %v5050 = vpop.f32.mrf.mxu0
        %v5051 = vadd.f32 %v4874, %v5050
        %v5052 = vpop.f32.mrf.mxu0
        %5053 = vmatprep.mubr.f32.mxu0 0.0
        %5054 = vmatmul.mubr.f32.gmra.mxu0 %v4916
        %v5055 = vpop.f32.mrf.mxu0
        %v5056 = vadd.f32 %v4874, %v5055
        %v5057 = vpop.f32.mrf.mxu0
        %5058 = vmatprep.mubr.f32.mxu0 0.0
        %5059 = vmatmul.mubr.f32.gmra.mxu0 %v4919
        %v5060 = vpop.f32.mrf.mxu0
        %v5061 = vadd.f32 %v4874, %v5060
        %v5062 = vpop.f32.mrf.mxu0
        %5063 = vmatprep.mubr.f32.mxu0 0.0
        %5064 = vmatmul.mubr.f32.gmra.mxu0 %v4922
        %v5065 = vpop.f32.mrf.mxu0
        %v5066 = vadd.f32 %v4874, %v5065
        %v5067 = vpop.f32.mrf.mxu0
        %5068 = vdwg.mxu0
        %v5069 = vadd.f32 %v4609, %v4991
        %v5070 = vadd.f32 %v4610, %v4996
        %v5071 = vadd.f32 %v4611, %v5001
        %v5072 = vadd.f32 %v4612, %v5006
        %v5073 = vadd.f32 %v4613, %v5011
        %v5074 = vadd.f32 %v4614, %v5016
        %v5075 = vadd.f32 %v4615, %v5021
        %v5076 = vadd.f32 %v4616, %v5026
        %v5077 = vadd.f32 %v4617, %v5031
        %v5078 = vadd.f32 %v4618, %v5036
        %v5079 = vadd.f32 %v4619, %v5041
        %v5080 = vadd.f32 %v4620, %v5046
        %v5081 = vadd.f32 %v4621, %v5051
        %v5082 = vadd.f32 %v4622, %v5056
        %v5083 = vadd.f32 %v4623, %v5061
        %v5084 = vadd.f32 %v4624, %v5066
        %v5085 = vmax.f32 %v5069, 0.0
        %v5086 = vmax.f32 %v5070, 0.0
        %v5087 = vmax.f32 %v5071, 0.0
        %v5088 = vmax.f32 %v5072, 0.0
        %v5089 = vmax.f32 %v5073, 0.0
        %v5090 = vmax.f32 %v5074, 0.0
        %v5091 = vmax.f32 %v5075, 0.0
        %v5092 = vmax.f32 %v5076, 0.0
        %v5093 = vmax.f32 %v5077, 0.0
        %v5094 = vmax.f32 %v5078, 0.0
        %v5095 = vmax.f32 %v5079, 0.0
        %v5096 = vmax.f32 %v5080, 0.0
        %v5097 = vmax.f32 %v5081, 0.0
        %v5098 = vmax.f32 %v5082, 0.0
        %v5099 = vmax.f32 %v5083, 0.0
        %v5100 = vmax.f32 %v5084, 0.0
        %v5101 = vld [vmem:[%s7] sm:$0x1]
        %v5102 = vld [vmem:[#allocation2] sm:$0x1]
        %5104 = vset.pattern.permute.xlu0 0
        %5105 = vperm.xlu0 %5104, %v5102
        %v5106 = vpop.permute.xlu0 %5105
        %v5108 = vlaneseq
        %v5109 = vshrl.u32 %v5108, 7
        %v5110 = vsub.s32 0, %v5109
        %v5111 = vrot.slane %v5106, %v5110
        %v5113 = vsel %vm3273, %v5101, 0
        %v5116 = vsel %vm3273, %v5085, 0
        %v5119 = vsel %vm3273, %v5086, 0
        %v5122 = vsel %vm3273, %v5087, 0
        %v5125 = vsel %vm3273, %v5088, 0
        %v5128 = vsel %vm3273, %v5089, 0
        %v5131 = vsel %vm3273, %v5090, 0
        %v5134 = vsel %vm3273, %v5091, 0
        %v5137 = vsel %vm3273, %v5092, 0
        %v5140 = vsel %vm3273, %v5093, 0
        %v5143 = vsel %vm3273, %v5094, 0
        %v5146 = vsel %vm3273, %v5095, 0
        %v5149 = vsel %vm3273, %v5096, 0
        %v5152 = vsel %vm3273, %v5097, 0
        %v5155 = vsel %vm3273, %v5098, 0
        %v5158 = vsel %vm3273, %v5099, 0
        %v5161 = vsel %vm3273, %v5100, 0
        %5163 = vmatprep.subr.mxu0 0.0
        %5164 = vmatpush1.xpose.msra.mxu0 %v5161
        %5165 = vmatprep.subr.mxu0 0.0
        %5166 = vmatpush1.xpose.msra.mxu0 %v5158
        %5167 = vmatprep.subr.mxu0 0.0
        %5168 = vmatpush1.xpose.msra.mxu0 %v5155
        %5169 = vmatprep.subr.mxu0 0.0
        %5170 = vmatpush1.xpose.msra.mxu0 %v5152
        %5171 = vmatprep.subr.mxu0 0.0
        %5172 = vmatpush1.xpose.msra.mxu0 %v5149
        %5173 = vmatprep.subr.mxu0 0.0
        %5174 = vmatpush1.xpose.msra.mxu0 %v5146
        %5175 = vmatprep.subr.mxu0 0.0
        %5176 = vmatpush1.xpose.msra.mxu0 %v5143
        %5177 = vmatprep.subr.mxu0 0.0
        %5178 = vmatpush1.xpose.msra.mxu0 %v5140
        %5179 = vmatprep.subr.mxu0 0.0
        %5180 = vmatpush1.xpose.msra.mxu0 %v5137
        %5181 = vmatprep.subr.mxu0 0.0
        %5182 = vmatpush1.xpose.msra.mxu0 %v5134
        %5183 = vmatprep.subr.mxu0 0.0
        %5184 = vmatpush1.xpose.msra.mxu0 %v5131
        %5185 = vmatprep.subr.mxu0 0.0
        %5186 = vmatpush1.xpose.msra.mxu0 %v5128
        %5187 = vmatprep.subr.mxu0 0.0
        %5188 = vmatpush1.xpose.msra.mxu0 %v5125
        %5189 = vmatprep.subr.mxu0 0.0
        %5190 = vmatpush1.xpose.msra.mxu0 %v5122
        %5191 = vmatprep.subr.mxu0 0.0
        %5192 = vmatpush1.xpose.msra.mxu0 %v5119
        %5193 = vmatprep.subr.mxu0 0.0
        %5194 = vmatpush1.xpose.msra.mxu0 %v5116
        %5195 = vmatprep.subr.mxu0 0.0
        %5196 = vmatpush2.xpose.msra.mxu0 0.0
        %5197 = vmatprep.subr.mxu0 0.0
        %5198 = vmatpush2.xpose.msra.mxu0 0.0
        %5199 = vmatprep.subr.mxu0 0.0
        %5200 = vmatpush2.xpose.msra.mxu0 0.0
        %5201 = vmatprep.subr.mxu0 0.0
        %5202 = vmatpush2.xpose.msra.mxu0 0.0
        %5203 = vmatprep.subr.mxu0 0.0
        %5204 = vmatpush2.xpose.msra.mxu0 0.0
        %5205 = vmatprep.subr.mxu0 0.0
        %5206 = vmatpush2.xpose.msra.mxu0 0.0
        %5207 = vmatprep.subr.mxu0 0.0
        %5208 = vmatpush2.xpose.msra.mxu0 0.0
        %5209 = vmatprep.subr.mxu0 0.0
        %5210 = vmatpush2.xpose.msra.mxu0 0.0
        %5211 = vmatprep.subr.mxu0 0.0
        %5212 = vmatpush2.xpose.msra.mxu0 0.0
        %5213 = vmatprep.subr.mxu0 0.0
        %5214 = vmatpush2.xpose.msra.mxu0 0.0
        %5215 = vmatprep.subr.mxu0 0.0
        %5216 = vmatpush2.xpose.msra.mxu0 0.0
        %5217 = vmatprep.subr.mxu0 0.0
        %5218 = vmatpush2.xpose.msra.mxu0 0.0
        %5219 = vmatprep.subr.mxu0 0.0
        %5220 = vmatpush2.xpose.msra.mxu0 0.0
        %5221 = vmatprep.subr.mxu0 0.0
        %5222 = vmatpush2.xpose.msra.mxu0 0.0
        %5223 = vmatprep.subr.mxu0 0.0
        %5224 = vmatpush2.xpose.msra.mxu0 0.0
        %5225 = vmatprep.subr.mxu0 0.0
        %5226 = vmatpush2.xpose.msra.mxu0 0.0
        %5227 = vmatprep.mubr.f32.mxu0 0.0
        %5228 = vmatmul.mubr.f32.gmra.mxu0 %v5113
        %v5229 = vpop.f32.mrf.mxu0
        %v5230 = vadd.f32 %v5111, %v5229
        %v5231 = vpop.f32.mrf.mxu0
        %5232 = vdwg.mxu0
        %5233 = vst [vmem:[%s390] sm:$0x1] %v5230
        %s5234 = sand.u32 %s258, 1
        %s5235 = scalar_lea.sflag [#allocation4], %s5234
        %s5236 = sand.u32 %s258, 1
        %s5237 = scalar_lea.vmem [#allocation3], %s5236
        // Predicated region
        $region64: #{tpu_custom_call.1} parent=55 // pred_check
          %p5238 = pneg %p268
        $region65: #{tpu_custom_call.1} parent=55 // pred_check_branch
          %5240 = sbr.rel (%p5238) target = $region67
        $region66: #{tpu_custom_call.1} parent=55 // pred_region
          %s5242 = ssub.s32 16, 16
          %5243 = vsyncadd %s5235, %s5242
          %s5244 = smul.addr %s29, 2
          %s5245 = sadd.s32 %s30, %s5244
          %s5246 = smul.addr %s5245, 16
          %s5247 = scalar_lea.hbm %s9, %s5246
          %s5249 = sshll.u32 %s5237, 4
          %s5250 = int_to_ptr.vmem [resolvable:$true] %s5249
          %5252 = dma.vmem_to_hbm [thread:$0]  %s5250, 16, %s5247, %s5235
        $region67: #{tpu_custom_call.1} parent=55 // pred_fallthru
          _
      $region56: #{tpu_custom_call.1} parent=5 // pred_fallthru
        _
      %p5253 = scmp.le.s32.totalorder 2, %s20
      // Predicated region
      $region68: #{tpu_custom_call.1} parent=5 // pred_check
        %p5254 = pneg %p5253
      $region69: #{tpu_custom_call.1} parent=5 // pred_check_branch
        %5256 = sbr.rel (%p5254) target = $region71
      $region70: #{tpu_custom_call.1} parent=5 // pred_region
        %s5257 = ssub.s32 %s20, 2
        // Predicated region
        $region72: #{tpu_custom_call.1} parent=70 // pred_check
          %p5258 = pneg %p274
        $region73: #{tpu_custom_call.1} parent=70 // pred_check_branch
          %5260 = sbr.rel (%p5258) target = $region75
        $region74: #{tpu_custom_call.1} parent=70 // pred_region
          %s5261 = sand.u32 %s259, 1
          %s5262 = scalar_lea.sflag [#allocation4], %s5261
          %s5263 = sand.u32 %s259, 1
          %s5264 = scalar_lea.vmem [#allocation3], %s5263
          %5265 = dma.done %s5262, 16
        $region75: #{tpu_custom_call.1} parent=70 // pred_fallthru
          _
      $region71: #{tpu_custom_call.1} parent=5 // pred_fallthru
        _
    $region6: #{tpu_custom_call.1} parent=1 // loop_footer
      %s24 = sadd.s32 1, %s20
    $region7: #{tpu_custom_call.1} parent=1 // loop_footer_branch
      %19 = sbr.rel target = $region3
    $region8: #{tpu_custom_call.1} parent=1 // loop_exit
      _
    %5266 = vsyncpa [#allocation4], 1
    %s5267 = scalar_lea.sflag [#allocation4], 1
    %5268 = vsyncpa %s5267, 1

</llo_original>
